<compile_context>
chip_gen: v6e
topology: v6e:2x2x1
jax: 0.10.0
libtpu: 0.0.40
codegen_flags: <defaults>
</compile_context>

<pallas_src>
import math
import jax
import jax.numpy as jnp
from jax.experimental import pallas as pl
from jax.experimental.pallas import tpu as pltpu

# ---- static problem sizes (small, synthetic) --------------------------------
B     = 2
CIN   = 1
T     = 260          # input audio length
K1    = 17           # "sinc" filterbank kernel size
C1    = 32           # filterbank channels
K2    = 5            # depthwise kernel size
C2    = 32           # pointwise output channels
T1    = T  - K1 + 1  # 244 (valid conv1 outputs)
T2    = T1 - K2 + 1  # 240 (valid dw-conv outputs)
T_OUT = 8            # pooled time steps
POOL  = T2 // T_OUT  # 30
P     = 384          # lane-aligned (multiple of 128) padded time extent >= T


# ---- Pallas kernel: whole backbone, one grid step ----------------------------
def audio_backbone_kernel(x_ref, w1_ref, b1_ref, wf_ref, bf_ref, pool_ref,
                          o_ref):
    # pltpu.roll follows jnp.roll semantics: out[:, t] = in[:, (t - shift) % P],
    # so shift = P - k gives out[:, t] = in[:, t + k].  Rolls act per sublane
    # row, so batches never mix; wraparound only lands in zero-weighted pad
    # columns (valid outputs need t + k <= T1 - 1 < T2-pad start).
    x = x_ref[...]                                              # (B, P)

    # conv1 (sinc filterbank stand-in): 17 shift-and-accumulate MXU matmuls
    # against per-tap block-diagonal (B*C1, B) weights.
    acc1 = jnp.dot(w1_ref[0], x, preferred_element_type=jnp.float32)
    for k in range(1, K1):
        acc1 = acc1 + jnp.dot(w1_ref[k],
                              pltpu.roll(x, shift=P - k, axis=1),
                              preferred_element_type=jnp.float32)
    h1 = jnp.maximum(acc1 + b1_ref[...], 0.0)                   # (B*C1, P)

    # fused depthwise + pointwise conv (no nonlinearity in between): 5 more
    # shift-and-accumulate matmuls against pre-fused (B*C2, B*C1) weights.
    acc2 = jnp.dot(wf_ref[0], h1, preferred_element_type=jnp.float32)
    for k in range(1, K2):
        acc2 = acc2 + jnp.dot(wf_ref[k],
                              pltpu.roll(h1, shift=P - k, axis=1),
                              preferred_element_type=jnp.float32)
    h2 = jnp.maximum(acc2 + bf_ref[...], 0.0)                   # (B*C2, P)

    # average pool over time as one matmul; pad columns of h2 hit zero rows of
    # the pool matrix, and the (B*C2, T_OUT) result is already in NCW order.
    o_ref[...] = jnp.dot(h2, pool_ref[...],
                         preferred_element_type=jnp.float32)    # (B*C2, T_OUT)


# ---- one-time parameter fusion (wrapper side) --------------------------------
def prepare_params(params):
    """Build block-diagonal per-tap weights, fused dw+pw weights, pool matrix."""
    w1, b1, wd, bd, wp, bp = params
    eye_b = jnp.eye(B, dtype=jnp.float32)

    # conv1: one (B*C1, B) block-diagonal slab per tap k.
    w1blk = jnp.einsum('kc,bd->kbcd', jnp.asarray(w1, jnp.float32), eye_b)
    w1blk = w1blk.reshape(K1, B * C1, B)                        # (K1, B*C1, B)
    b1col = jnp.tile(jnp.asarray(b1, jnp.float32).reshape(1, C1),
                     (B, 1)).reshape(B * C1, 1)                 # (B*C1, 1)

    # fused depthwise+pointwise: wf[k, c2, c1] = wd[k, c1] * wp[c1, c2],
    # block-diagonal over batch.
    wf = (jnp.asarray(wd, jnp.float32)[:, None, :]
          * jnp.asarray(wp, jnp.float32).T[None, :, :])         # (K2, C2, C1)
    wfblk = jnp.einsum('kij,bd->kbidj', wf, eye_b)
    wfblk = wfblk.reshape(K2, B * C2, B * C1)                   # (K2, B*C2, B*C1)
    bfcol = jnp.tile((jnp.asarray(bd, jnp.float32) @ wp + bp).reshape(1, C2),
                     (B, 1)).reshape(B * C2, 1)                 # (B*C2, 1)

    # average-pool matrix over the padded time axis: rows >= T2 are zero, so
    # garbage in the pad columns of h2 never reaches the output.
    pool_blk = jnp.kron(jnp.eye(T_OUT, dtype=jnp.float32),
                        jnp.ones((POOL, 1), jnp.float32)) / POOL      # (T2, T_OUT)
    pmat = jnp.zeros((P, T_OUT), jnp.float32).at[:T2, :].set(pool_blk)  # (P, T_OUT)
    return w1blk, b1col, wfblk, bfcol, pmat


# ---- forward wrapper ----------------------------------------------------------
def audio_backbone_forward(a_ncw, fused):
    """a_ncw: (B, CIN, T) float32 in PyTorch NCW layout. Returns (B, C2*T_OUT)."""
    w1blk, b1col, wfblk, bfcol, pmat = fused
    x = a_ncw.reshape(B, T).astype(jnp.float32)                 # CIN == 1
    x = jnp.pad(x, ((0, 0), (0, P - T)))                        # lane-align time

    out = pl.pallas_call(
        audio_backbone_kernel,
        out_shape=jax.ShapeDtypeStruct((B * C2, T_OUT), jnp.float32),
        grid=(1,),
        in_specs=[
            pl.BlockSpec((B, P),               lambda i: (0, 0)),     # raw input
            pl.BlockSpec((K1, B * C1, B),      lambda i: (0, 0, 0)),  # conv1 taps
            pl.BlockSpec((B * C1, 1),          lambda i: (0, 0)),     # conv1 bias
            pl.BlockSpec((K2, B * C2, B * C1), lambda i: (0, 0, 0)),  # fused dw+pw taps
            pl.BlockSpec((B * C2, 1),          lambda i: (0, 0)),     # fused bias
            pl.BlockSpec((P, T_OUT),           lambda i: (0, 0)),     # pool matrix
        ],
        out_specs=pl.BlockSpec((B * C2, T_OUT), lambda i: (0, 0)),
        compiler_params=pltpu.CompilerParams(
            dimension_semantics=("arbitrary",)),
    )(x, w1blk, b1col, wfblk, bfcol, pmat)

    # (B*C2, T_OUT) is already in NCW flatten order (b-major, c, then t), so
    # this reshape is a contiguous, zero-copy metadata change.
    return out.reshape(B, C2 * T_OUT)


# ---- pure-JAX reference (un-fused math) for a correctness check --------------
def reference_forward(a_ncw, params):
    w1, b1, wd, bd, wp, bp = params
    x = jnp.transpose(a_ncw, (0, 2, 1)).astype(jnp.float32)     # (B, T, CIN)

    def one(xb):
        acc1 = jnp.zeros((T1, C1), jnp.float32)
        for k in range(K1):
            acc1 = acc1 + xb[k:k + T1, :] * w1[k][None, :]
        h1 = jnp.maximum(acc1 + b1, 0.0)
        acc2 = jnp.zeros((T2, C1), jnp.float32)
        for k in range(K2):
            acc2 = acc2 + h1[k:k + T2, :] * wd[k][None, :]
        hd = acc2 + bd
        h2 = jnp.maximum(hd @ wp + bp, 0.0)
        return jnp.mean(h2.reshape(T_OUT, POOL, C2), axis=1)    # (T_OUT, C2)

    out = jax.vmap(one)(x)                                      # (B, T_OUT, C2)
    return jnp.transpose(out, (0, 2, 1)).reshape(B, -1)         # NCW flatten


# ---- deterministic parameter init --------------------------------------------
def init_params():
    key = jax.random.PRNGKey(0)
    k1, k2, k3, k4, k5, k6 = jax.random.split(key, 6)
    w1 = jax.random.normal(k1, (K1, C1), jnp.float32) * (1.0 / math.sqrt(K1))
    b1 = jax.random.normal(k2, (1, C1),  jnp.float32) * 0.01
    wd = jax.random.normal(k3, (K2, C1), jnp.float32) * (1.0 / math.sqrt(K2))
    bd = jax.random.normal(k4, (1, C1),  jnp.float32) * 0.01
    wp = jax.random.normal(k5, (C1, C2), jnp.float32) * (1.0 / math.sqrt(C1))
    bp = jax.random.normal(k6, (1, C2),  jnp.float32) * 0.01
    return (w1, b1, wd, bd, wp, bp)


if __name__ == "__main__":
    params = init_params()
    fused = prepare_params(params)

    key_in = jax.random.split(jax.random.PRNGKey(0), 2)[1]
    a = jax.random.normal(key_in, (B, CIN, T), jnp.float32)

    fwd = jax.jit(audio_backbone_forward)
    out = fwd(a, fused)
    out = jax.block_until_ready(out)

    ref = reference_forward(a, params)
    assert out.shape == (B, C2 * T_OUT), out.shape
    # 10x tighter than before; covers only MXU f32 multi-pass rounding and
    # accumulation-order differences, not layout/indexing bugs.
    assert jnp.allclose(out, ref, atol=1e-3, rtol=1e-3), \
        float(jnp.max(jnp.abs(out - ref)))

    print("KERNEL_OK")
</pallas_src>

<mosaic_0001>
module attributes {stable_mosaic.version = 11 : i64} {
  func.func @audio_backbone_kernel(%arg0: i32, %arg1: memref<2x384xf32, #tpu.memory_space<vmem>>, %arg2: memref<17x64x2xf32, #tpu.memory_space<vmem>>, %arg3: memref<64x1xf32, #tpu.memory_space<vmem>>, %arg4: memref<5x64x64xf32, #tpu.memory_space<vmem>>, %arg5: memref<64x1xf32, #tpu.memory_space<vmem>>, %arg6: memref<384x8xf32, #tpu.memory_space<vmem>>, %arg7: memref<64x8xf32, #tpu.memory_space<vmem>>) attributes {dimension_semantics = [#tpu.dimension_semantics<arbitrary>], iteration_bounds = array<i64: 1>, scalar_prefetch = 0 : i64, scratch_operands = 0 : i64, tpu.core_type = #tpu.core_type<tc>, window_params = [{pipeline_mode = #tpu.pipeline_mode<synchronous>, transform_indices = @transform_0, window_bounds = array<i64: 2, 384>}, {pipeline_mode = #tpu.pipeline_mode<synchronous>, transform_indices = @transform_1, window_bounds = array<i64: 17, 64, 2>}, {pipeline_mode = #tpu.pipeline_mode<synchronous>, transform_indices = @transform_2, window_bounds = array<i64: 64, 1>}, {pipeline_mode = #tpu.pipeline_mode<synchronous>, transform_indices = @transform_3, window_bounds = array<i64: 5, 64, 64>}, {pipeline_mode = #tpu.pipeline_mode<synchronous>, transform_indices = @transform_4, window_bounds = array<i64: 64, 1>}, {pipeline_mode = #tpu.pipeline_mode<synchronous>, transform_indices = @transform_5, window_bounds = array<i64: 384, 8>}, {pipeline_mode = #tpu.pipeline_mode<synchronous>, transform_indices = @transform_6, window_bounds = array<i64: 64, 8>}]} {
    %c0 = arith.constant 0 : index
    %c0_0 = arith.constant 0 : index
    %0 = vector.load %arg1[%c0, %c0_0] : memref<2x384xf32, #tpu.memory_space<vmem>>, vector<2x384xf32>
    %c0_1 = arith.constant 0 : index
    %c0_2 = arith.constant 0 : index
    %c0_3 = arith.constant 0 : index
    %1 = vector.load %arg2[%c0_1, %c0_2, %c0_3] : memref<17x64x2xf32, #tpu.memory_space<vmem>>, vector<1x64x2xf32>
    %2 = vector.shape_cast %1 : vector<1x64x2xf32> to vector<64x2xf32>
    %cst = arith.constant dense<0.000000e+00> : vector<64x384xf32>
    %3 = tpu.matmul %2, %0, %cst {dimension_numbers = #tpu.dot_dimension_numbers<[1], [0], [0], [1], [0, 0, 1, 1], [], []>} : vector<64x2xf32>, vector<2x384xf32>, vector<64x384xf32> -> vector<64x384xf32>
    %c1 = arith.constant 1 : index
    %c0_4 = arith.constant 0 : index
    %c0_5 = arith.constant 0 : index
    %4 = vector.load %arg2[%c1, %c0_4, %c0_5] : memref<17x64x2xf32, #tpu.memory_space<vmem>>, vector<1x64x2xf32>
    %5 = vector.shape_cast %4 : vector<1x64x2xf32> to vector<64x2xf32>
    %c383_i32 = arith.constant 383 : i32
    %6 = tpu.dynamic_rotate %0 by %c383_i32 dim 1 : vector<2x384xf32>, i32 -> vector<2x384xf32>
    %cst_6 = arith.constant dense<0.000000e+00> : vector<64x384xf32>
    %7 = tpu.matmul %5, %6, %cst_6 {dimension_numbers = #tpu.dot_dimension_numbers<[1], [0], [0], [1], [0, 0, 1, 1], [], []>} : vector<64x2xf32>, vector<2x384xf32>, vector<64x384xf32> -> vector<64x384xf32>
    %8 = arith.addf %3, %7 : vector<64x384xf32>
    %c2 = arith.constant 2 : index
    %c0_7 = arith.constant 0 : index
    %c0_8 = arith.constant 0 : index
    %9 = vector.load %arg2[%c2, %c0_7, %c0_8] : memref<17x64x2xf32, #tpu.memory_space<vmem>>, vector<1x64x2xf32>
    %10 = vector.shape_cast %9 : vector<1x64x2xf32> to vector<64x2xf32>
    %c382_i32 = arith.constant 382 : i32
    %11 = tpu.dynamic_rotate %0 by %c382_i32 dim 1 : vector<2x384xf32>, i32 -> vector<2x384xf32>
    %cst_9 = arith.constant dense<0.000000e+00> : vector<64x384xf32>
    %12 = tpu.matmul %10, %11, %cst_9 {dimension_numbers = #tpu.dot_dimension_numbers<[1], [0], [0], [1], [0, 0, 1, 1], [], []>} : vector<64x2xf32>, vector<2x384xf32>, vector<64x384xf32> -> vector<64x384xf32>
    %13 = arith.addf %8, %12 : vector<64x384xf32>
    %c3 = arith.constant 3 : index
    %c0_10 = arith.constant 0 : index
    %c0_11 = arith.constant 0 : index
    %14 = vector.load %arg2[%c3, %c0_10, %c0_11] : memref<17x64x2xf32, #tpu.memory_space<vmem>>, vector<1x64x2xf32>
    %15 = vector.shape_cast %14 : vector<1x64x2xf32> to vector<64x2xf32>
    %c381_i32 = arith.constant 381 : i32
    %16 = tpu.dynamic_rotate %0 by %c381_i32 dim 1 : vector<2x384xf32>, i32 -> vector<2x384xf32>
    %cst_12 = arith.constant dense<0.000000e+00> : vector<64x384xf32>
    %17 = tpu.matmul %15, %16, %cst_12 {dimension_numbers = #tpu.dot_dimension_numbers<[1], [0], [0], [1], [0, 0, 1, 1], [], []>} : vector<64x2xf32>, vector<2x384xf32>, vector<64x384xf32> -> vector<64x384xf32>
    %18 = arith.addf %13, %17 : vector<64x384xf32>
    %c4 = arith.constant 4 : index
    %c0_13 = arith.constant 0 : index
    %c0_14 = arith.constant 0 : index
    %19 = vector.load %arg2[%c4, %c0_13, %c0_14] : memref<17x64x2xf32, #tpu.memory_space<vmem>>, vector<1x64x2xf32>
    %20 = vector.shape_cast %19 : vector<1x64x2xf32> to vector<64x2xf32>
    %c380_i32 = arith.constant 380 : i32
    %21 = tpu.dynamic_rotate %0 by %c380_i32 dim 1 : vector<2x384xf32>, i32 -> vector<2x384xf32>
    %cst_15 = arith.constant dense<0.000000e+00> : vector<64x384xf32>
    %22 = tpu.matmul %20, %21, %cst_15 {dimension_numbers = #tpu.dot_dimension_numbers<[1], [0], [0], [1], [0, 0, 1, 1], [], []>} : vector<64x2xf32>, vector<2x384xf32>, vector<64x384xf32> -> vector<64x384xf32>
    %23 = arith.addf %18, %22 : vector<64x384xf32>
    %c5 = arith.constant 5 : index
    %c0_16 = arith.constant 0 : index
    %c0_17 = arith.constant 0 : index
    %24 = vector.load %arg2[%c5, %c0_16, %c0_17] : memref<17x64x2xf32, #tpu.memory_space<vmem>>, vector<1x64x2xf32>
    %25 = vector.shape_cast %24 : vector<1x64x2xf32> to vector<64x2xf32>
    %c379_i32 = arith.constant 379 : i32
    %26 = tpu.dynamic_rotate %0 by %c379_i32 dim 1 : vector<2x384xf32>, i32 -> vector<2x384xf32>
    %cst_18 = arith.constant dense<0.000000e+00> : vector<64x384xf32>
    %27 = tpu.matmul %25, %26, %cst_18 {dimension_numbers = #tpu.dot_dimension_numbers<[1], [0], [0], [1], [0, 0, 1, 1], [], []>} : vector<64x2xf32>, vector<2x384xf32>, vector<64x384xf32> -> vector<64x384xf32>
    %28 = arith.addf %23, %27 : vector<64x384xf32>
    %c6 = arith.constant 6 : index
    %c0_19 = arith.constant 0 : index
    %c0_20 = arith.constant 0 : index
    %29 = vector.load %arg2[%c6, %c0_19, %c0_20] : memref<17x64x2xf32, #tpu.memory_space<vmem>>, vector<1x64x2xf32>
    %30 = vector.shape_cast %29 : vector<1x64x2xf32> to vector<64x2xf32>
    %c378_i32 = arith.constant 378 : i32
    %31 = tpu.dynamic_rotate %0 by %c378_i32 dim 1 : vector<2x384xf32>, i32 -> vector<2x384xf32>
    %cst_21 = arith.constant dense<0.000000e+00> : vector<64x384xf32>
    %32 = tpu.matmul %30, %31, %cst_21 {dimension_numbers = #tpu.dot_dimension_numbers<[1], [0], [0], [1], [0, 0, 1, 1], [], []>} : vector<64x2xf32>, vector<2x384xf32>, vector<64x384xf32> -> vector<64x384xf32>
    %33 = arith.addf %28, %32 : vector<64x384xf32>
    %c7 = arith.constant 7 : index
    %c0_22 = arith.constant 0 : index
    %c0_23 = arith.constant 0 : index
    %34 = vector.load %arg2[%c7, %c0_22, %c0_23] : memref<17x64x2xf32, #tpu.memory_space<vmem>>, vector<1x64x2xf32>
    %35 = vector.shape_cast %34 : vector<1x64x2xf32> to vector<64x2xf32>
    %c377_i32 = arith.constant 377 : i32
    %36 = tpu.dynamic_rotate %0 by %c377_i32 dim 1 : vector<2x384xf32>, i32 -> vector<2x384xf32>
    %cst_24 = arith.constant dense<0.000000e+00> : vector<64x384xf32>
    %37 = tpu.matmul %35, %36, %cst_24 {dimension_numbers = #tpu.dot_dimension_numbers<[1], [0], [0], [1], [0, 0, 1, 1], [], []>} : vector<64x2xf32>, vector<2x384xf32>, vector<64x384xf32> -> vector<64x384xf32>
    %38 = arith.addf %33, %37 : vector<64x384xf32>
    %c8 = arith.constant 8 : index
    %c0_25 = arith.constant 0 : index
    %c0_26 = arith.constant 0 : index
    %39 = vector.load %arg2[%c8, %c0_25, %c0_26] : memref<17x64x2xf32, #tpu.memory_space<vmem>>, vector<1x64x2xf32>
    %40 = vector.shape_cast %39 : vector<1x64x2xf32> to vector<64x2xf32>
    %c376_i32 = arith.constant 376 : i32
    %41 = tpu.dynamic_rotate %0 by %c376_i32 dim 1 : vector<2x384xf32>, i32 -> vector<2x384xf32>
    %cst_27 = arith.constant dense<0.000000e+00> : vector<64x384xf32>
    %42 = tpu.matmul %40, %41, %cst_27 {dimension_numbers = #tpu.dot_dimension_numbers<[1], [0], [0], [1], [0, 0, 1, 1], [], []>} : vector<64x2xf32>, vector<2x384xf32>, vector<64x384xf32> -> vector<64x384xf32>
    %43 = arith.addf %38, %42 : vector<64x384xf32>
    %c9 = arith.constant 9 : index
    %c0_28 = arith.constant 0 : index
    %c0_29 = arith.constant 0 : index
    %44 = vector.load %arg2[%c9, %c0_28, %c0_29] : memref<17x64x2xf32, #tpu.memory_space<vmem>>, vector<1x64x2xf32>
    %45 = vector.shape_cast %44 : vector<1x64x2xf32> to vector<64x2xf32>
    %c375_i32 = arith.constant 375 : i32
    %46 = tpu.dynamic_rotate %0 by %c375_i32 dim 1 : vector<2x384xf32>, i32 -> vector<2x384xf32>
    %cst_30 = arith.constant dense<0.000000e+00> : vector<64x384xf32>
    %47 = tpu.matmul %45, %46, %cst_30 {dimension_numbers = #tpu.dot_dimension_numbers<[1], [0], [0], [1], [0, 0, 1, 1], [], []>} : vector<64x2xf32>, vector<2x384xf32>, vector<64x384xf32> -> vector<64x384xf32>
    %48 = arith.addf %43, %47 : vector<64x384xf32>
    %c10 = arith.constant 10 : index
    %c0_31 = arith.constant 0 : index
    %c0_32 = arith.constant 0 : index
    %49 = vector.load %arg2[%c10, %c0_31, %c0_32] : memref<17x64x2xf32, #tpu.memory_space<vmem>>, vector<1x64x2xf32>
    %50 = vector.shape_cast %49 : vector<1x64x2xf32> to vector<64x2xf32>
    %c374_i32 = arith.constant 374 : i32
    %51 = tpu.dynamic_rotate %0 by %c374_i32 dim 1 : vector<2x384xf32>, i32 -> vector<2x384xf32>
    %cst_33 = arith.constant dense<0.000000e+00> : vector<64x384xf32>
    %52 = tpu.matmul %50, %51, %cst_33 {dimension_numbers = #tpu.dot_dimension_numbers<[1], [0], [0], [1], [0, 0, 1, 1], [], []>} : vector<64x2xf32>, vector<2x384xf32>, vector<64x384xf32> -> vector<64x384xf32>
    %53 = arith.addf %48, %52 : vector<64x384xf32>
    %c11 = arith.constant 11 : index
    %c0_34 = arith.constant 0 : index
    %c0_35 = arith.constant 0 : index
    %54 = vector.load %arg2[%c11, %c0_34, %c0_35] : memref<17x64x2xf32, #tpu.memory_space<vmem>>, vector<1x64x2xf32>
    %55 = vector.shape_cast %54 : vector<1x64x2xf32> to vector<64x2xf32>
    %c373_i32 = arith.constant 373 : i32
    %56 = tpu.dynamic_rotate %0 by %c373_i32 dim 1 : vector<2x384xf32>, i32 -> vector<2x384xf32>
    %cst_36 = arith.constant dense<0.000000e+00> : vector<64x384xf32>
    %57 = tpu.matmul %55, %56, %cst_36 {dimension_numbers = #tpu.dot_dimension_numbers<[1], [0], [0], [1], [0, 0, 1, 1], [], []>} : vector<64x2xf32>, vector<2x384xf32>, vector<64x384xf32> -> vector<64x384xf32>
    %58 = arith.addf %53, %57 : vector<64x384xf32>
    %c12 = arith.constant 12 : index
    %c0_37 = arith.constant 0 : index
    %c0_38 = arith.constant 0 : index
    %59 = vector.load %arg2[%c12, %c0_37, %c0_38] : memref<17x64x2xf32, #tpu.memory_space<vmem>>, vector<1x64x2xf32>
    %60 = vector.shape_cast %59 : vector<1x64x2xf32> to vector<64x2xf32>
    %c372_i32 = arith.constant 372 : i32
    %61 = tpu.dynamic_rotate %0 by %c372_i32 dim 1 : vector<2x384xf32>, i32 -> vector<2x384xf32>
    %cst_39 = arith.constant dense<0.000000e+00> : vector<64x384xf32>
    %62 = tpu.matmul %60, %61, %cst_39 {dimension_numbers = #tpu.dot_dimension_numbers<[1], [0], [0], [1], [0, 0, 1, 1], [], []>} : vector<64x2xf32>, vector<2x384xf32>, vector<64x384xf32> -> vector<64x384xf32>
    %63 = arith.addf %58, %62 : vector<64x384xf32>
    %c13 = arith.constant 13 : index
    %c0_40 = arith.constant 0 : index
    %c0_41 = arith.constant 0 : index
    %64 = vector.load %arg2[%c13, %c0_40, %c0_41] : memref<17x64x2xf32, #tpu.memory_space<vmem>>, vector<1x64x2xf32>
    %65 = vector.shape_cast %64 : vector<1x64x2xf32> to vector<64x2xf32>
    %c371_i32 = arith.constant 371 : i32
    %66 = tpu.dynamic_rotate %0 by %c371_i32 dim 1 : vector<2x384xf32>, i32 -> vector<2x384xf32>
    %cst_42 = arith.constant dense<0.000000e+00> : vector<64x384xf32>
    %67 = tpu.matmul %65, %66, %cst_42 {dimension_numbers = #tpu.dot_dimension_numbers<[1], [0], [0], [1], [0, 0, 1, 1], [], []>} : vector<64x2xf32>, vector<2x384xf32>, vector<64x384xf32> -> vector<64x384xf32>
    %68 = arith.addf %63, %67 : vector<64x384xf32>
    %c14 = arith.constant 14 : index
    %c0_43 = arith.constant 0 : index
    %c0_44 = arith.constant 0 : index
    %69 = vector.load %arg2[%c14, %c0_43, %c0_44] : memref<17x64x2xf32, #tpu.memory_space<vmem>>, vector<1x64x2xf32>
    %70 = vector.shape_cast %69 : vector<1x64x2xf32> to vector<64x2xf32>
    %c370_i32 = arith.constant 370 : i32
    %71 = tpu.dynamic_rotate %0 by %c370_i32 dim 1 : vector<2x384xf32>, i32 -> vector<2x384xf32>
    %cst_45 = arith.constant dense<0.000000e+00> : vector<64x384xf32>
    %72 = tpu.matmul %70, %71, %cst_45 {dimension_numbers = #tpu.dot_dimension_numbers<[1], [0], [0], [1], [0, 0, 1, 1], [], []>} : vector<64x2xf32>, vector<2x384xf32>, vector<64x384xf32> -> vector<64x384xf32>
    %73 = arith.addf %68, %72 : vector<64x384xf32>
    %c15 = arith.constant 15 : index
    %c0_46 = arith.constant 0 : index
    %c0_47 = arith.constant 0 : index
    %74 = vector.load %arg2[%c15, %c0_46, %c0_47] : memref<17x64x2xf32, #tpu.memory_space<vmem>>, vector<1x64x2xf32>
    %75 = vector.shape_cast %74 : vector<1x64x2xf32> to vector<64x2xf32>
    %c369_i32 = arith.constant 369 : i32
    %76 = tpu.dynamic_rotate %0 by %c369_i32 dim 1 : vector<2x384xf32>, i32 -> vector<2x384xf32>
    %cst_48 = arith.constant dense<0.000000e+00> : vector<64x384xf32>
    %77 = tpu.matmul %75, %76, %cst_48 {dimension_numbers = #tpu.dot_dimension_numbers<[1], [0], [0], [1], [0, 0, 1, 1], [], []>} : vector<64x2xf32>, vector<2x384xf32>, vector<64x384xf32> -> vector<64x384xf32>
    %78 = arith.addf %73, %77 : vector<64x384xf32>
    %c16 = arith.constant 16 : index
    %c0_49 = arith.constant 0 : index
    %c0_50 = arith.constant 0 : index
    %79 = vector.load %arg2[%c16, %c0_49, %c0_50] : memref<17x64x2xf32, #tpu.memory_space<vmem>>, vector<1x64x2xf32>
    %80 = vector.shape_cast %79 : vector<1x64x2xf32> to vector<64x2xf32>
    %c368_i32 = arith.constant 368 : i32
    %81 = tpu.dynamic_rotate %0 by %c368_i32 dim 1 : vector<2x384xf32>, i32 -> vector<2x384xf32>
    %cst_51 = arith.constant dense<0.000000e+00> : vector<64x384xf32>
    %82 = tpu.matmul %80, %81, %cst_51 {dimension_numbers = #tpu.dot_dimension_numbers<[1], [0], [0], [1], [0, 0, 1, 1], [], []>} : vector<64x2xf32>, vector<2x384xf32>, vector<64x384xf32> -> vector<64x384xf32>
    %83 = arith.addf %78, %82 : vector<64x384xf32>
    %c0_52 = arith.constant 0 : index
    %c0_53 = arith.constant 0 : index
    %84 = vector.load %arg3[%c0_52, %c0_53] : memref<64x1xf32, #tpu.memory_space<vmem>>, vector<64x1xf32>
    %85 = vector.broadcast %84 : vector<64x1xf32> to vector<64x384xf32>
    %86 = arith.addf %83, %85 : vector<64x384xf32>
    %cst_54 = arith.constant 0.000000e+00 : f32
    %87 = vector.broadcast %cst_54 : f32 to vector<64x384xf32>
    %88 = arith.maximumf %86, %87 : vector<64x384xf32>
    %c0_55 = arith.constant 0 : index
    %c0_56 = arith.constant 0 : index
    %c0_57 = arith.constant 0 : index
    %89 = vector.load %arg4[%c0_55, %c0_56, %c0_57] : memref<5x64x64xf32, #tpu.memory_space<vmem>>, vector<1x64x64xf32>
    %90 = vector.shape_cast %89 : vector<1x64x64xf32> to vector<64x64xf32>
    %cst_58 = arith.constant dense<0.000000e+00> : vector<64x384xf32>
    %91 = tpu.matmul %90, %88, %cst_58 {dimension_numbers = #tpu.dot_dimension_numbers<[1], [0], [0], [1], [0, 0, 1, 1], [], []>} : vector<64x64xf32>, vector<64x384xf32>, vector<64x384xf32> -> vector<64x384xf32>
    %c1_59 = arith.constant 1 : index
    %c0_60 = arith.constant 0 : index
    %c0_61 = arith.constant 0 : index
    %92 = vector.load %arg4[%c1_59, %c0_60, %c0_61] : memref<5x64x64xf32, #tpu.memory_space<vmem>>, vector<1x64x64xf32>
    %93 = vector.shape_cast %92 : vector<1x64x64xf32> to vector<64x64xf32>
    %c383_i32_62 = arith.constant 383 : i32
    %94 = tpu.dynamic_rotate %88 by %c383_i32_62 dim 1 : vector<64x384xf32>, i32 -> vector<64x384xf32>
    %cst_63 = arith.constant dense<0.000000e+00> : vector<64x384xf32>
    %95 = tpu.matmul %93, %94, %cst_63 {dimension_numbers = #tpu.dot_dimension_numbers<[1], [0], [0], [1], [0, 0, 1, 1], [], []>} : vector<64x64xf32>, vector<64x384xf32>, vector<64x384xf32> -> vector<64x384xf32>
    %96 = arith.addf %91, %95 : vector<64x384xf32>
    %c2_64 = arith.constant 2 : index
    %c0_65 = arith.constant 0 : index
    %c0_66 = arith.constant 0 : index
    %97 = vector.load %arg4[%c2_64, %c0_65, %c0_66] : memref<5x64x64xf32, #tpu.memory_space<vmem>>, vector<1x64x64xf32>
    %98 = vector.shape_cast %97 : vector<1x64x64xf32> to vector<64x64xf32>
    %c382_i32_67 = arith.constant 382 : i32
    %99 = tpu.dynamic_rotate %88 by %c382_i32_67 dim 1 : vector<64x384xf32>, i32 -> vector<64x384xf32>
    %cst_68 = arith.constant dense<0.000000e+00> : vector<64x384xf32>
    %100 = tpu.matmul %98, %99, %cst_68 {dimension_numbers = #tpu.dot_dimension_numbers<[1], [0], [0], [1], [0, 0, 1, 1], [], []>} : vector<64x64xf32>, vector<64x384xf32>, vector<64x384xf32> -> vector<64x384xf32>
    %101 = arith.addf %96, %100 : vector<64x384xf32>
    %c3_69 = arith.constant 3 : index
    %c0_70 = arith.constant 0 : index
    %c0_71 = arith.constant 0 : index
    %102 = vector.load %arg4[%c3_69, %c0_70, %c0_71] : memref<5x64x64xf32, #tpu.memory_space<vmem>>, vector<1x64x64xf32>
    %103 = vector.shape_cast %102 : vector<1x64x64xf32> to vector<64x64xf32>
    %c381_i32_72 = arith.constant 381 : i32
    %104 = tpu.dynamic_rotate %88 by %c381_i32_72 dim 1 : vector<64x384xf32>, i32 -> vector<64x384xf32>
    %cst_73 = arith.constant dense<0.000000e+00> : vector<64x384xf32>
    %105 = tpu.matmul %103, %104, %cst_73 {dimension_numbers = #tpu.dot_dimension_numbers<[1], [0], [0], [1], [0, 0, 1, 1], [], []>} : vector<64x64xf32>, vector<64x384xf32>, vector<64x384xf32> -> vector<64x384xf32>
    %106 = arith.addf %101, %105 : vector<64x384xf32>
    %c4_74 = arith.constant 4 : index
    %c0_75 = arith.constant 0 : index
    %c0_76 = arith.constant 0 : index
    %107 = vector.load %arg4[%c4_74, %c0_75, %c0_76] : memref<5x64x64xf32, #tpu.memory_space<vmem>>, vector<1x64x64xf32>
    %108 = vector.shape_cast %107 : vector<1x64x64xf32> to vector<64x64xf32>
    %c380_i32_77 = arith.constant 380 : i32
    %109 = tpu.dynamic_rotate %88 by %c380_i32_77 dim 1 : vector<64x384xf32>, i32 -> vector<64x384xf32>
    %cst_78 = arith.constant dense<0.000000e+00> : vector<64x384xf32>
    %110 = tpu.matmul %108, %109, %cst_78 {dimension_numbers = #tpu.dot_dimension_numbers<[1], [0], [0], [1], [0, 0, 1, 1], [], []>} : vector<64x64xf32>, vector<64x384xf32>, vector<64x384xf32> -> vector<64x384xf32>
    %111 = arith.addf %106, %110 : vector<64x384xf32>
    %c0_79 = arith.constant 0 : index
    %c0_80 = arith.constant 0 : index
    %112 = vector.load %arg5[%c0_79, %c0_80] : memref<64x1xf32, #tpu.memory_space<vmem>>, vector<64x1xf32>
    %113 = vector.broadcast %112 : vector<64x1xf32> to vector<64x384xf32>
    %114 = arith.addf %111, %113 : vector<64x384xf32>
    %cst_81 = arith.constant 0.000000e+00 : f32
    %115 = vector.broadcast %cst_81 : f32 to vector<64x384xf32>
    %116 = arith.maximumf %114, %115 : vector<64x384xf32>
    %c0_82 = arith.constant 0 : index
    %c0_83 = arith.constant 0 : index
    %117 = vector.load %arg6[%c0_82, %c0_83] : memref<384x8xf32, #tpu.memory_space<vmem>>, vector<384x8xf32>
    %cst_84 = arith.constant dense<0.000000e+00> : vector<64x8xf32>
    %118 = tpu.matmul %116, %117, %cst_84 {dimension_numbers = #tpu.dot_dimension_numbers<[1], [0], [0], [1], [0, 0, 1, 1], [], []>} : vector<64x384xf32>, vector<384x8xf32>, vector<64x8xf32> -> vector<64x8xf32>
    %c0_85 = arith.constant 0 : index
    %c0_86 = arith.constant 0 : index
    %119 = vector.load %arg7[%c0_85, %c0_86] : memref<64x8xf32, #tpu.memory_space<vmem>>, vector<64x8xf32>
    tpu.vector_store %arg7[%c0_85, %c0_86], %118 {strides = array<i32>} : memref<64x8xf32, #tpu.memory_space<vmem>>, vector<64x8xf32>,
    return
  }
  func.func @transform_0(%arg0: i32) -> (i32, i32) {
    %c0_i32 = arith.constant 0 : i32
    %c0_i32_0 = arith.constant 0 : i32
    %c0_i32_1 = arith.constant 0 : i32
    return %c0_i32, %c0_i32_0 : i32, i32
  }
  func.func @transform_1(%arg0: i32) -> (i32, i32, i32) {
    %c0_i32 = arith.constant 0 : i32
    %c0_i32_0 = arith.constant 0 : i32
    %c0_i32_1 = arith.constant 0 : i32
    %c0_i32_2 = arith.constant 0 : i32
    return %c0_i32, %c0_i32_0, %c0_i32_1 : i32, i32, i32
  }
  func.func @transform_2(%arg0: i32) -> (i32, i32) {
    %c0_i32 = arith.constant 0 : i32
    %c0_i32_0 = arith.constant 0 : i32
    %c0_i32_1 = arith.constant 0 : i32
    return %c0_i32, %c0_i32_0 : i32, i32
  }
  func.func @transform_3(%arg0: i32) -> (i32, i32, i32) {
    %c0_i32 = arith.constant 0 : i32
    %c0_i32_0 = arith.constant 0 : i32
    %c0_i32_1 = arith.constant 0 : i32
    %c0_i32_2 = arith.constant 0 : i32
    return %c0_i32, %c0_i32_0, %c0_i32_1 : i32, i32, i32
  }
  func.func @transform_4(%arg0: i32) -> (i32, i32) {
    %c0_i32 = arith.constant 0 : i32
    %c0_i32_0 = arith.constant 0 : i32
    %c0_i32_1 = arith.constant 0 : i32
    return %c0_i32, %c0_i32_0 : i32, i32
  }
  func.func @transform_5(%arg0: i32) -> (i32, i32) {
    %c0_i32 = arith.constant 0 : i32
    %c0_i32_0 = arith.constant 0 : i32
    %c0_i32_1 = arith.constant 0 : i32
    return %c0_i32, %c0_i32_0 : i32, i32
  }
  func.func @transform_6(%arg0: i32) -> (i32, i32) {
    %c0_i32 = arith.constant 0 : i32
    %c0_i32_0 = arith.constant 0 : i32
    %c0_i32_1 = arith.constant 0 : i32
    return %c0_i32, %c0_i32_0 : i32, i32
  }
}

</mosaic_0001>

<llo_original>
// kernel: audio_backbone_forward.1
$region0: #{audio_backbone_forward.1}
  #allocation0 [shape = 'u32[]', space=smem, size = 0x4, offset = 0x4, fixed_abs, tag = 'smem constant byte address 0x4 - core index']
  #allocation1 [shape = 'u32[144,128]{1,0:T(1,128)}', space=vmem, size = 0x12000, scoped, tag = 'internal scratch']
  %s0 = inlined_call_operand.vmem [shape: f32[2,384], index: 0, kind: input, shape index: {}]
  %s1 = inlined_call_operand.vmem [shape: f32[17,64,2], index: 1, kind: input, shape index: {}]
  %s2 = inlined_call_operand.vmem [shape: f32[64,1], index: 2, kind: input, shape index: {}]
  %s3 = inlined_call_operand.vmem [shape: f32[5,64,64], index: 3, kind: input, shape index: {}]
  %s4 = inlined_call_operand.vmem [shape: f32[64,1], index: 4, kind: input, shape index: {}]
  %s5 = inlined_call_operand.vmem [shape: f32[384,8], index: 5, kind: input, shape index: {}]
  %s6 = inlined_call_operand.vmem [shape: f32[64,8], index: 6, kind: output, shape index: {}]
  %s7 = sld [smem:[#allocation0]]
  $region34: #{audio_backbone_forward.1} parent=0
    _
  %s9 = ssub.s32 1, %s7
  %s10 = scalar_select 0, %s9, %s7
  // Predicated region
  $region2: #{audio_backbone_forward.1} parent=0 // pred_check
    _
  $region3: #{audio_backbone_forward.1} parent=0 // pred_check_branch
    %12 = sbr.rel (0) target = $region5
  $region4: #{audio_backbone_forward.1} parent=0 // pred_region
    _
  $region5: #{audio_backbone_forward.1} parent=0 // pred_fallthru
    _
  // Predicated region
  $region6: #{audio_backbone_forward.1} parent=0 // pred_check
    _
  $region7: #{audio_backbone_forward.1} parent=0 // pred_check_branch
    %14 = sbr.rel (0) target = $region9
  $region8: #{audio_backbone_forward.1} parent=0 // pred_region
    _
  $region9: #{audio_backbone_forward.1} parent=0 // pred_fallthru
    _
  // Predicated region
  $region10: #{audio_backbone_forward.1} parent=0 // pred_check
    _
  $region11: #{audio_backbone_forward.1} parent=0 // pred_check_branch
    %16 = sbr.rel (0) target = $region13
  $region12: #{audio_backbone_forward.1} parent=0 // pred_region
    _
  $region13: #{audio_backbone_forward.1} parent=0 // pred_fallthru
    _
  // Predicated region
  $region14: #{audio_backbone_forward.1} parent=0 // pred_check
    _
  $region15: #{audio_backbone_forward.1} parent=0 // pred_check_branch
    %18 = sbr.rel (0) target = $region17
  $region16: #{audio_backbone_forward.1} parent=0 // pred_region
    _
  $region17: #{audio_backbone_forward.1} parent=0 // pred_fallthru
    _
  // Predicated region
  $region18: #{audio_backbone_forward.1} parent=0 // pred_check
    _
  $region19: #{audio_backbone_forward.1} parent=0 // pred_check_branch
    %20 = sbr.rel (0) target = $region21
  $region20: #{audio_backbone_forward.1} parent=0 // pred_region
    _
  $region21: #{audio_backbone_forward.1} parent=0 // pred_fallthru
    _
  // Predicated region
  $region22: #{audio_backbone_forward.1} parent=0 // pred_check
    _
  $region23: #{audio_backbone_forward.1} parent=0 // pred_check_branch
    %22 = sbr.rel (0) target = $region25
  $region24: #{audio_backbone_forward.1} parent=0 // pred_region
    _
  $region25: #{audio_backbone_forward.1} parent=0 // pred_fallthru
    _
  %v23 = vld [vmem:[%s0] sm:$0x3f]
  %v24 = vld [vmem:[%s1] sm:$0xff]
  %v25 = vld [vmem:[%s1 + $0x8] sm:$0xff]
  %v26 = vld [vmem:[%s1 + $0x10] sm:$0xff]
  %v27 = vld [vmem:[%s1 + $0x18] sm:$0xff]
  %v28 = vld [vmem:[%s1 + $0x20] sm:$0xff]
  %v29 = vld [vmem:[%s1 + $0x28] sm:$0xff]
  %v30 = vld [vmem:[%s1 + $0x30] sm:$0xff]
  %v31 = vld [vmem:[%s1 + $0x38] sm:$0xff]
  %s32 = scalar_lea.vmem %s1, 64
  %v33 = vld [vmem:[%s32] sm:$0xff]
  %v34 = vld [vmem:[%s32 + $0x8] sm:$0xff]
  %v35 = vld [vmem:[%s32 + $0x10] sm:$0xff]
  %v36 = vld [vmem:[%s32 + $0x18] sm:$0xff]
  %v37 = vld [vmem:[%s32 + $0x20] sm:$0xff]
  %v38 = vld [vmem:[%s32 + $0x28] sm:$0xff]
  %v39 = vld [vmem:[%s32 + $0x30] sm:$0xff]
  %v40 = vld [vmem:[%s32 + $0x38] sm:$0xff]
  %v42 = vcombine.high %v23, %v23
  %v44 = vunpack.c.l.s4 1983009808
  %v45 = vunpack.c.0.s8 %v44
  %v46 = vlaneseq
  %v47 = vshrl.u32 %v46, 7
  %v48 = vsub.s32 %v45, %v47
  %v49 = vrot.slane %v23, %v48
  %v51 = vunpack.c.l.s4 1983009808
  %v52 = vunpack.c.0.s8 %v51
  %v53 = vlaneseq
  %v54 = vshrl.u32 %v53, 7
  %v55 = vsub.s32 %v52, %v54
  %v56 = vrot.slane %v42, %v55
  %v57 = vcombine.high %v49, %v49
  %61 = vrot.lane.b32.xlu0 %v49, 127
  %v62 = vpop.permute.xlu0 %61
  %63 = vrot.lane.b32.xlu0 %v57, 127
  %v64 = vpop.permute.xlu0 %63
  %65 = vrot.lane.b32.xlu0 %v56, 127
  %v66 = vpop.permute.xlu0 %65
  %v67 = vlaneseq
  %v68 = vand.u32 %v67, 127
  %vm69 = vcmp.lt.s32.totalorder %v68, 127
  %v70 = vsel %vm69, %v64, %v66
  %v71 = vsel %vm69, %v62, %v64
  %v72 = vsel %vm69, %v66, %v62
  %vm73 = vcmask 15360
  %v75 = vsel %vm73, %v33, 0
  %v78 = vsel %vm73, %v34, 0
  %v81 = vsel %vm73, %v35, 0
  %v84 = vsel %vm73, %v36, 0
  %v87 = vsel %vm73, %v37, 0
  %v90 = vsel %vm73, %v38, 0
  %v93 = vsel %vm73, %v39, 0
  %v96 = vsel %vm73, %v40, 0
  %vm98 = vcmask 1041408
  %v100 = vsel %vm98, %v71, 0
  %v103 = vsel %vm98, %v70, 0
  %v106 = vsel %vm98, %v72, 0
  %108 = vmatprep.subr.mxu0 0.0
  %109 = vmatpush1.msra.mxu0 0.0
  %110 = vmatprep.subr.mxu0 0.0
  %111 = vmatpush1.msra.mxu0 0.0
  %112 = vmatprep.subr.mxu0 0.0
  %113 = vmatpush1.msra.mxu0 0.0
  %114 = vmatprep.subr.mxu0 0.0
  %115 = vmatpush1.msra.mxu0 0.0
  %116 = vmatprep.subr.mxu0 0.0
  %117 = vmatpush1.msra.mxu0 0.0
  %118 = vmatprep.subr.mxu0 0.0
  %119 = vmatpush1.msra.mxu0 0.0
  %120 = vmatprep.subr.mxu0 0.0
  %121 = vmatpush1.msra.mxu0 0.0
  %122 = vmatprep.subr.mxu0 0.0
  %123 = vmatpush1.msra.mxu0 0.0
  %124 = vmatprep.subr.mxu0 0.0
  %125 = vmatpush1.msra.mxu0 0.0
  %126 = vmatprep.subr.mxu0 0.0
  %127 = vmatpush1.msra.mxu0 0.0
  %128 = vmatprep.subr.mxu0 0.0
  %129 = vmatpush1.msra.mxu0 0.0
  %130 = vmatprep.subr.mxu0 0.0
  %131 = vmatpush1.msra.mxu0 0.0
  %132 = vmatprep.subr.mxu0 0.0
  %133 = vmatpush1.msra.mxu0 0.0
  %134 = vmatprep.subr.mxu0 0.0
  %135 = vmatpush1.msra.mxu0 0.0
  %136 = vmatprep.subr.mxu0 0.0
  %137 = vmatpush1.msra.mxu0 0.0
  %138 = vmatprep.subr.mxu0 %v103
  %139 = vmatpush1.msra.mxu0 %v100
  %140 = vmatprep.subr.mxu0 0.0
  %141 = vmatpush2.msra.mxu0 0.0
  %142 = vmatprep.subr.mxu0 0.0
  %143 = vmatpush2.msra.mxu0 0.0
  %144 = vmatprep.subr.mxu0 0.0
  %145 = vmatpush2.msra.mxu0 0.0
  %146 = vmatprep.subr.mxu0 0.0
  %147 = vmatpush2.msra.mxu0 0.0
  %148 = vmatprep.subr.mxu0 0.0
  %149 = vmatpush2.msra.mxu0 0.0
  %150 = vmatprep.subr.mxu0 0.0
  %151 = vmatpush2.msra.mxu0 0.0
  %152 = vmatprep.subr.mxu0 0.0
  %153 = vmatpush2.msra.mxu0 0.0
  %154 = vmatprep.subr.mxu0 0.0
  %155 = vmatpush2.msra.mxu0 0.0
  %156 = vmatprep.subr.mxu0 0.0
  %157 = vmatpush2.msra.mxu0 0.0
  %158 = vmatprep.subr.mxu0 0.0
  %159 = vmatpush2.msra.mxu0 0.0
  %160 = vmatprep.subr.mxu0 0.0
  %161 = vmatpush2.msra.mxu0 0.0
  %162 = vmatprep.subr.mxu0 0.0
  %163 = vmatpush2.msra.mxu0 0.0
  %164 = vmatprep.subr.mxu0 0.0
  %165 = vmatpush2.msra.mxu0 0.0
  %166 = vmatprep.subr.mxu0 0.0
  %167 = vmatpush2.msra.mxu0 0.0
  %168 = vmatprep.subr.mxu0 0.0
  %169 = vmatpush2.msra.mxu0 0.0
  %170 = vmatprep.subr.mxu0 0.0
  %171 = vmatpush2.msra.mxu0 0.0
  %172 = vmatprep.mubr.f32.mxu0 0.0
  %173 = vmatmul.mubr.f32.gmra.mxu0 %v75
  %v174 = vpop.f32.mrf.mxu0
  %v175 = vadd.f32 0.0, %v174
  %v176 = vpop.f32.mrf.mxu0
  %v177 = vadd.f32 0.0, %v176
  %178 = vmatprep.mubr.f32.mxu0 0.0
  %179 = vmatmul.mubr.f32.gmra.mxu0 %v78
  %v180 = vpop.f32.mrf.mxu0
  %v181 = vadd.f32 0.0, %v180
  %v182 = vpop.f32.mrf.mxu0
  %v183 = vadd.f32 0.0, %v182
  %184 = vmatprep.mubr.f32.mxu0 0.0
  %185 = vmatmul.mubr.f32.gmra.mxu0 %v81
  %v186 = vpop.f32.mrf.mxu0
  %v187 = vadd.f32 0.0, %v186
  %v188 = vpop.f32.mrf.mxu0
  %v189 = vadd.f32 0.0, %v188
  %190 = vmatprep.mubr.f32.mxu0 0.0
  %191 = vmatmul.mubr.f32.gmra.mxu0 %v84
  %v192 = vpop.f32.mrf.mxu0
  %v193 = vadd.f32 0.0, %v192
  %v194 = vpop.f32.mrf.mxu0
  %v195 = vadd.f32 0.0, %v194
  %196 = vmatprep.mubr.f32.mxu0 0.0
  %197 = vmatmul.mubr.f32.gmra.mxu0 %v87
  %v198 = vpop.f32.mrf.mxu0
  %v199 = vadd.f32 0.0, %v198
  %v200 = vpop.f32.mrf.mxu0
  %v201 = vadd.f32 0.0, %v200
  %202 = vmatprep.mubr.f32.mxu0 0.0
  %203 = vmatmul.mubr.f32.gmra.mxu0 %v90
  %v204 = vpop.f32.mrf.mxu0
  %v205 = vadd.f32 0.0, %v204
  %v206 = vpop.f32.mrf.mxu0
  %v207 = vadd.f32 0.0, %v206
  %208 = vmatprep.mubr.f32.mxu0 0.0
  %209 = vmatmul.mubr.f32.gmra.mxu0 %v93
  %v210 = vpop.f32.mrf.mxu0
  %v211 = vadd.f32 0.0, %v210
  %v212 = vpop.f32.mrf.mxu0
  %v213 = vadd.f32 0.0, %v212
  %214 = vmatprep.mubr.f32.mxu0 0.0
  %215 = vmatmul.mubr.f32.gmra.mxu0 %v96
  %v216 = vpop.f32.mrf.mxu0
  %v217 = vadd.f32 0.0, %v216
  %v218 = vpop.f32.mrf.mxu0
  %v219 = vadd.f32 0.0, %v218
  %220 = vdwg.mxu0
  %221 = vmatprep.subr.mxu0 0.0
  %222 = vmatpush1.msra.mxu0 0.0
  %223 = vmatprep.subr.mxu0 0.0
  %224 = vmatpush1.msra.mxu0 0.0
  %225 = vmatprep.subr.mxu0 0.0
  %226 = vmatpush1.msra.mxu0 0.0
  %227 = vmatprep.subr.mxu0 0.0
  %228 = vmatpush1.msra.mxu0 0.0
  %229 = vmatprep.subr.mxu0 0.0
  %230 = vmatpush1.msra.mxu0 0.0
  %231 = vmatprep.subr.mxu0 0.0
  %232 = vmatpush1.msra.mxu0 0.0
  %233 = vmatprep.subr.mxu0 0.0
  %234 = vmatpush1.msra.mxu0 0.0
  %235 = vmatprep.subr.mxu0 0.0
  %236 = vmatpush1.msra.mxu0 0.0
  %237 = vmatprep.subr.mxu0 0.0
  %238 = vmatpush1.msra.mxu0 0.0
  %239 = vmatprep.subr.mxu0 0.0
  %240 = vmatpush1.msra.mxu0 0.0
  %241 = vmatprep.subr.mxu0 0.0
  %242 = vmatpush1.msra.mxu0 0.0
  %243 = vmatprep.subr.mxu0 0.0
  %244 = vmatpush1.msra.mxu0 0.0
  %245 = vmatprep.subr.mxu0 0.0
  %246 = vmatpush1.msra.mxu0 0.0
  %247 = vmatprep.subr.mxu0 0.0
  %248 = vmatpush1.msra.mxu0 0.0
  %249 = vmatprep.subr.mxu0 0.0
  %250 = vmatpush1.msra.mxu0 0.0
  %251 = vmatprep.subr.mxu0 0.0
  %252 = vmatpush1.msra.mxu0 %v106
  %253 = vmatprep.subr.mxu0 0.0
  %254 = vmatpush2.msra.mxu0 0.0
  %255 = vmatprep.subr.mxu0 0.0
  %256 = vmatpush2.msra.mxu0 0.0
  %257 = vmatprep.subr.mxu0 0.0
  %258 = vmatpush2.msra.mxu0 0.0
  %259 = vmatprep.subr.mxu0 0.0
  %260 = vmatpush2.msra.mxu0 0.0
  %261 = vmatprep.subr.mxu0 0.0
  %262 = vmatpush2.msra.mxu0 0.0
  %263 = vmatprep.subr.mxu0 0.0
  %264 = vmatpush2.msra.mxu0 0.0
  %265 = vmatprep.subr.mxu0 0.0
  %266 = vmatpush2.msra.mxu0 0.0
  %267 = vmatprep.subr.mxu0 0.0
  %268 = vmatpush2.msra.mxu0 0.0
  %269 = vmatprep.subr.mxu0 0.0
  %270 = vmatpush2.msra.mxu0 0.0
  %271 = vmatprep.subr.mxu0 0.0
  %272 = vmatpush2.msra.mxu0 0.0
  %273 = vmatprep.subr.mxu0 0.0
  %274 = vmatpush2.msra.mxu0 0.0
  %275 = vmatprep.subr.mxu0 0.0
  %276 = vmatpush2.msra.mxu0 0.0
  %277 = vmatprep.subr.mxu0 0.0
  %278 = vmatpush2.msra.mxu0 0.0
  %279 = vmatprep.subr.mxu0 0.0
  %280 = vmatpush2.msra.mxu0 0.0
  %281 = vmatprep.subr.mxu0 0.0
  %282 = vmatpush2.msra.mxu0 0.0
  %283 = vmatprep.subr.mxu0 0.0
  %284 = vmatpush2.msra.mxu0 0.0
  %285 = vmatprep.mubr.f32.mxu0 0.0
  %286 = vmatmul.mubr.f32.gmra.mxu0 %v75
  %v287 = vpop.f32.mrf.mxu0
  %v288 = vadd.f32 0.0, %v287
  %v289 = vpop.f32.mrf.mxu0
  %290 = vmatprep.mubr.f32.mxu0 0.0
  %291 = vmatmul.mubr.f32.gmra.mxu0 %v78
  %v292 = vpop.f32.mrf.mxu0
  %v293 = vadd.f32 0.0, %v292
  %v294 = vpop.f32.mrf.mxu0
  %295 = vmatprep.mubr.f32.mxu0 0.0
  %296 = vmatmul.mubr.f32.gmra.mxu0 %v81
  %v297 = vpop.f32.mrf.mxu0
  %v298 = vadd.f32 0.0, %v297
  %v299 = vpop.f32.mrf.mxu0
  %300 = vmatprep.mubr.f32.mxu0 0.0
  %301 = vmatmul.mubr.f32.gmra.mxu0 %v84
  %v302 = vpop.f32.mrf.mxu0
  %v303 = vadd.f32 0.0, %v302
  %v304 = vpop.f32.mrf.mxu0
  %305 = vmatprep.mubr.f32.mxu0 0.0
  %306 = vmatmul.mubr.f32.gmra.mxu0 %v87
  %v307 = vpop.f32.mrf.mxu0
  %v308 = vadd.f32 0.0, %v307
  %v309 = vpop.f32.mrf.mxu0
  %310 = vmatprep.mubr.f32.mxu0 0.0
  %311 = vmatmul.mubr.f32.gmra.mxu0 %v90
  %v312 = vpop.f32.mrf.mxu0
  %v313 = vadd.f32 0.0, %v312
  %v314 = vpop.f32.mrf.mxu0
  %315 = vmatprep.mubr.f32.mxu0 0.0
  %316 = vmatmul.mubr.f32.gmra.mxu0 %v93
  %v317 = vpop.f32.mrf.mxu0
  %v318 = vadd.f32 0.0, %v317
  %v319 = vpop.f32.mrf.mxu0
  %320 = vmatprep.mubr.f32.mxu0 0.0
  %321 = vmatmul.mubr.f32.gmra.mxu0 %v96
  %v322 = vpop.f32.mrf.mxu0
  %v323 = vadd.f32 0.0, %v322
  %v324 = vpop.f32.mrf.mxu0
  %325 = vdwg.mxu0
  %v327 = vsel %vm73, %v24, 0
  %v330 = vsel %vm73, %v25, 0
  %v333 = vsel %vm73, %v26, 0
  %v336 = vsel %vm73, %v27, 0
  %v339 = vsel %vm73, %v28, 0
  %v342 = vsel %vm73, %v29, 0
  %v345 = vsel %vm73, %v30, 0
  %v348 = vsel %vm73, %v31, 0
  %v350 = vsel %vm98, %v49, 0
  %v352 = vsel %vm98, %v57, 0
  %v354 = vsel %vm98, %v56, 0
  %356 = vmatprep.subr.mxu0 0.0
  %357 = vmatpush1.msra.mxu0 0.0
  %358 = vmatprep.subr.mxu0 0.0
  %359 = vmatpush1.msra.mxu0 0.0
  %360 = vmatprep.subr.mxu0 0.0
  %361 = vmatpush1.msra.mxu0 0.0
  %362 = vmatprep.subr.mxu0 0.0
  %363 = vmatpush1.msra.mxu0 0.0
  %364 = vmatprep.subr.mxu0 0.0
  %365 = vmatpush1.msra.mxu0 0.0
  %366 = vmatprep.subr.mxu0 0.0
  %367 = vmatpush1.msra.mxu0 0.0
  %368 = vmatprep.subr.mxu0 0.0
  %369 = vmatpush1.msra.mxu0 0.0
  %370 = vmatprep.subr.mxu0 0.0
  %371 = vmatpush1.msra.mxu0 0.0
  %372 = vmatprep.subr.mxu0 0.0
  %373 = vmatpush1.msra.mxu0 0.0
  %374 = vmatprep.subr.mxu0 0.0
  %375 = vmatpush1.msra.mxu0 0.0
  %376 = vmatprep.subr.mxu0 0.0
  %377 = vmatpush1.msra.mxu0 0.0
  %378 = vmatprep.subr.mxu0 0.0
  %379 = vmatpush1.msra.mxu0 0.0
  %380 = vmatprep.subr.mxu0 0.0
  %381 = vmatpush1.msra.mxu0 0.0
  %382 = vmatprep.subr.mxu0 0.0
  %383 = vmatpush1.msra.mxu0 0.0
  %384 = vmatprep.subr.mxu0 0.0
  %385 = vmatpush1.msra.mxu0 0.0
  %386 = vmatprep.subr.mxu0 %v352
  %387 = vmatpush1.msra.mxu0 %v350
  %388 = vmatprep.subr.mxu0 0.0
  %389 = vmatpush2.msra.mxu0 0.0
  %390 = vmatprep.subr.mxu0 0.0
  %391 = vmatpush2.msra.mxu0 0.0
  %392 = vmatprep.subr.mxu0 0.0
  %393 = vmatpush2.msra.mxu0 0.0
  %394 = vmatprep.subr.mxu0 0.0
  %395 = vmatpush2.msra.mxu0 0.0
  %396 = vmatprep.subr.mxu0 0.0
  %397 = vmatpush2.msra.mxu0 0.0
  %398 = vmatprep.subr.mxu0 0.0
  %399 = vmatpush2.msra.mxu0 0.0
  %400 = vmatprep.subr.mxu0 0.0
  %401 = vmatpush2.msra.mxu0 0.0
  %402 = vmatprep.subr.mxu0 0.0
  %403 = vmatpush2.msra.mxu0 0.0
  %404 = vmatprep.subr.mxu0 0.0
  %405 = vmatpush2.msra.mxu0 0.0
  %406 = vmatprep.subr.mxu0 0.0
  %407 = vmatpush2.msra.mxu0 0.0
  %408 = vmatprep.subr.mxu0 0.0
  %409 = vmatpush2.msra.mxu0 0.0
  %410 = vmatprep.subr.mxu0 0.0
  %411 = vmatpush2.msra.mxu0 0.0
  %412 = vmatprep.subr.mxu0 0.0
  %413 = vmatpush2.msra.mxu0 0.0
  %414 = vmatprep.subr.mxu0 0.0
  %415 = vmatpush2.msra.mxu0 0.0
  %416 = vmatprep.subr.mxu0 0.0
  %417 = vmatpush2.msra.mxu0 0.0
  %418 = vmatprep.subr.mxu0 0.0
  %419 = vmatpush2.msra.mxu0 0.0
  %420 = vmatprep.mubr.f32.mxu0 0.0
  %421 = vmatmul.mubr.f32.gmra.mxu0 %v327
  %v422 = vpop.f32.mrf.mxu0
  %v423 = vadd.f32 %v175, %v422
  %v424 = vpop.f32.mrf.mxu0
  %v425 = vadd.f32 %v177, %v424
  %426 = vmatprep.mubr.f32.mxu0 0.0
  %427 = vmatmul.mubr.f32.gmra.mxu0 %v330
  %v428 = vpop.f32.mrf.mxu0
  %v429 = vadd.f32 %v181, %v428
  %v430 = vpop.f32.mrf.mxu0
  %v431 = vadd.f32 %v183, %v430
  %432 = vmatprep.mubr.f32.mxu0 0.0
  %433 = vmatmul.mubr.f32.gmra.mxu0 %v333
  %v434 = vpop.f32.mrf.mxu0
  %v435 = vadd.f32 %v187, %v434
  %v436 = vpop.f32.mrf.mxu0
  %v437 = vadd.f32 %v189, %v436
  %438 = vmatprep.mubr.f32.mxu0 0.0
  %439 = vmatmul.mubr.f32.gmra.mxu0 %v336
  %v440 = vpop.f32.mrf.mxu0
  %v441 = vadd.f32 %v193, %v440
  %v442 = vpop.f32.mrf.mxu0
  %v443 = vadd.f32 %v195, %v442
  %444 = vmatprep.mubr.f32.mxu0 0.0
  %445 = vmatmul.mubr.f32.gmra.mxu0 %v339
  %v446 = vpop.f32.mrf.mxu0
  %v447 = vadd.f32 %v199, %v446
  %v448 = vpop.f32.mrf.mxu0
  %v449 = vadd.f32 %v201, %v448
  %450 = vmatprep.mubr.f32.mxu0 0.0
  %451 = vmatmul.mubr.f32.gmra.mxu0 %v342
  %v452 = vpop.f32.mrf.mxu0
  %v453 = vadd.f32 %v205, %v452
  %v454 = vpop.f32.mrf.mxu0
  %v455 = vadd.f32 %v207, %v454
  %456 = vmatprep.mubr.f32.mxu0 0.0
  %457 = vmatmul.mubr.f32.gmra.mxu0 %v345
  %v458 = vpop.f32.mrf.mxu0
  %v459 = vadd.f32 %v211, %v458
  %v460 = vpop.f32.mrf.mxu0
  %v461 = vadd.f32 %v213, %v460
  %462 = vmatprep.mubr.f32.mxu0 0.0
  %463 = vmatmul.mubr.f32.gmra.mxu0 %v348
  %v464 = vpop.f32.mrf.mxu0
  %v465 = vadd.f32 %v217, %v464
  %v466 = vpop.f32.mrf.mxu0
  %v467 = vadd.f32 %v219, %v466
  %468 = vdwg.mxu0
  %469 = vmatprep.subr.mxu0 0.0
  %470 = vmatpush1.msra.mxu0 0.0
  %471 = vmatprep.subr.mxu0 0.0
  %472 = vmatpush1.msra.mxu0 0.0
  %473 = vmatprep.subr.mxu0 0.0
  %474 = vmatpush1.msra.mxu0 0.0
  %475 = vmatprep.subr.mxu0 0.0
  %476 = vmatpush1.msra.mxu0 0.0
  %477 = vmatprep.subr.mxu0 0.0
  %478 = vmatpush1.msra.mxu0 0.0
  %479 = vmatprep.subr.mxu0 0.0
  %480 = vmatpush1.msra.mxu0 0.0
  %481 = vmatprep.subr.mxu0 0.0
  %482 = vmatpush1.msra.mxu0 0.0
  %483 = vmatprep.subr.mxu0 0.0
  %484 = vmatpush1.msra.mxu0 0.0
  %485 = vmatprep.subr.mxu0 0.0
  %486 = vmatpush1.msra.mxu0 0.0
  %487 = vmatprep.subr.mxu0 0.0
  %488 = vmatpush1.msra.mxu0 0.0
  %489 = vmatprep.subr.mxu0 0.0
  %490 = vmatpush1.msra.mxu0 0.0
  %491 = vmatprep.subr.mxu0 0.0
  %492 = vmatpush1.msra.mxu0 0.0
  %493 = vmatprep.subr.mxu0 0.0
  %494 = vmatpush1.msra.mxu0 0.0
  %495 = vmatprep.subr.mxu0 0.0
  %496 = vmatpush1.msra.mxu0 0.0
  %497 = vmatprep.subr.mxu0 0.0
  %498 = vmatpush1.msra.mxu0 0.0
  %499 = vmatprep.subr.mxu0 0.0
  %500 = vmatpush1.msra.mxu0 %v354
  %501 = vmatprep.subr.mxu0 0.0
  %502 = vmatpush2.msra.mxu0 0.0
  %503 = vmatprep.subr.mxu0 0.0
  %504 = vmatpush2.msra.mxu0 0.0
  %505 = vmatprep.subr.mxu0 0.0
  %506 = vmatpush2.msra.mxu0 0.0
  %507 = vmatprep.subr.mxu0 0.0
  %508 = vmatpush2.msra.mxu0 0.0
  %509 = vmatprep.subr.mxu0 0.0
  %510 = vmatpush2.msra.mxu0 0.0
  %511 = vmatprep.subr.mxu0 0.0
  %512 = vmatpush2.msra.mxu0 0.0
  %513 = vmatprep.subr.mxu0 0.0
  %514 = vmatpush2.msra.mxu0 0.0
  %515 = vmatprep.subr.mxu0 0.0
  %516 = vmatpush2.msra.mxu0 0.0
  %517 = vmatprep.subr.mxu0 0.0
  %518 = vmatpush2.msra.mxu0 0.0
  %519 = vmatprep.subr.mxu0 0.0
  %520 = vmatpush2.msra.mxu0 0.0
  %521 = vmatprep.subr.mxu0 0.0
  %522 = vmatpush2.msra.mxu0 0.0
  %523 = vmatprep.subr.mxu0 0.0
  %524 = vmatpush2.msra.mxu0 0.0
  %525 = vmatprep.subr.mxu0 0.0
  %526 = vmatpush2.msra.mxu0 0.0
  %527 = vmatprep.subr.mxu0 0.0
  %528 = vmatpush2.msra.mxu0 0.0
  %529 = vmatprep.subr.mxu0 0.0
  %530 = vmatpush2.msra.mxu0 0.0
  %531 = vmatprep.subr.mxu0 0.0
  %532 = vmatpush2.msra.mxu0 0.0
  %533 = vmatprep.mubr.f32.mxu0 0.0
  %534 = vmatmul.mubr.f32.gmra.mxu0 %v327
  %v535 = vpop.f32.mrf.mxu0
  %v536 = vadd.f32 %v288, %v535
  %v537 = vpop.f32.mrf.mxu0
  %538 = vmatprep.mubr.f32.mxu0 0.0
  %539 = vmatmul.mubr.f32.gmra.mxu0 %v330
  %v540 = vpop.f32.mrf.mxu0
  %v541 = vadd.f32 %v293, %v540
  %v542 = vpop.f32.mrf.mxu0
  %543 = vmatprep.mubr.f32.mxu0 0.0
  %544 = vmatmul.mubr.f32.gmra.mxu0 %v333
  %v545 = vpop.f32.mrf.mxu0
  %v546 = vadd.f32 %v298, %v545
  %v547 = vpop.f32.mrf.mxu0
  %548 = vmatprep.mubr.f32.mxu0 0.0
  %549 = vmatmul.mubr.f32.gmra.mxu0 %v336
  %v550 = vpop.f32.mrf.mxu0
  %v551 = vadd.f32 %v303, %v550
  %v552 = vpop.f32.mrf.mxu0
  %553 = vmatprep.mubr.f32.mxu0 0.0
  %554 = vmatmul.mubr.f32.gmra.mxu0 %v339
  %v555 = vpop.f32.mrf.mxu0
  %v556 = vadd.f32 %v308, %v555
  %v557 = vpop.f32.mrf.mxu0
  %558 = vmatprep.mubr.f32.mxu0 0.0
  %559 = vmatmul.mubr.f32.gmra.mxu0 %v342
  %v560 = vpop.f32.mrf.mxu0
  %v561 = vadd.f32 %v313, %v560
  %v562 = vpop.f32.mrf.mxu0
  %563 = vmatprep.mubr.f32.mxu0 0.0
  %564 = vmatmul.mubr.f32.gmra.mxu0 %v345
  %v565 = vpop.f32.mrf.mxu0
  %v566 = vadd.f32 %v318, %v565
  %v567 = vpop.f32.mrf.mxu0
  %568 = vmatprep.mubr.f32.mxu0 0.0
  %569 = vmatmul.mubr.f32.gmra.mxu0 %v348
  %v570 = vpop.f32.mrf.mxu0
  %v571 = vadd.f32 %v323, %v570
  %v572 = vpop.f32.mrf.mxu0
  %573 = vdwg.mxu0
  %s574 = scalar_lea.vmem %s1, 128
  %v575 = vld [vmem:[%s574] sm:$0xff]
  %v576 = vld [vmem:[%s574 + $0x8] sm:$0xff]
  %v577 = vld [vmem:[%s574 + $0x10] sm:$0xff]
  %v578 = vld [vmem:[%s574 + $0x18] sm:$0xff]
  %v579 = vld [vmem:[%s574 + $0x20] sm:$0xff]
  %v580 = vld [vmem:[%s574 + $0x28] sm:$0xff]
  %v581 = vld [vmem:[%s574 + $0x30] sm:$0xff]
  %v582 = vld [vmem:[%s574 + $0x38] sm:$0xff]
  %583 = vrot.lane.b32.xlu0 %v49, 126
  %v584 = vpop.permute.xlu0 %583
  %585 = vrot.lane.b32.xlu0 %v57, 126
  %v586 = vpop.permute.xlu0 %585
  %587 = vrot.lane.b32.xlu0 %v56, 126
  %v588 = vpop.permute.xlu0 %587
  %vm589 = vcmp.lt.s32.totalorder %v68, 126
  %v590 = vsel %vm589, %v586, %v588
  %v591 = vsel %vm589, %v584, %v586
  %v592 = vsel %vm589, %v588, %v584
  %v594 = vsel %vm73, %v575, 0
  %v597 = vsel %vm73, %v576, 0
  %v600 = vsel %vm73, %v577, 0
  %v603 = vsel %vm73, %v578, 0
  %v606 = vsel %vm73, %v579, 0
  %v609 = vsel %vm73, %v580, 0
  %v612 = vsel %vm73, %v581, 0
  %v615 = vsel %vm73, %v582, 0
  %v618 = vsel %vm98, %v591, 0
  %v621 = vsel %vm98, %v590, 0
  %v624 = vsel %vm98, %v592, 0
  %626 = vmatprep.subr.mxu0 0.0
  %627 = vmatpush1.msra.mxu0 0.0
  %628 = vmatprep.subr.mxu0 0.0
  %629 = vmatpush1.msra.mxu0 0.0
  %630 = vmatprep.subr.mxu0 0.0
  %631 = vmatpush1.msra.mxu0 0.0
  %632 = vmatprep.subr.mxu0 0.0
  %633 = vmatpush1.msra.mxu0 0.0
  %634 = vmatprep.subr.mxu0 0.0
  %635 = vmatpush1.msra.mxu0 0.0
  %636 = vmatprep.subr.mxu0 0.0
  %637 = vmatpush1.msra.mxu0 0.0
  %638 = vmatprep.subr.mxu0 0.0
  %639 = vmatpush1.msra.mxu0 0.0
  %640 = vmatprep.subr.mxu0 0.0
  %641 = vmatpush1.msra.mxu0 0.0
  %642 = vmatprep.subr.mxu0 0.0
  %643 = vmatpush1.msra.mxu0 0.0
  %644 = vmatprep.subr.mxu0 0.0
  %645 = vmatpush1.msra.mxu0 0.0
  %646 = vmatprep.subr.mxu0 0.0
  %647 = vmatpush1.msra.mxu0 0.0
  %648 = vmatprep.subr.mxu0 0.0
  %649 = vmatpush1.msra.mxu0 0.0
  %650 = vmatprep.subr.mxu0 0.0
  %651 = vmatpush1.msra.mxu0 0.0
  %652 = vmatprep.subr.mxu0 0.0
  %653 = vmatpush1.msra.mxu0 0.0
  %654 = vmatprep.subr.mxu0 0.0
  %655 = vmatpush1.msra.mxu0 0.0
  %656 = vmatprep.subr.mxu0 %v621
  %657 = vmatpush1.msra.mxu0 %v618
  %658 = vmatprep.subr.mxu0 0.0
  %659 = vmatpush2.msra.mxu0 0.0
  %660 = vmatprep.subr.mxu0 0.0
  %661 = vmatpush2.msra.mxu0 0.0
  %662 = vmatprep.subr.mxu0 0.0
  %663 = vmatpush2.msra.mxu0 0.0
  %664 = vmatprep.subr.mxu0 0.0
  %665 = vmatpush2.msra.mxu0 0.0
  %666 = vmatprep.subr.mxu0 0.0
  %667 = vmatpush2.msra.mxu0 0.0
  %668 = vmatprep.subr.mxu0 0.0
  %669 = vmatpush2.msra.mxu0 0.0
  %670 = vmatprep.subr.mxu0 0.0
  %671 = vmatpush2.msra.mxu0 0.0
  %672 = vmatprep.subr.mxu0 0.0
  %673 = vmatpush2.msra.mxu0 0.0
  %674 = vmatprep.subr.mxu0 0.0
  %675 = vmatpush2.msra.mxu0 0.0
  %676 = vmatprep.subr.mxu0 0.0
  %677 = vmatpush2.msra.mxu0 0.0
  %678 = vmatprep.subr.mxu0 0.0
  %679 = vmatpush2.msra.mxu0 0.0
  %680 = vmatprep.subr.mxu0 0.0
  %681 = vmatpush2.msra.mxu0 0.0
  %682 = vmatprep.subr.mxu0 0.0
  %683 = vmatpush2.msra.mxu0 0.0
  %684 = vmatprep.subr.mxu0 0.0
  %685 = vmatpush2.msra.mxu0 0.0
  %686 = vmatprep.subr.mxu0 0.0
  %687 = vmatpush2.msra.mxu0 0.0
  %688 = vmatprep.subr.mxu0 0.0
  %689 = vmatpush2.msra.mxu0 0.0
  %690 = vmatprep.mubr.f32.mxu0 0.0
  %691 = vmatmul.mubr.f32.gmra.mxu0 %v594
  %v692 = vpop.f32.mrf.mxu0
  %v693 = vadd.f32 0.0, %v692
  %v694 = vpop.f32.mrf.mxu0
  %v695 = vadd.f32 0.0, %v694
  %696 = vmatprep.mubr.f32.mxu0 0.0
  %697 = vmatmul.mubr.f32.gmra.mxu0 %v597
  %v698 = vpop.f32.mrf.mxu0
  %v699 = vadd.f32 0.0, %v698
  %v700 = vpop.f32.mrf.mxu0
  %v701 = vadd.f32 0.0, %v700
  %702 = vmatprep.mubr.f32.mxu0 0.0
  %703 = vmatmul.mubr.f32.gmra.mxu0 %v600
  %v704 = vpop.f32.mrf.mxu0
  %v705 = vadd.f32 0.0, %v704
  %v706 = vpop.f32.mrf.mxu0
  %v707 = vadd.f32 0.0, %v706
  %708 = vmatprep.mubr.f32.mxu0 0.0
  %709 = vmatmul.mubr.f32.gmra.mxu0 %v603
  %v710 = vpop.f32.mrf.mxu0
  %v711 = vadd.f32 0.0, %v710
  %v712 = vpop.f32.mrf.mxu0
  %v713 = vadd.f32 0.0, %v712
  %714 = vmatprep.mubr.f32.mxu0 0.0
  %715 = vmatmul.mubr.f32.gmra.mxu0 %v606
  %v716 = vpop.f32.mrf.mxu0
  %v717 = vadd.f32 0.0, %v716
  %v718 = vpop.f32.mrf.mxu0
  %v719 = vadd.f32 0.0, %v718
  %720 = vmatprep.mubr.f32.mxu0 0.0
  %721 = vmatmul.mubr.f32.gmra.mxu0 %v609
  %v722 = vpop.f32.mrf.mxu0
  %v723 = vadd.f32 0.0, %v722
  %v724 = vpop.f32.mrf.mxu0
  %v725 = vadd.f32 0.0, %v724
  %726 = vmatprep.mubr.f32.mxu0 0.0
  %727 = vmatmul.mubr.f32.gmra.mxu0 %v612
  %v728 = vpop.f32.mrf.mxu0
  %v729 = vadd.f32 0.0, %v728
  %v730 = vpop.f32.mrf.mxu0
  %v731 = vadd.f32 0.0, %v730
  %732 = vmatprep.mubr.f32.mxu0 0.0
  %733 = vmatmul.mubr.f32.gmra.mxu0 %v615
  %v734 = vpop.f32.mrf.mxu0
  %v735 = vadd.f32 0.0, %v734
  %v736 = vpop.f32.mrf.mxu0
  %v737 = vadd.f32 0.0, %v736
  %738 = vdwg.mxu0
  %739 = vmatprep.subr.mxu0 0.0
  %740 = vmatpush1.msra.mxu0 0.0
  %741 = vmatprep.subr.mxu0 0.0
  %742 = vmatpush1.msra.mxu0 0.0
  %743 = vmatprep.subr.mxu0 0.0
  %744 = vmatpush1.msra.mxu0 0.0
  %745 = vmatprep.subr.mxu0 0.0
  %746 = vmatpush1.msra.mxu0 0.0
  %747 = vmatprep.subr.mxu0 0.0
  %748 = vmatpush1.msra.mxu0 0.0
  %749 = vmatprep.subr.mxu0 0.0
  %750 = vmatpush1.msra.mxu0 0.0
  %751 = vmatprep.subr.mxu0 0.0
  %752 = vmatpush1.msra.mxu0 0.0
  %753 = vmatprep.subr.mxu0 0.0
  %754 = vmatpush1.msra.mxu0 0.0
  %755 = vmatprep.subr.mxu0 0.0
  %756 = vmatpush1.msra.mxu0 0.0
  %757 = vmatprep.subr.mxu0 0.0
  %758 = vmatpush1.msra.mxu0 0.0
  %759 = vmatprep.subr.mxu0 0.0
  %760 = vmatpush1.msra.mxu0 0.0
  %761 = vmatprep.subr.mxu0 0.0
  %762 = vmatpush1.msra.mxu0 0.0
  %763 = vmatprep.subr.mxu0 0.0
  %764 = vmatpush1.msra.mxu0 0.0
  %765 = vmatprep.subr.mxu0 0.0
  %766 = vmatpush1.msra.mxu0 0.0
  %767 = vmatprep.subr.mxu0 0.0
  %768 = vmatpush1.msra.mxu0 0.0
  %769 = vmatprep.subr.mxu0 0.0
  %770 = vmatpush1.msra.mxu0 %v624
  %771 = vmatprep.subr.mxu0 0.0
  %772 = vmatpush2.msra.mxu0 0.0
  %773 = vmatprep.subr.mxu0 0.0
  %774 = vmatpush2.msra.mxu0 0.0
  %775 = vmatprep.subr.mxu0 0.0
  %776 = vmatpush2.msra.mxu0 0.0
  %777 = vmatprep.subr.mxu0 0.0
  %778 = vmatpush2.msra.mxu0 0.0
  %779 = vmatprep.subr.mxu0 0.0
  %780 = vmatpush2.msra.mxu0 0.0
  %781 = vmatprep.subr.mxu0 0.0
  %782 = vmatpush2.msra.mxu0 0.0
  %783 = vmatprep.subr.mxu0 0.0
  %784 = vmatpush2.msra.mxu0 0.0
  %785 = vmatprep.subr.mxu0 0.0
  %786 = vmatpush2.msra.mxu0 0.0
  %787 = vmatprep.subr.mxu0 0.0
  %788 = vmatpush2.msra.mxu0 0.0
  %789 = vmatprep.subr.mxu0 0.0
  %790 = vmatpush2.msra.mxu0 0.0
  %791 = vmatprep.subr.mxu0 0.0
  %792 = vmatpush2.msra.mxu0 0.0
  %793 = vmatprep.subr.mxu0 0.0
  %794 = vmatpush2.msra.mxu0 0.0
  %795 = vmatprep.subr.mxu0 0.0
  %796 = vmatpush2.msra.mxu0 0.0
  %797 = vmatprep.subr.mxu0 0.0
  %798 = vmatpush2.msra.mxu0 0.0
  %799 = vmatprep.subr.mxu0 0.0
  %800 = vmatpush2.msra.mxu0 0.0
  %801 = vmatprep.subr.mxu0 0.0
  %802 = vmatpush2.msra.mxu0 0.0
  %803 = vmatprep.mubr.f32.mxu0 0.0
  %804 = vmatmul.mubr.f32.gmra.mxu0 %v594
  %v805 = vpop.f32.mrf.mxu0
  %v806 = vadd.f32 0.0, %v805
  %v807 = vpop.f32.mrf.mxu0
  %808 = vmatprep.mubr.f32.mxu0 0.0
  %809 = vmatmul.mubr.f32.gmra.mxu0 %v597
  %v810 = vpop.f32.mrf.mxu0
  %v811 = vadd.f32 0.0, %v810
  %v812 = vpop.f32.mrf.mxu0
  %813 = vmatprep.mubr.f32.mxu0 0.0
  %814 = vmatmul.mubr.f32.gmra.mxu0 %v600
  %v815 = vpop.f32.mrf.mxu0
  %v816 = vadd.f32 0.0, %v815
  %v817 = vpop.f32.mrf.mxu0
  %818 = vmatprep.mubr.f32.mxu0 0.0
  %819 = vmatmul.mubr.f32.gmra.mxu0 %v603
  %v820 = vpop.f32.mrf.mxu0
  %v821 = vadd.f32 0.0, %v820
  %v822 = vpop.f32.mrf.mxu0
  %823 = vmatprep.mubr.f32.mxu0 0.0
  %824 = vmatmul.mubr.f32.gmra.mxu0 %v606
  %v825 = vpop.f32.mrf.mxu0
  %v826 = vadd.f32 0.0, %v825
  %v827 = vpop.f32.mrf.mxu0
  %828 = vmatprep.mubr.f32.mxu0 0.0
  %829 = vmatmul.mubr.f32.gmra.mxu0 %v609
  %v830 = vpop.f32.mrf.mxu0
  %v831 = vadd.f32 0.0, %v830
  %v832 = vpop.f32.mrf.mxu0
  %833 = vmatprep.mubr.f32.mxu0 0.0
  %834 = vmatmul.mubr.f32.gmra.mxu0 %v612
  %v835 = vpop.f32.mrf.mxu0
  %v836 = vadd.f32 0.0, %v835
  %v837 = vpop.f32.mrf.mxu0
  %838 = vmatprep.mubr.f32.mxu0 0.0
  %839 = vmatmul.mubr.f32.gmra.mxu0 %v615
  %v840 = vpop.f32.mrf.mxu0
  %v841 = vadd.f32 0.0, %v840
  %v842 = vpop.f32.mrf.mxu0
  %843 = vdwg.mxu0
  %v844 = vadd.f32 %v423, %v693
  %v845 = vadd.f32 %v425, %v695
  %v846 = vadd.f32 %v536, %v806
  %v847 = vadd.f32 %v429, %v699
  %v848 = vadd.f32 %v431, %v701
  %v849 = vadd.f32 %v541, %v811
  %v850 = vadd.f32 %v435, %v705
  %v851 = vadd.f32 %v437, %v707
  %v852 = vadd.f32 %v546, %v816
  %v853 = vadd.f32 %v441, %v711
  %v854 = vadd.f32 %v443, %v713
  %v855 = vadd.f32 %v551, %v821
  %v856 = vadd.f32 %v447, %v717
  %v857 = vadd.f32 %v449, %v719
  %v858 = vadd.f32 %v556, %v826
  %v859 = vadd.f32 %v453, %v723
  %v860 = vadd.f32 %v455, %v725
  %v861 = vadd.f32 %v561, %v831
  %v862 = vadd.f32 %v459, %v729
  %v863 = vadd.f32 %v461, %v731
  %v864 = vadd.f32 %v566, %v836
  %v865 = vadd.f32 %v465, %v735
  %v866 = vadd.f32 %v467, %v737
  %v867 = vadd.f32 %v571, %v841
  %s868 = scalar_lea.vmem %s1, 192
  %v869 = vld [vmem:[%s868] sm:$0xff]
  %v870 = vld [vmem:[%s868 + $0x8] sm:$0xff]
  %v871 = vld [vmem:[%s868 + $0x10] sm:$0xff]
  %v872 = vld [vmem:[%s868 + $0x18] sm:$0xff]
  %v873 = vld [vmem:[%s868 + $0x20] sm:$0xff]
  %v874 = vld [vmem:[%s868 + $0x28] sm:$0xff]
  %v875 = vld [vmem:[%s868 + $0x30] sm:$0xff]
  %v876 = vld [vmem:[%s868 + $0x38] sm:$0xff]
  %877 = vrot.lane.b32.xlu0 %v49, 125
  %v878 = vpop.permute.xlu0 %877
  %879 = vrot.lane.b32.xlu0 %v57, 125
  %v880 = vpop.permute.xlu0 %879
  %881 = vrot.lane.b32.xlu0 %v56, 125
  %v882 = vpop.permute.xlu0 %881
  %vm883 = vcmp.lt.s32.totalorder %v68, 125
  %v884 = vsel %vm883, %v880, %v882
  %v885 = vsel %vm883, %v878, %v880
  %v886 = vsel %vm883, %v882, %v878
  %v888 = vsel %vm73, %v869, 0
  %v891 = vsel %vm73, %v870, 0
  %v894 = vsel %vm73, %v871, 0
  %v897 = vsel %vm73, %v872, 0
  %v900 = vsel %vm73, %v873, 0
  %v903 = vsel %vm73, %v874, 0
  %v906 = vsel %vm73, %v875, 0
  %v909 = vsel %vm73, %v876, 0
  %v912 = vsel %vm98, %v885, 0
  %v915 = vsel %vm98, %v884, 0
  %v918 = vsel %vm98, %v886, 0
  %920 = vmatprep.subr.mxu0 0.0
  %921 = vmatpush1.msra.mxu0 0.0
  %922 = vmatprep.subr.mxu0 0.0
  %923 = vmatpush1.msra.mxu0 0.0
  %924 = vmatprep.subr.mxu0 0.0
  %925 = vmatpush1.msra.mxu0 0.0
  %926 = vmatprep.subr.mxu0 0.0
  %927 = vmatpush1.msra.mxu0 0.0
  %928 = vmatprep.subr.mxu0 0.0
  %929 = vmatpush1.msra.mxu0 0.0
  %930 = vmatprep.subr.mxu0 0.0
  %931 = vmatpush1.msra.mxu0 0.0
  %932 = vmatprep.subr.mxu0 0.0
  %933 = vmatpush1.msra.mxu0 0.0
  %934 = vmatprep.subr.mxu0 0.0
  %935 = vmatpush1.msra.mxu0 0.0
  %936 = vmatprep.subr.mxu0 0.0
  %937 = vmatpush1.msra.mxu0 0.0
  %938 = vmatprep.subr.mxu0 0.0
  %939 = vmatpush1.msra.mxu0 0.0
  %940 = vmatprep.subr.mxu0 0.0
  %941 = vmatpush1.msra.mxu0 0.0
  %942 = vmatprep.subr.mxu0 0.0
  %943 = vmatpush1.msra.mxu0 0.0
  %944 = vmatprep.subr.mxu0 0.0
  %945 = vmatpush1.msra.mxu0 0.0
  %946 = vmatprep.subr.mxu0 0.0
  %947 = vmatpush1.msra.mxu0 0.0
  %948 = vmatprep.subr.mxu0 0.0
  %949 = vmatpush1.msra.mxu0 0.0
  %950 = vmatprep.subr.mxu0 %v915
  %951 = vmatpush1.msra.mxu0 %v912
  %952 = vmatprep.subr.mxu0 0.0
  %953 = vmatpush2.msra.mxu0 0.0
  %954 = vmatprep.subr.mxu0 0.0
  %955 = vmatpush2.msra.mxu0 0.0
  %956 = vmatprep.subr.mxu0 0.0
  %957 = vmatpush2.msra.mxu0 0.0
  %958 = vmatprep.subr.mxu0 0.0
  %959 = vmatpush2.msra.mxu0 0.0
  %960 = vmatprep.subr.mxu0 0.0
  %961 = vmatpush2.msra.mxu0 0.0
  %962 = vmatprep.subr.mxu0 0.0
  %963 = vmatpush2.msra.mxu0 0.0
  %964 = vmatprep.subr.mxu0 0.0
  %965 = vmatpush2.msra.mxu0 0.0
  %966 = vmatprep.subr.mxu0 0.0
  %967 = vmatpush2.msra.mxu0 0.0
  %968 = vmatprep.subr.mxu0 0.0
  %969 = vmatpush2.msra.mxu0 0.0
  %970 = vmatprep.subr.mxu0 0.0
  %971 = vmatpush2.msra.mxu0 0.0
  %972 = vmatprep.subr.mxu0 0.0
  %973 = vmatpush2.msra.mxu0 0.0
  %974 = vmatprep.subr.mxu0 0.0
  %975 = vmatpush2.msra.mxu0 0.0
  %976 = vmatprep.subr.mxu0 0.0
  %977 = vmatpush2.msra.mxu0 0.0
  %978 = vmatprep.subr.mxu0 0.0
  %979 = vmatpush2.msra.mxu0 0.0
  %980 = vmatprep.subr.mxu0 0.0
  %981 = vmatpush2.msra.mxu0 0.0
  %982 = vmatprep.subr.mxu0 0.0
  %983 = vmatpush2.msra.mxu0 0.0
  %984 = vmatprep.mubr.f32.mxu0 0.0
  %985 = vmatmul.mubr.f32.gmra.mxu0 %v888
  %v986 = vpop.f32.mrf.mxu0
  %v987 = vadd.f32 0.0, %v986
  %v988 = vpop.f32.mrf.mxu0
  %v989 = vadd.f32 0.0, %v988
  %990 = vmatprep.mubr.f32.mxu0 0.0
  %991 = vmatmul.mubr.f32.gmra.mxu0 %v891
  %v992 = vpop.f32.mrf.mxu0
  %v993 = vadd.f32 0.0, %v992
  %v994 = vpop.f32.mrf.mxu0
  %v995 = vadd.f32 0.0, %v994
  %996 = vmatprep.mubr.f32.mxu0 0.0
  %997 = vmatmul.mubr.f32.gmra.mxu0 %v894
  %v998 = vpop.f32.mrf.mxu0
  %v999 = vadd.f32 0.0, %v998
  %v1000 = vpop.f32.mrf.mxu0
  %v1001 = vadd.f32 0.0, %v1000
  %1002 = vmatprep.mubr.f32.mxu0 0.0
  %1003 = vmatmul.mubr.f32.gmra.mxu0 %v897
  %v1004 = vpop.f32.mrf.mxu0
  %v1005 = vadd.f32 0.0, %v1004
  %v1006 = vpop.f32.mrf.mxu0
  %v1007 = vadd.f32 0.0, %v1006
  %1008 = vmatprep.mubr.f32.mxu0 0.0
  %1009 = vmatmul.mubr.f32.gmra.mxu0 %v900
  %v1010 = vpop.f32.mrf.mxu0
  %v1011 = vadd.f32 0.0, %v1010
  %v1012 = vpop.f32.mrf.mxu0
  %v1013 = vadd.f32 0.0, %v1012
  %1014 = vmatprep.mubr.f32.mxu0 0.0
  %1015 = vmatmul.mubr.f32.gmra.mxu0 %v903
  %v1016 = vpop.f32.mrf.mxu0
  %v1017 = vadd.f32 0.0, %v1016
  %v1018 = vpop.f32.mrf.mxu0
  %v1019 = vadd.f32 0.0, %v1018
  %1020 = vmatprep.mubr.f32.mxu0 0.0
  %1021 = vmatmul.mubr.f32.gmra.mxu0 %v906
  %v1022 = vpop.f32.mrf.mxu0
  %v1023 = vadd.f32 0.0, %v1022
  %v1024 = vpop.f32.mrf.mxu0
  %v1025 = vadd.f32 0.0, %v1024
  %1026 = vmatprep.mubr.f32.mxu0 0.0
  %1027 = vmatmul.mubr.f32.gmra.mxu0 %v909
  %v1028 = vpop.f32.mrf.mxu0
  %v1029 = vadd.f32 0.0, %v1028
  %v1030 = vpop.f32.mrf.mxu0
  %v1031 = vadd.f32 0.0, %v1030
  %1032 = vdwg.mxu0
  %1033 = vmatprep.subr.mxu0 0.0
  %1034 = vmatpush1.msra.mxu0 0.0
  %1035 = vmatprep.subr.mxu0 0.0
  %1036 = vmatpush1.msra.mxu0 0.0
  %1037 = vmatprep.subr.mxu0 0.0
  %1038 = vmatpush1.msra.mxu0 0.0
  %1039 = vmatprep.subr.mxu0 0.0
  %1040 = vmatpush1.msra.mxu0 0.0
  %1041 = vmatprep.subr.mxu0 0.0
  %1042 = vmatpush1.msra.mxu0 0.0
  %1043 = vmatprep.subr.mxu0 0.0
  %1044 = vmatpush1.msra.mxu0 0.0
  %1045 = vmatprep.subr.mxu0 0.0
  %1046 = vmatpush1.msra.mxu0 0.0
  %1047 = vmatprep.subr.mxu0 0.0
  %1048 = vmatpush1.msra.mxu0 0.0
  %1049 = vmatprep.subr.mxu0 0.0
  %1050 = vmatpush1.msra.mxu0 0.0
  %1051 = vmatprep.subr.mxu0 0.0
  %1052 = vmatpush1.msra.mxu0 0.0
  %1053 = vmatprep.subr.mxu0 0.0
  %1054 = vmatpush1.msra.mxu0 0.0
  %1055 = vmatprep.subr.mxu0 0.0
  %1056 = vmatpush1.msra.mxu0 0.0
  %1057 = vmatprep.subr.mxu0 0.0
  %1058 = vmatpush1.msra.mxu0 0.0
  %1059 = vmatprep.subr.mxu0 0.0
  %1060 = vmatpush1.msra.mxu0 0.0
  %1061 = vmatprep.subr.mxu0 0.0
  %1062 = vmatpush1.msra.mxu0 0.0
  %1063 = vmatprep.subr.mxu0 0.0
  %1064 = vmatpush1.msra.mxu0 %v918
  %1065 = vmatprep.subr.mxu0 0.0
  %1066 = vmatpush2.msra.mxu0 0.0
  %1067 = vmatprep.subr.mxu0 0.0
  %1068 = vmatpush2.msra.mxu0 0.0
  %1069 = vmatprep.subr.mxu0 0.0
  %1070 = vmatpush2.msra.mxu0 0.0
  %1071 = vmatprep.subr.mxu0 0.0
  %1072 = vmatpush2.msra.mxu0 0.0
  %1073 = vmatprep.subr.mxu0 0.0
  %1074 = vmatpush2.msra.mxu0 0.0
  %1075 = vmatprep.subr.mxu0 0.0
  %1076 = vmatpush2.msra.mxu0 0.0
  %1077 = vmatprep.subr.mxu0 0.0
  %1078 = vmatpush2.msra.mxu0 0.0
  %1079 = vmatprep.subr.mxu0 0.0
  %1080 = vmatpush2.msra.mxu0 0.0
  %1081 = vmatprep.subr.mxu0 0.0
  %1082 = vmatpush2.msra.mxu0 0.0
  %1083 = vmatprep.subr.mxu0 0.0
  %1084 = vmatpush2.msra.mxu0 0.0
  %1085 = vmatprep.subr.mxu0 0.0
  %1086 = vmatpush2.msra.mxu0 0.0
  %1087 = vmatprep.subr.mxu0 0.0
  %1088 = vmatpush2.msra.mxu0 0.0
  %1089 = vmatprep.subr.mxu0 0.0
  %1090 = vmatpush2.msra.mxu0 0.0
  %1091 = vmatprep.subr.mxu0 0.0
  %1092 = vmatpush2.msra.mxu0 0.0
  %1093 = vmatprep.subr.mxu0 0.0
  %1094 = vmatpush2.msra.mxu0 0.0
  %1095 = vmatprep.subr.mxu0 0.0
  %1096 = vmatpush2.msra.mxu0 0.0
  %1097 = vmatprep.mubr.f32.mxu0 0.0
  %1098 = vmatmul.mubr.f32.gmra.mxu0 %v888
  %v1099 = vpop.f32.mrf.mxu0
  %v1100 = vadd.f32 0.0, %v1099
  %v1101 = vpop.f32.mrf.mxu0
  %1102 = vmatprep.mubr.f32.mxu0 0.0
  %1103 = vmatmul.mubr.f32.gmra.mxu0 %v891
  %v1104 = vpop.f32.mrf.mxu0
  %v1105 = vadd.f32 0.0, %v1104
  %v1106 = vpop.f32.mrf.mxu0
  %1107 = vmatprep.mubr.f32.mxu0 0.0
  %1108 = vmatmul.mubr.f32.gmra.mxu0 %v894
  %v1109 = vpop.f32.mrf.mxu0
  %v1110 = vadd.f32 0.0, %v1109
  %v1111 = vpop.f32.mrf.mxu0
  %1112 = vmatprep.mubr.f32.mxu0 0.0
  %1113 = vmatmul.mubr.f32.gmra.mxu0 %v897
  %v1114 = vpop.f32.mrf.mxu0
  %v1115 = vadd.f32 0.0, %v1114
  %v1116 = vpop.f32.mrf.mxu0
  %1117 = vmatprep.mubr.f32.mxu0 0.0
  %1118 = vmatmul.mubr.f32.gmra.mxu0 %v900
  %v1119 = vpop.f32.mrf.mxu0
  %v1120 = vadd.f32 0.0, %v1119
  %v1121 = vpop.f32.mrf.mxu0
  %1122 = vmatprep.mubr.f32.mxu0 0.0
  %1123 = vmatmul.mubr.f32.gmra.mxu0 %v903
  %v1124 = vpop.f32.mrf.mxu0
  %v1125 = vadd.f32 0.0, %v1124
  %v1126 = vpop.f32.mrf.mxu0
  %1127 = vmatprep.mubr.f32.mxu0 0.0
  %1128 = vmatmul.mubr.f32.gmra.mxu0 %v906
  %v1129 = vpop.f32.mrf.mxu0
  %v1130 = vadd.f32 0.0, %v1129
  %v1131 = vpop.f32.mrf.mxu0
  %1132 = vmatprep.mubr.f32.mxu0 0.0
  %1133 = vmatmul.mubr.f32.gmra.mxu0 %v909
  %v1134 = vpop.f32.mrf.mxu0
  %v1135 = vadd.f32 0.0, %v1134
  %v1136 = vpop.f32.mrf.mxu0
  %1137 = vdwg.mxu0
  %v1138 = vadd.f32 %v844, %v987
  %v1139 = vadd.f32 %v845, %v989
  %v1140 = vadd.f32 %v846, %v1100
  %v1141 = vadd.f32 %v847, %v993
  %v1142 = vadd.f32 %v848, %v995
  %v1143 = vadd.f32 %v849, %v1105
  %v1144 = vadd.f32 %v850, %v999
  %v1145 = vadd.f32 %v851, %v1001
  %v1146 = vadd.f32 %v852, %v1110
  %v1147 = vadd.f32 %v853, %v1005
  %v1148 = vadd.f32 %v854, %v1007
  %v1149 = vadd.f32 %v855, %v1115
  %v1150 = vadd.f32 %v856, %v1011
  %v1151 = vadd.f32 %v857, %v1013
  %v1152 = vadd.f32 %v858, %v1120
  %v1153 = vadd.f32 %v859, %v1017
  %v1154 = vadd.f32 %v860, %v1019
  %v1155 = vadd.f32 %v861, %v1125
  %v1156 = vadd.f32 %v862, %v1023
  %v1157 = vadd.f32 %v863, %v1025
  %v1158 = vadd.f32 %v864, %v1130
  %v1159 = vadd.f32 %v865, %v1029
  %v1160 = vadd.f32 %v866, %v1031
  %v1161 = vadd.f32 %v867, %v1135
  %s1162 = scalar_lea.vmem %s1, 256
  %v1163 = vld [vmem:[%s1162] sm:$0xff]
  %v1164 = vld [vmem:[%s1162 + $0x8] sm:$0xff]
  %v1165 = vld [vmem:[%s1162 + $0x10] sm:$0xff]
  %v1166 = vld [vmem:[%s1162 + $0x18] sm:$0xff]
  %v1167 = vld [vmem:[%s1162 + $0x20] sm:$0xff]
  %v1168 = vld [vmem:[%s1162 + $0x28] sm:$0xff]
  %v1169 = vld [vmem:[%s1162 + $0x30] sm:$0xff]
  %v1170 = vld [vmem:[%s1162 + $0x38] sm:$0xff]
  %1171 = vrot.lane.b32.xlu0 %v49, 124
  %v1172 = vpop.permute.xlu0 %1171
  %1173 = vrot.lane.b32.xlu0 %v57, 124
  %v1174 = vpop.permute.xlu0 %1173
  %1175 = vrot.lane.b32.xlu0 %v56, 124
  %v1176 = vpop.permute.xlu0 %1175
  %vm1177 = vcmp.lt.s32.totalorder %v68, 124
  %v1178 = vsel %vm1177, %v1174, %v1176
  %v1179 = vsel %vm1177, %v1172, %v1174
  %v1180 = vsel %vm1177, %v1176, %v1172
  %v1182 = vsel %vm73, %v1163, 0
  %v1185 = vsel %vm73, %v1164, 0
  %v1188 = vsel %vm73, %v1165, 0
  %v1191 = vsel %vm73, %v1166, 0
  %v1194 = vsel %vm73, %v1167, 0
  %v1197 = vsel %vm73, %v1168, 0
  %v1200 = vsel %vm73, %v1169, 0
  %v1203 = vsel %vm73, %v1170, 0
  %v1206 = vsel %vm98, %v1179, 0
  %v1209 = vsel %vm98, %v1178, 0
  %v1212 = vsel %vm98, %v1180, 0
  %1214 = vmatprep.subr.mxu0 0.0
  %1215 = vmatpush1.msra.mxu0 0.0
  %1216 = vmatprep.subr.mxu0 0.0
  %1217 = vmatpush1.msra.mxu0 0.0
  %1218 = vmatprep.subr.mxu0 0.0
  %1219 = vmatpush1.msra.mxu0 0.0
  %1220 = vmatprep.subr.mxu0 0.0
  %1221 = vmatpush1.msra.mxu0 0.0
  %1222 = vmatprep.subr.mxu0 0.0
  %1223 = vmatpush1.msra.mxu0 0.0
  %1224 = vmatprep.subr.mxu0 0.0
  %1225 = vmatpush1.msra.mxu0 0.0
  %1226 = vmatprep.subr.mxu0 0.0
  %1227 = vmatpush1.msra.mxu0 0.0
  %1228 = vmatprep.subr.mxu0 0.0
  %1229 = vmatpush1.msra.mxu0 0.0
  %1230 = vmatprep.subr.mxu0 0.0
  %1231 = vmatpush1.msra.mxu0 0.0
  %1232 = vmatprep.subr.mxu0 0.0
  %1233 = vmatpush1.msra.mxu0 0.0
  %1234 = vmatprep.subr.mxu0 0.0
  %1235 = vmatpush1.msra.mxu0 0.0
  %1236 = vmatprep.subr.mxu0 0.0
  %1237 = vmatpush1.msra.mxu0 0.0
  %1238 = vmatprep.subr.mxu0 0.0
  %1239 = vmatpush1.msra.mxu0 0.0
  %1240 = vmatprep.subr.mxu0 0.0
  %1241 = vmatpush1.msra.mxu0 0.0
  %1242 = vmatprep.subr.mxu0 0.0
  %1243 = vmatpush1.msra.mxu0 0.0
  %1244 = vmatprep.subr.mxu0 %v1209
  %1245 = vmatpush1.msra.mxu0 %v1206
  %1246 = vmatprep.subr.mxu0 0.0
  %1247 = vmatpush2.msra.mxu0 0.0
  %1248 = vmatprep.subr.mxu0 0.0
  %1249 = vmatpush2.msra.mxu0 0.0
  %1250 = vmatprep.subr.mxu0 0.0
  %1251 = vmatpush2.msra.mxu0 0.0
  %1252 = vmatprep.subr.mxu0 0.0
  %1253 = vmatpush2.msra.mxu0 0.0
  %1254 = vmatprep.subr.mxu0 0.0
  %1255 = vmatpush2.msra.mxu0 0.0
  %1256 = vmatprep.subr.mxu0 0.0
  %1257 = vmatpush2.msra.mxu0 0.0
  %1258 = vmatprep.subr.mxu0 0.0
  %1259 = vmatpush2.msra.mxu0 0.0
  %1260 = vmatprep.subr.mxu0 0.0
  %1261 = vmatpush2.msra.mxu0 0.0
  %1262 = vmatprep.subr.mxu0 0.0
  %1263 = vmatpush2.msra.mxu0 0.0
  %1264 = vmatprep.subr.mxu0 0.0
  %1265 = vmatpush2.msra.mxu0 0.0
  %1266 = vmatprep.subr.mxu0 0.0
  %1267 = vmatpush2.msra.mxu0 0.0
  %1268 = vmatprep.subr.mxu0 0.0
  %1269 = vmatpush2.msra.mxu0 0.0
  %1270 = vmatprep.subr.mxu0 0.0
  %1271 = vmatpush2.msra.mxu0 0.0
  %1272 = vmatprep.subr.mxu0 0.0
  %1273 = vmatpush2.msra.mxu0 0.0
  %1274 = vmatprep.subr.mxu0 0.0
  %1275 = vmatpush2.msra.mxu0 0.0
  %1276 = vmatprep.subr.mxu0 0.0
  %1277 = vmatpush2.msra.mxu0 0.0
  %1278 = vmatprep.mubr.f32.mxu0 0.0
  %1279 = vmatmul.mubr.f32.gmra.mxu0 %v1182
  %v1280 = vpop.f32.mrf.mxu0
  %v1281 = vadd.f32 0.0, %v1280
  %v1282 = vpop.f32.mrf.mxu0
  %v1283 = vadd.f32 0.0, %v1282
  %1284 = vmatprep.mubr.f32.mxu0 0.0
  %1285 = vmatmul.mubr.f32.gmra.mxu0 %v1185
  %v1286 = vpop.f32.mrf.mxu0
  %v1287 = vadd.f32 0.0, %v1286
  %v1288 = vpop.f32.mrf.mxu0
  %v1289 = vadd.f32 0.0, %v1288
  %1290 = vmatprep.mubr.f32.mxu0 0.0
  %1291 = vmatmul.mubr.f32.gmra.mxu0 %v1188
  %v1292 = vpop.f32.mrf.mxu0
  %v1293 = vadd.f32 0.0, %v1292
  %v1294 = vpop.f32.mrf.mxu0
  %v1295 = vadd.f32 0.0, %v1294
  %1296 = vmatprep.mubr.f32.mxu0 0.0
  %1297 = vmatmul.mubr.f32.gmra.mxu0 %v1191
  %v1298 = vpop.f32.mrf.mxu0
  %v1299 = vadd.f32 0.0, %v1298
  %v1300 = vpop.f32.mrf.mxu0
  %v1301 = vadd.f32 0.0, %v1300
  %1302 = vmatprep.mubr.f32.mxu0 0.0
  %1303 = vmatmul.mubr.f32.gmra.mxu0 %v1194
  %v1304 = vpop.f32.mrf.mxu0
  %v1305 = vadd.f32 0.0, %v1304
  %v1306 = vpop.f32.mrf.mxu0
  %v1307 = vadd.f32 0.0, %v1306
  %1308 = vmatprep.mubr.f32.mxu0 0.0
  %1309 = vmatmul.mubr.f32.gmra.mxu0 %v1197
  %v1310 = vpop.f32.mrf.mxu0
  %v1311 = vadd.f32 0.0, %v1310
  %v1312 = vpop.f32.mrf.mxu0
  %v1313 = vadd.f32 0.0, %v1312
  %1314 = vmatprep.mubr.f32.mxu0 0.0
  %1315 = vmatmul.mubr.f32.gmra.mxu0 %v1200
  %v1316 = vpop.f32.mrf.mxu0
  %v1317 = vadd.f32 0.0, %v1316
  %v1318 = vpop.f32.mrf.mxu0
  %v1319 = vadd.f32 0.0, %v1318
  %1320 = vmatprep.mubr.f32.mxu0 0.0
  %1321 = vmatmul.mubr.f32.gmra.mxu0 %v1203
  %v1322 = vpop.f32.mrf.mxu0
  %v1323 = vadd.f32 0.0, %v1322
  %v1324 = vpop.f32.mrf.mxu0
  %v1325 = vadd.f32 0.0, %v1324
  %1326 = vdwg.mxu0
  %1327 = vmatprep.subr.mxu0 0.0
  %1328 = vmatpush1.msra.mxu0 0.0
  %1329 = vmatprep.subr.mxu0 0.0
  %1330 = vmatpush1.msra.mxu0 0.0
  %1331 = vmatprep.subr.mxu0 0.0
  %1332 = vmatpush1.msra.mxu0 0.0
  %1333 = vmatprep.subr.mxu0 0.0
  %1334 = vmatpush1.msra.mxu0 0.0
  %1335 = vmatprep.subr.mxu0 0.0
  %1336 = vmatpush1.msra.mxu0 0.0
  %1337 = vmatprep.subr.mxu0 0.0
  %1338 = vmatpush1.msra.mxu0 0.0
  %1339 = vmatprep.subr.mxu0 0.0
  %1340 = vmatpush1.msra.mxu0 0.0
  %1341 = vmatprep.subr.mxu0 0.0
  %1342 = vmatpush1.msra.mxu0 0.0
  %1343 = vmatprep.subr.mxu0 0.0
  %1344 = vmatpush1.msra.mxu0 0.0
  %1345 = vmatprep.subr.mxu0 0.0
  %1346 = vmatpush1.msra.mxu0 0.0
  %1347 = vmatprep.subr.mxu0 0.0
  %1348 = vmatpush1.msra.mxu0 0.0
  %1349 = vmatprep.subr.mxu0 0.0
  %1350 = vmatpush1.msra.mxu0 0.0
  %1351 = vmatprep.subr.mxu0 0.0
  %1352 = vmatpush1.msra.mxu0 0.0
  %1353 = vmatprep.subr.mxu0 0.0
  %1354 = vmatpush1.msra.mxu0 0.0
  %1355 = vmatprep.subr.mxu0 0.0
  %1356 = vmatpush1.msra.mxu0 0.0
  %1357 = vmatprep.subr.mxu0 0.0
  %1358 = vmatpush1.msra.mxu0 %v1212
  %1359 = vmatprep.subr.mxu0 0.0
  %1360 = vmatpush2.msra.mxu0 0.0
  %1361 = vmatprep.subr.mxu0 0.0
  %1362 = vmatpush2.msra.mxu0 0.0
  %1363 = vmatprep.subr.mxu0 0.0
  %1364 = vmatpush2.msra.mxu0 0.0
  %1365 = vmatprep.subr.mxu0 0.0
  %1366 = vmatpush2.msra.mxu0 0.0
  %1367 = vmatprep.subr.mxu0 0.0
  %1368 = vmatpush2.msra.mxu0 0.0
  %1369 = vmatprep.subr.mxu0 0.0
  %1370 = vmatpush2.msra.mxu0 0.0
  %1371 = vmatprep.subr.mxu0 0.0
  %1372 = vmatpush2.msra.mxu0 0.0
  %1373 = vmatprep.subr.mxu0 0.0
  %1374 = vmatpush2.msra.mxu0 0.0
  %1375 = vmatprep.subr.mxu0 0.0
  %1376 = vmatpush2.msra.mxu0 0.0
  %1377 = vmatprep.subr.mxu0 0.0
  %1378 = vmatpush2.msra.mxu0 0.0
  %1379 = vmatprep.subr.mxu0 0.0
  %1380 = vmatpush2.msra.mxu0 0.0
  %1381 = vmatprep.subr.mxu0 0.0
  %1382 = vmatpush2.msra.mxu0 0.0
  %1383 = vmatprep.subr.mxu0 0.0
  %1384 = vmatpush2.msra.mxu0 0.0
  %1385 = vmatprep.subr.mxu0 0.0
  %1386 = vmatpush2.msra.mxu0 0.0
  %1387 = vmatprep.subr.mxu0 0.0
  %1388 = vmatpush2.msra.mxu0 0.0
  %1389 = vmatprep.subr.mxu0 0.0
  %1390 = vmatpush2.msra.mxu0 0.0
  %1391 = vmatprep.mubr.f32.mxu0 0.0
  %1392 = vmatmul.mubr.f32.gmra.mxu0 %v1182
  %v1393 = vpop.f32.mrf.mxu0
  %v1394 = vadd.f32 0.0, %v1393
  %v1395 = vpop.f32.mrf.mxu0
  %1396 = vmatprep.mubr.f32.mxu0 0.0
  %1397 = vmatmul.mubr.f32.gmra.mxu0 %v1185
  %v1398 = vpop.f32.mrf.mxu0
  %v1399 = vadd.f32 0.0, %v1398
  %v1400 = vpop.f32.mrf.mxu0
  %1401 = vmatprep.mubr.f32.mxu0 0.0
  %1402 = vmatmul.mubr.f32.gmra.mxu0 %v1188
  %v1403 = vpop.f32.mrf.mxu0
  %v1404 = vadd.f32 0.0, %v1403
  %v1405 = vpop.f32.mrf.mxu0
  %1406 = vmatprep.mubr.f32.mxu0 0.0
  %1407 = vmatmul.mubr.f32.gmra.mxu0 %v1191
  %v1408 = vpop.f32.mrf.mxu0
  %v1409 = vadd.f32 0.0, %v1408
  %v1410 = vpop.f32.mrf.mxu0
  %1411 = vmatprep.mubr.f32.mxu0 0.0
  %1412 = vmatmul.mubr.f32.gmra.mxu0 %v1194
  %v1413 = vpop.f32.mrf.mxu0
  %v1414 = vadd.f32 0.0, %v1413
  %v1415 = vpop.f32.mrf.mxu0
  %1416 = vmatprep.mubr.f32.mxu0 0.0
  %1417 = vmatmul.mubr.f32.gmra.mxu0 %v1197
  %v1418 = vpop.f32.mrf.mxu0
  %v1419 = vadd.f32 0.0, %v1418
  %v1420 = vpop.f32.mrf.mxu0
  %1421 = vmatprep.mubr.f32.mxu0 0.0
  %1422 = vmatmul.mubr.f32.gmra.mxu0 %v1200
  %v1423 = vpop.f32.mrf.mxu0
  %v1424 = vadd.f32 0.0, %v1423
  %v1425 = vpop.f32.mrf.mxu0
  %1426 = vmatprep.mubr.f32.mxu0 0.0
  %1427 = vmatmul.mubr.f32.gmra.mxu0 %v1203
  %v1428 = vpop.f32.mrf.mxu0
  %v1429 = vadd.f32 0.0, %v1428
  %v1430 = vpop.f32.mrf.mxu0
  %1431 = vdwg.mxu0
  %v1432 = vadd.f32 %v1138, %v1281
  %v1433 = vadd.f32 %v1139, %v1283
  %v1434 = vadd.f32 %v1140, %v1394
  %v1435 = vadd.f32 %v1141, %v1287
  %v1436 = vadd.f32 %v1142, %v1289
  %v1437 = vadd.f32 %v1143, %v1399
  %v1438 = vadd.f32 %v1144, %v1293
  %v1439 = vadd.f32 %v1145, %v1295
  %v1440 = vadd.f32 %v1146, %v1404
  %v1441 = vadd.f32 %v1147, %v1299
  %v1442 = vadd.f32 %v1148, %v1301
  %v1443 = vadd.f32 %v1149, %v1409
  %v1444 = vadd.f32 %v1150, %v1305
  %v1445 = vadd.f32 %v1151, %v1307
  %v1446 = vadd.f32 %v1152, %v1414
  %v1447 = vadd.f32 %v1153, %v1311
  %v1448 = vadd.f32 %v1154, %v1313
  %v1449 = vadd.f32 %v1155, %v1419
  %v1450 = vadd.f32 %v1156, %v1317
  %v1451 = vadd.f32 %v1157, %v1319
  %v1452 = vadd.f32 %v1158, %v1424
  %v1453 = vadd.f32 %v1159, %v1323
  %v1454 = vadd.f32 %v1160, %v1325
  %v1455 = vadd.f32 %v1161, %v1429
  %s1456 = scalar_lea.vmem %s1, 320
  %v1457 = vld [vmem:[%s1456] sm:$0xff]
  %v1458 = vld [vmem:[%s1456 + $0x8] sm:$0xff]
  %v1459 = vld [vmem:[%s1456 + $0x10] sm:$0xff]
  %v1460 = vld [vmem:[%s1456 + $0x18] sm:$0xff]
  %v1461 = vld [vmem:[%s1456 + $0x20] sm:$0xff]
  %v1462 = vld [vmem:[%s1456 + $0x28] sm:$0xff]
  %v1463 = vld [vmem:[%s1456 + $0x30] sm:$0xff]
  %v1464 = vld [vmem:[%s1456 + $0x38] sm:$0xff]
  %1465 = vrot.lane.b32.xlu0 %v49, 123
  %v1466 = vpop.permute.xlu0 %1465
  %1467 = vrot.lane.b32.xlu0 %v57, 123
  %v1468 = vpop.permute.xlu0 %1467
  %1469 = vrot.lane.b32.xlu0 %v56, 123
  %v1470 = vpop.permute.xlu0 %1469
  %vm1471 = vcmp.lt.s32.totalorder %v68, 123
  %v1472 = vsel %vm1471, %v1468, %v1470
  %v1473 = vsel %vm1471, %v1466, %v1468
  %v1474 = vsel %vm1471, %v1470, %v1466
  %v1476 = vsel %vm73, %v1457, 0
  %v1479 = vsel %vm73, %v1458, 0
  %v1482 = vsel %vm73, %v1459, 0
  %v1485 = vsel %vm73, %v1460, 0
  %v1488 = vsel %vm73, %v1461, 0
  %v1491 = vsel %vm73, %v1462, 0
  %v1494 = vsel %vm73, %v1463, 0
  %v1497 = vsel %vm73, %v1464, 0
  %v1500 = vsel %vm98, %v1473, 0
  %v1503 = vsel %vm98, %v1472, 0
  %v1506 = vsel %vm98, %v1474, 0
  %1508 = vmatprep.subr.mxu0 0.0
  %1509 = vmatpush1.msra.mxu0 0.0
  %1510 = vmatprep.subr.mxu0 0.0
  %1511 = vmatpush1.msra.mxu0 0.0
  %1512 = vmatprep.subr.mxu0 0.0
  %1513 = vmatpush1.msra.mxu0 0.0
  %1514 = vmatprep.subr.mxu0 0.0
  %1515 = vmatpush1.msra.mxu0 0.0
  %1516 = vmatprep.subr.mxu0 0.0
  %1517 = vmatpush1.msra.mxu0 0.0
  %1518 = vmatprep.subr.mxu0 0.0
  %1519 = vmatpush1.msra.mxu0 0.0
  %1520 = vmatprep.subr.mxu0 0.0
  %1521 = vmatpush1.msra.mxu0 0.0
  %1522 = vmatprep.subr.mxu0 0.0
  %1523 = vmatpush1.msra.mxu0 0.0
  %1524 = vmatprep.subr.mxu0 0.0
  %1525 = vmatpush1.msra.mxu0 0.0
  %1526 = vmatprep.subr.mxu0 0.0
  %1527 = vmatpush1.msra.mxu0 0.0
  %1528 = vmatprep.subr.mxu0 0.0
  %1529 = vmatpush1.msra.mxu0 0.0
  %1530 = vmatprep.subr.mxu0 0.0
  %1531 = vmatpush1.msra.mxu0 0.0
  %1532 = vmatprep.subr.mxu0 0.0
  %1533 = vmatpush1.msra.mxu0 0.0
  %1534 = vmatprep.subr.mxu0 0.0
  %1535 = vmatpush1.msra.mxu0 0.0
  %1536 = vmatprep.subr.mxu0 0.0
  %1537 = vmatpush1.msra.mxu0 0.0
  %1538 = vmatprep.subr.mxu0 %v1503
  %1539 = vmatpush1.msra.mxu0 %v1500
  %1540 = vmatprep.subr.mxu0 0.0
  %1541 = vmatpush2.msra.mxu0 0.0
  %1542 = vmatprep.subr.mxu0 0.0
  %1543 = vmatpush2.msra.mxu0 0.0
  %1544 = vmatprep.subr.mxu0 0.0
  %1545 = vmatpush2.msra.mxu0 0.0
  %1546 = vmatprep.subr.mxu0 0.0
  %1547 = vmatpush2.msra.mxu0 0.0
  %1548 = vmatprep.subr.mxu0 0.0
  %1549 = vmatpush2.msra.mxu0 0.0
  %1550 = vmatprep.subr.mxu0 0.0
  %1551 = vmatpush2.msra.mxu0 0.0
  %1552 = vmatprep.subr.mxu0 0.0
  %1553 = vmatpush2.msra.mxu0 0.0
  %1554 = vmatprep.subr.mxu0 0.0
  %1555 = vmatpush2.msra.mxu0 0.0
  %1556 = vmatprep.subr.mxu0 0.0
  %1557 = vmatpush2.msra.mxu0 0.0
  %1558 = vmatprep.subr.mxu0 0.0
  %1559 = vmatpush2.msra.mxu0 0.0
  %1560 = vmatprep.subr.mxu0 0.0
  %1561 = vmatpush2.msra.mxu0 0.0
  %1562 = vmatprep.subr.mxu0 0.0
  %1563 = vmatpush2.msra.mxu0 0.0
  %1564 = vmatprep.subr.mxu0 0.0
  %1565 = vmatpush2.msra.mxu0 0.0
  %1566 = vmatprep.subr.mxu0 0.0
  %1567 = vmatpush2.msra.mxu0 0.0
  %1568 = vmatprep.subr.mxu0 0.0
  %1569 = vmatpush2.msra.mxu0 0.0
  %1570 = vmatprep.subr.mxu0 0.0
  %1571 = vmatpush2.msra.mxu0 0.0
  %1572 = vmatprep.mubr.f32.mxu0 0.0
  %1573 = vmatmul.mubr.f32.gmra.mxu0 %v1476
  %v1574 = vpop.f32.mrf.mxu0
  %v1575 = vadd.f32 0.0, %v1574
  %v1576 = vpop.f32.mrf.mxu0
  %v1577 = vadd.f32 0.0, %v1576
  %1578 = vmatprep.mubr.f32.mxu0 0.0
  %1579 = vmatmul.mubr.f32.gmra.mxu0 %v1479
  %v1580 = vpop.f32.mrf.mxu0
  %v1581 = vadd.f32 0.0, %v1580
  %v1582 = vpop.f32.mrf.mxu0
  %v1583 = vadd.f32 0.0, %v1582
  %1584 = vmatprep.mubr.f32.mxu0 0.0
  %1585 = vmatmul.mubr.f32.gmra.mxu0 %v1482
  %v1586 = vpop.f32.mrf.mxu0
  %v1587 = vadd.f32 0.0, %v1586
  %v1588 = vpop.f32.mrf.mxu0
  %v1589 = vadd.f32 0.0, %v1588
  %1590 = vmatprep.mubr.f32.mxu0 0.0
  %1591 = vmatmul.mubr.f32.gmra.mxu0 %v1485
  %v1592 = vpop.f32.mrf.mxu0
  %v1593 = vadd.f32 0.0, %v1592
  %v1594 = vpop.f32.mrf.mxu0
  %v1595 = vadd.f32 0.0, %v1594
  %1596 = vmatprep.mubr.f32.mxu0 0.0
  %1597 = vmatmul.mubr.f32.gmra.mxu0 %v1488
  %v1598 = vpop.f32.mrf.mxu0
  %v1599 = vadd.f32 0.0, %v1598
  %v1600 = vpop.f32.mrf.mxu0
  %v1601 = vadd.f32 0.0, %v1600
  %1602 = vmatprep.mubr.f32.mxu0 0.0
  %1603 = vmatmul.mubr.f32.gmra.mxu0 %v1491
  %v1604 = vpop.f32.mrf.mxu0
  %v1605 = vadd.f32 0.0, %v1604
  %v1606 = vpop.f32.mrf.mxu0
  %v1607 = vadd.f32 0.0, %v1606
  %1608 = vmatprep.mubr.f32.mxu0 0.0
  %1609 = vmatmul.mubr.f32.gmra.mxu0 %v1494
  %v1610 = vpop.f32.mrf.mxu0
  %v1611 = vadd.f32 0.0, %v1610
  %v1612 = vpop.f32.mrf.mxu0
  %v1613 = vadd.f32 0.0, %v1612
  %1614 = vmatprep.mubr.f32.mxu0 0.0
  %1615 = vmatmul.mubr.f32.gmra.mxu0 %v1497
  %v1616 = vpop.f32.mrf.mxu0
  %v1617 = vadd.f32 0.0, %v1616
  %v1618 = vpop.f32.mrf.mxu0
  %v1619 = vadd.f32 0.0, %v1618
  %1620 = vdwg.mxu0
  %1621 = vmatprep.subr.mxu0 0.0
  %1622 = vmatpush1.msra.mxu0 0.0
  %1623 = vmatprep.subr.mxu0 0.0
  %1624 = vmatpush1.msra.mxu0 0.0
  %1625 = vmatprep.subr.mxu0 0.0
  %1626 = vmatpush1.msra.mxu0 0.0
  %1627 = vmatprep.subr.mxu0 0.0
  %1628 = vmatpush1.msra.mxu0 0.0
  %1629 = vmatprep.subr.mxu0 0.0
  %1630 = vmatpush1.msra.mxu0 0.0
  %1631 = vmatprep.subr.mxu0 0.0
  %1632 = vmatpush1.msra.mxu0 0.0
  %1633 = vmatprep.subr.mxu0 0.0
  %1634 = vmatpush1.msra.mxu0 0.0
  %1635 = vmatprep.subr.mxu0 0.0
  %1636 = vmatpush1.msra.mxu0 0.0
  %1637 = vmatprep.subr.mxu0 0.0
  %1638 = vmatpush1.msra.mxu0 0.0
  %1639 = vmatprep.subr.mxu0 0.0
  %1640 = vmatpush1.msra.mxu0 0.0
  %1641 = vmatprep.subr.mxu0 0.0
  %1642 = vmatpush1.msra.mxu0 0.0
  %1643 = vmatprep.subr.mxu0 0.0
  %1644 = vmatpush1.msra.mxu0 0.0
  %1645 = vmatprep.subr.mxu0 0.0
  %1646 = vmatpush1.msra.mxu0 0.0
  %1647 = vmatprep.subr.mxu0 0.0
  %1648 = vmatpush1.msra.mxu0 0.0
  %1649 = vmatprep.subr.mxu0 0.0
  %1650 = vmatpush1.msra.mxu0 0.0
  %1651 = vmatprep.subr.mxu0 0.0
  %1652 = vmatpush1.msra.mxu0 %v1506
  %1653 = vmatprep.subr.mxu0 0.0
  %1654 = vmatpush2.msra.mxu0 0.0
  %1655 = vmatprep.subr.mxu0 0.0
  %1656 = vmatpush2.msra.mxu0 0.0
  %1657 = vmatprep.subr.mxu0 0.0
  %1658 = vmatpush2.msra.mxu0 0.0
  %1659 = vmatprep.subr.mxu0 0.0
  %1660 = vmatpush2.msra.mxu0 0.0
  %1661 = vmatprep.subr.mxu0 0.0
  %1662 = vmatpush2.msra.mxu0 0.0
  %1663 = vmatprep.subr.mxu0 0.0
  %1664 = vmatpush2.msra.mxu0 0.0
  %1665 = vmatprep.subr.mxu0 0.0
  %1666 = vmatpush2.msra.mxu0 0.0
  %1667 = vmatprep.subr.mxu0 0.0
  %1668 = vmatpush2.msra.mxu0 0.0
  %1669 = vmatprep.subr.mxu0 0.0
  %1670 = vmatpush2.msra.mxu0 0.0
  %1671 = vmatprep.subr.mxu0 0.0
  %1672 = vmatpush2.msra.mxu0 0.0
  %1673 = vmatprep.subr.mxu0 0.0
  %1674 = vmatpush2.msra.mxu0 0.0
  %1675 = vmatprep.subr.mxu0 0.0
  %1676 = vmatpush2.msra.mxu0 0.0
  %1677 = vmatprep.subr.mxu0 0.0
  %1678 = vmatpush2.msra.mxu0 0.0
  %1679 = vmatprep.subr.mxu0 0.0
  %1680 = vmatpush2.msra.mxu0 0.0
  %1681 = vmatprep.subr.mxu0 0.0
  %1682 = vmatpush2.msra.mxu0 0.0
  %1683 = vmatprep.subr.mxu0 0.0
  %1684 = vmatpush2.msra.mxu0 0.0
  %1685 = vmatprep.mubr.f32.mxu0 0.0
  %1686 = vmatmul.mubr.f32.gmra.mxu0 %v1476
  %v1687 = vpop.f32.mrf.mxu0
  %v1688 = vadd.f32 0.0, %v1687
  %v1689 = vpop.f32.mrf.mxu0
  %1690 = vmatprep.mubr.f32.mxu0 0.0
  %1691 = vmatmul.mubr.f32.gmra.mxu0 %v1479
  %v1692 = vpop.f32.mrf.mxu0
  %v1693 = vadd.f32 0.0, %v1692
  %v1694 = vpop.f32.mrf.mxu0
  %1695 = vmatprep.mubr.f32.mxu0 0.0
  %1696 = vmatmul.mubr.f32.gmra.mxu0 %v1482
  %v1697 = vpop.f32.mrf.mxu0
  %v1698 = vadd.f32 0.0, %v1697
  %v1699 = vpop.f32.mrf.mxu0
  %1700 = vmatprep.mubr.f32.mxu0 0.0
  %1701 = vmatmul.mubr.f32.gmra.mxu0 %v1485
  %v1702 = vpop.f32.mrf.mxu0
  %v1703 = vadd.f32 0.0, %v1702
  %v1704 = vpop.f32.mrf.mxu0
  %1705 = vmatprep.mubr.f32.mxu0 0.0
  %1706 = vmatmul.mubr.f32.gmra.mxu0 %v1488
  %v1707 = vpop.f32.mrf.mxu0
  %v1708 = vadd.f32 0.0, %v1707
  %v1709 = vpop.f32.mrf.mxu0
  %1710 = vmatprep.mubr.f32.mxu0 0.0
  %1711 = vmatmul.mubr.f32.gmra.mxu0 %v1491
  %v1712 = vpop.f32.mrf.mxu0
  %v1713 = vadd.f32 0.0, %v1712
  %v1714 = vpop.f32.mrf.mxu0
  %1715 = vmatprep.mubr.f32.mxu0 0.0
  %1716 = vmatmul.mubr.f32.gmra.mxu0 %v1494
  %v1717 = vpop.f32.mrf.mxu0
  %v1718 = vadd.f32 0.0, %v1717
  %v1719 = vpop.f32.mrf.mxu0
  %1720 = vmatprep.mubr.f32.mxu0 0.0
  %1721 = vmatmul.mubr.f32.gmra.mxu0 %v1497
  %v1722 = vpop.f32.mrf.mxu0
  %v1723 = vadd.f32 0.0, %v1722
  %v1724 = vpop.f32.mrf.mxu0
  %1725 = vdwg.mxu0
  %v1726 = vadd.f32 %v1432, %v1575
  %v1727 = vadd.f32 %v1433, %v1577
  %v1728 = vadd.f32 %v1434, %v1688
  %v1729 = vadd.f32 %v1435, %v1581
  %v1730 = vadd.f32 %v1436, %v1583
  %v1731 = vadd.f32 %v1437, %v1693
  %v1732 = vadd.f32 %v1438, %v1587
  %v1733 = vadd.f32 %v1439, %v1589
  %v1734 = vadd.f32 %v1440, %v1698
  %v1735 = vadd.f32 %v1441, %v1593
  %v1736 = vadd.f32 %v1442, %v1595
  %v1737 = vadd.f32 %v1443, %v1703
  %v1738 = vadd.f32 %v1444, %v1599
  %v1739 = vadd.f32 %v1445, %v1601
  %v1740 = vadd.f32 %v1446, %v1708
  %v1741 = vadd.f32 %v1447, %v1605
  %v1742 = vadd.f32 %v1448, %v1607
  %v1743 = vadd.f32 %v1449, %v1713
  %v1744 = vadd.f32 %v1450, %v1611
  %v1745 = vadd.f32 %v1451, %v1613
  %v1746 = vadd.f32 %v1452, %v1718
  %v1747 = vadd.f32 %v1453, %v1617
  %v1748 = vadd.f32 %v1454, %v1619
  %v1749 = vadd.f32 %v1455, %v1723
  %s1750 = scalar_lea.vmem %s1, 384
  %v1751 = vld [vmem:[%s1750] sm:$0xff]
  %v1752 = vld [vmem:[%s1750 + $0x8] sm:$0xff]
  %v1753 = vld [vmem:[%s1750 + $0x10] sm:$0xff]
  %v1754 = vld [vmem:[%s1750 + $0x18] sm:$0xff]
  %v1755 = vld [vmem:[%s1750 + $0x20] sm:$0xff]
  %v1756 = vld [vmem:[%s1750 + $0x28] sm:$0xff]
  %v1757 = vld [vmem:[%s1750 + $0x30] sm:$0xff]
  %v1758 = vld [vmem:[%s1750 + $0x38] sm:$0xff]
  %1759 = vrot.lane.b32.xlu0 %v49, 122
  %v1760 = vpop.permute.xlu0 %1759
  %1761 = vrot.lane.b32.xlu0 %v57, 122
  %v1762 = vpop.permute.xlu0 %1761
  %1763 = vrot.lane.b32.xlu0 %v56, 122
  %v1764 = vpop.permute.xlu0 %1763
  %vm1765 = vcmp.lt.s32.totalorder %v68, 122
  %v1766 = vsel %vm1765, %v1762, %v1764
  %v1767 = vsel %vm1765, %v1760, %v1762
  %v1768 = vsel %vm1765, %v1764, %v1760
  %v1770 = vsel %vm73, %v1751, 0
  %v1773 = vsel %vm73, %v1752, 0
  %v1776 = vsel %vm73, %v1753, 0
  %v1779 = vsel %vm73, %v1754, 0
  %v1782 = vsel %vm73, %v1755, 0
  %v1785 = vsel %vm73, %v1756, 0
  %v1788 = vsel %vm73, %v1757, 0
  %v1791 = vsel %vm73, %v1758, 0
  %v1794 = vsel %vm98, %v1767, 0
  %v1797 = vsel %vm98, %v1766, 0
  %v1800 = vsel %vm98, %v1768, 0
  %1802 = vmatprep.subr.mxu0 0.0
  %1803 = vmatpush1.msra.mxu0 0.0
  %1804 = vmatprep.subr.mxu0 0.0
  %1805 = vmatpush1.msra.mxu0 0.0
  %1806 = vmatprep.subr.mxu0 0.0
  %1807 = vmatpush1.msra.mxu0 0.0
  %1808 = vmatprep.subr.mxu0 0.0
  %1809 = vmatpush1.msra.mxu0 0.0
  %1810 = vmatprep.subr.mxu0 0.0
  %1811 = vmatpush1.msra.mxu0 0.0
  %1812 = vmatprep.subr.mxu0 0.0
  %1813 = vmatpush1.msra.mxu0 0.0
  %1814 = vmatprep.subr.mxu0 0.0
  %1815 = vmatpush1.msra.mxu0 0.0
  %1816 = vmatprep.subr.mxu0 0.0
  %1817 = vmatpush1.msra.mxu0 0.0
  %1818 = vmatprep.subr.mxu0 0.0
  %1819 = vmatpush1.msra.mxu0 0.0
  %1820 = vmatprep.subr.mxu0 0.0
  %1821 = vmatpush1.msra.mxu0 0.0
  %1822 = vmatprep.subr.mxu0 0.0
  %1823 = vmatpush1.msra.mxu0 0.0
  %1824 = vmatprep.subr.mxu0 0.0
  %1825 = vmatpush1.msra.mxu0 0.0
  %1826 = vmatprep.subr.mxu0 0.0
  %1827 = vmatpush1.msra.mxu0 0.0
  %1828 = vmatprep.subr.mxu0 0.0
  %1829 = vmatpush1.msra.mxu0 0.0
  %1830 = vmatprep.subr.mxu0 0.0
  %1831 = vmatpush1.msra.mxu0 0.0
  %1832 = vmatprep.subr.mxu0 %v1797
  %1833 = vmatpush1.msra.mxu0 %v1794
  %1834 = vmatprep.subr.mxu0 0.0
  %1835 = vmatpush2.msra.mxu0 0.0
  %1836 = vmatprep.subr.mxu0 0.0
  %1837 = vmatpush2.msra.mxu0 0.0
  %1838 = vmatprep.subr.mxu0 0.0
  %1839 = vmatpush2.msra.mxu0 0.0
  %1840 = vmatprep.subr.mxu0 0.0
  %1841 = vmatpush2.msra.mxu0 0.0
  %1842 = vmatprep.subr.mxu0 0.0
  %1843 = vmatpush2.msra.mxu0 0.0
  %1844 = vmatprep.subr.mxu0 0.0
  %1845 = vmatpush2.msra.mxu0 0.0
  %1846 = vmatprep.subr.mxu0 0.0
  %1847 = vmatpush2.msra.mxu0 0.0
  %1848 = vmatprep.subr.mxu0 0.0
  %1849 = vmatpush2.msra.mxu0 0.0
  %1850 = vmatprep.subr.mxu0 0.0
  %1851 = vmatpush2.msra.mxu0 0.0
  %1852 = vmatprep.subr.mxu0 0.0
  %1853 = vmatpush2.msra.mxu0 0.0
  %1854 = vmatprep.subr.mxu0 0.0
  %1855 = vmatpush2.msra.mxu0 0.0
  %1856 = vmatprep.subr.mxu0 0.0
  %1857 = vmatpush2.msra.mxu0 0.0
  %1858 = vmatprep.subr.mxu0 0.0
  %1859 = vmatpush2.msra.mxu0 0.0
  %1860 = vmatprep.subr.mxu0 0.0
  %1861 = vmatpush2.msra.mxu0 0.0
  %1862 = vmatprep.subr.mxu0 0.0
  %1863 = vmatpush2.msra.mxu0 0.0
  %1864 = vmatprep.subr.mxu0 0.0
  %1865 = vmatpush2.msra.mxu0 0.0
  %1866 = vmatprep.mubr.f32.mxu0 0.0
  %1867 = vmatmul.mubr.f32.gmra.mxu0 %v1770
  %v1868 = vpop.f32.mrf.mxu0
  %v1869 = vadd.f32 0.0, %v1868
  %v1870 = vpop.f32.mrf.mxu0
  %v1871 = vadd.f32 0.0, %v1870
  %1872 = vmatprep.mubr.f32.mxu0 0.0
  %1873 = vmatmul.mubr.f32.gmra.mxu0 %v1773
  %v1874 = vpop.f32.mrf.mxu0
  %v1875 = vadd.f32 0.0, %v1874
  %v1876 = vpop.f32.mrf.mxu0
  %v1877 = vadd.f32 0.0, %v1876
  %1878 = vmatprep.mubr.f32.mxu0 0.0
  %1879 = vmatmul.mubr.f32.gmra.mxu0 %v1776
  %v1880 = vpop.f32.mrf.mxu0
  %v1881 = vadd.f32 0.0, %v1880
  %v1882 = vpop.f32.mrf.mxu0
  %v1883 = vadd.f32 0.0, %v1882
  %1884 = vmatprep.mubr.f32.mxu0 0.0
  %1885 = vmatmul.mubr.f32.gmra.mxu0 %v1779
  %v1886 = vpop.f32.mrf.mxu0
  %v1887 = vadd.f32 0.0, %v1886
  %v1888 = vpop.f32.mrf.mxu0
  %v1889 = vadd.f32 0.0, %v1888
  %1890 = vmatprep.mubr.f32.mxu0 0.0
  %1891 = vmatmul.mubr.f32.gmra.mxu0 %v1782
  %v1892 = vpop.f32.mrf.mxu0
  %v1893 = vadd.f32 0.0, %v1892
  %v1894 = vpop.f32.mrf.mxu0
  %v1895 = vadd.f32 0.0, %v1894
  %1896 = vmatprep.mubr.f32.mxu0 0.0
  %1897 = vmatmul.mubr.f32.gmra.mxu0 %v1785
  %v1898 = vpop.f32.mrf.mxu0
  %v1899 = vadd.f32 0.0, %v1898
  %v1900 = vpop.f32.mrf.mxu0
  %v1901 = vadd.f32 0.0, %v1900
  %1902 = vmatprep.mubr.f32.mxu0 0.0
  %1903 = vmatmul.mubr.f32.gmra.mxu0 %v1788
  %v1904 = vpop.f32.mrf.mxu0
  %v1905 = vadd.f32 0.0, %v1904
  %v1906 = vpop.f32.mrf.mxu0
  %v1907 = vadd.f32 0.0, %v1906
  %1908 = vmatprep.mubr.f32.mxu0 0.0
  %1909 = vmatmul.mubr.f32.gmra.mxu0 %v1791
  %v1910 = vpop.f32.mrf.mxu0
  %v1911 = vadd.f32 0.0, %v1910
  %v1912 = vpop.f32.mrf.mxu0
  %v1913 = vadd.f32 0.0, %v1912
  %1914 = vdwg.mxu0
  %1915 = vmatprep.subr.mxu0 0.0
  %1916 = vmatpush1.msra.mxu0 0.0
  %1917 = vmatprep.subr.mxu0 0.0
  %1918 = vmatpush1.msra.mxu0 0.0
  %1919 = vmatprep.subr.mxu0 0.0
  %1920 = vmatpush1.msra.mxu0 0.0
  %1921 = vmatprep.subr.mxu0 0.0
  %1922 = vmatpush1.msra.mxu0 0.0
  %1923 = vmatprep.subr.mxu0 0.0
  %1924 = vmatpush1.msra.mxu0 0.0
  %1925 = vmatprep.subr.mxu0 0.0
  %1926 = vmatpush1.msra.mxu0 0.0
  %1927 = vmatprep.subr.mxu0 0.0
  %1928 = vmatpush1.msra.mxu0 0.0
  %1929 = vmatprep.subr.mxu0 0.0
  %1930 = vmatpush1.msra.mxu0 0.0
  %1931 = vmatprep.subr.mxu0 0.0
  %1932 = vmatpush1.msra.mxu0 0.0
  %1933 = vmatprep.subr.mxu0 0.0
  %1934 = vmatpush1.msra.mxu0 0.0
  %1935 = vmatprep.subr.mxu0 0.0
  %1936 = vmatpush1.msra.mxu0 0.0
  %1937 = vmatprep.subr.mxu0 0.0
  %1938 = vmatpush1.msra.mxu0 0.0
  %1939 = vmatprep.subr.mxu0 0.0
  %1940 = vmatpush1.msra.mxu0 0.0
  %1941 = vmatprep.subr.mxu0 0.0
  %1942 = vmatpush1.msra.mxu0 0.0
  %1943 = vmatprep.subr.mxu0 0.0
  %1944 = vmatpush1.msra.mxu0 0.0
  %1945 = vmatprep.subr.mxu0 0.0
  %1946 = vmatpush1.msra.mxu0 %v1800
  %1947 = vmatprep.subr.mxu0 0.0
  %1948 = vmatpush2.msra.mxu0 0.0
  %1949 = vmatprep.subr.mxu0 0.0
  %1950 = vmatpush2.msra.mxu0 0.0
  %1951 = vmatprep.subr.mxu0 0.0
  %1952 = vmatpush2.msra.mxu0 0.0
  %1953 = vmatprep.subr.mxu0 0.0
  %1954 = vmatpush2.msra.mxu0 0.0
  %1955 = vmatprep.subr.mxu0 0.0
  %1956 = vmatpush2.msra.mxu0 0.0
  %1957 = vmatprep.subr.mxu0 0.0
  %1958 = vmatpush2.msra.mxu0 0.0
  %1959 = vmatprep.subr.mxu0 0.0
  %1960 = vmatpush2.msra.mxu0 0.0
  %1961 = vmatprep.subr.mxu0 0.0
  %1962 = vmatpush2.msra.mxu0 0.0
  %1963 = vmatprep.subr.mxu0 0.0
  %1964 = vmatpush2.msra.mxu0 0.0
  %1965 = vmatprep.subr.mxu0 0.0
  %1966 = vmatpush2.msra.mxu0 0.0
  %1967 = vmatprep.subr.mxu0 0.0
  %1968 = vmatpush2.msra.mxu0 0.0
  %1969 = vmatprep.subr.mxu0 0.0
  %1970 = vmatpush2.msra.mxu0 0.0
  %1971 = vmatprep.subr.mxu0 0.0
  %1972 = vmatpush2.msra.mxu0 0.0
  %1973 = vmatprep.subr.mxu0 0.0
  %1974 = vmatpush2.msra.mxu0 0.0
  %1975 = vmatprep.subr.mxu0 0.0
  %1976 = vmatpush2.msra.mxu0 0.0
  %1977 = vmatprep.subr.mxu0 0.0
  %1978 = vmatpush2.msra.mxu0 0.0
  %1979 = vmatprep.mubr.f32.mxu0 0.0
  %1980 = vmatmul.mubr.f32.gmra.mxu0 %v1770
  %v1981 = vpop.f32.mrf.mxu0
  %v1982 = vadd.f32 0.0, %v1981
  %v1983 = vpop.f32.mrf.mxu0
  %1984 = vmatprep.mubr.f32.mxu0 0.0
  %1985 = vmatmul.mubr.f32.gmra.mxu0 %v1773
  %v1986 = vpop.f32.mrf.mxu0
  %v1987 = vadd.f32 0.0, %v1986
  %v1988 = vpop.f32.mrf.mxu0
  %1989 = vmatprep.mubr.f32.mxu0 0.0
  %1990 = vmatmul.mubr.f32.gmra.mxu0 %v1776
  %v1991 = vpop.f32.mrf.mxu0
  %v1992 = vadd.f32 0.0, %v1991
  %v1993 = vpop.f32.mrf.mxu0
  %1994 = vmatprep.mubr.f32.mxu0 0.0
  %1995 = vmatmul.mubr.f32.gmra.mxu0 %v1779
  %v1996 = vpop.f32.mrf.mxu0
  %v1997 = vadd.f32 0.0, %v1996
  %v1998 = vpop.f32.mrf.mxu0
  %1999 = vmatprep.mubr.f32.mxu0 0.0
  %2000 = vmatmul.mubr.f32.gmra.mxu0 %v1782
  %v2001 = vpop.f32.mrf.mxu0
  %v2002 = vadd.f32 0.0, %v2001
  %v2003 = vpop.f32.mrf.mxu0
  %2004 = vmatprep.mubr.f32.mxu0 0.0
  %2005 = vmatmul.mubr.f32.gmra.mxu0 %v1785
  %v2006 = vpop.f32.mrf.mxu0
  %v2007 = vadd.f32 0.0, %v2006
  %v2008 = vpop.f32.mrf.mxu0
  %2009 = vmatprep.mubr.f32.mxu0 0.0
  %2010 = vmatmul.mubr.f32.gmra.mxu0 %v1788
  %v2011 = vpop.f32.mrf.mxu0
  %v2012 = vadd.f32 0.0, %v2011
  %v2013 = vpop.f32.mrf.mxu0
  %2014 = vmatprep.mubr.f32.mxu0 0.0
  %2015 = vmatmul.mubr.f32.gmra.mxu0 %v1791
  %v2016 = vpop.f32.mrf.mxu0
  %v2017 = vadd.f32 0.0, %v2016
  %v2018 = vpop.f32.mrf.mxu0
  %2019 = vdwg.mxu0
  %v2020 = vadd.f32 %v1726, %v1869
  %v2021 = vadd.f32 %v1727, %v1871
  %v2022 = vadd.f32 %v1728, %v1982
  %v2023 = vadd.f32 %v1729, %v1875
  %v2024 = vadd.f32 %v1730, %v1877
  %v2025 = vadd.f32 %v1731, %v1987
  %v2026 = vadd.f32 %v1732, %v1881
  %v2027 = vadd.f32 %v1733, %v1883
  %v2028 = vadd.f32 %v1734, %v1992
  %v2029 = vadd.f32 %v1735, %v1887
  %v2030 = vadd.f32 %v1736, %v1889
  %v2031 = vadd.f32 %v1737, %v1997
  %v2032 = vadd.f32 %v1738, %v1893
  %v2033 = vadd.f32 %v1739, %v1895
  %v2034 = vadd.f32 %v1740, %v2002
  %v2035 = vadd.f32 %v1741, %v1899
  %v2036 = vadd.f32 %v1742, %v1901
  %v2037 = vadd.f32 %v1743, %v2007
  %v2038 = vadd.f32 %v1744, %v1905
  %v2039 = vadd.f32 %v1745, %v1907
  %v2040 = vadd.f32 %v1746, %v2012
  %v2041 = vadd.f32 %v1747, %v1911
  %v2042 = vadd.f32 %v1748, %v1913
  %v2043 = vadd.f32 %v1749, %v2017
  %s2044 = scalar_lea.vmem %s1, 448
  %v2045 = vld [vmem:[%s2044] sm:$0xff]
  %v2046 = vld [vmem:[%s2044 + $0x8] sm:$0xff]
  %v2047 = vld [vmem:[%s2044 + $0x10] sm:$0xff]
  %v2048 = vld [vmem:[%s2044 + $0x18] sm:$0xff]
  %v2049 = vld [vmem:[%s2044 + $0x20] sm:$0xff]
  %v2050 = vld [vmem:[%s2044 + $0x28] sm:$0xff]
  %v2051 = vld [vmem:[%s2044 + $0x30] sm:$0xff]
  %v2052 = vld [vmem:[%s2044 + $0x38] sm:$0xff]
  %2053 = vrot.lane.b32.xlu0 %v49, 121
  %v2054 = vpop.permute.xlu0 %2053
  %2055 = vrot.lane.b32.xlu0 %v57, 121
  %v2056 = vpop.permute.xlu0 %2055
  %2057 = vrot.lane.b32.xlu0 %v56, 121
  %v2058 = vpop.permute.xlu0 %2057
  %vm2059 = vcmp.lt.s32.totalorder %v68, 121
  %v2060 = vsel %vm2059, %v2056, %v2058
  %v2061 = vsel %vm2059, %v2054, %v2056
  %v2062 = vsel %vm2059, %v2058, %v2054
  %v2064 = vsel %vm73, %v2045, 0
  %v2067 = vsel %vm73, %v2046, 0
  %v2070 = vsel %vm73, %v2047, 0
  %v2073 = vsel %vm73, %v2048, 0
  %v2076 = vsel %vm73, %v2049, 0
  %v2079 = vsel %vm73, %v2050, 0
  %v2082 = vsel %vm73, %v2051, 0
  %v2085 = vsel %vm73, %v2052, 0
  %v2088 = vsel %vm98, %v2061, 0
  %v2091 = vsel %vm98, %v2060, 0
  %v2094 = vsel %vm98, %v2062, 0
  %2096 = vmatprep.subr.mxu0 0.0
  %2097 = vmatpush1.msra.mxu0 0.0
  %2098 = vmatprep.subr.mxu0 0.0
  %2099 = vmatpush1.msra.mxu0 0.0
  %2100 = vmatprep.subr.mxu0 0.0
  %2101 = vmatpush1.msra.mxu0 0.0
  %2102 = vmatprep.subr.mxu0 0.0
  %2103 = vmatpush1.msra.mxu0 0.0
  %2104 = vmatprep.subr.mxu0 0.0
  %2105 = vmatpush1.msra.mxu0 0.0
  %2106 = vmatprep.subr.mxu0 0.0
  %2107 = vmatpush1.msra.mxu0 0.0
  %2108 = vmatprep.subr.mxu0 0.0
  %2109 = vmatpush1.msra.mxu0 0.0
  %2110 = vmatprep.subr.mxu0 0.0
  %2111 = vmatpush1.msra.mxu0 0.0
  %2112 = vmatprep.subr.mxu0 0.0
  %2113 = vmatpush1.msra.mxu0 0.0
  %2114 = vmatprep.subr.mxu0 0.0
  %2115 = vmatpush1.msra.mxu0 0.0
  %2116 = vmatprep.subr.mxu0 0.0
  %2117 = vmatpush1.msra.mxu0 0.0
  %2118 = vmatprep.subr.mxu0 0.0
  %2119 = vmatpush1.msra.mxu0 0.0
  %2120 = vmatprep.subr.mxu0 0.0
  %2121 = vmatpush1.msra.mxu0 0.0
  %2122 = vmatprep.subr.mxu0 0.0
  %2123 = vmatpush1.msra.mxu0 0.0
  %2124 = vmatprep.subr.mxu0 0.0
  %2125 = vmatpush1.msra.mxu0 0.0
  %2126 = vmatprep.subr.mxu0 %v2091
  %2127 = vmatpush1.msra.mxu0 %v2088
  %2128 = vmatprep.subr.mxu0 0.0
  %2129 = vmatpush2.msra.mxu0 0.0
  %2130 = vmatprep.subr.mxu0 0.0
  %2131 = vmatpush2.msra.mxu0 0.0
  %2132 = vmatprep.subr.mxu0 0.0
  %2133 = vmatpush2.msra.mxu0 0.0
  %2134 = vmatprep.subr.mxu0 0.0
  %2135 = vmatpush2.msra.mxu0 0.0
  %2136 = vmatprep.subr.mxu0 0.0
  %2137 = vmatpush2.msra.mxu0 0.0
  %2138 = vmatprep.subr.mxu0 0.0
  %2139 = vmatpush2.msra.mxu0 0.0
  %2140 = vmatprep.subr.mxu0 0.0
  %2141 = vmatpush2.msra.mxu0 0.0
  %2142 = vmatprep.subr.mxu0 0.0
  %2143 = vmatpush2.msra.mxu0 0.0
  %2144 = vmatprep.subr.mxu0 0.0
  %2145 = vmatpush2.msra.mxu0 0.0
  %2146 = vmatprep.subr.mxu0 0.0
  %2147 = vmatpush2.msra.mxu0 0.0
  %2148 = vmatprep.subr.mxu0 0.0
  %2149 = vmatpush2.msra.mxu0 0.0
  %2150 = vmatprep.subr.mxu0 0.0
  %2151 = vmatpush2.msra.mxu0 0.0
  %2152 = vmatprep.subr.mxu0 0.0
  %2153 = vmatpush2.msra.mxu0 0.0
  %2154 = vmatprep.subr.mxu0 0.0
  %2155 = vmatpush2.msra.mxu0 0.0
  %2156 = vmatprep.subr.mxu0 0.0
  %2157 = vmatpush2.msra.mxu0 0.0
  %2158 = vmatprep.subr.mxu0 0.0
  %2159 = vmatpush2.msra.mxu0 0.0
  %2160 = vmatprep.mubr.f32.mxu0 0.0
  %2161 = vmatmul.mubr.f32.gmra.mxu0 %v2064
  %v2162 = vpop.f32.mrf.mxu0
  %v2163 = vadd.f32 0.0, %v2162
  %v2164 = vpop.f32.mrf.mxu0
  %v2165 = vadd.f32 0.0, %v2164
  %2166 = vmatprep.mubr.f32.mxu0 0.0
  %2167 = vmatmul.mubr.f32.gmra.mxu0 %v2067
  %v2168 = vpop.f32.mrf.mxu0
  %v2169 = vadd.f32 0.0, %v2168
  %v2170 = vpop.f32.mrf.mxu0
  %v2171 = vadd.f32 0.0, %v2170
  %2172 = vmatprep.mubr.f32.mxu0 0.0
  %2173 = vmatmul.mubr.f32.gmra.mxu0 %v2070
  %v2174 = vpop.f32.mrf.mxu0
  %v2175 = vadd.f32 0.0, %v2174
  %v2176 = vpop.f32.mrf.mxu0
  %v2177 = vadd.f32 0.0, %v2176
  %2178 = vmatprep.mubr.f32.mxu0 0.0
  %2179 = vmatmul.mubr.f32.gmra.mxu0 %v2073
  %v2180 = vpop.f32.mrf.mxu0
  %v2181 = vadd.f32 0.0, %v2180
  %v2182 = vpop.f32.mrf.mxu0
  %v2183 = vadd.f32 0.0, %v2182
  %2184 = vmatprep.mubr.f32.mxu0 0.0
  %2185 = vmatmul.mubr.f32.gmra.mxu0 %v2076
  %v2186 = vpop.f32.mrf.mxu0
  %v2187 = vadd.f32 0.0, %v2186
  %v2188 = vpop.f32.mrf.mxu0
  %v2189 = vadd.f32 0.0, %v2188
  %2190 = vmatprep.mubr.f32.mxu0 0.0
  %2191 = vmatmul.mubr.f32.gmra.mxu0 %v2079
  %v2192 = vpop.f32.mrf.mxu0
  %v2193 = vadd.f32 0.0, %v2192
  %v2194 = vpop.f32.mrf.mxu0
  %v2195 = vadd.f32 0.0, %v2194
  %2196 = vmatprep.mubr.f32.mxu0 0.0
  %2197 = vmatmul.mubr.f32.gmra.mxu0 %v2082
  %v2198 = vpop.f32.mrf.mxu0
  %v2199 = vadd.f32 0.0, %v2198
  %v2200 = vpop.f32.mrf.mxu0
  %v2201 = vadd.f32 0.0, %v2200
  %2202 = vmatprep.mubr.f32.mxu0 0.0
  %2203 = vmatmul.mubr.f32.gmra.mxu0 %v2085
  %v2204 = vpop.f32.mrf.mxu0
  %v2205 = vadd.f32 0.0, %v2204
  %v2206 = vpop.f32.mrf.mxu0
  %v2207 = vadd.f32 0.0, %v2206
  %2208 = vdwg.mxu0
  %2209 = vmatprep.subr.mxu0 0.0
  %2210 = vmatpush1.msra.mxu0 0.0
  %2211 = vmatprep.subr.mxu0 0.0
  %2212 = vmatpush1.msra.mxu0 0.0
  %2213 = vmatprep.subr.mxu0 0.0
  %2214 = vmatpush1.msra.mxu0 0.0
  %2215 = vmatprep.subr.mxu0 0.0
  %2216 = vmatpush1.msra.mxu0 0.0
  %2217 = vmatprep.subr.mxu0 0.0
  %2218 = vmatpush1.msra.mxu0 0.0
  %2219 = vmatprep.subr.mxu0 0.0
  %2220 = vmatpush1.msra.mxu0 0.0
  %2221 = vmatprep.subr.mxu0 0.0
  %2222 = vmatpush1.msra.mxu0 0.0
  %2223 = vmatprep.subr.mxu0 0.0
  %2224 = vmatpush1.msra.mxu0 0.0
  %2225 = vmatprep.subr.mxu0 0.0
  %2226 = vmatpush1.msra.mxu0 0.0
  %2227 = vmatprep.subr.mxu0 0.0
  %2228 = vmatpush1.msra.mxu0 0.0
  %2229 = vmatprep.subr.mxu0 0.0
  %2230 = vmatpush1.msra.mxu0 0.0
  %2231 = vmatprep.subr.mxu0 0.0
  %2232 = vmatpush1.msra.mxu0 0.0
  %2233 = vmatprep.subr.mxu0 0.0
  %2234 = vmatpush1.msra.mxu0 0.0
  %2235 = vmatprep.subr.mxu0 0.0
  %2236 = vmatpush1.msra.mxu0 0.0
  %2237 = vmatprep.subr.mxu0 0.0
  %2238 = vmatpush1.msra.mxu0 0.0
  %2239 = vmatprep.subr.mxu0 0.0
  %2240 = vmatpush1.msra.mxu0 %v2094
  %2241 = vmatprep.subr.mxu0 0.0
  %2242 = vmatpush2.msra.mxu0 0.0
  %2243 = vmatprep.subr.mxu0 0.0
  %2244 = vmatpush2.msra.mxu0 0.0
  %2245 = vmatprep.subr.mxu0 0.0
  %2246 = vmatpush2.msra.mxu0 0.0
  %2247 = vmatprep.subr.mxu0 0.0
  %2248 = vmatpush2.msra.mxu0 0.0
  %2249 = vmatprep.subr.mxu0 0.0
  %2250 = vmatpush2.msra.mxu0 0.0
  %2251 = vmatprep.subr.mxu0 0.0
  %2252 = vmatpush2.msra.mxu0 0.0
  %2253 = vmatprep.subr.mxu0 0.0
  %2254 = vmatpush2.msra.mxu0 0.0
  %2255 = vmatprep.subr.mxu0 0.0
  %2256 = vmatpush2.msra.mxu0 0.0
  %2257 = vmatprep.subr.mxu0 0.0
  %2258 = vmatpush2.msra.mxu0 0.0
  %2259 = vmatprep.subr.mxu0 0.0
  %2260 = vmatpush2.msra.mxu0 0.0
  %2261 = vmatprep.subr.mxu0 0.0
  %2262 = vmatpush2.msra.mxu0 0.0
  %2263 = vmatprep.subr.mxu0 0.0
  %2264 = vmatpush2.msra.mxu0 0.0
  %2265 = vmatprep.subr.mxu0 0.0
  %2266 = vmatpush2.msra.mxu0 0.0
  %2267 = vmatprep.subr.mxu0 0.0
  %2268 = vmatpush2.msra.mxu0 0.0
  %2269 = vmatprep.subr.mxu0 0.0
  %2270 = vmatpush2.msra.mxu0 0.0
  %2271 = vmatprep.subr.mxu0 0.0
  %2272 = vmatpush2.msra.mxu0 0.0
  %2273 = vmatprep.mubr.f32.mxu0 0.0
  %2274 = vmatmul.mubr.f32.gmra.mxu0 %v2064
  %v2275 = vpop.f32.mrf.mxu0
  %v2276 = vadd.f32 0.0, %v2275
  %v2277 = vpop.f32.mrf.mxu0
  %2278 = vmatprep.mubr.f32.mxu0 0.0
  %2279 = vmatmul.mubr.f32.gmra.mxu0 %v2067
  %v2280 = vpop.f32.mrf.mxu0
  %v2281 = vadd.f32 0.0, %v2280
  %v2282 = vpop.f32.mrf.mxu0
  %2283 = vmatprep.mubr.f32.mxu0 0.0
  %2284 = vmatmul.mubr.f32.gmra.mxu0 %v2070
  %v2285 = vpop.f32.mrf.mxu0
  %v2286 = vadd.f32 0.0, %v2285
  %v2287 = vpop.f32.mrf.mxu0
  %2288 = vmatprep.mubr.f32.mxu0 0.0
  %2289 = vmatmul.mubr.f32.gmra.mxu0 %v2073
  %v2290 = vpop.f32.mrf.mxu0
  %v2291 = vadd.f32 0.0, %v2290
  %v2292 = vpop.f32.mrf.mxu0
  %2293 = vmatprep.mubr.f32.mxu0 0.0
  %2294 = vmatmul.mubr.f32.gmra.mxu0 %v2076
  %v2295 = vpop.f32.mrf.mxu0
  %v2296 = vadd.f32 0.0, %v2295
  %v2297 = vpop.f32.mrf.mxu0
  %2298 = vmatprep.mubr.f32.mxu0 0.0
  %2299 = vmatmul.mubr.f32.gmra.mxu0 %v2079
  %v2300 = vpop.f32.mrf.mxu0
  %v2301 = vadd.f32 0.0, %v2300
  %v2302 = vpop.f32.mrf.mxu0
  %2303 = vmatprep.mubr.f32.mxu0 0.0
  %2304 = vmatmul.mubr.f32.gmra.mxu0 %v2082
  %v2305 = vpop.f32.mrf.mxu0
  %v2306 = vadd.f32 0.0, %v2305
  %v2307 = vpop.f32.mrf.mxu0
  %2308 = vmatprep.mubr.f32.mxu0 0.0
  %2309 = vmatmul.mubr.f32.gmra.mxu0 %v2085
  %v2310 = vpop.f32.mrf.mxu0
  %v2311 = vadd.f32 0.0, %v2310
  %v2312 = vpop.f32.mrf.mxu0
  %2313 = vdwg.mxu0
  %v2314 = vadd.f32 %v2020, %v2163
  %v2315 = vadd.f32 %v2021, %v2165
  %v2316 = vadd.f32 %v2022, %v2276
  %v2317 = vadd.f32 %v2023, %v2169
  %v2318 = vadd.f32 %v2024, %v2171
  %v2319 = vadd.f32 %v2025, %v2281
  %v2320 = vadd.f32 %v2026, %v2175
  %v2321 = vadd.f32 %v2027, %v2177
  %v2322 = vadd.f32 %v2028, %v2286
  %v2323 = vadd.f32 %v2029, %v2181
  %v2324 = vadd.f32 %v2030, %v2183
  %v2325 = vadd.f32 %v2031, %v2291
  %v2326 = vadd.f32 %v2032, %v2187
  %v2327 = vadd.f32 %v2033, %v2189
  %v2328 = vadd.f32 %v2034, %v2296
  %v2329 = vadd.f32 %v2035, %v2193
  %v2330 = vadd.f32 %v2036, %v2195
  %v2331 = vadd.f32 %v2037, %v2301
  %v2332 = vadd.f32 %v2038, %v2199
  %v2333 = vadd.f32 %v2039, %v2201
  %v2334 = vadd.f32 %v2040, %v2306
  %v2335 = vadd.f32 %v2041, %v2205
  %v2336 = vadd.f32 %v2042, %v2207
  %v2337 = vadd.f32 %v2043, %v2311
  %s2338 = scalar_lea.vmem %s1, 512
  %v2339 = vld [vmem:[%s2338] sm:$0xff]
  %v2340 = vld [vmem:[%s2338 + $0x8] sm:$0xff]
  %v2341 = vld [vmem:[%s2338 + $0x10] sm:$0xff]
  %v2342 = vld [vmem:[%s2338 + $0x18] sm:$0xff]
  %v2343 = vld [vmem:[%s2338 + $0x20] sm:$0xff]
  %v2344 = vld [vmem:[%s2338 + $0x28] sm:$0xff]
  %v2345 = vld [vmem:[%s2338 + $0x30] sm:$0xff]
  %v2346 = vld [vmem:[%s2338 + $0x38] sm:$0xff]
  %2347 = vrot.lane.b32.xlu0 %v49, 120
  %v2348 = vpop.permute.xlu0 %2347
  %2349 = vrot.lane.b32.xlu0 %v57, 120
  %v2350 = vpop.permute.xlu0 %2349
  %2351 = vrot.lane.b32.xlu0 %v56, 120
  %v2352 = vpop.permute.xlu0 %2351
  %vm2353 = vcmp.lt.s32.totalorder %v68, 120
  %v2354 = vsel %vm2353, %v2350, %v2352
  %v2355 = vsel %vm2353, %v2348, %v2350
  %v2356 = vsel %vm2353, %v2352, %v2348
  %v2358 = vsel %vm73, %v2339, 0
  %v2361 = vsel %vm73, %v2340, 0
  %v2364 = vsel %vm73, %v2341, 0
  %v2367 = vsel %vm73, %v2342, 0
  %v2370 = vsel %vm73, %v2343, 0
  %v2373 = vsel %vm73, %v2344, 0
  %v2376 = vsel %vm73, %v2345, 0
  %v2379 = vsel %vm73, %v2346, 0
  %v2382 = vsel %vm98, %v2355, 0
  %v2385 = vsel %vm98, %v2354, 0
  %v2388 = vsel %vm98, %v2356, 0
  %2390 = vmatprep.subr.mxu0 0.0
  %2391 = vmatpush1.msra.mxu0 0.0
  %2392 = vmatprep.subr.mxu0 0.0
  %2393 = vmatpush1.msra.mxu0 0.0
  %2394 = vmatprep.subr.mxu0 0.0
  %2395 = vmatpush1.msra.mxu0 0.0
  %2396 = vmatprep.subr.mxu0 0.0
  %2397 = vmatpush1.msra.mxu0 0.0
  %2398 = vmatprep.subr.mxu0 0.0
  %2399 = vmatpush1.msra.mxu0 0.0
  %2400 = vmatprep.subr.mxu0 0.0
  %2401 = vmatpush1.msra.mxu0 0.0
  %2402 = vmatprep.subr.mxu0 0.0
  %2403 = vmatpush1.msra.mxu0 0.0
  %2404 = vmatprep.subr.mxu0 0.0
  %2405 = vmatpush1.msra.mxu0 0.0
  %2406 = vmatprep.subr.mxu0 0.0
  %2407 = vmatpush1.msra.mxu0 0.0
  %2408 = vmatprep.subr.mxu0 0.0
  %2409 = vmatpush1.msra.mxu0 0.0
  %2410 = vmatprep.subr.mxu0 0.0
  %2411 = vmatpush1.msra.mxu0 0.0
  %2412 = vmatprep.subr.mxu0 0.0
  %2413 = vmatpush1.msra.mxu0 0.0
  %2414 = vmatprep.subr.mxu0 0.0
  %2415 = vmatpush1.msra.mxu0 0.0
  %2416 = vmatprep.subr.mxu0 0.0
  %2417 = vmatpush1.msra.mxu0 0.0
  %2418 = vmatprep.subr.mxu0 0.0
  %2419 = vmatpush1.msra.mxu0 0.0
  %2420 = vmatprep.subr.mxu0 %v2385
  %2421 = vmatpush1.msra.mxu0 %v2382
  %2422 = vmatprep.subr.mxu0 0.0
  %2423 = vmatpush2.msra.mxu0 0.0
  %2424 = vmatprep.subr.mxu0 0.0
  %2425 = vmatpush2.msra.mxu0 0.0
  %2426 = vmatprep.subr.mxu0 0.0
  %2427 = vmatpush2.msra.mxu0 0.0
  %2428 = vmatprep.subr.mxu0 0.0
  %2429 = vmatpush2.msra.mxu0 0.0
  %2430 = vmatprep.subr.mxu0 0.0
  %2431 = vmatpush2.msra.mxu0 0.0
  %2432 = vmatprep.subr.mxu0 0.0
  %2433 = vmatpush2.msra.mxu0 0.0
  %2434 = vmatprep.subr.mxu0 0.0
  %2435 = vmatpush2.msra.mxu0 0.0
  %2436 = vmatprep.subr.mxu0 0.0
  %2437 = vmatpush2.msra.mxu0 0.0
  %2438 = vmatprep.subr.mxu0 0.0
  %2439 = vmatpush2.msra.mxu0 0.0
  %2440 = vmatprep.subr.mxu0 0.0
  %2441 = vmatpush2.msra.mxu0 0.0
  %2442 = vmatprep.subr.mxu0 0.0
  %2443 = vmatpush2.msra.mxu0 0.0
  %2444 = vmatprep.subr.mxu0 0.0
  %2445 = vmatpush2.msra.mxu0 0.0
  %2446 = vmatprep.subr.mxu0 0.0
  %2447 = vmatpush2.msra.mxu0 0.0
  %2448 = vmatprep.subr.mxu0 0.0
  %2449 = vmatpush2.msra.mxu0 0.0
  %2450 = vmatprep.subr.mxu0 0.0
  %2451 = vmatpush2.msra.mxu0 0.0
  %2452 = vmatprep.subr.mxu0 0.0
  %2453 = vmatpush2.msra.mxu0 0.0
  %2454 = vmatprep.mubr.f32.mxu0 0.0
  %2455 = vmatmul.mubr.f32.gmra.mxu0 %v2358
  %v2456 = vpop.f32.mrf.mxu0
  %v2457 = vadd.f32 0.0, %v2456
  %v2458 = vpop.f32.mrf.mxu0
  %v2459 = vadd.f32 0.0, %v2458
  %2460 = vmatprep.mubr.f32.mxu0 0.0
  %2461 = vmatmul.mubr.f32.gmra.mxu0 %v2361
  %v2462 = vpop.f32.mrf.mxu0
  %v2463 = vadd.f32 0.0, %v2462
  %v2464 = vpop.f32.mrf.mxu0
  %v2465 = vadd.f32 0.0, %v2464
  %2466 = vmatprep.mubr.f32.mxu0 0.0
  %2467 = vmatmul.mubr.f32.gmra.mxu0 %v2364
  %v2468 = vpop.f32.mrf.mxu0
  %v2469 = vadd.f32 0.0, %v2468
  %v2470 = vpop.f32.mrf.mxu0
  %v2471 = vadd.f32 0.0, %v2470
  %2472 = vmatprep.mubr.f32.mxu0 0.0
  %2473 = vmatmul.mubr.f32.gmra.mxu0 %v2367
  %v2474 = vpop.f32.mrf.mxu0
  %v2475 = vadd.f32 0.0, %v2474
  %v2476 = vpop.f32.mrf.mxu0
  %v2477 = vadd.f32 0.0, %v2476
  %2478 = vmatprep.mubr.f32.mxu0 0.0
  %2479 = vmatmul.mubr.f32.gmra.mxu0 %v2370
  %v2480 = vpop.f32.mrf.mxu0
  %v2481 = vadd.f32 0.0, %v2480
  %v2482 = vpop.f32.mrf.mxu0
  %v2483 = vadd.f32 0.0, %v2482
  %2484 = vmatprep.mubr.f32.mxu0 0.0
  %2485 = vmatmul.mubr.f32.gmra.mxu0 %v2373
  %v2486 = vpop.f32.mrf.mxu0
  %v2487 = vadd.f32 0.0, %v2486
  %v2488 = vpop.f32.mrf.mxu0
  %v2489 = vadd.f32 0.0, %v2488
  %2490 = vmatprep.mubr.f32.mxu0 0.0
  %2491 = vmatmul.mubr.f32.gmra.mxu0 %v2376
  %v2492 = vpop.f32.mrf.mxu0
  %v2493 = vadd.f32 0.0, %v2492
  %v2494 = vpop.f32.mrf.mxu0
  %v2495 = vadd.f32 0.0, %v2494
  %2496 = vmatprep.mubr.f32.mxu0 0.0
  %2497 = vmatmul.mubr.f32.gmra.mxu0 %v2379
  %v2498 = vpop.f32.mrf.mxu0
  %v2499 = vadd.f32 0.0, %v2498
  %v2500 = vpop.f32.mrf.mxu0
  %v2501 = vadd.f32 0.0, %v2500
  %2502 = vdwg.mxu0
  %2503 = vmatprep.subr.mxu0 0.0
  %2504 = vmatpush1.msra.mxu0 0.0
  %2505 = vmatprep.subr.mxu0 0.0
  %2506 = vmatpush1.msra.mxu0 0.0
  %2507 = vmatprep.subr.mxu0 0.0
  %2508 = vmatpush1.msra.mxu0 0.0
  %2509 = vmatprep.subr.mxu0 0.0
  %2510 = vmatpush1.msra.mxu0 0.0
  %2511 = vmatprep.subr.mxu0 0.0
  %2512 = vmatpush1.msra.mxu0 0.0
  %2513 = vmatprep.subr.mxu0 0.0
  %2514 = vmatpush1.msra.mxu0 0.0
  %2515 = vmatprep.subr.mxu0 0.0
  %2516 = vmatpush1.msra.mxu0 0.0
  %2517 = vmatprep.subr.mxu0 0.0
  %2518 = vmatpush1.msra.mxu0 0.0
  %2519 = vmatprep.subr.mxu0 0.0
  %2520 = vmatpush1.msra.mxu0 0.0
  %2521 = vmatprep.subr.mxu0 0.0
  %2522 = vmatpush1.msra.mxu0 0.0
  %2523 = vmatprep.subr.mxu0 0.0
  %2524 = vmatpush1.msra.mxu0 0.0
  %2525 = vmatprep.subr.mxu0 0.0
  %2526 = vmatpush1.msra.mxu0 0.0
  %2527 = vmatprep.subr.mxu0 0.0
  %2528 = vmatpush1.msra.mxu0 0.0
  %2529 = vmatprep.subr.mxu0 0.0
  %2530 = vmatpush1.msra.mxu0 0.0
  %2531 = vmatprep.subr.mxu0 0.0
  %2532 = vmatpush1.msra.mxu0 0.0
  %2533 = vmatprep.subr.mxu0 0.0
  %2534 = vmatpush1.msra.mxu0 %v2388
  %2535 = vmatprep.subr.mxu0 0.0
  %2536 = vmatpush2.msra.mxu0 0.0
  %2537 = vmatprep.subr.mxu0 0.0
  %2538 = vmatpush2.msra.mxu0 0.0
  %2539 = vmatprep.subr.mxu0 0.0
  %2540 = vmatpush2.msra.mxu0 0.0
  %2541 = vmatprep.subr.mxu0 0.0
  %2542 = vmatpush2.msra.mxu0 0.0
  %2543 = vmatprep.subr.mxu0 0.0
  %2544 = vmatpush2.msra.mxu0 0.0
  %2545 = vmatprep.subr.mxu0 0.0
  %2546 = vmatpush2.msra.mxu0 0.0
  %2547 = vmatprep.subr.mxu0 0.0
  %2548 = vmatpush2.msra.mxu0 0.0
  %2549 = vmatprep.subr.mxu0 0.0
  %2550 = vmatpush2.msra.mxu0 0.0
  %2551 = vmatprep.subr.mxu0 0.0
  %2552 = vmatpush2.msra.mxu0 0.0
  %2553 = vmatprep.subr.mxu0 0.0
  %2554 = vmatpush2.msra.mxu0 0.0
  %2555 = vmatprep.subr.mxu0 0.0
  %2556 = vmatpush2.msra.mxu0 0.0
  %2557 = vmatprep.subr.mxu0 0.0
  %2558 = vmatpush2.msra.mxu0 0.0
  %2559 = vmatprep.subr.mxu0 0.0
  %2560 = vmatpush2.msra.mxu0 0.0
  %2561 = vmatprep.subr.mxu0 0.0
  %2562 = vmatpush2.msra.mxu0 0.0
  %2563 = vmatprep.subr.mxu0 0.0
  %2564 = vmatpush2.msra.mxu0 0.0
  %2565 = vmatprep.subr.mxu0 0.0
  %2566 = vmatpush2.msra.mxu0 0.0
  %2567 = vmatprep.mubr.f32.mxu0 0.0
  %2568 = vmatmul.mubr.f32.gmra.mxu0 %v2358
  %v2569 = vpop.f32.mrf.mxu0
  %v2570 = vadd.f32 0.0, %v2569
  %v2571 = vpop.f32.mrf.mxu0
  %2572 = vmatprep.mubr.f32.mxu0 0.0
  %2573 = vmatmul.mubr.f32.gmra.mxu0 %v2361
  %v2574 = vpop.f32.mrf.mxu0
  %v2575 = vadd.f32 0.0, %v2574
  %v2576 = vpop.f32.mrf.mxu0
  %2577 = vmatprep.mubr.f32.mxu0 0.0
  %2578 = vmatmul.mubr.f32.gmra.mxu0 %v2364
  %v2579 = vpop.f32.mrf.mxu0
  %v2580 = vadd.f32 0.0, %v2579
  %v2581 = vpop.f32.mrf.mxu0
  %2582 = vmatprep.mubr.f32.mxu0 0.0
  %2583 = vmatmul.mubr.f32.gmra.mxu0 %v2367
  %v2584 = vpop.f32.mrf.mxu0
  %v2585 = vadd.f32 0.0, %v2584
  %v2586 = vpop.f32.mrf.mxu0
  %2587 = vmatprep.mubr.f32.mxu0 0.0
  %2588 = vmatmul.mubr.f32.gmra.mxu0 %v2370
  %v2589 = vpop.f32.mrf.mxu0
  %v2590 = vadd.f32 0.0, %v2589
  %v2591 = vpop.f32.mrf.mxu0
  %2592 = vmatprep.mubr.f32.mxu0 0.0
  %2593 = vmatmul.mubr.f32.gmra.mxu0 %v2373
  %v2594 = vpop.f32.mrf.mxu0
  %v2595 = vadd.f32 0.0, %v2594
  %v2596 = vpop.f32.mrf.mxu0
  %2597 = vmatprep.mubr.f32.mxu0 0.0
  %2598 = vmatmul.mubr.f32.gmra.mxu0 %v2376
  %v2599 = vpop.f32.mrf.mxu0
  %v2600 = vadd.f32 0.0, %v2599
  %v2601 = vpop.f32.mrf.mxu0
  %2602 = vmatprep.mubr.f32.mxu0 0.0
  %2603 = vmatmul.mubr.f32.gmra.mxu0 %v2379
  %v2604 = vpop.f32.mrf.mxu0
  %v2605 = vadd.f32 0.0, %v2604
  %v2606 = vpop.f32.mrf.mxu0
  %2607 = vdwg.mxu0
  %v2608 = vadd.f32 %v2314, %v2457
  %v2609 = vadd.f32 %v2315, %v2459
  %v2610 = vadd.f32 %v2316, %v2570
  %v2611 = vadd.f32 %v2317, %v2463
  %v2612 = vadd.f32 %v2318, %v2465
  %v2613 = vadd.f32 %v2319, %v2575
  %v2614 = vadd.f32 %v2320, %v2469
  %v2615 = vadd.f32 %v2321, %v2471
  %v2616 = vadd.f32 %v2322, %v2580
  %v2617 = vadd.f32 %v2323, %v2475
  %v2618 = vadd.f32 %v2324, %v2477
  %v2619 = vadd.f32 %v2325, %v2585
  %v2620 = vadd.f32 %v2326, %v2481
  %v2621 = vadd.f32 %v2327, %v2483
  %v2622 = vadd.f32 %v2328, %v2590
  %v2623 = vadd.f32 %v2329, %v2487
  %v2624 = vadd.f32 %v2330, %v2489
  %v2625 = vadd.f32 %v2331, %v2595
  %v2626 = vadd.f32 %v2332, %v2493
  %v2627 = vadd.f32 %v2333, %v2495
  %v2628 = vadd.f32 %v2334, %v2600
  %v2629 = vadd.f32 %v2335, %v2499
  %v2630 = vadd.f32 %v2336, %v2501
  %v2631 = vadd.f32 %v2337, %v2605
  %s2632 = scalar_lea.vmem %s1, 576
  %v2633 = vld [vmem:[%s2632] sm:$0xff]
  %v2634 = vld [vmem:[%s2632 + $0x8] sm:$0xff]
  %v2635 = vld [vmem:[%s2632 + $0x10] sm:$0xff]
  %v2636 = vld [vmem:[%s2632 + $0x18] sm:$0xff]
  %v2637 = vld [vmem:[%s2632 + $0x20] sm:$0xff]
  %v2638 = vld [vmem:[%s2632 + $0x28] sm:$0xff]
  %v2639 = vld [vmem:[%s2632 + $0x30] sm:$0xff]
  %v2640 = vld [vmem:[%s2632 + $0x38] sm:$0xff]
  %2641 = vrot.lane.b32.xlu0 %v49, 119
  %v2642 = vpop.permute.xlu0 %2641
  %2643 = vrot.lane.b32.xlu0 %v57, 119
  %v2644 = vpop.permute.xlu0 %2643
  %2645 = vrot.lane.b32.xlu0 %v56, 119
  %v2646 = vpop.permute.xlu0 %2645
  %vm2647 = vcmp.lt.s32.totalorder %v68, 119
  %v2648 = vsel %vm2647, %v2644, %v2646
  %v2649 = vsel %vm2647, %v2642, %v2644
  %v2650 = vsel %vm2647, %v2646, %v2642
  %v2652 = vsel %vm73, %v2633, 0
  %v2655 = vsel %vm73, %v2634, 0
  %v2658 = vsel %vm73, %v2635, 0
  %v2661 = vsel %vm73, %v2636, 0
  %v2664 = vsel %vm73, %v2637, 0
  %v2667 = vsel %vm73, %v2638, 0
  %v2670 = vsel %vm73, %v2639, 0
  %v2673 = vsel %vm73, %v2640, 0
  %v2676 = vsel %vm98, %v2649, 0
  %v2679 = vsel %vm98, %v2648, 0
  %v2682 = vsel %vm98, %v2650, 0
  %2684 = vmatprep.subr.mxu0 0.0
  %2685 = vmatpush1.msra.mxu0 0.0
  %2686 = vmatprep.subr.mxu0 0.0
  %2687 = vmatpush1.msra.mxu0 0.0
  %2688 = vmatprep.subr.mxu0 0.0
  %2689 = vmatpush1.msra.mxu0 0.0
  %2690 = vmatprep.subr.mxu0 0.0
  %2691 = vmatpush1.msra.mxu0 0.0
  %2692 = vmatprep.subr.mxu0 0.0
  %2693 = vmatpush1.msra.mxu0 0.0
  %2694 = vmatprep.subr.mxu0 0.0
  %2695 = vmatpush1.msra.mxu0 0.0
  %2696 = vmatprep.subr.mxu0 0.0
  %2697 = vmatpush1.msra.mxu0 0.0
  %2698 = vmatprep.subr.mxu0 0.0
  %2699 = vmatpush1.msra.mxu0 0.0
  %2700 = vmatprep.subr.mxu0 0.0
  %2701 = vmatpush1.msra.mxu0 0.0
  %2702 = vmatprep.subr.mxu0 0.0
  %2703 = vmatpush1.msra.mxu0 0.0
  %2704 = vmatprep.subr.mxu0 0.0
  %2705 = vmatpush1.msra.mxu0 0.0
  %2706 = vmatprep.subr.mxu0 0.0
  %2707 = vmatpush1.msra.mxu0 0.0
  %2708 = vmatprep.subr.mxu0 0.0
  %2709 = vmatpush1.msra.mxu0 0.0
  %2710 = vmatprep.subr.mxu0 0.0
  %2711 = vmatpush1.msra.mxu0 0.0
  %2712 = vmatprep.subr.mxu0 0.0
  %2713 = vmatpush1.msra.mxu0 0.0
  %2714 = vmatprep.subr.mxu0 %v2679
  %2715 = vmatpush1.msra.mxu0 %v2676
  %2716 = vmatprep.subr.mxu0 0.0
  %2717 = vmatpush2.msra.mxu0 0.0
  %2718 = vmatprep.subr.mxu0 0.0
  %2719 = vmatpush2.msra.mxu0 0.0
  %2720 = vmatprep.subr.mxu0 0.0
  %2721 = vmatpush2.msra.mxu0 0.0
  %2722 = vmatprep.subr.mxu0 0.0
  %2723 = vmatpush2.msra.mxu0 0.0
  %2724 = vmatprep.subr.mxu0 0.0
  %2725 = vmatpush2.msra.mxu0 0.0
  %2726 = vmatprep.subr.mxu0 0.0
  %2727 = vmatpush2.msra.mxu0 0.0
  %2728 = vmatprep.subr.mxu0 0.0
  %2729 = vmatpush2.msra.mxu0 0.0
  %2730 = vmatprep.subr.mxu0 0.0
  %2731 = vmatpush2.msra.mxu0 0.0
  %2732 = vmatprep.subr.mxu0 0.0
  %2733 = vmatpush2.msra.mxu0 0.0
  %2734 = vmatprep.subr.mxu0 0.0
  %2735 = vmatpush2.msra.mxu0 0.0
  %2736 = vmatprep.subr.mxu0 0.0
  %2737 = vmatpush2.msra.mxu0 0.0
  %2738 = vmatprep.subr.mxu0 0.0
  %2739 = vmatpush2.msra.mxu0 0.0
  %2740 = vmatprep.subr.mxu0 0.0
  %2741 = vmatpush2.msra.mxu0 0.0
  %2742 = vmatprep.subr.mxu0 0.0
  %2743 = vmatpush2.msra.mxu0 0.0
  %2744 = vmatprep.subr.mxu0 0.0
  %2745 = vmatpush2.msra.mxu0 0.0
  %2746 = vmatprep.subr.mxu0 0.0
  %2747 = vmatpush2.msra.mxu0 0.0
  %2748 = vmatprep.mubr.f32.mxu0 0.0
  %2749 = vmatmul.mubr.f32.gmra.mxu0 %v2652
  %v2750 = vpop.f32.mrf.mxu0
  %v2751 = vadd.f32 0.0, %v2750
  %v2752 = vpop.f32.mrf.mxu0
  %v2753 = vadd.f32 0.0, %v2752
  %2754 = vmatprep.mubr.f32.mxu0 0.0
  %2755 = vmatmul.mubr.f32.gmra.mxu0 %v2655
  %v2756 = vpop.f32.mrf.mxu0
  %v2757 = vadd.f32 0.0, %v2756
  %v2758 = vpop.f32.mrf.mxu0
  %v2759 = vadd.f32 0.0, %v2758
  %2760 = vmatprep.mubr.f32.mxu0 0.0
  %2761 = vmatmul.mubr.f32.gmra.mxu0 %v2658
  %v2762 = vpop.f32.mrf.mxu0
  %v2763 = vadd.f32 0.0, %v2762
  %v2764 = vpop.f32.mrf.mxu0
  %v2765 = vadd.f32 0.0, %v2764
  %2766 = vmatprep.mubr.f32.mxu0 0.0
  %2767 = vmatmul.mubr.f32.gmra.mxu0 %v2661
  %v2768 = vpop.f32.mrf.mxu0
  %v2769 = vadd.f32 0.0, %v2768
  %v2770 = vpop.f32.mrf.mxu0
  %v2771 = vadd.f32 0.0, %v2770
  %2772 = vmatprep.mubr.f32.mxu0 0.0
  %2773 = vmatmul.mubr.f32.gmra.mxu0 %v2664
  %v2774 = vpop.f32.mrf.mxu0
  %v2775 = vadd.f32 0.0, %v2774
  %v2776 = vpop.f32.mrf.mxu0
  %v2777 = vadd.f32 0.0, %v2776
  %2778 = vmatprep.mubr.f32.mxu0 0.0
  %2779 = vmatmul.mubr.f32.gmra.mxu0 %v2667
  %v2780 = vpop.f32.mrf.mxu0
  %v2781 = vadd.f32 0.0, %v2780
  %v2782 = vpop.f32.mrf.mxu0
  %v2783 = vadd.f32 0.0, %v2782
  %2784 = vmatprep.mubr.f32.mxu0 0.0
  %2785 = vmatmul.mubr.f32.gmra.mxu0 %v2670
  %v2786 = vpop.f32.mrf.mxu0
  %v2787 = vadd.f32 0.0, %v2786
  %v2788 = vpop.f32.mrf.mxu0
  %v2789 = vadd.f32 0.0, %v2788
  %2790 = vmatprep.mubr.f32.mxu0 0.0
  %2791 = vmatmul.mubr.f32.gmra.mxu0 %v2673
  %v2792 = vpop.f32.mrf.mxu0
  %v2793 = vadd.f32 0.0, %v2792
  %v2794 = vpop.f32.mrf.mxu0
  %v2795 = vadd.f32 0.0, %v2794
  %2796 = vdwg.mxu0
  %2797 = vmatprep.subr.mxu0 0.0
  %2798 = vmatpush1.msra.mxu0 0.0
  %2799 = vmatprep.subr.mxu0 0.0
  %2800 = vmatpush1.msra.mxu0 0.0
  %2801 = vmatprep.subr.mxu0 0.0
  %2802 = vmatpush1.msra.mxu0 0.0
  %2803 = vmatprep.subr.mxu0 0.0
  %2804 = vmatpush1.msra.mxu0 0.0
  %2805 = vmatprep.subr.mxu0 0.0
  %2806 = vmatpush1.msra.mxu0 0.0
  %2807 = vmatprep.subr.mxu0 0.0
  %2808 = vmatpush1.msra.mxu0 0.0
  %2809 = vmatprep.subr.mxu0 0.0
  %2810 = vmatpush1.msra.mxu0 0.0
  %2811 = vmatprep.subr.mxu0 0.0
  %2812 = vmatpush1.msra.mxu0 0.0
  %2813 = vmatprep.subr.mxu0 0.0
  %2814 = vmatpush1.msra.mxu0 0.0
  %2815 = vmatprep.subr.mxu0 0.0
  %2816 = vmatpush1.msra.mxu0 0.0
  %2817 = vmatprep.subr.mxu0 0.0
  %2818 = vmatpush1.msra.mxu0 0.0
  %2819 = vmatprep.subr.mxu0 0.0
  %2820 = vmatpush1.msra.mxu0 0.0
  %2821 = vmatprep.subr.mxu0 0.0
  %2822 = vmatpush1.msra.mxu0 0.0
  %2823 = vmatprep.subr.mxu0 0.0
  %2824 = vmatpush1.msra.mxu0 0.0
  %2825 = vmatprep.subr.mxu0 0.0
  %2826 = vmatpush1.msra.mxu0 0.0
  %2827 = vmatprep.subr.mxu0 0.0
  %2828 = vmatpush1.msra.mxu0 %v2682
  %2829 = vmatprep.subr.mxu0 0.0
  %2830 = vmatpush2.msra.mxu0 0.0
  %2831 = vmatprep.subr.mxu0 0.0
  %2832 = vmatpush2.msra.mxu0 0.0
  %2833 = vmatprep.subr.mxu0 0.0
  %2834 = vmatpush2.msra.mxu0 0.0
  %2835 = vmatprep.subr.mxu0 0.0
  %2836 = vmatpush2.msra.mxu0 0.0
  %2837 = vmatprep.subr.mxu0 0.0
  %2838 = vmatpush2.msra.mxu0 0.0
  %2839 = vmatprep.subr.mxu0 0.0
  %2840 = vmatpush2.msra.mxu0 0.0
  %2841 = vmatprep.subr.mxu0 0.0
  %2842 = vmatpush2.msra.mxu0 0.0
  %2843 = vmatprep.subr.mxu0 0.0
  %2844 = vmatpush2.msra.mxu0 0.0
  %2845 = vmatprep.subr.mxu0 0.0
  %2846 = vmatpush2.msra.mxu0 0.0
  %2847 = vmatprep.subr.mxu0 0.0
  %2848 = vmatpush2.msra.mxu0 0.0
  %2849 = vmatprep.subr.mxu0 0.0
  %2850 = vmatpush2.msra.mxu0 0.0
  %2851 = vmatprep.subr.mxu0 0.0
  %2852 = vmatpush2.msra.mxu0 0.0
  %2853 = vmatprep.subr.mxu0 0.0
  %2854 = vmatpush2.msra.mxu0 0.0
  %2855 = vmatprep.subr.mxu0 0.0
  %2856 = vmatpush2.msra.mxu0 0.0
  %2857 = vmatprep.subr.mxu0 0.0
  %2858 = vmatpush2.msra.mxu0 0.0
  %2859 = vmatprep.subr.mxu0 0.0
  %2860 = vmatpush2.msra.mxu0 0.0
  %2861 = vmatprep.mubr.f32.mxu0 0.0
  %2862 = vmatmul.mubr.f32.gmra.mxu0 %v2652
  %v2863 = vpop.f32.mrf.mxu0
  %v2864 = vadd.f32 0.0, %v2863
  %v2865 = vpop.f32.mrf.mxu0
  %2866 = vmatprep.mubr.f32.mxu0 0.0
  %2867 = vmatmul.mubr.f32.gmra.mxu0 %v2655
  %v2868 = vpop.f32.mrf.mxu0
  %v2869 = vadd.f32 0.0, %v2868
  %v2870 = vpop.f32.mrf.mxu0
  %2871 = vmatprep.mubr.f32.mxu0 0.0
  %2872 = vmatmul.mubr.f32.gmra.mxu0 %v2658
  %v2873 = vpop.f32.mrf.mxu0
  %v2874 = vadd.f32 0.0, %v2873
  %v2875 = vpop.f32.mrf.mxu0
  %2876 = vmatprep.mubr.f32.mxu0 0.0
  %2877 = vmatmul.mubr.f32.gmra.mxu0 %v2661
  %v2878 = vpop.f32.mrf.mxu0
  %v2879 = vadd.f32 0.0, %v2878
  %v2880 = vpop.f32.mrf.mxu0
  %2881 = vmatprep.mubr.f32.mxu0 0.0
  %2882 = vmatmul.mubr.f32.gmra.mxu0 %v2664
  %v2883 = vpop.f32.mrf.mxu0
  %v2884 = vadd.f32 0.0, %v2883
  %v2885 = vpop.f32.mrf.mxu0
  %2886 = vmatprep.mubr.f32.mxu0 0.0
  %2887 = vmatmul.mubr.f32.gmra.mxu0 %v2667
  %v2888 = vpop.f32.mrf.mxu0
  %v2889 = vadd.f32 0.0, %v2888
  %v2890 = vpop.f32.mrf.mxu0
  %2891 = vmatprep.mubr.f32.mxu0 0.0
  %2892 = vmatmul.mubr.f32.gmra.mxu0 %v2670
  %v2893 = vpop.f32.mrf.mxu0
  %v2894 = vadd.f32 0.0, %v2893
  %v2895 = vpop.f32.mrf.mxu0
  %2896 = vmatprep.mubr.f32.mxu0 0.0
  %2897 = vmatmul.mubr.f32.gmra.mxu0 %v2673
  %v2898 = vpop.f32.mrf.mxu0
  %v2899 = vadd.f32 0.0, %v2898
  %v2900 = vpop.f32.mrf.mxu0
  %2901 = vdwg.mxu0
  %v2902 = vadd.f32 %v2608, %v2751
  %v2903 = vadd.f32 %v2609, %v2753
  %v2904 = vadd.f32 %v2610, %v2864
  %v2905 = vadd.f32 %v2611, %v2757
  %v2906 = vadd.f32 %v2612, %v2759
  %v2907 = vadd.f32 %v2613, %v2869
  %v2908 = vadd.f32 %v2614, %v2763
  %v2909 = vadd.f32 %v2615, %v2765
  %v2910 = vadd.f32 %v2616, %v2874
  %v2911 = vadd.f32 %v2617, %v2769
  %v2912 = vadd.f32 %v2618, %v2771
  %v2913 = vadd.f32 %v2619, %v2879
  %v2914 = vadd.f32 %v2620, %v2775
  %v2915 = vadd.f32 %v2621, %v2777
  %v2916 = vadd.f32 %v2622, %v2884
  %v2917 = vadd.f32 %v2623, %v2781
  %v2918 = vadd.f32 %v2624, %v2783
  %v2919 = vadd.f32 %v2625, %v2889
  %v2920 = vadd.f32 %v2626, %v2787
  %v2921 = vadd.f32 %v2627, %v2789
  %v2922 = vadd.f32 %v2628, %v2894
  %v2923 = vadd.f32 %v2629, %v2793
  %v2924 = vadd.f32 %v2630, %v2795
  %v2925 = vadd.f32 %v2631, %v2899
  %s2926 = scalar_lea.vmem %s1, 640
  %v2927 = vld [vmem:[%s2926] sm:$0xff]
  %v2928 = vld [vmem:[%s2926 + $0x8] sm:$0xff]
  %v2929 = vld [vmem:[%s2926 + $0x10] sm:$0xff]
  %v2930 = vld [vmem:[%s2926 + $0x18] sm:$0xff]
  %v2931 = vld [vmem:[%s2926 + $0x20] sm:$0xff]
  %v2932 = vld [vmem:[%s2926 + $0x28] sm:$0xff]
  %v2933 = vld [vmem:[%s2926 + $0x30] sm:$0xff]
  %v2934 = vld [vmem:[%s2926 + $0x38] sm:$0xff]
  %2935 = vrot.lane.b32.xlu0 %v49, 118
  %v2936 = vpop.permute.xlu0 %2935
  %2937 = vrot.lane.b32.xlu0 %v57, 118
  %v2938 = vpop.permute.xlu0 %2937
  %2939 = vrot.lane.b32.xlu0 %v56, 118
  %v2940 = vpop.permute.xlu0 %2939
  %vm2941 = vcmp.lt.s32.totalorder %v68, 118
  %v2942 = vsel %vm2941, %v2938, %v2940
  %v2943 = vsel %vm2941, %v2936, %v2938
  %v2944 = vsel %vm2941, %v2940, %v2936
  %v2946 = vsel %vm73, %v2927, 0
  %v2949 = vsel %vm73, %v2928, 0
  %v2952 = vsel %vm73, %v2929, 0
  %v2955 = vsel %vm73, %v2930, 0
  %v2958 = vsel %vm73, %v2931, 0
  %v2961 = vsel %vm73, %v2932, 0
  %v2964 = vsel %vm73, %v2933, 0
  %v2967 = vsel %vm73, %v2934, 0
  %v2970 = vsel %vm98, %v2943, 0
  %v2973 = vsel %vm98, %v2942, 0
  %v2976 = vsel %vm98, %v2944, 0
  %2978 = vmatprep.subr.mxu0 0.0
  %2979 = vmatpush1.msra.mxu0 0.0
  %2980 = vmatprep.subr.mxu0 0.0
  %2981 = vmatpush1.msra.mxu0 0.0
  %2982 = vmatprep.subr.mxu0 0.0
  %2983 = vmatpush1.msra.mxu0 0.0
  %2984 = vmatprep.subr.mxu0 0.0
  %2985 = vmatpush1.msra.mxu0 0.0
  %2986 = vmatprep.subr.mxu0 0.0
  %2987 = vmatpush1.msra.mxu0 0.0
  %2988 = vmatprep.subr.mxu0 0.0
  %2989 = vmatpush1.msra.mxu0 0.0
  %2990 = vmatprep.subr.mxu0 0.0
  %2991 = vmatpush1.msra.mxu0 0.0
  %2992 = vmatprep.subr.mxu0 0.0
  %2993 = vmatpush1.msra.mxu0 0.0
  %2994 = vmatprep.subr.mxu0 0.0
  %2995 = vmatpush1.msra.mxu0 0.0
  %2996 = vmatprep.subr.mxu0 0.0
  %2997 = vmatpush1.msra.mxu0 0.0
  %2998 = vmatprep.subr.mxu0 0.0
  %2999 = vmatpush1.msra.mxu0 0.0
  %3000 = vmatprep.subr.mxu0 0.0
  %3001 = vmatpush1.msra.mxu0 0.0
  %3002 = vmatprep.subr.mxu0 0.0
  %3003 = vmatpush1.msra.mxu0 0.0
  %3004 = vmatprep.subr.mxu0 0.0
  %3005 = vmatpush1.msra.mxu0 0.0
  %3006 = vmatprep.subr.mxu0 0.0
  %3007 = vmatpush1.msra.mxu0 0.0
  %3008 = vmatprep.subr.mxu0 %v2973
  %3009 = vmatpush1.msra.mxu0 %v2970
  %3010 = vmatprep.subr.mxu0 0.0
  %3011 = vmatpush2.msra.mxu0 0.0
  %3012 = vmatprep.subr.mxu0 0.0
  %3013 = vmatpush2.msra.mxu0 0.0
  %3014 = vmatprep.subr.mxu0 0.0
  %3015 = vmatpush2.msra.mxu0 0.0
  %3016 = vmatprep.subr.mxu0 0.0
  %3017 = vmatpush2.msra.mxu0 0.0
  %3018 = vmatprep.subr.mxu0 0.0
  %3019 = vmatpush2.msra.mxu0 0.0
  %3020 = vmatprep.subr.mxu0 0.0
  %3021 = vmatpush2.msra.mxu0 0.0
  %3022 = vmatprep.subr.mxu0 0.0
  %3023 = vmatpush2.msra.mxu0 0.0
  %3024 = vmatprep.subr.mxu0 0.0
  %3025 = vmatpush2.msra.mxu0 0.0
  %3026 = vmatprep.subr.mxu0 0.0
  %3027 = vmatpush2.msra.mxu0 0.0
  %3028 = vmatprep.subr.mxu0 0.0
  %3029 = vmatpush2.msra.mxu0 0.0
  %3030 = vmatprep.subr.mxu0 0.0
  %3031 = vmatpush2.msra.mxu0 0.0
  %3032 = vmatprep.subr.mxu0 0.0
  %3033 = vmatpush2.msra.mxu0 0.0
  %3034 = vmatprep.subr.mxu0 0.0
  %3035 = vmatpush2.msra.mxu0 0.0
  %3036 = vmatprep.subr.mxu0 0.0
  %3037 = vmatpush2.msra.mxu0 0.0
  %3038 = vmatprep.subr.mxu0 0.0
  %3039 = vmatpush2.msra.mxu0 0.0
  %3040 = vmatprep.subr.mxu0 0.0
  %3041 = vmatpush2.msra.mxu0 0.0
  %3042 = vmatprep.mubr.f32.mxu0 0.0
  %3043 = vmatmul.mubr.f32.gmra.mxu0 %v2946
  %v3044 = vpop.f32.mrf.mxu0
  %v3045 = vadd.f32 0.0, %v3044
  %v3046 = vpop.f32.mrf.mxu0
  %v3047 = vadd.f32 0.0, %v3046
  %3048 = vmatprep.mubr.f32.mxu0 0.0
  %3049 = vmatmul.mubr.f32.gmra.mxu0 %v2949
  %v3050 = vpop.f32.mrf.mxu0
  %v3051 = vadd.f32 0.0, %v3050
  %v3052 = vpop.f32.mrf.mxu0
  %v3053 = vadd.f32 0.0, %v3052
  %3054 = vmatprep.mubr.f32.mxu0 0.0
  %3055 = vmatmul.mubr.f32.gmra.mxu0 %v2952
  %v3056 = vpop.f32.mrf.mxu0
  %v3057 = vadd.f32 0.0, %v3056
  %v3058 = vpop.f32.mrf.mxu0
  %v3059 = vadd.f32 0.0, %v3058
  %3060 = vmatprep.mubr.f32.mxu0 0.0
  %3061 = vmatmul.mubr.f32.gmra.mxu0 %v2955
  %v3062 = vpop.f32.mrf.mxu0
  %v3063 = vadd.f32 0.0, %v3062
  %v3064 = vpop.f32.mrf.mxu0
  %v3065 = vadd.f32 0.0, %v3064
  %3066 = vmatprep.mubr.f32.mxu0 0.0
  %3067 = vmatmul.mubr.f32.gmra.mxu0 %v2958
  %v3068 = vpop.f32.mrf.mxu0
  %v3069 = vadd.f32 0.0, %v3068
  %v3070 = vpop.f32.mrf.mxu0
  %v3071 = vadd.f32 0.0, %v3070
  %3072 = vmatprep.mubr.f32.mxu0 0.0
  %3073 = vmatmul.mubr.f32.gmra.mxu0 %v2961
  %v3074 = vpop.f32.mrf.mxu0
  %v3075 = vadd.f32 0.0, %v3074
  %v3076 = vpop.f32.mrf.mxu0
  %v3077 = vadd.f32 0.0, %v3076
  %3078 = vmatprep.mubr.f32.mxu0 0.0
  %3079 = vmatmul.mubr.f32.gmra.mxu0 %v2964
  %v3080 = vpop.f32.mrf.mxu0
  %v3081 = vadd.f32 0.0, %v3080
  %v3082 = vpop.f32.mrf.mxu0
  %v3083 = vadd.f32 0.0, %v3082
  %3084 = vmatprep.mubr.f32.mxu0 0.0
  %3085 = vmatmul.mubr.f32.gmra.mxu0 %v2967
  %v3086 = vpop.f32.mrf.mxu0
  %v3087 = vadd.f32 0.0, %v3086
  %v3088 = vpop.f32.mrf.mxu0
  %v3089 = vadd.f32 0.0, %v3088
  %3090 = vdwg.mxu0
  %3091 = vmatprep.subr.mxu0 0.0
  %3092 = vmatpush1.msra.mxu0 0.0
  %3093 = vmatprep.subr.mxu0 0.0
  %3094 = vmatpush1.msra.mxu0 0.0
  %3095 = vmatprep.subr.mxu0 0.0
  %3096 = vmatpush1.msra.mxu0 0.0
  %3097 = vmatprep.subr.mxu0 0.0
  %3098 = vmatpush1.msra.mxu0 0.0
  %3099 = vmatprep.subr.mxu0 0.0
  %3100 = vmatpush1.msra.mxu0 0.0
  %3101 = vmatprep.subr.mxu0 0.0
  %3102 = vmatpush1.msra.mxu0 0.0
  %3103 = vmatprep.subr.mxu0 0.0
  %3104 = vmatpush1.msra.mxu0 0.0
  %3105 = vmatprep.subr.mxu0 0.0
  %3106 = vmatpush1.msra.mxu0 0.0
  %3107 = vmatprep.subr.mxu0 0.0
  %3108 = vmatpush1.msra.mxu0 0.0
  %3109 = vmatprep.subr.mxu0 0.0
  %3110 = vmatpush1.msra.mxu0 0.0
  %3111 = vmatprep.subr.mxu0 0.0
  %3112 = vmatpush1.msra.mxu0 0.0
  %3113 = vmatprep.subr.mxu0 0.0
  %3114 = vmatpush1.msra.mxu0 0.0
  %3115 = vmatprep.subr.mxu0 0.0
  %3116 = vmatpush1.msra.mxu0 0.0
  %3117 = vmatprep.subr.mxu0 0.0
  %3118 = vmatpush1.msra.mxu0 0.0
  %3119 = vmatprep.subr.mxu0 0.0
  %3120 = vmatpush1.msra.mxu0 0.0
  %3121 = vmatprep.subr.mxu0 0.0
  %3122 = vmatpush1.msra.mxu0 %v2976
  %3123 = vmatprep.subr.mxu0 0.0
  %3124 = vmatpush2.msra.mxu0 0.0
  %3125 = vmatprep.subr.mxu0 0.0
  %3126 = vmatpush2.msra.mxu0 0.0
  %3127 = vmatprep.subr.mxu0 0.0
  %3128 = vmatpush2.msra.mxu0 0.0
  %3129 = vmatprep.subr.mxu0 0.0
  %3130 = vmatpush2.msra.mxu0 0.0
  %3131 = vmatprep.subr.mxu0 0.0
  %3132 = vmatpush2.msra.mxu0 0.0
  %3133 = vmatprep.subr.mxu0 0.0
  %3134 = vmatpush2.msra.mxu0 0.0
  %3135 = vmatprep.subr.mxu0 0.0
  %3136 = vmatpush2.msra.mxu0 0.0
  %3137 = vmatprep.subr.mxu0 0.0
  %3138 = vmatpush2.msra.mxu0 0.0
  %3139 = vmatprep.subr.mxu0 0.0
  %3140 = vmatpush2.msra.mxu0 0.0
  %3141 = vmatprep.subr.mxu0 0.0
  %3142 = vmatpush2.msra.mxu0 0.0
  %3143 = vmatprep.subr.mxu0 0.0
  %3144 = vmatpush2.msra.mxu0 0.0
  %3145 = vmatprep.subr.mxu0 0.0
  %3146 = vmatpush2.msra.mxu0 0.0
  %3147 = vmatprep.subr.mxu0 0.0
  %3148 = vmatpush2.msra.mxu0 0.0
  %3149 = vmatprep.subr.mxu0 0.0
  %3150 = vmatpush2.msra.mxu0 0.0
  %3151 = vmatprep.subr.mxu0 0.0
  %3152 = vmatpush2.msra.mxu0 0.0
  %3153 = vmatprep.subr.mxu0 0.0
  %3154 = vmatpush2.msra.mxu0 0.0
  %3155 = vmatprep.mubr.f32.mxu0 0.0
  %3156 = vmatmul.mubr.f32.gmra.mxu0 %v2946
  %v3157 = vpop.f32.mrf.mxu0
  %v3158 = vadd.f32 0.0, %v3157
  %v3159 = vpop.f32.mrf.mxu0
  %3160 = vmatprep.mubr.f32.mxu0 0.0
  %3161 = vmatmul.mubr.f32.gmra.mxu0 %v2949
  %v3162 = vpop.f32.mrf.mxu0
  %v3163 = vadd.f32 0.0, %v3162
  %v3164 = vpop.f32.mrf.mxu0
  %3165 = vmatprep.mubr.f32.mxu0 0.0
  %3166 = vmatmul.mubr.f32.gmra.mxu0 %v2952
  %v3167 = vpop.f32.mrf.mxu0
  %v3168 = vadd.f32 0.0, %v3167
  %v3169 = vpop.f32.mrf.mxu0
  %3170 = vmatprep.mubr.f32.mxu0 0.0
  %3171 = vmatmul.mubr.f32.gmra.mxu0 %v2955
  %v3172 = vpop.f32.mrf.mxu0
  %v3173 = vadd.f32 0.0, %v3172
  %v3174 = vpop.f32.mrf.mxu0
  %3175 = vmatprep.mubr.f32.mxu0 0.0
  %3176 = vmatmul.mubr.f32.gmra.mxu0 %v2958
  %v3177 = vpop.f32.mrf.mxu0
  %v3178 = vadd.f32 0.0, %v3177
  %v3179 = vpop.f32.mrf.mxu0
  %3180 = vmatprep.mubr.f32.mxu0 0.0
  %3181 = vmatmul.mubr.f32.gmra.mxu0 %v2961
  %v3182 = vpop.f32.mrf.mxu0
  %v3183 = vadd.f32 0.0, %v3182
  %v3184 = vpop.f32.mrf.mxu0
  %3185 = vmatprep.mubr.f32.mxu0 0.0
  %3186 = vmatmul.mubr.f32.gmra.mxu0 %v2964
  %v3187 = vpop.f32.mrf.mxu0
  %v3188 = vadd.f32 0.0, %v3187
  %v3189 = vpop.f32.mrf.mxu0
  %3190 = vmatprep.mubr.f32.mxu0 0.0
  %3191 = vmatmul.mubr.f32.gmra.mxu0 %v2967
  %v3192 = vpop.f32.mrf.mxu0
  %v3193 = vadd.f32 0.0, %v3192
  %v3194 = vpop.f32.mrf.mxu0
  %3195 = vdwg.mxu0
  %v3196 = vadd.f32 %v2902, %v3045
  %v3197 = vadd.f32 %v2903, %v3047
  %v3198 = vadd.f32 %v2904, %v3158
  %v3199 = vadd.f32 %v2905, %v3051
  %v3200 = vadd.f32 %v2906, %v3053
  %v3201 = vadd.f32 %v2907, %v3163
  %v3202 = vadd.f32 %v2908, %v3057
  %v3203 = vadd.f32 %v2909, %v3059
  %v3204 = vadd.f32 %v2910, %v3168
  %v3205 = vadd.f32 %v2911, %v3063
  %v3206 = vadd.f32 %v2912, %v3065
  %v3207 = vadd.f32 %v2913, %v3173
  %v3208 = vadd.f32 %v2914, %v3069
  %v3209 = vadd.f32 %v2915, %v3071
  %v3210 = vadd.f32 %v2916, %v3178
  %v3211 = vadd.f32 %v2917, %v3075
  %v3212 = vadd.f32 %v2918, %v3077
  %v3213 = vadd.f32 %v2919, %v3183
  %v3214 = vadd.f32 %v2920, %v3081
  %v3215 = vadd.f32 %v2921, %v3083
  %v3216 = vadd.f32 %v2922, %v3188
  %v3217 = vadd.f32 %v2923, %v3087
  %v3218 = vadd.f32 %v2924, %v3089
  %v3219 = vadd.f32 %v2925, %v3193
  %s3220 = scalar_lea.vmem %s1, 704
  %v3221 = vld [vmem:[%s3220] sm:$0xff]
  %v3222 = vld [vmem:[%s3220 + $0x8] sm:$0xff]
  %v3223 = vld [vmem:[%s3220 + $0x10] sm:$0xff]
  %v3224 = vld [vmem:[%s3220 + $0x18] sm:$0xff]
  %v3225 = vld [vmem:[%s3220 + $0x20] sm:$0xff]
  %v3226 = vld [vmem:[%s3220 + $0x28] sm:$0xff]
  %v3227 = vld [vmem:[%s3220 + $0x30] sm:$0xff]
  %v3228 = vld [vmem:[%s3220 + $0x38] sm:$0xff]
  %3229 = vrot.lane.b32.xlu0 %v49, 117
  %v3230 = vpop.permute.xlu0 %3229
  %3231 = vrot.lane.b32.xlu0 %v57, 117
  %v3232 = vpop.permute.xlu0 %3231
  %3233 = vrot.lane.b32.xlu0 %v56, 117
  %v3234 = vpop.permute.xlu0 %3233
  %vm3235 = vcmp.lt.s32.totalorder %v68, 117
  %v3236 = vsel %vm3235, %v3232, %v3234
  %v3237 = vsel %vm3235, %v3230, %v3232
  %v3238 = vsel %vm3235, %v3234, %v3230
  %v3240 = vsel %vm73, %v3221, 0
  %v3243 = vsel %vm73, %v3222, 0
  %v3246 = vsel %vm73, %v3223, 0
  %v3249 = vsel %vm73, %v3224, 0
  %v3252 = vsel %vm73, %v3225, 0
  %v3255 = vsel %vm73, %v3226, 0
  %v3258 = vsel %vm73, %v3227, 0
  %v3261 = vsel %vm73, %v3228, 0
  %v3264 = vsel %vm98, %v3237, 0
  %v3267 = vsel %vm98, %v3236, 0
  %v3270 = vsel %vm98, %v3238, 0
  %3272 = vmatprep.subr.mxu0 0.0
  %3273 = vmatpush1.msra.mxu0 0.0
  %3274 = vmatprep.subr.mxu0 0.0
  %3275 = vmatpush1.msra.mxu0 0.0
  %3276 = vmatprep.subr.mxu0 0.0
  %3277 = vmatpush1.msra.mxu0 0.0
  %3278 = vmatprep.subr.mxu0 0.0
  %3279 = vmatpush1.msra.mxu0 0.0
  %3280 = vmatprep.subr.mxu0 0.0
  %3281 = vmatpush1.msra.mxu0 0.0
  %3282 = vmatprep.subr.mxu0 0.0
  %3283 = vmatpush1.msra.mxu0 0.0
  %3284 = vmatprep.subr.mxu0 0.0
  %3285 = vmatpush1.msra.mxu0 0.0
  %3286 = vmatprep.subr.mxu0 0.0
  %3287 = vmatpush1.msra.mxu0 0.0
  %3288 = vmatprep.subr.mxu0 0.0
  %3289 = vmatpush1.msra.mxu0 0.0
  %3290 = vmatprep.subr.mxu0 0.0
  %3291 = vmatpush1.msra.mxu0 0.0
  %3292 = vmatprep.subr.mxu0 0.0
  %3293 = vmatpush1.msra.mxu0 0.0
  %3294 = vmatprep.subr.mxu0 0.0
  %3295 = vmatpush1.msra.mxu0 0.0
  %3296 = vmatprep.subr.mxu0 0.0
  %3297 = vmatpush1.msra.mxu0 0.0
  %3298 = vmatprep.subr.mxu0 0.0
  %3299 = vmatpush1.msra.mxu0 0.0
  %3300 = vmatprep.subr.mxu0 0.0
  %3301 = vmatpush1.msra.mxu0 0.0
  %3302 = vmatprep.subr.mxu0 %v3267
  %3303 = vmatpush1.msra.mxu0 %v3264
  %3304 = vmatprep.subr.mxu0 0.0
  %3305 = vmatpush2.msra.mxu0 0.0
  %3306 = vmatprep.subr.mxu0 0.0
  %3307 = vmatpush2.msra.mxu0 0.0
  %3308 = vmatprep.subr.mxu0 0.0
  %3309 = vmatpush2.msra.mxu0 0.0
  %3310 = vmatprep.subr.mxu0 0.0
  %3311 = vmatpush2.msra.mxu0 0.0
  %3312 = vmatprep.subr.mxu0 0.0
  %3313 = vmatpush2.msra.mxu0 0.0
  %3314 = vmatprep.subr.mxu0 0.0
  %3315 = vmatpush2.msra.mxu0 0.0
  %3316 = vmatprep.subr.mxu0 0.0
  %3317 = vmatpush2.msra.mxu0 0.0
  %3318 = vmatprep.subr.mxu0 0.0
  %3319 = vmatpush2.msra.mxu0 0.0
  %3320 = vmatprep.subr.mxu0 0.0
  %3321 = vmatpush2.msra.mxu0 0.0
  %3322 = vmatprep.subr.mxu0 0.0
  %3323 = vmatpush2.msra.mxu0 0.0
  %3324 = vmatprep.subr.mxu0 0.0
  %3325 = vmatpush2.msra.mxu0 0.0
  %3326 = vmatprep.subr.mxu0 0.0
  %3327 = vmatpush2.msra.mxu0 0.0
  %3328 = vmatprep.subr.mxu0 0.0
  %3329 = vmatpush2.msra.mxu0 0.0
  %3330 = vmatprep.subr.mxu0 0.0
  %3331 = vmatpush2.msra.mxu0 0.0
  %3332 = vmatprep.subr.mxu0 0.0
  %3333 = vmatpush2.msra.mxu0 0.0
  %3334 = vmatprep.subr.mxu0 0.0
  %3335 = vmatpush2.msra.mxu0 0.0
  %3336 = vmatprep.mubr.f32.mxu0 0.0
  %3337 = vmatmul.mubr.f32.gmra.mxu0 %v3240
  %v3338 = vpop.f32.mrf.mxu0
  %v3339 = vadd.f32 0.0, %v3338
  %v3340 = vpop.f32.mrf.mxu0
  %v3341 = vadd.f32 0.0, %v3340
  %3342 = vmatprep.mubr.f32.mxu0 0.0
  %3343 = vmatmul.mubr.f32.gmra.mxu0 %v3243
  %v3344 = vpop.f32.mrf.mxu0
  %v3345 = vadd.f32 0.0, %v3344
  %v3346 = vpop.f32.mrf.mxu0
  %v3347 = vadd.f32 0.0, %v3346
  %3348 = vmatprep.mubr.f32.mxu0 0.0
  %3349 = vmatmul.mubr.f32.gmra.mxu0 %v3246
  %v3350 = vpop.f32.mrf.mxu0
  %v3351 = vadd.f32 0.0, %v3350
  %v3352 = vpop.f32.mrf.mxu0
  %v3353 = vadd.f32 0.0, %v3352
  %3354 = vmatprep.mubr.f32.mxu0 0.0
  %3355 = vmatmul.mubr.f32.gmra.mxu0 %v3249
  %v3356 = vpop.f32.mrf.mxu0
  %v3357 = vadd.f32 0.0, %v3356
  %v3358 = vpop.f32.mrf.mxu0
  %v3359 = vadd.f32 0.0, %v3358
  %3360 = vmatprep.mubr.f32.mxu0 0.0
  %3361 = vmatmul.mubr.f32.gmra.mxu0 %v3252
  %v3362 = vpop.f32.mrf.mxu0
  %v3363 = vadd.f32 0.0, %v3362
  %v3364 = vpop.f32.mrf.mxu0
  %v3365 = vadd.f32 0.0, %v3364
  %3366 = vmatprep.mubr.f32.mxu0 0.0
  %3367 = vmatmul.mubr.f32.gmra.mxu0 %v3255
  %v3368 = vpop.f32.mrf.mxu0
  %v3369 = vadd.f32 0.0, %v3368
  %v3370 = vpop.f32.mrf.mxu0
  %v3371 = vadd.f32 0.0, %v3370
  %3372 = vmatprep.mubr.f32.mxu0 0.0
  %3373 = vmatmul.mubr.f32.gmra.mxu0 %v3258
  %v3374 = vpop.f32.mrf.mxu0
  %v3375 = vadd.f32 0.0, %v3374
  %v3376 = vpop.f32.mrf.mxu0
  %v3377 = vadd.f32 0.0, %v3376
  %3378 = vmatprep.mubr.f32.mxu0 0.0
  %3379 = vmatmul.mubr.f32.gmra.mxu0 %v3261
  %v3380 = vpop.f32.mrf.mxu0
  %v3381 = vadd.f32 0.0, %v3380
  %v3382 = vpop.f32.mrf.mxu0
  %v3383 = vadd.f32 0.0, %v3382
  %3384 = vdwg.mxu0
  %3385 = vmatprep.subr.mxu0 0.0
  %3386 = vmatpush1.msra.mxu0 0.0
  %3387 = vmatprep.subr.mxu0 0.0
  %3388 = vmatpush1.msra.mxu0 0.0
  %3389 = vmatprep.subr.mxu0 0.0
  %3390 = vmatpush1.msra.mxu0 0.0
  %3391 = vmatprep.subr.mxu0 0.0
  %3392 = vmatpush1.msra.mxu0 0.0
  %3393 = vmatprep.subr.mxu0 0.0
  %3394 = vmatpush1.msra.mxu0 0.0
  %3395 = vmatprep.subr.mxu0 0.0
  %3396 = vmatpush1.msra.mxu0 0.0
  %3397 = vmatprep.subr.mxu0 0.0
  %3398 = vmatpush1.msra.mxu0 0.0
  %3399 = vmatprep.subr.mxu0 0.0
  %3400 = vmatpush1.msra.mxu0 0.0
  %3401 = vmatprep.subr.mxu0 0.0
  %3402 = vmatpush1.msra.mxu0 0.0
  %3403 = vmatprep.subr.mxu0 0.0
  %3404 = vmatpush1.msra.mxu0 0.0
  %3405 = vmatprep.subr.mxu0 0.0
  %3406 = vmatpush1.msra.mxu0 0.0
  %3407 = vmatprep.subr.mxu0 0.0
  %3408 = vmatpush1.msra.mxu0 0.0
  %3409 = vmatprep.subr.mxu0 0.0
  %3410 = vmatpush1.msra.mxu0 0.0
  %3411 = vmatprep.subr.mxu0 0.0
  %3412 = vmatpush1.msra.mxu0 0.0
  %3413 = vmatprep.subr.mxu0 0.0
  %3414 = vmatpush1.msra.mxu0 0.0
  %3415 = vmatprep.subr.mxu0 0.0
  %3416 = vmatpush1.msra.mxu0 %v3270
  %3417 = vmatprep.subr.mxu0 0.0
  %3418 = vmatpush2.msra.mxu0 0.0
  %3419 = vmatprep.subr.mxu0 0.0
  %3420 = vmatpush2.msra.mxu0 0.0
  %3421 = vmatprep.subr.mxu0 0.0
  %3422 = vmatpush2.msra.mxu0 0.0
  %3423 = vmatprep.subr.mxu0 0.0
  %3424 = vmatpush2.msra.mxu0 0.0
  %3425 = vmatprep.subr.mxu0 0.0
  %3426 = vmatpush2.msra.mxu0 0.0
  %3427 = vmatprep.subr.mxu0 0.0
  %3428 = vmatpush2.msra.mxu0 0.0
  %3429 = vmatprep.subr.mxu0 0.0
  %3430 = vmatpush2.msra.mxu0 0.0
  %3431 = vmatprep.subr.mxu0 0.0
  %3432 = vmatpush2.msra.mxu0 0.0
  %3433 = vmatprep.subr.mxu0 0.0
  %3434 = vmatpush2.msra.mxu0 0.0
  %3435 = vmatprep.subr.mxu0 0.0
  %3436 = vmatpush2.msra.mxu0 0.0
  %3437 = vmatprep.subr.mxu0 0.0
  %3438 = vmatpush2.msra.mxu0 0.0
  %3439 = vmatprep.subr.mxu0 0.0
  %3440 = vmatpush2.msra.mxu0 0.0
  %3441 = vmatprep.subr.mxu0 0.0
  %3442 = vmatpush2.msra.mxu0 0.0
  %3443 = vmatprep.subr.mxu0 0.0
  %3444 = vmatpush2.msra.mxu0 0.0
  %3445 = vmatprep.subr.mxu0 0.0
  %3446 = vmatpush2.msra.mxu0 0.0
  %3447 = vmatprep.subr.mxu0 0.0
  %3448 = vmatpush2.msra.mxu0 0.0
  %3449 = vmatprep.mubr.f32.mxu0 0.0
  %3450 = vmatmul.mubr.f32.gmra.mxu0 %v3240
  %v3451 = vpop.f32.mrf.mxu0
  %v3452 = vadd.f32 0.0, %v3451
  %v3453 = vpop.f32.mrf.mxu0
  %3454 = vmatprep.mubr.f32.mxu0 0.0
  %3455 = vmatmul.mubr.f32.gmra.mxu0 %v3243
  %v3456 = vpop.f32.mrf.mxu0
  %v3457 = vadd.f32 0.0, %v3456
  %v3458 = vpop.f32.mrf.mxu0
  %3459 = vmatprep.mubr.f32.mxu0 0.0
  %3460 = vmatmul.mubr.f32.gmra.mxu0 %v3246
  %v3461 = vpop.f32.mrf.mxu0
  %v3462 = vadd.f32 0.0, %v3461
  %v3463 = vpop.f32.mrf.mxu0
  %3464 = vmatprep.mubr.f32.mxu0 0.0
  %3465 = vmatmul.mubr.f32.gmra.mxu0 %v3249
  %v3466 = vpop.f32.mrf.mxu0
  %v3467 = vadd.f32 0.0, %v3466
  %v3468 = vpop.f32.mrf.mxu0
  %3469 = vmatprep.mubr.f32.mxu0 0.0
  %3470 = vmatmul.mubr.f32.gmra.mxu0 %v3252
  %v3471 = vpop.f32.mrf.mxu0
  %v3472 = vadd.f32 0.0, %v3471
  %v3473 = vpop.f32.mrf.mxu0
  %3474 = vmatprep.mubr.f32.mxu0 0.0
  %3475 = vmatmul.mubr.f32.gmra.mxu0 %v3255
  %v3476 = vpop.f32.mrf.mxu0
  %v3477 = vadd.f32 0.0, %v3476
  %v3478 = vpop.f32.mrf.mxu0
  %3479 = vmatprep.mubr.f32.mxu0 0.0
  %3480 = vmatmul.mubr.f32.gmra.mxu0 %v3258
  %v3481 = vpop.f32.mrf.mxu0
  %v3482 = vadd.f32 0.0, %v3481
  %v3483 = vpop.f32.mrf.mxu0
  %3484 = vmatprep.mubr.f32.mxu0 0.0
  %3485 = vmatmul.mubr.f32.gmra.mxu0 %v3261
  %v3486 = vpop.f32.mrf.mxu0
  %v3487 = vadd.f32 0.0, %v3486
  %v3488 = vpop.f32.mrf.mxu0
  %3489 = vdwg.mxu0
  %v3490 = vadd.f32 %v3196, %v3339
  %v3491 = vadd.f32 %v3197, %v3341
  %v3492 = vadd.f32 %v3198, %v3452
  %v3493 = vadd.f32 %v3199, %v3345
  %v3494 = vadd.f32 %v3200, %v3347
  %v3495 = vadd.f32 %v3201, %v3457
  %v3496 = vadd.f32 %v3202, %v3351
  %v3497 = vadd.f32 %v3203, %v3353
  %v3498 = vadd.f32 %v3204, %v3462
  %v3499 = vadd.f32 %v3205, %v3357
  %v3500 = vadd.f32 %v3206, %v3359
  %v3501 = vadd.f32 %v3207, %v3467
  %v3502 = vadd.f32 %v3208, %v3363
  %v3503 = vadd.f32 %v3209, %v3365
  %v3504 = vadd.f32 %v3210, %v3472
  %v3505 = vadd.f32 %v3211, %v3369
  %v3506 = vadd.f32 %v3212, %v3371
  %v3507 = vadd.f32 %v3213, %v3477
  %v3508 = vadd.f32 %v3214, %v3375
  %v3509 = vadd.f32 %v3215, %v3377
  %v3510 = vadd.f32 %v3216, %v3482
  %v3511 = vadd.f32 %v3217, %v3381
  %v3512 = vadd.f32 %v3218, %v3383
  %v3513 = vadd.f32 %v3219, %v3487
  %s3514 = scalar_lea.vmem %s1, 768
  %v3515 = vld [vmem:[%s3514] sm:$0xff]
  %v3516 = vld [vmem:[%s3514 + $0x8] sm:$0xff]
  %v3517 = vld [vmem:[%s3514 + $0x10] sm:$0xff]
  %v3518 = vld [vmem:[%s3514 + $0x18] sm:$0xff]
  %v3519 = vld [vmem:[%s3514 + $0x20] sm:$0xff]
  %v3520 = vld [vmem:[%s3514 + $0x28] sm:$0xff]
  %v3521 = vld [vmem:[%s3514 + $0x30] sm:$0xff]
  %v3522 = vld [vmem:[%s3514 + $0x38] sm:$0xff]
  %3523 = vrot.lane.b32.xlu0 %v49, 116
  %v3524 = vpop.permute.xlu0 %3523
  %3525 = vrot.lane.b32.xlu0 %v57, 116
  %v3526 = vpop.permute.xlu0 %3525
  %3527 = vrot.lane.b32.xlu0 %v56, 116
  %v3528 = vpop.permute.xlu0 %3527
  %vm3529 = vcmp.lt.s32.totalorder %v68, 116
  %v3530 = vsel %vm3529, %v3526, %v3528
  %v3531 = vsel %vm3529, %v3524, %v3526
  %v3532 = vsel %vm3529, %v3528, %v3524
  %v3534 = vsel %vm73, %v3515, 0
  %v3537 = vsel %vm73, %v3516, 0
  %v3540 = vsel %vm73, %v3517, 0
  %v3543 = vsel %vm73, %v3518, 0
  %v3546 = vsel %vm73, %v3519, 0
  %v3549 = vsel %vm73, %v3520, 0
  %v3552 = vsel %vm73, %v3521, 0
  %v3555 = vsel %vm73, %v3522, 0
  %v3558 = vsel %vm98, %v3531, 0
  %v3561 = vsel %vm98, %v3530, 0
  %v3564 = vsel %vm98, %v3532, 0
  %3566 = vmatprep.subr.mxu0 0.0
  %3567 = vmatpush1.msra.mxu0 0.0
  %3568 = vmatprep.subr.mxu0 0.0
  %3569 = vmatpush1.msra.mxu0 0.0
  %3570 = vmatprep.subr.mxu0 0.0
  %3571 = vmatpush1.msra.mxu0 0.0
  %3572 = vmatprep.subr.mxu0 0.0
  %3573 = vmatpush1.msra.mxu0 0.0
  %3574 = vmatprep.subr.mxu0 0.0
  %3575 = vmatpush1.msra.mxu0 0.0
  %3576 = vmatprep.subr.mxu0 0.0
  %3577 = vmatpush1.msra.mxu0 0.0
  %3578 = vmatprep.subr.mxu0 0.0
  %3579 = vmatpush1.msra.mxu0 0.0
  %3580 = vmatprep.subr.mxu0 0.0
  %3581 = vmatpush1.msra.mxu0 0.0
  %3582 = vmatprep.subr.mxu0 0.0
  %3583 = vmatpush1.msra.mxu0 0.0
  %3584 = vmatprep.subr.mxu0 0.0
  %3585 = vmatpush1.msra.mxu0 0.0
  %3586 = vmatprep.subr.mxu0 0.0
  %3587 = vmatpush1.msra.mxu0 0.0
  %3588 = vmatprep.subr.mxu0 0.0
  %3589 = vmatpush1.msra.mxu0 0.0
  %3590 = vmatprep.subr.mxu0 0.0
  %3591 = vmatpush1.msra.mxu0 0.0
  %3592 = vmatprep.subr.mxu0 0.0
  %3593 = vmatpush1.msra.mxu0 0.0
  %3594 = vmatprep.subr.mxu0 0.0
  %3595 = vmatpush1.msra.mxu0 0.0
  %3596 = vmatprep.subr.mxu0 %v3561
  %3597 = vmatpush1.msra.mxu0 %v3558
  %3598 = vmatprep.subr.mxu0 0.0
  %3599 = vmatpush2.msra.mxu0 0.0
  %3600 = vmatprep.subr.mxu0 0.0
  %3601 = vmatpush2.msra.mxu0 0.0
  %3602 = vmatprep.subr.mxu0 0.0
  %3603 = vmatpush2.msra.mxu0 0.0
  %3604 = vmatprep.subr.mxu0 0.0
  %3605 = vmatpush2.msra.mxu0 0.0
  %3606 = vmatprep.subr.mxu0 0.0
  %3607 = vmatpush2.msra.mxu0 0.0
  %3608 = vmatprep.subr.mxu0 0.0
  %3609 = vmatpush2.msra.mxu0 0.0
  %3610 = vmatprep.subr.mxu0 0.0
  %3611 = vmatpush2.msra.mxu0 0.0
  %3612 = vmatprep.subr.mxu0 0.0
  %3613 = vmatpush2.msra.mxu0 0.0
  %3614 = vmatprep.subr.mxu0 0.0
  %3615 = vmatpush2.msra.mxu0 0.0
  %3616 = vmatprep.subr.mxu0 0.0
  %3617 = vmatpush2.msra.mxu0 0.0
  %3618 = vmatprep.subr.mxu0 0.0
  %3619 = vmatpush2.msra.mxu0 0.0
  %3620 = vmatprep.subr.mxu0 0.0
  %3621 = vmatpush2.msra.mxu0 0.0
  %3622 = vmatprep.subr.mxu0 0.0
  %3623 = vmatpush2.msra.mxu0 0.0
  %3624 = vmatprep.subr.mxu0 0.0
  %3625 = vmatpush2.msra.mxu0 0.0
  %3626 = vmatprep.subr.mxu0 0.0
  %3627 = vmatpush2.msra.mxu0 0.0
  %3628 = vmatprep.subr.mxu0 0.0
  %3629 = vmatpush2.msra.mxu0 0.0
  %3630 = vmatprep.mubr.f32.mxu0 0.0
  %3631 = vmatmul.mubr.f32.gmra.mxu0 %v3534
  %v3632 = vpop.f32.mrf.mxu0
  %v3633 = vadd.f32 0.0, %v3632
  %v3634 = vpop.f32.mrf.mxu0
  %v3635 = vadd.f32 0.0, %v3634
  %3636 = vmatprep.mubr.f32.mxu0 0.0
  %3637 = vmatmul.mubr.f32.gmra.mxu0 %v3537
  %v3638 = vpop.f32.mrf.mxu0
  %v3639 = vadd.f32 0.0, %v3638
  %v3640 = vpop.f32.mrf.mxu0
  %v3641 = vadd.f32 0.0, %v3640
  %3642 = vmatprep.mubr.f32.mxu0 0.0
  %3643 = vmatmul.mubr.f32.gmra.mxu0 %v3540
  %v3644 = vpop.f32.mrf.mxu0
  %v3645 = vadd.f32 0.0, %v3644
  %v3646 = vpop.f32.mrf.mxu0
  %v3647 = vadd.f32 0.0, %v3646
  %3648 = vmatprep.mubr.f32.mxu0 0.0
  %3649 = vmatmul.mubr.f32.gmra.mxu0 %v3543
  %v3650 = vpop.f32.mrf.mxu0
  %v3651 = vadd.f32 0.0, %v3650
  %v3652 = vpop.f32.mrf.mxu0
  %v3653 = vadd.f32 0.0, %v3652
  %3654 = vmatprep.mubr.f32.mxu0 0.0
  %3655 = vmatmul.mubr.f32.gmra.mxu0 %v3546
  %v3656 = vpop.f32.mrf.mxu0
  %v3657 = vadd.f32 0.0, %v3656
  %v3658 = vpop.f32.mrf.mxu0
  %v3659 = vadd.f32 0.0, %v3658
  %3660 = vmatprep.mubr.f32.mxu0 0.0
  %3661 = vmatmul.mubr.f32.gmra.mxu0 %v3549
  %v3662 = vpop.f32.mrf.mxu0
  %v3663 = vadd.f32 0.0, %v3662
  %v3664 = vpop.f32.mrf.mxu0
  %v3665 = vadd.f32 0.0, %v3664
  %3666 = vmatprep.mubr.f32.mxu0 0.0
  %3667 = vmatmul.mubr.f32.gmra.mxu0 %v3552
  %v3668 = vpop.f32.mrf.mxu0
  %v3669 = vadd.f32 0.0, %v3668
  %v3670 = vpop.f32.mrf.mxu0
  %v3671 = vadd.f32 0.0, %v3670
  %3672 = vmatprep.mubr.f32.mxu0 0.0
  %3673 = vmatmul.mubr.f32.gmra.mxu0 %v3555
  %v3674 = vpop.f32.mrf.mxu0
  %v3675 = vadd.f32 0.0, %v3674
  %v3676 = vpop.f32.mrf.mxu0
  %v3677 = vadd.f32 0.0, %v3676
  %3678 = vdwg.mxu0
  %3679 = vmatprep.subr.mxu0 0.0
  %3680 = vmatpush1.msra.mxu0 0.0
  %3681 = vmatprep.subr.mxu0 0.0
  %3682 = vmatpush1.msra.mxu0 0.0
  %3683 = vmatprep.subr.mxu0 0.0
  %3684 = vmatpush1.msra.mxu0 0.0
  %3685 = vmatprep.subr.mxu0 0.0
  %3686 = vmatpush1.msra.mxu0 0.0
  %3687 = vmatprep.subr.mxu0 0.0
  %3688 = vmatpush1.msra.mxu0 0.0
  %3689 = vmatprep.subr.mxu0 0.0
  %3690 = vmatpush1.msra.mxu0 0.0
  %3691 = vmatprep.subr.mxu0 0.0
  %3692 = vmatpush1.msra.mxu0 0.0
  %3693 = vmatprep.subr.mxu0 0.0
  %3694 = vmatpush1.msra.mxu0 0.0
  %3695 = vmatprep.subr.mxu0 0.0
  %3696 = vmatpush1.msra.mxu0 0.0
  %3697 = vmatprep.subr.mxu0 0.0
  %3698 = vmatpush1.msra.mxu0 0.0
  %3699 = vmatprep.subr.mxu0 0.0
  %3700 = vmatpush1.msra.mxu0 0.0
  %3701 = vmatprep.subr.mxu0 0.0
  %3702 = vmatpush1.msra.mxu0 0.0
  %3703 = vmatprep.subr.mxu0 0.0
  %3704 = vmatpush1.msra.mxu0 0.0
  %3705 = vmatprep.subr.mxu0 0.0
  %3706 = vmatpush1.msra.mxu0 0.0
  %3707 = vmatprep.subr.mxu0 0.0
  %3708 = vmatpush1.msra.mxu0 0.0
  %3709 = vmatprep.subr.mxu0 0.0
  %3710 = vmatpush1.msra.mxu0 %v3564
  %3711 = vmatprep.subr.mxu0 0.0
  %3712 = vmatpush2.msra.mxu0 0.0
  %3713 = vmatprep.subr.mxu0 0.0
  %3714 = vmatpush2.msra.mxu0 0.0
  %3715 = vmatprep.subr.mxu0 0.0
  %3716 = vmatpush2.msra.mxu0 0.0
  %3717 = vmatprep.subr.mxu0 0.0
  %3718 = vmatpush2.msra.mxu0 0.0
  %3719 = vmatprep.subr.mxu0 0.0
  %3720 = vmatpush2.msra.mxu0 0.0
  %3721 = vmatprep.subr.mxu0 0.0
  %3722 = vmatpush2.msra.mxu0 0.0
  %3723 = vmatprep.subr.mxu0 0.0
  %3724 = vmatpush2.msra.mxu0 0.0
  %3725 = vmatprep.subr.mxu0 0.0
  %3726 = vmatpush2.msra.mxu0 0.0
  %3727 = vmatprep.subr.mxu0 0.0
  %3728 = vmatpush2.msra.mxu0 0.0
  %3729 = vmatprep.subr.mxu0 0.0
  %3730 = vmatpush2.msra.mxu0 0.0
  %3731 = vmatprep.subr.mxu0 0.0
  %3732 = vmatpush2.msra.mxu0 0.0
  %3733 = vmatprep.subr.mxu0 0.0
  %3734 = vmatpush2.msra.mxu0 0.0
  %3735 = vmatprep.subr.mxu0 0.0
  %3736 = vmatpush2.msra.mxu0 0.0
  %3737 = vmatprep.subr.mxu0 0.0
  %3738 = vmatpush2.msra.mxu0 0.0
  %3739 = vmatprep.subr.mxu0 0.0
  %3740 = vmatpush2.msra.mxu0 0.0
  %3741 = vmatprep.subr.mxu0 0.0
  %3742 = vmatpush2.msra.mxu0 0.0
  %3743 = vmatprep.mubr.f32.mxu0 0.0
  %3744 = vmatmul.mubr.f32.gmra.mxu0 %v3534
  %v3745 = vpop.f32.mrf.mxu0
  %v3746 = vadd.f32 0.0, %v3745
  %v3747 = vpop.f32.mrf.mxu0
  %3748 = vmatprep.mubr.f32.mxu0 0.0
  %3749 = vmatmul.mubr.f32.gmra.mxu0 %v3537
  %v3750 = vpop.f32.mrf.mxu0
  %v3751 = vadd.f32 0.0, %v3750
  %v3752 = vpop.f32.mrf.mxu0
  %3753 = vmatprep.mubr.f32.mxu0 0.0
  %3754 = vmatmul.mubr.f32.gmra.mxu0 %v3540
  %v3755 = vpop.f32.mrf.mxu0
  %v3756 = vadd.f32 0.0, %v3755
  %v3757 = vpop.f32.mrf.mxu0
  %3758 = vmatprep.mubr.f32.mxu0 0.0
  %3759 = vmatmul.mubr.f32.gmra.mxu0 %v3543
  %v3760 = vpop.f32.mrf.mxu0
  %v3761 = vadd.f32 0.0, %v3760
  %v3762 = vpop.f32.mrf.mxu0
  %3763 = vmatprep.mubr.f32.mxu0 0.0
  %3764 = vmatmul.mubr.f32.gmra.mxu0 %v3546
  %v3765 = vpop.f32.mrf.mxu0
  %v3766 = vadd.f32 0.0, %v3765
  %v3767 = vpop.f32.mrf.mxu0
  %3768 = vmatprep.mubr.f32.mxu0 0.0
  %3769 = vmatmul.mubr.f32.gmra.mxu0 %v3549
  %v3770 = vpop.f32.mrf.mxu0
  %v3771 = vadd.f32 0.0, %v3770
  %v3772 = vpop.f32.mrf.mxu0
  %3773 = vmatprep.mubr.f32.mxu0 0.0
  %3774 = vmatmul.mubr.f32.gmra.mxu0 %v3552
  %v3775 = vpop.f32.mrf.mxu0
  %v3776 = vadd.f32 0.0, %v3775
  %v3777 = vpop.f32.mrf.mxu0
  %3778 = vmatprep.mubr.f32.mxu0 0.0
  %3779 = vmatmul.mubr.f32.gmra.mxu0 %v3555
  %v3780 = vpop.f32.mrf.mxu0
  %v3781 = vadd.f32 0.0, %v3780
  %v3782 = vpop.f32.mrf.mxu0
  %3783 = vdwg.mxu0
  %v3784 = vadd.f32 %v3490, %v3633
  %v3785 = vadd.f32 %v3491, %v3635
  %v3786 = vadd.f32 %v3492, %v3746
  %v3787 = vadd.f32 %v3493, %v3639
  %v3788 = vadd.f32 %v3494, %v3641
  %v3789 = vadd.f32 %v3495, %v3751
  %v3790 = vadd.f32 %v3496, %v3645
  %v3791 = vadd.f32 %v3497, %v3647
  %v3792 = vadd.f32 %v3498, %v3756
  %v3793 = vadd.f32 %v3499, %v3651
  %v3794 = vadd.f32 %v3500, %v3653
  %v3795 = vadd.f32 %v3501, %v3761
  %v3796 = vadd.f32 %v3502, %v3657
  %v3797 = vadd.f32 %v3503, %v3659
  %v3798 = vadd.f32 %v3504, %v3766
  %v3799 = vadd.f32 %v3505, %v3663
  %v3800 = vadd.f32 %v3506, %v3665
  %v3801 = vadd.f32 %v3507, %v3771
  %v3802 = vadd.f32 %v3508, %v3669
  %v3803 = vadd.f32 %v3509, %v3671
  %v3804 = vadd.f32 %v3510, %v3776
  %v3805 = vadd.f32 %v3511, %v3675
  %v3806 = vadd.f32 %v3512, %v3677
  %v3807 = vadd.f32 %v3513, %v3781
  %s3808 = scalar_lea.vmem %s1, 832
  %v3809 = vld [vmem:[%s3808] sm:$0xff]
  %v3810 = vld [vmem:[%s3808 + $0x8] sm:$0xff]
  %v3811 = vld [vmem:[%s3808 + $0x10] sm:$0xff]
  %v3812 = vld [vmem:[%s3808 + $0x18] sm:$0xff]
  %v3813 = vld [vmem:[%s3808 + $0x20] sm:$0xff]
  %v3814 = vld [vmem:[%s3808 + $0x28] sm:$0xff]
  %v3815 = vld [vmem:[%s3808 + $0x30] sm:$0xff]
  %v3816 = vld [vmem:[%s3808 + $0x38] sm:$0xff]
  %3817 = vrot.lane.b32.xlu0 %v49, 115
  %v3818 = vpop.permute.xlu0 %3817
  %3819 = vrot.lane.b32.xlu0 %v57, 115
  %v3820 = vpop.permute.xlu0 %3819
  %3821 = vrot.lane.b32.xlu0 %v56, 115
  %v3822 = vpop.permute.xlu0 %3821
  %vm3823 = vcmp.lt.s32.totalorder %v68, 115
  %v3824 = vsel %vm3823, %v3820, %v3822
  %v3825 = vsel %vm3823, %v3818, %v3820
  %v3826 = vsel %vm3823, %v3822, %v3818
  %v3828 = vsel %vm73, %v3809, 0
  %v3831 = vsel %vm73, %v3810, 0
  %v3834 = vsel %vm73, %v3811, 0
  %v3837 = vsel %vm73, %v3812, 0
  %v3840 = vsel %vm73, %v3813, 0
  %v3843 = vsel %vm73, %v3814, 0
  %v3846 = vsel %vm73, %v3815, 0
  %v3849 = vsel %vm73, %v3816, 0
  %v3852 = vsel %vm98, %v3825, 0
  %v3855 = vsel %vm98, %v3824, 0
  %v3858 = vsel %vm98, %v3826, 0
  %3860 = vmatprep.subr.mxu0 0.0
  %3861 = vmatpush1.msra.mxu0 0.0
  %3862 = vmatprep.subr.mxu0 0.0
  %3863 = vmatpush1.msra.mxu0 0.0
  %3864 = vmatprep.subr.mxu0 0.0
  %3865 = vmatpush1.msra.mxu0 0.0
  %3866 = vmatprep.subr.mxu0 0.0
  %3867 = vmatpush1.msra.mxu0 0.0
  %3868 = vmatprep.subr.mxu0 0.0
  %3869 = vmatpush1.msra.mxu0 0.0
  %3870 = vmatprep.subr.mxu0 0.0
  %3871 = vmatpush1.msra.mxu0 0.0
  %3872 = vmatprep.subr.mxu0 0.0
  %3873 = vmatpush1.msra.mxu0 0.0
  %3874 = vmatprep.subr.mxu0 0.0
  %3875 = vmatpush1.msra.mxu0 0.0
  %3876 = vmatprep.subr.mxu0 0.0
  %3877 = vmatpush1.msra.mxu0 0.0
  %3878 = vmatprep.subr.mxu0 0.0
  %3879 = vmatpush1.msra.mxu0 0.0
  %3880 = vmatprep.subr.mxu0 0.0
  %3881 = vmatpush1.msra.mxu0 0.0
  %3882 = vmatprep.subr.mxu0 0.0
  %3883 = vmatpush1.msra.mxu0 0.0
  %3884 = vmatprep.subr.mxu0 0.0
  %3885 = vmatpush1.msra.mxu0 0.0
  %3886 = vmatprep.subr.mxu0 0.0
  %3887 = vmatpush1.msra.mxu0 0.0
  %3888 = vmatprep.subr.mxu0 0.0
  %3889 = vmatpush1.msra.mxu0 0.0
  %3890 = vmatprep.subr.mxu0 %v3855
  %3891 = vmatpush1.msra.mxu0 %v3852
  %3892 = vmatprep.subr.mxu0 0.0
  %3893 = vmatpush2.msra.mxu0 0.0
  %3894 = vmatprep.subr.mxu0 0.0
  %3895 = vmatpush2.msra.mxu0 0.0
  %3896 = vmatprep.subr.mxu0 0.0
  %3897 = vmatpush2.msra.mxu0 0.0
  %3898 = vmatprep.subr.mxu0 0.0
  %3899 = vmatpush2.msra.mxu0 0.0
  %3900 = vmatprep.subr.mxu0 0.0
  %3901 = vmatpush2.msra.mxu0 0.0
  %3902 = vmatprep.subr.mxu0 0.0
  %3903 = vmatpush2.msra.mxu0 0.0
  %3904 = vmatprep.subr.mxu0 0.0
  %3905 = vmatpush2.msra.mxu0 0.0
  %3906 = vmatprep.subr.mxu0 0.0
  %3907 = vmatpush2.msra.mxu0 0.0
  %3908 = vmatprep.subr.mxu0 0.0
  %3909 = vmatpush2.msra.mxu0 0.0
  %3910 = vmatprep.subr.mxu0 0.0
  %3911 = vmatpush2.msra.mxu0 0.0
  %3912 = vmatprep.subr.mxu0 0.0
  %3913 = vmatpush2.msra.mxu0 0.0
  %3914 = vmatprep.subr.mxu0 0.0
  %3915 = vmatpush2.msra.mxu0 0.0
  %3916 = vmatprep.subr.mxu0 0.0
  %3917 = vmatpush2.msra.mxu0 0.0
  %3918 = vmatprep.subr.mxu0 0.0
  %3919 = vmatpush2.msra.mxu0 0.0
  %3920 = vmatprep.subr.mxu0 0.0
  %3921 = vmatpush2.msra.mxu0 0.0
  %3922 = vmatprep.subr.mxu0 0.0
  %3923 = vmatpush2.msra.mxu0 0.0
  %3924 = vmatprep.mubr.f32.mxu0 0.0
  %3925 = vmatmul.mubr.f32.gmra.mxu0 %v3828
  %v3926 = vpop.f32.mrf.mxu0
  %v3927 = vadd.f32 0.0, %v3926
  %v3928 = vpop.f32.mrf.mxu0
  %v3929 = vadd.f32 0.0, %v3928
  %3930 = vmatprep.mubr.f32.mxu0 0.0
  %3931 = vmatmul.mubr.f32.gmra.mxu0 %v3831
  %v3932 = vpop.f32.mrf.mxu0
  %v3933 = vadd.f32 0.0, %v3932
  %v3934 = vpop.f32.mrf.mxu0
  %v3935 = vadd.f32 0.0, %v3934
  %3936 = vmatprep.mubr.f32.mxu0 0.0
  %3937 = vmatmul.mubr.f32.gmra.mxu0 %v3834
  %v3938 = vpop.f32.mrf.mxu0
  %v3939 = vadd.f32 0.0, %v3938
  %v3940 = vpop.f32.mrf.mxu0
  %v3941 = vadd.f32 0.0, %v3940
  %3942 = vmatprep.mubr.f32.mxu0 0.0
  %3943 = vmatmul.mubr.f32.gmra.mxu0 %v3837
  %v3944 = vpop.f32.mrf.mxu0
  %v3945 = vadd.f32 0.0, %v3944
  %v3946 = vpop.f32.mrf.mxu0
  %v3947 = vadd.f32 0.0, %v3946
  %3948 = vmatprep.mubr.f32.mxu0 0.0
  %3949 = vmatmul.mubr.f32.gmra.mxu0 %v3840
  %v3950 = vpop.f32.mrf.mxu0
  %v3951 = vadd.f32 0.0, %v3950
  %v3952 = vpop.f32.mrf.mxu0
  %v3953 = vadd.f32 0.0, %v3952
  %3954 = vmatprep.mubr.f32.mxu0 0.0
  %3955 = vmatmul.mubr.f32.gmra.mxu0 %v3843
  %v3956 = vpop.f32.mrf.mxu0
  %v3957 = vadd.f32 0.0, %v3956
  %v3958 = vpop.f32.mrf.mxu0
  %v3959 = vadd.f32 0.0, %v3958
  %3960 = vmatprep.mubr.f32.mxu0 0.0
  %3961 = vmatmul.mubr.f32.gmra.mxu0 %v3846
  %v3962 = vpop.f32.mrf.mxu0
  %v3963 = vadd.f32 0.0, %v3962
  %v3964 = vpop.f32.mrf.mxu0
  %v3965 = vadd.f32 0.0, %v3964
  %3966 = vmatprep.mubr.f32.mxu0 0.0
  %3967 = vmatmul.mubr.f32.gmra.mxu0 %v3849
  %v3968 = vpop.f32.mrf.mxu0
  %v3969 = vadd.f32 0.0, %v3968
  %v3970 = vpop.f32.mrf.mxu0
  %v3971 = vadd.f32 0.0, %v3970
  %3972 = vdwg.mxu0
  %3973 = vmatprep.subr.mxu0 0.0
  %3974 = vmatpush1.msra.mxu0 0.0
  %3975 = vmatprep.subr.mxu0 0.0
  %3976 = vmatpush1.msra.mxu0 0.0
  %3977 = vmatprep.subr.mxu0 0.0
  %3978 = vmatpush1.msra.mxu0 0.0
  %3979 = vmatprep.subr.mxu0 0.0
  %3980 = vmatpush1.msra.mxu0 0.0
  %3981 = vmatprep.subr.mxu0 0.0
  %3982 = vmatpush1.msra.mxu0 0.0
  %3983 = vmatprep.subr.mxu0 0.0
  %3984 = vmatpush1.msra.mxu0 0.0
  %3985 = vmatprep.subr.mxu0 0.0
  %3986 = vmatpush1.msra.mxu0 0.0
  %3987 = vmatprep.subr.mxu0 0.0
  %3988 = vmatpush1.msra.mxu0 0.0
  %3989 = vmatprep.subr.mxu0 0.0
  %3990 = vmatpush1.msra.mxu0 0.0
  %3991 = vmatprep.subr.mxu0 0.0
  %3992 = vmatpush1.msra.mxu0 0.0
  %3993 = vmatprep.subr.mxu0 0.0
  %3994 = vmatpush1.msra.mxu0 0.0
  %3995 = vmatprep.subr.mxu0 0.0
  %3996 = vmatpush1.msra.mxu0 0.0
  %3997 = vmatprep.subr.mxu0 0.0
  %3998 = vmatpush1.msra.mxu0 0.0
  %3999 = vmatprep.subr.mxu0 0.0
  %4000 = vmatpush1.msra.mxu0 0.0
  %4001 = vmatprep.subr.mxu0 0.0
  %4002 = vmatpush1.msra.mxu0 0.0
  %4003 = vmatprep.subr.mxu0 0.0
  %4004 = vmatpush1.msra.mxu0 %v3858
  %4005 = vmatprep.subr.mxu0 0.0
  %4006 = vmatpush2.msra.mxu0 0.0
  %4007 = vmatprep.subr.mxu0 0.0
  %4008 = vmatpush2.msra.mxu0 0.0
  %4009 = vmatprep.subr.mxu0 0.0
  %4010 = vmatpush2.msra.mxu0 0.0
  %4011 = vmatprep.subr.mxu0 0.0
  %4012 = vmatpush2.msra.mxu0 0.0
  %4013 = vmatprep.subr.mxu0 0.0
  %4014 = vmatpush2.msra.mxu0 0.0
  %4015 = vmatprep.subr.mxu0 0.0
  %4016 = vmatpush2.msra.mxu0 0.0
  %4017 = vmatprep.subr.mxu0 0.0
  %4018 = vmatpush2.msra.mxu0 0.0
  %4019 = vmatprep.subr.mxu0 0.0
  %4020 = vmatpush2.msra.mxu0 0.0
  %4021 = vmatprep.subr.mxu0 0.0
  %4022 = vmatpush2.msra.mxu0 0.0
  %4023 = vmatprep.subr.mxu0 0.0
  %4024 = vmatpush2.msra.mxu0 0.0
  %4025 = vmatprep.subr.mxu0 0.0
  %4026 = vmatpush2.msra.mxu0 0.0
  %4027 = vmatprep.subr.mxu0 0.0
  %4028 = vmatpush2.msra.mxu0 0.0
  %4029 = vmatprep.subr.mxu0 0.0
  %4030 = vmatpush2.msra.mxu0 0.0
  %4031 = vmatprep.subr.mxu0 0.0
  %4032 = vmatpush2.msra.mxu0 0.0
  %4033 = vmatprep.subr.mxu0 0.0
  %4034 = vmatpush2.msra.mxu0 0.0
  %4035 = vmatprep.subr.mxu0 0.0
  %4036 = vmatpush2.msra.mxu0 0.0
  %4037 = vmatprep.mubr.f32.mxu0 0.0
  %4038 = vmatmul.mubr.f32.gmra.mxu0 %v3828
  %v4039 = vpop.f32.mrf.mxu0
  %v4040 = vadd.f32 0.0, %v4039
  %v4041 = vpop.f32.mrf.mxu0
  %4042 = vmatprep.mubr.f32.mxu0 0.0
  %4043 = vmatmul.mubr.f32.gmra.mxu0 %v3831
  %v4044 = vpop.f32.mrf.mxu0
  %v4045 = vadd.f32 0.0, %v4044
  %v4046 = vpop.f32.mrf.mxu0
  %4047 = vmatprep.mubr.f32.mxu0 0.0
  %4048 = vmatmul.mubr.f32.gmra.mxu0 %v3834
  %v4049 = vpop.f32.mrf.mxu0
  %v4050 = vadd.f32 0.0, %v4049
  %v4051 = vpop.f32.mrf.mxu0
  %4052 = vmatprep.mubr.f32.mxu0 0.0
  %4053 = vmatmul.mubr.f32.gmra.mxu0 %v3837
  %v4054 = vpop.f32.mrf.mxu0
  %v4055 = vadd.f32 0.0, %v4054
  %v4056 = vpop.f32.mrf.mxu0
  %4057 = vmatprep.mubr.f32.mxu0 0.0
  %4058 = vmatmul.mubr.f32.gmra.mxu0 %v3840
  %v4059 = vpop.f32.mrf.mxu0
  %v4060 = vadd.f32 0.0, %v4059
  %v4061 = vpop.f32.mrf.mxu0
  %4062 = vmatprep.mubr.f32.mxu0 0.0
  %4063 = vmatmul.mubr.f32.gmra.mxu0 %v3843
  %v4064 = vpop.f32.mrf.mxu0
  %v4065 = vadd.f32 0.0, %v4064
  %v4066 = vpop.f32.mrf.mxu0
  %4067 = vmatprep.mubr.f32.mxu0 0.0
  %4068 = vmatmul.mubr.f32.gmra.mxu0 %v3846
  %v4069 = vpop.f32.mrf.mxu0
  %v4070 = vadd.f32 0.0, %v4069
  %v4071 = vpop.f32.mrf.mxu0
  %4072 = vmatprep.mubr.f32.mxu0 0.0
  %4073 = vmatmul.mubr.f32.gmra.mxu0 %v3849
  %v4074 = vpop.f32.mrf.mxu0
  %v4075 = vadd.f32 0.0, %v4074
  %v4076 = vpop.f32.mrf.mxu0
  %4077 = vdwg.mxu0
  %v4078 = vadd.f32 %v3784, %v3927
  %v4079 = vadd.f32 %v3785, %v3929
  %v4080 = vadd.f32 %v3786, %v4040
  %v4081 = vadd.f32 %v3787, %v3933
  %v4082 = vadd.f32 %v3788, %v3935
  %v4083 = vadd.f32 %v3789, %v4045
  %v4084 = vadd.f32 %v3790, %v3939
  %v4085 = vadd.f32 %v3791, %v3941
  %v4086 = vadd.f32 %v3792, %v4050
  %v4087 = vadd.f32 %v3793, %v3945
  %v4088 = vadd.f32 %v3794, %v3947
  %v4089 = vadd.f32 %v3795, %v4055
  %v4090 = vadd.f32 %v3796, %v3951
  %v4091 = vadd.f32 %v3797, %v3953
  %v4092 = vadd.f32 %v3798, %v4060
  %v4093 = vadd.f32 %v3799, %v3957
  %v4094 = vadd.f32 %v3800, %v3959
  %v4095 = vadd.f32 %v3801, %v4065
  %v4096 = vadd.f32 %v3802, %v3963
  %v4097 = vadd.f32 %v3803, %v3965
  %v4098 = vadd.f32 %v3804, %v4070
  %v4099 = vadd.f32 %v3805, %v3969
  %v4100 = vadd.f32 %v3806, %v3971
  %v4101 = vadd.f32 %v3807, %v4075
  %s4102 = scalar_lea.vmem %s1, 896
  %v4103 = vld [vmem:[%s4102] sm:$0xff]
  %v4104 = vld [vmem:[%s4102 + $0x8] sm:$0xff]
  %v4105 = vld [vmem:[%s4102 + $0x10] sm:$0xff]
  %v4106 = vld [vmem:[%s4102 + $0x18] sm:$0xff]
  %v4107 = vld [vmem:[%s4102 + $0x20] sm:$0xff]
  %v4108 = vld [vmem:[%s4102 + $0x28] sm:$0xff]
  %v4109 = vld [vmem:[%s4102 + $0x30] sm:$0xff]
  %v4110 = vld [vmem:[%s4102 + $0x38] sm:$0xff]
  %4111 = vrot.lane.b32.xlu0 %v49, 114
  %v4112 = vpop.permute.xlu0 %4111
  %4113 = vrot.lane.b32.xlu0 %v57, 114
  %v4114 = vpop.permute.xlu0 %4113
  %4115 = vrot.lane.b32.xlu0 %v56, 114
  %v4116 = vpop.permute.xlu0 %4115
  %vm4117 = vcmp.lt.s32.totalorder %v68, 114
  %v4118 = vsel %vm4117, %v4114, %v4116
  %v4119 = vsel %vm4117, %v4112, %v4114
  %v4120 = vsel %vm4117, %v4116, %v4112
  %v4122 = vsel %vm73, %v4103, 0
  %v4125 = vsel %vm73, %v4104, 0
  %v4128 = vsel %vm73, %v4105, 0
  %v4131 = vsel %vm73, %v4106, 0
  %v4134 = vsel %vm73, %v4107, 0
  %v4137 = vsel %vm73, %v4108, 0
  %v4140 = vsel %vm73, %v4109, 0
  %v4143 = vsel %vm73, %v4110, 0
  %v4146 = vsel %vm98, %v4119, 0
  %v4149 = vsel %vm98, %v4118, 0
  %v4152 = vsel %vm98, %v4120, 0
  %4154 = vmatprep.subr.mxu0 0.0
  %4155 = vmatpush1.msra.mxu0 0.0
  %4156 = vmatprep.subr.mxu0 0.0
  %4157 = vmatpush1.msra.mxu0 0.0
  %4158 = vmatprep.subr.mxu0 0.0
  %4159 = vmatpush1.msra.mxu0 0.0
  %4160 = vmatprep.subr.mxu0 0.0
  %4161 = vmatpush1.msra.mxu0 0.0
  %4162 = vmatprep.subr.mxu0 0.0
  %4163 = vmatpush1.msra.mxu0 0.0
  %4164 = vmatprep.subr.mxu0 0.0
  %4165 = vmatpush1.msra.mxu0 0.0
  %4166 = vmatprep.subr.mxu0 0.0
  %4167 = vmatpush1.msra.mxu0 0.0
  %4168 = vmatprep.subr.mxu0 0.0
  %4169 = vmatpush1.msra.mxu0 0.0
  %4170 = vmatprep.subr.mxu0 0.0
  %4171 = vmatpush1.msra.mxu0 0.0
  %4172 = vmatprep.subr.mxu0 0.0
  %4173 = vmatpush1.msra.mxu0 0.0
  %4174 = vmatprep.subr.mxu0 0.0
  %4175 = vmatpush1.msra.mxu0 0.0
  %4176 = vmatprep.subr.mxu0 0.0
  %4177 = vmatpush1.msra.mxu0 0.0
  %4178 = vmatprep.subr.mxu0 0.0
  %4179 = vmatpush1.msra.mxu0 0.0
  %4180 = vmatprep.subr.mxu0 0.0
  %4181 = vmatpush1.msra.mxu0 0.0
  %4182 = vmatprep.subr.mxu0 0.0
  %4183 = vmatpush1.msra.mxu0 0.0
  %4184 = vmatprep.subr.mxu0 %v4149
  %4185 = vmatpush1.msra.mxu0 %v4146
  %4186 = vmatprep.subr.mxu0 0.0
  %4187 = vmatpush2.msra.mxu0 0.0
  %4188 = vmatprep.subr.mxu0 0.0
  %4189 = vmatpush2.msra.mxu0 0.0
  %4190 = vmatprep.subr.mxu0 0.0
  %4191 = vmatpush2.msra.mxu0 0.0
  %4192 = vmatprep.subr.mxu0 0.0
  %4193 = vmatpush2.msra.mxu0 0.0
  %4194 = vmatprep.subr.mxu0 0.0
  %4195 = vmatpush2.msra.mxu0 0.0
  %4196 = vmatprep.subr.mxu0 0.0
  %4197 = vmatpush2.msra.mxu0 0.0
  %4198 = vmatprep.subr.mxu0 0.0
  %4199 = vmatpush2.msra.mxu0 0.0
  %4200 = vmatprep.subr.mxu0 0.0
  %4201 = vmatpush2.msra.mxu0 0.0
  %4202 = vmatprep.subr.mxu0 0.0
  %4203 = vmatpush2.msra.mxu0 0.0
  %4204 = vmatprep.subr.mxu0 0.0
  %4205 = vmatpush2.msra.mxu0 0.0
  %4206 = vmatprep.subr.mxu0 0.0
  %4207 = vmatpush2.msra.mxu0 0.0
  %4208 = vmatprep.subr.mxu0 0.0
  %4209 = vmatpush2.msra.mxu0 0.0
  %4210 = vmatprep.subr.mxu0 0.0
  %4211 = vmatpush2.msra.mxu0 0.0
  %4212 = vmatprep.subr.mxu0 0.0
  %4213 = vmatpush2.msra.mxu0 0.0
  %4214 = vmatprep.subr.mxu0 0.0
  %4215 = vmatpush2.msra.mxu0 0.0
  %4216 = vmatprep.subr.mxu0 0.0
  %4217 = vmatpush2.msra.mxu0 0.0
  %4218 = vmatprep.mubr.f32.mxu0 0.0
  %4219 = vmatmul.mubr.f32.gmra.mxu0 %v4122
  %v4220 = vpop.f32.mrf.mxu0
  %v4221 = vadd.f32 0.0, %v4220
  %v4222 = vpop.f32.mrf.mxu0
  %v4223 = vadd.f32 0.0, %v4222
  %4224 = vmatprep.mubr.f32.mxu0 0.0
  %4225 = vmatmul.mubr.f32.gmra.mxu0 %v4125
  %v4226 = vpop.f32.mrf.mxu0
  %v4227 = vadd.f32 0.0, %v4226
  %v4228 = vpop.f32.mrf.mxu0
  %v4229 = vadd.f32 0.0, %v4228
  %4230 = vmatprep.mubr.f32.mxu0 0.0
  %4231 = vmatmul.mubr.f32.gmra.mxu0 %v4128
  %v4232 = vpop.f32.mrf.mxu0
  %v4233 = vadd.f32 0.0, %v4232
  %v4234 = vpop.f32.mrf.mxu0
  %v4235 = vadd.f32 0.0, %v4234
  %4236 = vmatprep.mubr.f32.mxu0 0.0
  %4237 = vmatmul.mubr.f32.gmra.mxu0 %v4131
  %v4238 = vpop.f32.mrf.mxu0
  %v4239 = vadd.f32 0.0, %v4238
  %v4240 = vpop.f32.mrf.mxu0
  %v4241 = vadd.f32 0.0, %v4240
  %4242 = vmatprep.mubr.f32.mxu0 0.0
  %4243 = vmatmul.mubr.f32.gmra.mxu0 %v4134
  %v4244 = vpop.f32.mrf.mxu0
  %v4245 = vadd.f32 0.0, %v4244
  %v4246 = vpop.f32.mrf.mxu0
  %v4247 = vadd.f32 0.0, %v4246
  %4248 = vmatprep.mubr.f32.mxu0 0.0
  %4249 = vmatmul.mubr.f32.gmra.mxu0 %v4137
  %v4250 = vpop.f32.mrf.mxu0
  %v4251 = vadd.f32 0.0, %v4250
  %v4252 = vpop.f32.mrf.mxu0
  %v4253 = vadd.f32 0.0, %v4252
  %4254 = vmatprep.mubr.f32.mxu0 0.0
  %4255 = vmatmul.mubr.f32.gmra.mxu0 %v4140
  %v4256 = vpop.f32.mrf.mxu0
  %v4257 = vadd.f32 0.0, %v4256
  %v4258 = vpop.f32.mrf.mxu0
  %v4259 = vadd.f32 0.0, %v4258
  %4260 = vmatprep.mubr.f32.mxu0 0.0
  %4261 = vmatmul.mubr.f32.gmra.mxu0 %v4143
  %v4262 = vpop.f32.mrf.mxu0
  %v4263 = vadd.f32 0.0, %v4262
  %v4264 = vpop.f32.mrf.mxu0
  %v4265 = vadd.f32 0.0, %v4264
  %4266 = vdwg.mxu0
  %4267 = vmatprep.subr.mxu0 0.0
  %4268 = vmatpush1.msra.mxu0 0.0
  %4269 = vmatprep.subr.mxu0 0.0
  %4270 = vmatpush1.msra.mxu0 0.0
  %4271 = vmatprep.subr.mxu0 0.0
  %4272 = vmatpush1.msra.mxu0 0.0
  %4273 = vmatprep.subr.mxu0 0.0
  %4274 = vmatpush1.msra.mxu0 0.0
  %4275 = vmatprep.subr.mxu0 0.0
  %4276 = vmatpush1.msra.mxu0 0.0
  %4277 = vmatprep.subr.mxu0 0.0
  %4278 = vmatpush1.msra.mxu0 0.0
  %4279 = vmatprep.subr.mxu0 0.0
  %4280 = vmatpush1.msra.mxu0 0.0
  %4281 = vmatprep.subr.mxu0 0.0
  %4282 = vmatpush1.msra.mxu0 0.0
  %4283 = vmatprep.subr.mxu0 0.0
  %4284 = vmatpush1.msra.mxu0 0.0
  %4285 = vmatprep.subr.mxu0 0.0
  %4286 = vmatpush1.msra.mxu0 0.0
  %4287 = vmatprep.subr.mxu0 0.0
  %4288 = vmatpush1.msra.mxu0 0.0
  %4289 = vmatprep.subr.mxu0 0.0
  %4290 = vmatpush1.msra.mxu0 0.0
  %4291 = vmatprep.subr.mxu0 0.0
  %4292 = vmatpush1.msra.mxu0 0.0
  %4293 = vmatprep.subr.mxu0 0.0
  %4294 = vmatpush1.msra.mxu0 0.0
  %4295 = vmatprep.subr.mxu0 0.0
  %4296 = vmatpush1.msra.mxu0 0.0
  %4297 = vmatprep.subr.mxu0 0.0
  %4298 = vmatpush1.msra.mxu0 %v4152
  %4299 = vmatprep.subr.mxu0 0.0
  %4300 = vmatpush2.msra.mxu0 0.0
  %4301 = vmatprep.subr.mxu0 0.0
  %4302 = vmatpush2.msra.mxu0 0.0
  %4303 = vmatprep.subr.mxu0 0.0
  %4304 = vmatpush2.msra.mxu0 0.0
  %4305 = vmatprep.subr.mxu0 0.0
  %4306 = vmatpush2.msra.mxu0 0.0
  %4307 = vmatprep.subr.mxu0 0.0
  %4308 = vmatpush2.msra.mxu0 0.0
  %4309 = vmatprep.subr.mxu0 0.0
  %4310 = vmatpush2.msra.mxu0 0.0
  %4311 = vmatprep.subr.mxu0 0.0
  %4312 = vmatpush2.msra.mxu0 0.0
  %4313 = vmatprep.subr.mxu0 0.0
  %4314 = vmatpush2.msra.mxu0 0.0
  %4315 = vmatprep.subr.mxu0 0.0
  %4316 = vmatpush2.msra.mxu0 0.0
  %4317 = vmatprep.subr.mxu0 0.0
  %4318 = vmatpush2.msra.mxu0 0.0
  %4319 = vmatprep.subr.mxu0 0.0
  %4320 = vmatpush2.msra.mxu0 0.0
  %4321 = vmatprep.subr.mxu0 0.0
  %4322 = vmatpush2.msra.mxu0 0.0
  %4323 = vmatprep.subr.mxu0 0.0
  %4324 = vmatpush2.msra.mxu0 0.0
  %4325 = vmatprep.subr.mxu0 0.0
  %4326 = vmatpush2.msra.mxu0 0.0
  %4327 = vmatprep.subr.mxu0 0.0
  %4328 = vmatpush2.msra.mxu0 0.0
  %4329 = vmatprep.subr.mxu0 0.0
  %4330 = vmatpush2.msra.mxu0 0.0
  %4331 = vmatprep.mubr.f32.mxu0 0.0
  %4332 = vmatmul.mubr.f32.gmra.mxu0 %v4122
  %v4333 = vpop.f32.mrf.mxu0
  %v4334 = vadd.f32 0.0, %v4333
  %v4335 = vpop.f32.mrf.mxu0
  %4336 = vmatprep.mubr.f32.mxu0 0.0
  %4337 = vmatmul.mubr.f32.gmra.mxu0 %v4125
  %v4338 = vpop.f32.mrf.mxu0
  %v4339 = vadd.f32 0.0, %v4338
  %v4340 = vpop.f32.mrf.mxu0
  %4341 = vmatprep.mubr.f32.mxu0 0.0
  %4342 = vmatmul.mubr.f32.gmra.mxu0 %v4128
  %v4343 = vpop.f32.mrf.mxu0
  %v4344 = vadd.f32 0.0, %v4343
  %v4345 = vpop.f32.mrf.mxu0
  %4346 = vmatprep.mubr.f32.mxu0 0.0
  %4347 = vmatmul.mubr.f32.gmra.mxu0 %v4131
  %v4348 = vpop.f32.mrf.mxu0
  %v4349 = vadd.f32 0.0, %v4348
  %v4350 = vpop.f32.mrf.mxu0
  %4351 = vmatprep.mubr.f32.mxu0 0.0
  %4352 = vmatmul.mubr.f32.gmra.mxu0 %v4134
  %v4353 = vpop.f32.mrf.mxu0
  %v4354 = vadd.f32 0.0, %v4353
  %v4355 = vpop.f32.mrf.mxu0
  %4356 = vmatprep.mubr.f32.mxu0 0.0
  %4357 = vmatmul.mubr.f32.gmra.mxu0 %v4137
  %v4358 = vpop.f32.mrf.mxu0
  %v4359 = vadd.f32 0.0, %v4358
  %v4360 = vpop.f32.mrf.mxu0
  %4361 = vmatprep.mubr.f32.mxu0 0.0
  %4362 = vmatmul.mubr.f32.gmra.mxu0 %v4140
  %v4363 = vpop.f32.mrf.mxu0
  %v4364 = vadd.f32 0.0, %v4363
  %v4365 = vpop.f32.mrf.mxu0
  %4366 = vmatprep.mubr.f32.mxu0 0.0
  %4367 = vmatmul.mubr.f32.gmra.mxu0 %v4143
  %v4368 = vpop.f32.mrf.mxu0
  %v4369 = vadd.f32 0.0, %v4368
  %v4370 = vpop.f32.mrf.mxu0
  %4371 = vdwg.mxu0
  %v4372 = vadd.f32 %v4078, %v4221
  %v4373 = vadd.f32 %v4079, %v4223
  %v4374 = vadd.f32 %v4080, %v4334
  %v4375 = vadd.f32 %v4081, %v4227
  %v4376 = vadd.f32 %v4082, %v4229
  %v4377 = vadd.f32 %v4083, %v4339
  %v4378 = vadd.f32 %v4084, %v4233
  %v4379 = vadd.f32 %v4085, %v4235
  %v4380 = vadd.f32 %v4086, %v4344
  %v4381 = vadd.f32 %v4087, %v4239
  %v4382 = vadd.f32 %v4088, %v4241
  %v4383 = vadd.f32 %v4089, %v4349
  %v4384 = vadd.f32 %v4090, %v4245
  %v4385 = vadd.f32 %v4091, %v4247
  %v4386 = vadd.f32 %v4092, %v4354
  %v4387 = vadd.f32 %v4093, %v4251
  %v4388 = vadd.f32 %v4094, %v4253
  %v4389 = vadd.f32 %v4095, %v4359
  %v4390 = vadd.f32 %v4096, %v4257
  %v4391 = vadd.f32 %v4097, %v4259
  %v4392 = vadd.f32 %v4098, %v4364
  %v4393 = vadd.f32 %v4099, %v4263
  %v4394 = vadd.f32 %v4100, %v4265
  %v4395 = vadd.f32 %v4101, %v4369
  %s4396 = scalar_lea.vmem %s1, 960
  %v4397 = vld [vmem:[%s4396] sm:$0xff]
  %v4398 = vld [vmem:[%s4396 + $0x8] sm:$0xff]
  %v4399 = vld [vmem:[%s4396 + $0x10] sm:$0xff]
  %v4400 = vld [vmem:[%s4396 + $0x18] sm:$0xff]
  %v4401 = vld [vmem:[%s4396 + $0x20] sm:$0xff]
  %v4402 = vld [vmem:[%s4396 + $0x28] sm:$0xff]
  %v4403 = vld [vmem:[%s4396 + $0x30] sm:$0xff]
  %v4404 = vld [vmem:[%s4396 + $0x38] sm:$0xff]
  %4405 = vrot.lane.b32.xlu0 %v49, 113
  %v4406 = vpop.permute.xlu0 %4405
  %4407 = vrot.lane.b32.xlu0 %v57, 113
  %v4408 = vpop.permute.xlu0 %4407
  %4409 = vrot.lane.b32.xlu0 %v56, 113
  %v4410 = vpop.permute.xlu0 %4409
  %vm4411 = vcmp.lt.s32.totalorder %v68, 113
  %v4412 = vsel %vm4411, %v4408, %v4410
  %v4413 = vsel %vm4411, %v4406, %v4408
  %v4414 = vsel %vm4411, %v4410, %v4406
  %v4416 = vsel %vm73, %v4397, 0
  %v4419 = vsel %vm73, %v4398, 0
  %v4422 = vsel %vm73, %v4399, 0
  %v4425 = vsel %vm73, %v4400, 0
  %v4428 = vsel %vm73, %v4401, 0
  %v4431 = vsel %vm73, %v4402, 0
  %v4434 = vsel %vm73, %v4403, 0
  %v4437 = vsel %vm73, %v4404, 0
  %v4440 = vsel %vm98, %v4413, 0
  %v4443 = vsel %vm98, %v4412, 0
  %v4446 = vsel %vm98, %v4414, 0
  %4448 = vmatprep.subr.mxu0 0.0
  %4449 = vmatpush1.msra.mxu0 0.0
  %4450 = vmatprep.subr.mxu0 0.0
  %4451 = vmatpush1.msra.mxu0 0.0
  %4452 = vmatprep.subr.mxu0 0.0
  %4453 = vmatpush1.msra.mxu0 0.0
  %4454 = vmatprep.subr.mxu0 0.0
  %4455 = vmatpush1.msra.mxu0 0.0
  %4456 = vmatprep.subr.mxu0 0.0
  %4457 = vmatpush1.msra.mxu0 0.0
  %4458 = vmatprep.subr.mxu0 0.0
  %4459 = vmatpush1.msra.mxu0 0.0
  %4460 = vmatprep.subr.mxu0 0.0
  %4461 = vmatpush1.msra.mxu0 0.0
  %4462 = vmatprep.subr.mxu0 0.0
  %4463 = vmatpush1.msra.mxu0 0.0
  %4464 = vmatprep.subr.mxu0 0.0
  %4465 = vmatpush1.msra.mxu0 0.0
  %4466 = vmatprep.subr.mxu0 0.0
  %4467 = vmatpush1.msra.mxu0 0.0
  %4468 = vmatprep.subr.mxu0 0.0
  %4469 = vmatpush1.msra.mxu0 0.0
  %4470 = vmatprep.subr.mxu0 0.0
  %4471 = vmatpush1.msra.mxu0 0.0
  %4472 = vmatprep.subr.mxu0 0.0
  %4473 = vmatpush1.msra.mxu0 0.0
  %4474 = vmatprep.subr.mxu0 0.0
  %4475 = vmatpush1.msra.mxu0 0.0
  %4476 = vmatprep.subr.mxu0 0.0
  %4477 = vmatpush1.msra.mxu0 0.0
  %4478 = vmatprep.subr.mxu0 %v4443
  %4479 = vmatpush1.msra.mxu0 %v4440
  %4480 = vmatprep.subr.mxu0 0.0
  %4481 = vmatpush2.msra.mxu0 0.0
  %4482 = vmatprep.subr.mxu0 0.0
  %4483 = vmatpush2.msra.mxu0 0.0
  %4484 = vmatprep.subr.mxu0 0.0
  %4485 = vmatpush2.msra.mxu0 0.0
  %4486 = vmatprep.subr.mxu0 0.0
  %4487 = vmatpush2.msra.mxu0 0.0
  %4488 = vmatprep.subr.mxu0 0.0
  %4489 = vmatpush2.msra.mxu0 0.0
  %4490 = vmatprep.subr.mxu0 0.0
  %4491 = vmatpush2.msra.mxu0 0.0
  %4492 = vmatprep.subr.mxu0 0.0
  %4493 = vmatpush2.msra.mxu0 0.0
  %4494 = vmatprep.subr.mxu0 0.0
  %4495 = vmatpush2.msra.mxu0 0.0
  %4496 = vmatprep.subr.mxu0 0.0
  %4497 = vmatpush2.msra.mxu0 0.0
  %4498 = vmatprep.subr.mxu0 0.0
  %4499 = vmatpush2.msra.mxu0 0.0
  %4500 = vmatprep.subr.mxu0 0.0
  %4501 = vmatpush2.msra.mxu0 0.0
  %4502 = vmatprep.subr.mxu0 0.0
  %4503 = vmatpush2.msra.mxu0 0.0
  %4504 = vmatprep.subr.mxu0 0.0
  %4505 = vmatpush2.msra.mxu0 0.0
  %4506 = vmatprep.subr.mxu0 0.0
  %4507 = vmatpush2.msra.mxu0 0.0
  %4508 = vmatprep.subr.mxu0 0.0
  %4509 = vmatpush2.msra.mxu0 0.0
  %4510 = vmatprep.subr.mxu0 0.0
  %4511 = vmatpush2.msra.mxu0 0.0
  %4512 = vmatprep.mubr.f32.mxu0 0.0
  %4513 = vmatmul.mubr.f32.gmra.mxu0 %v4416
  %v4514 = vpop.f32.mrf.mxu0
  %v4515 = vadd.f32 0.0, %v4514
  %v4516 = vpop.f32.mrf.mxu0
  %v4517 = vadd.f32 0.0, %v4516
  %4518 = vmatprep.mubr.f32.mxu0 0.0
  %4519 = vmatmul.mubr.f32.gmra.mxu0 %v4419
  %v4520 = vpop.f32.mrf.mxu0
  %v4521 = vadd.f32 0.0, %v4520
  %v4522 = vpop.f32.mrf.mxu0
  %v4523 = vadd.f32 0.0, %v4522
  %4524 = vmatprep.mubr.f32.mxu0 0.0
  %4525 = vmatmul.mubr.f32.gmra.mxu0 %v4422
  %v4526 = vpop.f32.mrf.mxu0
  %v4527 = vadd.f32 0.0, %v4526
  %v4528 = vpop.f32.mrf.mxu0
  %v4529 = vadd.f32 0.0, %v4528
  %4530 = vmatprep.mubr.f32.mxu0 0.0
  %4531 = vmatmul.mubr.f32.gmra.mxu0 %v4425
  %v4532 = vpop.f32.mrf.mxu0
  %v4533 = vadd.f32 0.0, %v4532
  %v4534 = vpop.f32.mrf.mxu0
  %v4535 = vadd.f32 0.0, %v4534
  %4536 = vmatprep.mubr.f32.mxu0 0.0
  %4537 = vmatmul.mubr.f32.gmra.mxu0 %v4428
  %v4538 = vpop.f32.mrf.mxu0
  %v4539 = vadd.f32 0.0, %v4538
  %v4540 = vpop.f32.mrf.mxu0
  %v4541 = vadd.f32 0.0, %v4540
  %4542 = vmatprep.mubr.f32.mxu0 0.0
  %4543 = vmatmul.mubr.f32.gmra.mxu0 %v4431
  %v4544 = vpop.f32.mrf.mxu0
  %v4545 = vadd.f32 0.0, %v4544
  %v4546 = vpop.f32.mrf.mxu0
  %v4547 = vadd.f32 0.0, %v4546
  %4548 = vmatprep.mubr.f32.mxu0 0.0
  %4549 = vmatmul.mubr.f32.gmra.mxu0 %v4434
  %v4550 = vpop.f32.mrf.mxu0
  %v4551 = vadd.f32 0.0, %v4550
  %v4552 = vpop.f32.mrf.mxu0
  %v4553 = vadd.f32 0.0, %v4552
  %4554 = vmatprep.mubr.f32.mxu0 0.0
  %4555 = vmatmul.mubr.f32.gmra.mxu0 %v4437
  %v4556 = vpop.f32.mrf.mxu0
  %v4557 = vadd.f32 0.0, %v4556
  %v4558 = vpop.f32.mrf.mxu0
  %v4559 = vadd.f32 0.0, %v4558
  %4560 = vdwg.mxu0
  %4561 = vmatprep.subr.mxu0 0.0
  %4562 = vmatpush1.msra.mxu0 0.0
  %4563 = vmatprep.subr.mxu0 0.0
  %4564 = vmatpush1.msra.mxu0 0.0
  %4565 = vmatprep.subr.mxu0 0.0
  %4566 = vmatpush1.msra.mxu0 0.0
  %4567 = vmatprep.subr.mxu0 0.0
  %4568 = vmatpush1.msra.mxu0 0.0
  %4569 = vmatprep.subr.mxu0 0.0
  %4570 = vmatpush1.msra.mxu0 0.0
  %4571 = vmatprep.subr.mxu0 0.0
  %4572 = vmatpush1.msra.mxu0 0.0
  %4573 = vmatprep.subr.mxu0 0.0
  %4574 = vmatpush1.msra.mxu0 0.0
  %4575 = vmatprep.subr.mxu0 0.0
  %4576 = vmatpush1.msra.mxu0 0.0
  %4577 = vmatprep.subr.mxu0 0.0
  %4578 = vmatpush1.msra.mxu0 0.0
  %4579 = vmatprep.subr.mxu0 0.0
  %4580 = vmatpush1.msra.mxu0 0.0
  %4581 = vmatprep.subr.mxu0 0.0
  %4582 = vmatpush1.msra.mxu0 0.0
  %4583 = vmatprep.subr.mxu0 0.0
  %4584 = vmatpush1.msra.mxu0 0.0
  %4585 = vmatprep.subr.mxu0 0.0
  %4586 = vmatpush1.msra.mxu0 0.0
  %4587 = vmatprep.subr.mxu0 0.0
  %4588 = vmatpush1.msra.mxu0 0.0
  %4589 = vmatprep.subr.mxu0 0.0
  %4590 = vmatpush1.msra.mxu0 0.0
  %4591 = vmatprep.subr.mxu0 0.0
  %4592 = vmatpush1.msra.mxu0 %v4446
  %4593 = vmatprep.subr.mxu0 0.0
  %4594 = vmatpush2.msra.mxu0 0.0
  %4595 = vmatprep.subr.mxu0 0.0
  %4596 = vmatpush2.msra.mxu0 0.0
  %4597 = vmatprep.subr.mxu0 0.0
  %4598 = vmatpush2.msra.mxu0 0.0
  %4599 = vmatprep.subr.mxu0 0.0
  %4600 = vmatpush2.msra.mxu0 0.0
  %4601 = vmatprep.subr.mxu0 0.0
  %4602 = vmatpush2.msra.mxu0 0.0
  %4603 = vmatprep.subr.mxu0 0.0
  %4604 = vmatpush2.msra.mxu0 0.0
  %4605 = vmatprep.subr.mxu0 0.0
  %4606 = vmatpush2.msra.mxu0 0.0
  %4607 = vmatprep.subr.mxu0 0.0
  %4608 = vmatpush2.msra.mxu0 0.0
  %4609 = vmatprep.subr.mxu0 0.0
  %4610 = vmatpush2.msra.mxu0 0.0
  %4611 = vmatprep.subr.mxu0 0.0
  %4612 = vmatpush2.msra.mxu0 0.0
  %4613 = vmatprep.subr.mxu0 0.0
  %4614 = vmatpush2.msra.mxu0 0.0
  %4615 = vmatprep.subr.mxu0 0.0
  %4616 = vmatpush2.msra.mxu0 0.0
  %4617 = vmatprep.subr.mxu0 0.0
  %4618 = vmatpush2.msra.mxu0 0.0
  %4619 = vmatprep.subr.mxu0 0.0
  %4620 = vmatpush2.msra.mxu0 0.0
  %4621 = vmatprep.subr.mxu0 0.0
  %4622 = vmatpush2.msra.mxu0 0.0
  %4623 = vmatprep.subr.mxu0 0.0
  %4624 = vmatpush2.msra.mxu0 0.0
  %4625 = vmatprep.mubr.f32.mxu0 0.0
  %4626 = vmatmul.mubr.f32.gmra.mxu0 %v4416
  %v4627 = vpop.f32.mrf.mxu0
  %v4628 = vadd.f32 0.0, %v4627
  %v4629 = vpop.f32.mrf.mxu0
  %4630 = vmatprep.mubr.f32.mxu0 0.0
  %4631 = vmatmul.mubr.f32.gmra.mxu0 %v4419
  %v4632 = vpop.f32.mrf.mxu0
  %v4633 = vadd.f32 0.0, %v4632
  %v4634 = vpop.f32.mrf.mxu0
  %4635 = vmatprep.mubr.f32.mxu0 0.0
  %4636 = vmatmul.mubr.f32.gmra.mxu0 %v4422
  %v4637 = vpop.f32.mrf.mxu0
  %v4638 = vadd.f32 0.0, %v4637
  %v4639 = vpop.f32.mrf.mxu0
  %4640 = vmatprep.mubr.f32.mxu0 0.0
  %4641 = vmatmul.mubr.f32.gmra.mxu0 %v4425
  %v4642 = vpop.f32.mrf.mxu0
  %v4643 = vadd.f32 0.0, %v4642
  %v4644 = vpop.f32.mrf.mxu0
  %4645 = vmatprep.mubr.f32.mxu0 0.0
  %4646 = vmatmul.mubr.f32.gmra.mxu0 %v4428
  %v4647 = vpop.f32.mrf.mxu0
  %v4648 = vadd.f32 0.0, %v4647
  %v4649 = vpop.f32.mrf.mxu0
  %4650 = vmatprep.mubr.f32.mxu0 0.0
  %4651 = vmatmul.mubr.f32.gmra.mxu0 %v4431
  %v4652 = vpop.f32.mrf.mxu0
  %v4653 = vadd.f32 0.0, %v4652
  %v4654 = vpop.f32.mrf.mxu0
  %4655 = vmatprep.mubr.f32.mxu0 0.0
  %4656 = vmatmul.mubr.f32.gmra.mxu0 %v4434
  %v4657 = vpop.f32.mrf.mxu0
  %v4658 = vadd.f32 0.0, %v4657
  %v4659 = vpop.f32.mrf.mxu0
  %4660 = vmatprep.mubr.f32.mxu0 0.0
  %4661 = vmatmul.mubr.f32.gmra.mxu0 %v4437
  %v4662 = vpop.f32.mrf.mxu0
  %v4663 = vadd.f32 0.0, %v4662
  %v4664 = vpop.f32.mrf.mxu0
  %4665 = vdwg.mxu0
  %v4666 = vadd.f32 %v4372, %v4515
  %v4667 = vadd.f32 %v4373, %v4517
  %v4668 = vadd.f32 %v4374, %v4628
  %v4669 = vadd.f32 %v4375, %v4521
  %v4670 = vadd.f32 %v4376, %v4523
  %v4671 = vadd.f32 %v4377, %v4633
  %v4672 = vadd.f32 %v4378, %v4527
  %v4673 = vadd.f32 %v4379, %v4529
  %v4674 = vadd.f32 %v4380, %v4638
  %v4675 = vadd.f32 %v4381, %v4533
  %v4676 = vadd.f32 %v4382, %v4535
  %v4677 = vadd.f32 %v4383, %v4643
  %v4678 = vadd.f32 %v4384, %v4539
  %v4679 = vadd.f32 %v4385, %v4541
  %v4680 = vadd.f32 %v4386, %v4648
  %v4681 = vadd.f32 %v4387, %v4545
  %v4682 = vadd.f32 %v4388, %v4547
  %v4683 = vadd.f32 %v4389, %v4653
  %v4684 = vadd.f32 %v4390, %v4551
  %v4685 = vadd.f32 %v4391, %v4553
  %v4686 = vadd.f32 %v4392, %v4658
  %v4687 = vadd.f32 %v4393, %v4557
  %v4688 = vadd.f32 %v4394, %v4559
  %v4689 = vadd.f32 %v4395, %v4663
  %s4690 = scalar_lea.vmem %s1, 1024
  %v4691 = vld [vmem:[%s4690] sm:$0xff]
  %v4692 = vld [vmem:[%s4690 + $0x8] sm:$0xff]
  %v4693 = vld [vmem:[%s4690 + $0x10] sm:$0xff]
  %v4694 = vld [vmem:[%s4690 + $0x18] sm:$0xff]
  %v4695 = vld [vmem:[%s4690 + $0x20] sm:$0xff]
  %v4696 = vld [vmem:[%s4690 + $0x28] sm:$0xff]
  %v4697 = vld [vmem:[%s4690 + $0x30] sm:$0xff]
  %v4698 = vld [vmem:[%s4690 + $0x38] sm:$0xff]
  %4699 = vrot.lane.b32.xlu0 %v49, 112
  %v4700 = vpop.permute.xlu0 %4699
  %4701 = vrot.lane.b32.xlu0 %v57, 112
  %v4702 = vpop.permute.xlu0 %4701
  %4703 = vrot.lane.b32.xlu0 %v56, 112
  %v4704 = vpop.permute.xlu0 %4703
  %vm4705 = vcmp.lt.s32.totalorder %v68, 112
  %v4706 = vsel %vm4705, %v4702, %v4704
  %v4707 = vsel %vm4705, %v4700, %v4702
  %v4708 = vsel %vm4705, %v4704, %v4700
  %v4710 = vsel %vm73, %v4691, 0
  %v4713 = vsel %vm73, %v4692, 0
  %v4716 = vsel %vm73, %v4693, 0
  %v4719 = vsel %vm73, %v4694, 0
  %v4722 = vsel %vm73, %v4695, 0
  %v4725 = vsel %vm73, %v4696, 0
  %v4728 = vsel %vm73, %v4697, 0
  %v4731 = vsel %vm73, %v4698, 0
  %v4734 = vsel %vm98, %v4707, 0
  %v4737 = vsel %vm98, %v4706, 0
  %v4740 = vsel %vm98, %v4708, 0
  %4742 = vmatprep.subr.mxu0 0.0
  %4743 = vmatpush1.msra.mxu0 0.0
  %4744 = vmatprep.subr.mxu0 0.0
  %4745 = vmatpush1.msra.mxu0 0.0
  %4746 = vmatprep.subr.mxu0 0.0
  %4747 = vmatpush1.msra.mxu0 0.0
  %4748 = vmatprep.subr.mxu0 0.0
  %4749 = vmatpush1.msra.mxu0 0.0
  %4750 = vmatprep.subr.mxu0 0.0
  %4751 = vmatpush1.msra.mxu0 0.0
  %4752 = vmatprep.subr.mxu0 0.0
  %4753 = vmatpush1.msra.mxu0 0.0
  %4754 = vmatprep.subr.mxu0 0.0
  %4755 = vmatpush1.msra.mxu0 0.0
  %4756 = vmatprep.subr.mxu0 0.0
  %4757 = vmatpush1.msra.mxu0 0.0
  %4758 = vmatprep.subr.mxu0 0.0
  %4759 = vmatpush1.msra.mxu0 0.0
  %4760 = vmatprep.subr.mxu0 0.0
  %4761 = vmatpush1.msra.mxu0 0.0
  %4762 = vmatprep.subr.mxu0 0.0
  %4763 = vmatpush1.msra.mxu0 0.0
  %4764 = vmatprep.subr.mxu0 0.0
  %4765 = vmatpush1.msra.mxu0 0.0
  %4766 = vmatprep.subr.mxu0 0.0
  %4767 = vmatpush1.msra.mxu0 0.0
  %4768 = vmatprep.subr.mxu0 0.0
  %4769 = vmatpush1.msra.mxu0 0.0
  %4770 = vmatprep.subr.mxu0 0.0
  %4771 = vmatpush1.msra.mxu0 0.0
  %4772 = vmatprep.subr.mxu0 %v4737
  %4773 = vmatpush1.msra.mxu0 %v4734
  %4774 = vmatprep.subr.mxu0 0.0
  %4775 = vmatpush2.msra.mxu0 0.0
  %4776 = vmatprep.subr.mxu0 0.0
  %4777 = vmatpush2.msra.mxu0 0.0
  %4778 = vmatprep.subr.mxu0 0.0
  %4779 = vmatpush2.msra.mxu0 0.0
  %4780 = vmatprep.subr.mxu0 0.0
  %4781 = vmatpush2.msra.mxu0 0.0
  %4782 = vmatprep.subr.mxu0 0.0
  %4783 = vmatpush2.msra.mxu0 0.0
  %4784 = vmatprep.subr.mxu0 0.0
  %4785 = vmatpush2.msra.mxu0 0.0
  %4786 = vmatprep.subr.mxu0 0.0
  %4787 = vmatpush2.msra.mxu0 0.0
  %4788 = vmatprep.subr.mxu0 0.0
  %4789 = vmatpush2.msra.mxu0 0.0
  %4790 = vmatprep.subr.mxu0 0.0
  %4791 = vmatpush2.msra.mxu0 0.0
  %4792 = vmatprep.subr.mxu0 0.0
  %4793 = vmatpush2.msra.mxu0 0.0
  %4794 = vmatprep.subr.mxu0 0.0
  %4795 = vmatpush2.msra.mxu0 0.0
  %4796 = vmatprep.subr.mxu0 0.0
  %4797 = vmatpush2.msra.mxu0 0.0
  %4798 = vmatprep.subr.mxu0 0.0
  %4799 = vmatpush2.msra.mxu0 0.0
  %4800 = vmatprep.subr.mxu0 0.0
  %4801 = vmatpush2.msra.mxu0 0.0
  %4802 = vmatprep.subr.mxu0 0.0
  %4803 = vmatpush2.msra.mxu0 0.0
  %4804 = vmatprep.subr.mxu0 0.0
  %4805 = vmatpush2.msra.mxu0 0.0
  %4806 = vmatprep.mubr.f32.mxu0 0.0
  %4807 = vmatmul.mubr.f32.gmra.mxu0 %v4710
  %v4808 = vpop.f32.mrf.mxu0
  %v4809 = vadd.f32 0.0, %v4808
  %v4810 = vpop.f32.mrf.mxu0
  %v4811 = vadd.f32 0.0, %v4810
  %4812 = vmatprep.mubr.f32.mxu0 0.0
  %4813 = vmatmul.mubr.f32.gmra.mxu0 %v4713
  %v4814 = vpop.f32.mrf.mxu0
  %v4815 = vadd.f32 0.0, %v4814
  %v4816 = vpop.f32.mrf.mxu0
  %v4817 = vadd.f32 0.0, %v4816
  %4818 = vmatprep.mubr.f32.mxu0 0.0
  %4819 = vmatmul.mubr.f32.gmra.mxu0 %v4716
  %v4820 = vpop.f32.mrf.mxu0
  %v4821 = vadd.f32 0.0, %v4820
  %v4822 = vpop.f32.mrf.mxu0
  %v4823 = vadd.f32 0.0, %v4822
  %4824 = vmatprep.mubr.f32.mxu0 0.0
  %4825 = vmatmul.mubr.f32.gmra.mxu0 %v4719
  %v4826 = vpop.f32.mrf.mxu0
  %v4827 = vadd.f32 0.0, %v4826
  %v4828 = vpop.f32.mrf.mxu0
  %v4829 = vadd.f32 0.0, %v4828
  %4830 = vmatprep.mubr.f32.mxu0 0.0
  %4831 = vmatmul.mubr.f32.gmra.mxu0 %v4722
  %v4832 = vpop.f32.mrf.mxu0
  %v4833 = vadd.f32 0.0, %v4832
  %v4834 = vpop.f32.mrf.mxu0
  %v4835 = vadd.f32 0.0, %v4834
  %4836 = vmatprep.mubr.f32.mxu0 0.0
  %4837 = vmatmul.mubr.f32.gmra.mxu0 %v4725
  %v4838 = vpop.f32.mrf.mxu0
  %v4839 = vadd.f32 0.0, %v4838
  %v4840 = vpop.f32.mrf.mxu0
  %v4841 = vadd.f32 0.0, %v4840
  %4842 = vmatprep.mubr.f32.mxu0 0.0
  %4843 = vmatmul.mubr.f32.gmra.mxu0 %v4728
  %v4844 = vpop.f32.mrf.mxu0
  %v4845 = vadd.f32 0.0, %v4844
  %v4846 = vpop.f32.mrf.mxu0
  %v4847 = vadd.f32 0.0, %v4846
  %4848 = vmatprep.mubr.f32.mxu0 0.0
  %4849 = vmatmul.mubr.f32.gmra.mxu0 %v4731
  %v4850 = vpop.f32.mrf.mxu0
  %v4851 = vadd.f32 0.0, %v4850
  %v4852 = vpop.f32.mrf.mxu0
  %v4853 = vadd.f32 0.0, %v4852
  %4854 = vdwg.mxu0
  %4855 = vmatprep.subr.mxu0 0.0
  %4856 = vmatpush1.msra.mxu0 0.0
  %4857 = vmatprep.subr.mxu0 0.0
  %4858 = vmatpush1.msra.mxu0 0.0
  %4859 = vmatprep.subr.mxu0 0.0
  %4860 = vmatpush1.msra.mxu0 0.0
  %4861 = vmatprep.subr.mxu0 0.0
  %4862 = vmatpush1.msra.mxu0 0.0
  %4863 = vmatprep.subr.mxu0 0.0
  %4864 = vmatpush1.msra.mxu0 0.0
  %4865 = vmatprep.subr.mxu0 0.0
  %4866 = vmatpush1.msra.mxu0 0.0
  %4867 = vmatprep.subr.mxu0 0.0
  %4868 = vmatpush1.msra.mxu0 0.0
  %4869 = vmatprep.subr.mxu0 0.0
  %4870 = vmatpush1.msra.mxu0 0.0
  %4871 = vmatprep.subr.mxu0 0.0
  %4872 = vmatpush1.msra.mxu0 0.0
  %4873 = vmatprep.subr.mxu0 0.0
  %4874 = vmatpush1.msra.mxu0 0.0
  %4875 = vmatprep.subr.mxu0 0.0
  %4876 = vmatpush1.msra.mxu0 0.0
  %4877 = vmatprep.subr.mxu0 0.0
  %4878 = vmatpush1.msra.mxu0 0.0
  %4879 = vmatprep.subr.mxu0 0.0
  %4880 = vmatpush1.msra.mxu0 0.0
  %4881 = vmatprep.subr.mxu0 0.0
  %4882 = vmatpush1.msra.mxu0 0.0
  %4883 = vmatprep.subr.mxu0 0.0
  %4884 = vmatpush1.msra.mxu0 0.0
  %4885 = vmatprep.subr.mxu0 0.0
  %4886 = vmatpush1.msra.mxu0 %v4740
  %4887 = vmatprep.subr.mxu0 0.0
  %4888 = vmatpush2.msra.mxu0 0.0
  %4889 = vmatprep.subr.mxu0 0.0
  %4890 = vmatpush2.msra.mxu0 0.0
  %4891 = vmatprep.subr.mxu0 0.0
  %4892 = vmatpush2.msra.mxu0 0.0
  %4893 = vmatprep.subr.mxu0 0.0
  %4894 = vmatpush2.msra.mxu0 0.0
  %4895 = vmatprep.subr.mxu0 0.0
  %4896 = vmatpush2.msra.mxu0 0.0
  %4897 = vmatprep.subr.mxu0 0.0
  %4898 = vmatpush2.msra.mxu0 0.0
  %4899 = vmatprep.subr.mxu0 0.0
  %4900 = vmatpush2.msra.mxu0 0.0
  %4901 = vmatprep.subr.mxu0 0.0
  %4902 = vmatpush2.msra.mxu0 0.0
  %4903 = vmatprep.subr.mxu0 0.0
  %4904 = vmatpush2.msra.mxu0 0.0
  %4905 = vmatprep.subr.mxu0 0.0
  %4906 = vmatpush2.msra.mxu0 0.0
  %4907 = vmatprep.subr.mxu0 0.0
  %4908 = vmatpush2.msra.mxu0 0.0
  %4909 = vmatprep.subr.mxu0 0.0
  %4910 = vmatpush2.msra.mxu0 0.0
  %4911 = vmatprep.subr.mxu0 0.0
  %4912 = vmatpush2.msra.mxu0 0.0
  %4913 = vmatprep.subr.mxu0 0.0
  %4914 = vmatpush2.msra.mxu0 0.0
  %4915 = vmatprep.subr.mxu0 0.0
  %4916 = vmatpush2.msra.mxu0 0.0
  %4917 = vmatprep.subr.mxu0 0.0
  %4918 = vmatpush2.msra.mxu0 0.0
  %4919 = vmatprep.mubr.f32.mxu0 0.0
  %4920 = vmatmul.mubr.f32.gmra.mxu0 %v4710
  %v4921 = vpop.f32.mrf.mxu0
  %v4922 = vadd.f32 0.0, %v4921
  %v4923 = vpop.f32.mrf.mxu0
  %4924 = vmatprep.mubr.f32.mxu0 0.0
  %4925 = vmatmul.mubr.f32.gmra.mxu0 %v4713
  %v4926 = vpop.f32.mrf.mxu0
  %v4927 = vadd.f32 0.0, %v4926
  %v4928 = vpop.f32.mrf.mxu0
  %4929 = vmatprep.mubr.f32.mxu0 0.0
  %4930 = vmatmul.mubr.f32.gmra.mxu0 %v4716
  %v4931 = vpop.f32.mrf.mxu0
  %v4932 = vadd.f32 0.0, %v4931
  %v4933 = vpop.f32.mrf.mxu0
  %4934 = vmatprep.mubr.f32.mxu0 0.0
  %4935 = vmatmul.mubr.f32.gmra.mxu0 %v4719
  %v4936 = vpop.f32.mrf.mxu0
  %v4937 = vadd.f32 0.0, %v4936
  %v4938 = vpop.f32.mrf.mxu0
  %4939 = vmatprep.mubr.f32.mxu0 0.0
  %4940 = vmatmul.mubr.f32.gmra.mxu0 %v4722
  %v4941 = vpop.f32.mrf.mxu0
  %v4942 = vadd.f32 0.0, %v4941
  %v4943 = vpop.f32.mrf.mxu0
  %4944 = vmatprep.mubr.f32.mxu0 0.0
  %4945 = vmatmul.mubr.f32.gmra.mxu0 %v4725
  %v4946 = vpop.f32.mrf.mxu0
  %v4947 = vadd.f32 0.0, %v4946
  %v4948 = vpop.f32.mrf.mxu0
  %4949 = vmatprep.mubr.f32.mxu0 0.0
  %4950 = vmatmul.mubr.f32.gmra.mxu0 %v4728
  %v4951 = vpop.f32.mrf.mxu0
  %v4952 = vadd.f32 0.0, %v4951
  %v4953 = vpop.f32.mrf.mxu0
  %4954 = vmatprep.mubr.f32.mxu0 0.0
  %4955 = vmatmul.mubr.f32.gmra.mxu0 %v4731
  %v4956 = vpop.f32.mrf.mxu0
  %v4957 = vadd.f32 0.0, %v4956
  %v4958 = vpop.f32.mrf.mxu0
  %4959 = vdwg.mxu0
  %v4960 = vadd.f32 %v4666, %v4809
  %v4961 = vadd.f32 %v4667, %v4811
  %v4962 = vadd.f32 %v4668, %v4922
  %v4963 = vadd.f32 %v4669, %v4815
  %v4964 = vadd.f32 %v4670, %v4817
  %v4965 = vadd.f32 %v4671, %v4927
  %v4966 = vadd.f32 %v4672, %v4821
  %v4967 = vadd.f32 %v4673, %v4823
  %v4968 = vadd.f32 %v4674, %v4932
  %v4969 = vadd.f32 %v4675, %v4827
  %v4970 = vadd.f32 %v4676, %v4829
  %v4971 = vadd.f32 %v4677, %v4937
  %v4972 = vadd.f32 %v4678, %v4833
  %v4973 = vadd.f32 %v4679, %v4835
  %v4974 = vadd.f32 %v4680, %v4942
  %v4975 = vadd.f32 %v4681, %v4839
  %v4976 = vadd.f32 %v4682, %v4841
  %v4977 = vadd.f32 %v4683, %v4947
  %v4978 = vadd.f32 %v4684, %v4845
  %v4979 = vadd.f32 %v4685, %v4847
  %v4980 = vadd.f32 %v4686, %v4952
  %v4981 = vadd.f32 %v4687, %v4851
  %v4982 = vadd.f32 %v4688, %v4853
  %v4983 = vadd.f32 %v4689, %v4957
  %v4984 = vld [vmem:[%s2] sm:$0xff]
  %v4985 = vld [vmem:[%s2 + $0x8] sm:$0xff]
  %v4986 = vld [vmem:[%s2 + $0x10] sm:$0xff]
  %v4987 = vld [vmem:[%s2 + $0x18] sm:$0xff]
  %v4988 = vld [vmem:[%s2 + $0x20] sm:$0xff]
  %v4989 = vld [vmem:[%s2 + $0x28] sm:$0xff]
  %v4990 = vld [vmem:[%s2 + $0x30] sm:$0xff]
  %v4991 = vld [vmem:[%s2 + $0x38] sm:$0xff]
  %4993 = vset.pattern.permute.xlu0 0
  %4994 = vperm.xlu0 %4993, %v4984
  %v4995 = vpop.permute.xlu0 %4994
  %4998 = vset.pattern.permute.xlu0 0
  %4999 = vperm.xlu0 %4998, %v4985
  %v5000 = vpop.permute.xlu0 %4999
  %5003 = vset.pattern.permute.xlu0 0
  %5004 = vperm.xlu0 %5003, %v4986
  %v5005 = vpop.permute.xlu0 %5004
  %5008 = vset.pattern.permute.xlu0 0
  %5009 = vperm.xlu0 %5008, %v4987
  %v5010 = vpop.permute.xlu0 %5009
  %5013 = vset.pattern.permute.xlu0 0
  %5014 = vperm.xlu0 %5013, %v4988
  %v5015 = vpop.permute.xlu0 %5014
  %5018 = vset.pattern.permute.xlu0 0
  %5019 = vperm.xlu0 %5018, %v4989
  %v5020 = vpop.permute.xlu0 %5019
  %5023 = vset.pattern.permute.xlu0 0
  %5024 = vperm.xlu0 %5023, %v4990
  %v5025 = vpop.permute.xlu0 %5024
  %5028 = vset.pattern.permute.xlu0 0
  %5029 = vperm.xlu0 %5028, %v4991
  %v5030 = vpop.permute.xlu0 %5029
  %v5032 = vadd.f32 %v4960, %v4995
  %v5033 = vadd.f32 %v4961, %v4995
  %v5034 = vadd.f32 %v4962, %v4995
  %v5035 = vadd.f32 %v4963, %v5000
  %v5036 = vadd.f32 %v4964, %v5000
  %v5037 = vadd.f32 %v4965, %v5000
  %v5038 = vadd.f32 %v4966, %v5005
  %v5039 = vadd.f32 %v4967, %v5005
  %v5040 = vadd.f32 %v4968, %v5005
  %v5041 = vadd.f32 %v4969, %v5010
  %v5042 = vadd.f32 %v4970, %v5010
  %v5043 = vadd.f32 %v4971, %v5010
  %v5044 = vadd.f32 %v4972, %v5015
  %v5045 = vadd.f32 %v4973, %v5015
  %v5046 = vadd.f32 %v4974, %v5015
  %v5047 = vadd.f32 %v4975, %v5020
  %v5048 = vadd.f32 %v4976, %v5020
  %v5049 = vadd.f32 %v4977, %v5020
  %v5050 = vadd.f32 %v4978, %v5025
  %v5051 = vadd.f32 %v4979, %v5025
  %v5052 = vadd.f32 %v4980, %v5025
  %v5053 = vadd.f32 %v4981, %v5030
  %v5054 = vadd.f32 %v4982, %v5030
  %v5055 = vadd.f32 %v4983, %v5030
  %v5056 = vmax.f32 %v5032, 0.0
  %v5057 = vmax.f32 %v5033, 0.0
  %v5058 = vmax.f32 %v5034, 0.0
  %v5059 = vmax.f32 %v5035, 0.0
  %v5060 = vmax.f32 %v5036, 0.0
  %v5061 = vmax.f32 %v5037, 0.0
  %v5062 = vmax.f32 %v5038, 0.0
  %v5063 = vmax.f32 %v5039, 0.0
  %v5064 = vmax.f32 %v5040, 0.0
  %v5065 = vmax.f32 %v5041, 0.0
  %v5066 = vmax.f32 %v5042, 0.0
  %v5067 = vmax.f32 %v5043, 0.0
  %v5068 = vmax.f32 %v5044, 0.0
  %v5069 = vmax.f32 %v5045, 0.0
  %v5070 = vmax.f32 %v5046, 0.0
  %v5071 = vmax.f32 %v5047, 0.0
  %v5072 = vmax.f32 %v5048, 0.0
  %v5073 = vmax.f32 %v5049, 0.0
  %v5074 = vmax.f32 %v5050, 0.0
  %v5075 = vmax.f32 %v5051, 0.0
  %v5076 = vmax.f32 %v5052, 0.0
  %v5077 = vmax.f32 %v5053, 0.0
  %v5078 = vmax.f32 %v5054, 0.0
  %v5079 = vmax.f32 %v5055, 0.0
  %v5080 = vld [vmem:[%s3] sm:$0xff]
  %v5081 = vld [vmem:[%s3 + $0x8] sm:$0xff]
  %v5082 = vld [vmem:[%s3 + $0x10] sm:$0xff]
  %v5083 = vld [vmem:[%s3 + $0x18] sm:$0xff]
  %v5084 = vld [vmem:[%s3 + $0x20] sm:$0xff]
  %v5085 = vld [vmem:[%s3 + $0x28] sm:$0xff]
  %v5086 = vld [vmem:[%s3 + $0x30] sm:$0xff]
  %v5087 = vld [vmem:[%s3 + $0x38] sm:$0xff]
  %s5088 = scalar_lea.vmem %s3, 64
  %v5089 = vld [vmem:[%s5088] sm:$0xff]
  %v5090 = vld [vmem:[%s5088 + $0x8] sm:$0xff]
  %v5091 = vld [vmem:[%s5088 + $0x10] sm:$0xff]
  %v5092 = vld [vmem:[%s5088 + $0x18] sm:$0xff]
  %v5093 = vld [vmem:[%s5088 + $0x20] sm:$0xff]
  %v5094 = vld [vmem:[%s5088 + $0x28] sm:$0xff]
  %v5095 = vld [vmem:[%s5088 + $0x30] sm:$0xff]
  %v5096 = vld [vmem:[%s5088 + $0x38] sm:$0xff]
  %5097 = vrot.lane.b32.xlu0 %v5056, 127
  %v5098 = vpop.permute.xlu0 %5097
  %5099 = vrot.lane.b32.xlu0 %v5059, 127
  %v5100 = vpop.permute.xlu0 %5099
  %5101 = vrot.lane.b32.xlu0 %v5062, 127
  %v5102 = vpop.permute.xlu0 %5101
  %5103 = vrot.lane.b32.xlu0 %v5065, 127
  %v5104 = vpop.permute.xlu0 %5103
  %5105 = vrot.lane.b32.xlu0 %v5068, 127
  %v5106 = vpop.permute.xlu0 %5105
  %5107 = vrot.lane.b32.xlu0 %v5071, 127
  %v5108 = vpop.permute.xlu0 %5107
  %5109 = vrot.lane.b32.xlu0 %v5074, 127
  %v5110 = vpop.permute.xlu0 %5109
  %5111 = vrot.lane.b32.xlu0 %v5077, 127
  %v5112 = vpop.permute.xlu0 %5111
  %5113 = vrot.lane.b32.xlu0 %v5057, 127
  %v5114 = vpop.permute.xlu0 %5113
  %5115 = vrot.lane.b32.xlu0 %v5060, 127
  %v5116 = vpop.permute.xlu0 %5115
  %5117 = vrot.lane.b32.xlu0 %v5063, 127
  %v5118 = vpop.permute.xlu0 %5117
  %5119 = vrot.lane.b32.xlu0 %v5066, 127
  %v5120 = vpop.permute.xlu0 %5119
  %5121 = vrot.lane.b32.xlu0 %v5069, 127
  %v5122 = vpop.permute.xlu0 %5121
  %5123 = vrot.lane.b32.xlu0 %v5072, 127
  %v5124 = vpop.permute.xlu0 %5123
  %5125 = vrot.lane.b32.xlu0 %v5075, 127
  %v5126 = vpop.permute.xlu0 %5125
  %5127 = vrot.lane.b32.xlu0 %v5078, 127
  %v5128 = vpop.permute.xlu0 %5127
  %5129 = vrot.lane.b32.xlu0 %v5058, 127
  %v5130 = vpop.permute.xlu0 %5129
  %5131 = vrot.lane.b32.xlu0 %v5061, 127
  %v5132 = vpop.permute.xlu0 %5131
  %5133 = vrot.lane.b32.xlu0 %v5064, 127
  %v5134 = vpop.permute.xlu0 %5133
  %5135 = vrot.lane.b32.xlu0 %v5067, 127
  %v5136 = vpop.permute.xlu0 %5135
  %5137 = vrot.lane.b32.xlu0 %v5070, 127
  %v5138 = vpop.permute.xlu0 %5137
  %5139 = vrot.lane.b32.xlu0 %v5073, 127
  %v5140 = vpop.permute.xlu0 %5139
  %5141 = vrot.lane.b32.xlu0 %v5076, 127
  %v5142 = vpop.permute.xlu0 %5141
  %5143 = vrot.lane.b32.xlu0 %v5079, 127
  %v5144 = vpop.permute.xlu0 %5143
  %v5145 = vsel %vm69, %v5114, %v5130
  %v5146 = vsel %vm69, %v5116, %v5132
  %v5147 = vsel %vm69, %v5118, %v5134
  %v5148 = vsel %vm69, %v5120, %v5136
  %v5149 = vsel %vm69, %v5122, %v5138
  %v5150 = vsel %vm69, %v5124, %v5140
  %v5151 = vsel %vm69, %v5126, %v5142
  %v5152 = vsel %vm69, %v5128, %v5144
  %v5153 = vsel %vm69, %v5098, %v5114
  %v5154 = vsel %vm69, %v5100, %v5116
  %v5155 = vsel %vm69, %v5102, %v5118
  %v5156 = vsel %vm69, %v5104, %v5120
  %v5157 = vsel %vm69, %v5106, %v5122
  %v5158 = vsel %vm69, %v5108, %v5124
  %v5159 = vsel %vm69, %v5110, %v5126
  %v5160 = vsel %vm69, %v5112, %v5128
  %v5161 = vsel %vm69, %v5130, %v5098
  %v5162 = vsel %vm69, %v5132, %v5100
  %v5163 = vsel %vm69, %v5134, %v5102
  %v5164 = vsel %vm69, %v5136, %v5104
  %v5165 = vsel %vm69, %v5138, %v5106
  %v5166 = vsel %vm69, %v5140, %v5108
  %v5167 = vsel %vm69, %v5142, %v5110
  %v5168 = vsel %vm69, %v5144, %v5112
  %vm5169 = vcmask 523264
  %v5171 = vsel %vm5169, %v5089, 0
  %v5174 = vsel %vm5169, %v5090, 0
  %v5177 = vsel %vm5169, %v5091, 0
  %v5180 = vsel %vm5169, %v5092, 0
  %v5183 = vsel %vm5169, %v5093, 0
  %v5186 = vsel %vm5169, %v5094, 0
  %v5189 = vsel %vm5169, %v5095, 0
  %v5192 = vsel %vm5169, %v5096, 0
  %5194 = vmatprep.subr.mxu0 0.0
  %5195 = vmatpush1.msra.mxu0 0.0
  %5196 = vmatprep.subr.mxu0 0.0
  %5197 = vmatpush1.msra.mxu0 0.0
  %5198 = vmatprep.subr.mxu0 0.0
  %5199 = vmatpush1.msra.mxu0 0.0
  %5200 = vmatprep.subr.mxu0 0.0
  %5201 = vmatpush1.msra.mxu0 0.0
  %5202 = vmatprep.subr.mxu0 0.0
  %5203 = vmatpush1.msra.mxu0 0.0
  %5204 = vmatprep.subr.mxu0 0.0
  %5205 = vmatpush1.msra.mxu0 0.0
  %5206 = vmatprep.subr.mxu0 0.0
  %5207 = vmatpush1.msra.mxu0 0.0
  %5208 = vmatprep.subr.mxu0 0.0
  %5209 = vmatpush1.msra.mxu0 0.0
  %5210 = vmatprep.subr.mxu0 %v5152
  %5211 = vmatpush1.msra.mxu0 %v5160
  %5212 = vmatprep.subr.mxu0 %v5151
  %5213 = vmatpush1.msra.mxu0 %v5159
  %5214 = vmatprep.subr.mxu0 %v5150
  %5215 = vmatpush1.msra.mxu0 %v5158
  %5216 = vmatprep.subr.mxu0 %v5149
  %5217 = vmatpush1.msra.mxu0 %v5157
  %5218 = vmatprep.subr.mxu0 %v5148
  %5219 = vmatpush1.msra.mxu0 %v5156
  %5220 = vmatprep.subr.mxu0 %v5147
  %5221 = vmatpush1.msra.mxu0 %v5155
  %5222 = vmatprep.subr.mxu0 %v5146
  %5223 = vmatpush1.msra.mxu0 %v5154
  %5224 = vmatprep.subr.mxu0 %v5145
  %5225 = vmatpush1.msra.mxu0 %v5153
  %5226 = vmatprep.subr.mxu0 0.0
  %5227 = vmatpush2.msra.mxu0 0.0
  %5228 = vmatprep.subr.mxu0 0.0
  %5229 = vmatpush2.msra.mxu0 0.0
  %5230 = vmatprep.subr.mxu0 0.0
  %5231 = vmatpush2.msra.mxu0 0.0
  %5232 = vmatprep.subr.mxu0 0.0
  %5233 = vmatpush2.msra.mxu0 0.0
  %5234 = vmatprep.subr.mxu0 0.0
  %5235 = vmatpush2.msra.mxu0 0.0
  %5236 = vmatprep.subr.mxu0 0.0
  %5237 = vmatpush2.msra.mxu0 0.0
  %5238 = vmatprep.subr.mxu0 0.0
  %5239 = vmatpush2.msra.mxu0 0.0
  %5240 = vmatprep.subr.mxu0 0.0
  %5241 = vmatpush2.msra.mxu0 0.0
  %5242 = vmatprep.subr.mxu0 0.0
  %5243 = vmatpush2.msra.mxu0 0.0
  %5244 = vmatprep.subr.mxu0 0.0
  %5245 = vmatpush2.msra.mxu0 0.0
  %5246 = vmatprep.subr.mxu0 0.0
  %5247 = vmatpush2.msra.mxu0 0.0
  %5248 = vmatprep.subr.mxu0 0.0
  %5249 = vmatpush2.msra.mxu0 0.0
  %5250 = vmatprep.subr.mxu0 0.0
  %5251 = vmatpush2.msra.mxu0 0.0
  %5252 = vmatprep.subr.mxu0 0.0
  %5253 = vmatpush2.msra.mxu0 0.0
  %5254 = vmatprep.subr.mxu0 0.0
  %5255 = vmatpush2.msra.mxu0 0.0
  %5256 = vmatprep.subr.mxu0 0.0
  %5257 = vmatpush2.msra.mxu0 0.0
  %5258 = vmatprep.mubr.f32.mxu0 0.0
  %5259 = vmatmul.mubr.f32.gmra.mxu0 %v5171
  %v5260 = vpop.f32.mrf.mxu0
  %v5261 = vadd.f32 0.0, %v5260
  %v5262 = vpop.f32.mrf.mxu0
  %v5263 = vadd.f32 0.0, %v5262
  %5264 = vmatprep.mubr.f32.mxu0 0.0
  %5265 = vmatmul.mubr.f32.gmra.mxu0 %v5174
  %v5266 = vpop.f32.mrf.mxu0
  %v5267 = vadd.f32 0.0, %v5266
  %v5268 = vpop.f32.mrf.mxu0
  %v5269 = vadd.f32 0.0, %v5268
  %5270 = vmatprep.mubr.f32.mxu0 0.0
  %5271 = vmatmul.mubr.f32.gmra.mxu0 %v5177
  %v5272 = vpop.f32.mrf.mxu0
  %v5273 = vadd.f32 0.0, %v5272
  %v5274 = vpop.f32.mrf.mxu0
  %v5275 = vadd.f32 0.0, %v5274
  %5276 = vmatprep.mubr.f32.mxu0 0.0
  %5277 = vmatmul.mubr.f32.gmra.mxu0 %v5180
  %v5278 = vpop.f32.mrf.mxu0
  %v5279 = vadd.f32 0.0, %v5278
  %v5280 = vpop.f32.mrf.mxu0
  %v5281 = vadd.f32 0.0, %v5280
  %5282 = vmatprep.mubr.f32.mxu0 0.0
  %5283 = vmatmul.mubr.f32.gmra.mxu0 %v5183
  %v5284 = vpop.f32.mrf.mxu0
  %v5285 = vadd.f32 0.0, %v5284
  %v5286 = vpop.f32.mrf.mxu0
  %v5287 = vadd.f32 0.0, %v5286
  %5288 = vmatprep.mubr.f32.mxu0 0.0
  %5289 = vmatmul.mubr.f32.gmra.mxu0 %v5186
  %v5290 = vpop.f32.mrf.mxu0
  %v5291 = vadd.f32 0.0, %v5290
  %v5292 = vpop.f32.mrf.mxu0
  %v5293 = vadd.f32 0.0, %v5292
  %5294 = vmatprep.mubr.f32.mxu0 0.0
  %5295 = vmatmul.mubr.f32.gmra.mxu0 %v5189
  %v5296 = vpop.f32.mrf.mxu0
  %v5297 = vadd.f32 0.0, %v5296
  %v5298 = vpop.f32.mrf.mxu0
  %v5299 = vadd.f32 0.0, %v5298
  %5300 = vmatprep.mubr.f32.mxu0 0.0
  %5301 = vmatmul.mubr.f32.gmra.mxu0 %v5192
  %v5302 = vpop.f32.mrf.mxu0
  %v5303 = vadd.f32 0.0, %v5302
  %v5304 = vpop.f32.mrf.mxu0
  %v5305 = vadd.f32 0.0, %v5304
  %5306 = vdwg.mxu0
  %5307 = vmatprep.subr.mxu0 0.0
  %5308 = vmatpush1.msra.mxu0 0.0
  %5309 = vmatprep.subr.mxu0 0.0
  %5310 = vmatpush1.msra.mxu0 0.0
  %5311 = vmatprep.subr.mxu0 0.0
  %5312 = vmatpush1.msra.mxu0 0.0
  %5313 = vmatprep.subr.mxu0 0.0
  %5314 = vmatpush1.msra.mxu0 0.0
  %5315 = vmatprep.subr.mxu0 0.0
  %5316 = vmatpush1.msra.mxu0 0.0
  %5317 = vmatprep.subr.mxu0 0.0
  %5318 = vmatpush1.msra.mxu0 0.0
  %5319 = vmatprep.subr.mxu0 0.0
  %5320 = vmatpush1.msra.mxu0 0.0
  %5321 = vmatprep.subr.mxu0 0.0
  %5322 = vmatpush1.msra.mxu0 0.0
  %5323 = vmatprep.subr.mxu0 0.0
  %5324 = vmatpush1.msra.mxu0 %v5168
  %5325 = vmatprep.subr.mxu0 0.0
  %5326 = vmatpush1.msra.mxu0 %v5167
  %5327 = vmatprep.subr.mxu0 0.0
  %5328 = vmatpush1.msra.mxu0 %v5166
  %5329 = vmatprep.subr.mxu0 0.0
  %5330 = vmatpush1.msra.mxu0 %v5165
  %5331 = vmatprep.subr.mxu0 0.0
  %5332 = vmatpush1.msra.mxu0 %v5164
  %5333 = vmatprep.subr.mxu0 0.0
  %5334 = vmatpush1.msra.mxu0 %v5163
  %5335 = vmatprep.subr.mxu0 0.0
  %5336 = vmatpush1.msra.mxu0 %v5162
  %5337 = vmatprep.subr.mxu0 0.0
  %5338 = vmatpush1.msra.mxu0 %v5161
  %5339 = vmatprep.subr.mxu0 0.0
  %5340 = vmatpush2.msra.mxu0 0.0
  %5341 = vmatprep.subr.mxu0 0.0
  %5342 = vmatpush2.msra.mxu0 0.0
  %5343 = vmatprep.subr.mxu0 0.0
  %5344 = vmatpush2.msra.mxu0 0.0
  %5345 = vmatprep.subr.mxu0 0.0
  %5346 = vmatpush2.msra.mxu0 0.0
  %5347 = vmatprep.subr.mxu0 0.0
  %5348 = vmatpush2.msra.mxu0 0.0
  %5349 = vmatprep.subr.mxu0 0.0
  %5350 = vmatpush2.msra.mxu0 0.0
  %5351 = vmatprep.subr.mxu0 0.0
  %5352 = vmatpush2.msra.mxu0 0.0
  %5353 = vmatprep.subr.mxu0 0.0
  %5354 = vmatpush2.msra.mxu0 0.0
  %5355 = vmatprep.subr.mxu0 0.0
  %5356 = vmatpush2.msra.mxu0 0.0
  %5357 = vmatprep.subr.mxu0 0.0
  %5358 = vmatpush2.msra.mxu0 0.0
  %5359 = vmatprep.subr.mxu0 0.0
  %5360 = vmatpush2.msra.mxu0 0.0
  %5361 = vmatprep.subr.mxu0 0.0
  %5362 = vmatpush2.msra.mxu0 0.0
  %5363 = vmatprep.subr.mxu0 0.0
  %5364 = vmatpush2.msra.mxu0 0.0
  %5365 = vmatprep.subr.mxu0 0.0
  %5366 = vmatpush2.msra.mxu0 0.0
  %5367 = vmatprep.subr.mxu0 0.0
  %5368 = vmatpush2.msra.mxu0 0.0
  %5369 = vmatprep.subr.mxu0 0.0
  %5370 = vmatpush2.msra.mxu0 0.0
  %5371 = vmatprep.mubr.f32.mxu0 0.0
  %5372 = vmatmul.mubr.f32.gmra.mxu0 %v5171
  %v5373 = vpop.f32.mrf.mxu0
  %v5374 = vadd.f32 0.0, %v5373
  %v5375 = vpop.f32.mrf.mxu0
  %5376 = vmatprep.mubr.f32.mxu0 0.0
  %5377 = vmatmul.mubr.f32.gmra.mxu0 %v5174
  %v5378 = vpop.f32.mrf.mxu0
  %v5379 = vadd.f32 0.0, %v5378
  %v5380 = vpop.f32.mrf.mxu0
  %5381 = vmatprep.mubr.f32.mxu0 0.0
  %5382 = vmatmul.mubr.f32.gmra.mxu0 %v5177
  %v5383 = vpop.f32.mrf.mxu0
  %v5384 = vadd.f32 0.0, %v5383
  %v5385 = vpop.f32.mrf.mxu0
  %5386 = vmatprep.mubr.f32.mxu0 0.0
  %5387 = vmatmul.mubr.f32.gmra.mxu0 %v5180
  %v5388 = vpop.f32.mrf.mxu0
  %v5389 = vadd.f32 0.0, %v5388
  %v5390 = vpop.f32.mrf.mxu0
  %5391 = vmatprep.mubr.f32.mxu0 0.0
  %5392 = vmatmul.mubr.f32.gmra.mxu0 %v5183
  %v5393 = vpop.f32.mrf.mxu0
  %v5394 = vadd.f32 0.0, %v5393
  %v5395 = vpop.f32.mrf.mxu0
  %5396 = vmatprep.mubr.f32.mxu0 0.0
  %5397 = vmatmul.mubr.f32.gmra.mxu0 %v5186
  %v5398 = vpop.f32.mrf.mxu0
  %v5399 = vadd.f32 0.0, %v5398
  %v5400 = vpop.f32.mrf.mxu0
  %5401 = vmatprep.mubr.f32.mxu0 0.0
  %5402 = vmatmul.mubr.f32.gmra.mxu0 %v5189
  %v5403 = vpop.f32.mrf.mxu0
  %v5404 = vadd.f32 0.0, %v5403
  %v5405 = vpop.f32.mrf.mxu0
  %5406 = vmatprep.mubr.f32.mxu0 0.0
  %5407 = vmatmul.mubr.f32.gmra.mxu0 %v5192
  %v5408 = vpop.f32.mrf.mxu0
  %v5409 = vadd.f32 0.0, %v5408
  %v5410 = vpop.f32.mrf.mxu0
  %5411 = vdwg.mxu0
  %v5413 = vsel %vm5169, %v5080, 0
  %v5416 = vsel %vm5169, %v5081, 0
  %v5419 = vsel %vm5169, %v5082, 0
  %v5422 = vsel %vm5169, %v5083, 0
  %v5425 = vsel %vm5169, %v5084, 0
  %v5428 = vsel %vm5169, %v5085, 0
  %v5431 = vsel %vm5169, %v5086, 0
  %v5434 = vsel %vm5169, %v5087, 0
  %5436 = vmatprep.subr.mxu0 0.0
  %5437 = vmatpush1.msra.mxu0 0.0
  %5438 = vmatprep.subr.mxu0 0.0
  %5439 = vmatpush1.msra.mxu0 0.0
  %5440 = vmatprep.subr.mxu0 0.0
  %5441 = vmatpush1.msra.mxu0 0.0
  %5442 = vmatprep.subr.mxu0 0.0
  %5443 = vmatpush1.msra.mxu0 0.0
  %5444 = vmatprep.subr.mxu0 0.0
  %5445 = vmatpush1.msra.mxu0 0.0
  %5446 = vmatprep.subr.mxu0 0.0
  %5447 = vmatpush1.msra.mxu0 0.0
  %5448 = vmatprep.subr.mxu0 0.0
  %5449 = vmatpush1.msra.mxu0 0.0
  %5450 = vmatprep.subr.mxu0 0.0
  %5451 = vmatpush1.msra.mxu0 0.0
  %5452 = vmatprep.subr.mxu0 %v5078
  %5453 = vmatpush1.msra.mxu0 %v5077
  %5454 = vmatprep.subr.mxu0 %v5075
  %5455 = vmatpush1.msra.mxu0 %v5074
  %5456 = vmatprep.subr.mxu0 %v5072
  %5457 = vmatpush1.msra.mxu0 %v5071
  %5458 = vmatprep.subr.mxu0 %v5069
  %5459 = vmatpush1.msra.mxu0 %v5068
  %5460 = vmatprep.subr.mxu0 %v5066
  %5461 = vmatpush1.msra.mxu0 %v5065
  %5462 = vmatprep.subr.mxu0 %v5063
  %5463 = vmatpush1.msra.mxu0 %v5062
  %5464 = vmatprep.subr.mxu0 %v5060
  %5465 = vmatpush1.msra.mxu0 %v5059
  %5466 = vmatprep.subr.mxu0 %v5057
  %5467 = vmatpush1.msra.mxu0 %v5056
  %5468 = vmatprep.subr.mxu0 0.0
  %5469 = vmatpush2.msra.mxu0 0.0
  %5470 = vmatprep.subr.mxu0 0.0
  %5471 = vmatpush2.msra.mxu0 0.0
  %5472 = vmatprep.subr.mxu0 0.0
  %5473 = vmatpush2.msra.mxu0 0.0
  %5474 = vmatprep.subr.mxu0 0.0
  %5475 = vmatpush2.msra.mxu0 0.0
  %5476 = vmatprep.subr.mxu0 0.0
  %5477 = vmatpush2.msra.mxu0 0.0
  %5478 = vmatprep.subr.mxu0 0.0
  %5479 = vmatpush2.msra.mxu0 0.0
  %5480 = vmatprep.subr.mxu0 0.0
  %5481 = vmatpush2.msra.mxu0 0.0
  %5482 = vmatprep.subr.mxu0 0.0
  %5483 = vmatpush2.msra.mxu0 0.0
  %5484 = vmatprep.subr.mxu0 0.0
  %5485 = vmatpush2.msra.mxu0 0.0
  %5486 = vmatprep.subr.mxu0 0.0
  %5487 = vmatpush2.msra.mxu0 0.0
  %5488 = vmatprep.subr.mxu0 0.0
  %5489 = vmatpush2.msra.mxu0 0.0
  %5490 = vmatprep.subr.mxu0 0.0
  %5491 = vmatpush2.msra.mxu0 0.0
  %5492 = vmatprep.subr.mxu0 0.0
  %5493 = vmatpush2.msra.mxu0 0.0
  %5494 = vmatprep.subr.mxu0 0.0
  %5495 = vmatpush2.msra.mxu0 0.0
  %5496 = vmatprep.subr.mxu0 0.0
  %5497 = vmatpush2.msra.mxu0 0.0
  %5498 = vmatprep.subr.mxu0 0.0
  %5499 = vmatpush2.msra.mxu0 0.0
  %5500 = vmatprep.mubr.f32.mxu0 0.0
  %5501 = vmatmul.mubr.f32.gmra.mxu0 %v5413
  %v5502 = vpop.f32.mrf.mxu0
  %v5503 = vadd.f32 %v5261, %v5502
  %v5504 = vpop.f32.mrf.mxu0
  %v5505 = vadd.f32 %v5263, %v5504
  %5506 = vmatprep.mubr.f32.mxu0 0.0
  %5507 = vmatmul.mubr.f32.gmra.mxu0 %v5416
  %v5508 = vpop.f32.mrf.mxu0
  %v5509 = vadd.f32 %v5267, %v5508
  %v5510 = vpop.f32.mrf.mxu0
  %v5511 = vadd.f32 %v5269, %v5510
  %5512 = vmatprep.mubr.f32.mxu0 0.0
  %5513 = vmatmul.mubr.f32.gmra.mxu0 %v5419
  %v5514 = vpop.f32.mrf.mxu0
  %v5515 = vadd.f32 %v5273, %v5514
  %v5516 = vpop.f32.mrf.mxu0
  %v5517 = vadd.f32 %v5275, %v5516
  %5518 = vmatprep.mubr.f32.mxu0 0.0
  %5519 = vmatmul.mubr.f32.gmra.mxu0 %v5422
  %v5520 = vpop.f32.mrf.mxu0
  %v5521 = vadd.f32 %v5279, %v5520
  %v5522 = vpop.f32.mrf.mxu0
  %v5523 = vadd.f32 %v5281, %v5522
  %5524 = vmatprep.mubr.f32.mxu0 0.0
  %5525 = vmatmul.mubr.f32.gmra.mxu0 %v5425
  %v5526 = vpop.f32.mrf.mxu0
  %v5527 = vadd.f32 %v5285, %v5526
  %v5528 = vpop.f32.mrf.mxu0
  %v5529 = vadd.f32 %v5287, %v5528
  %5530 = vmatprep.mubr.f32.mxu0 0.0
  %5531 = vmatmul.mubr.f32.gmra.mxu0 %v5428
  %v5532 = vpop.f32.mrf.mxu0
  %v5533 = vadd.f32 %v5291, %v5532
  %v5534 = vpop.f32.mrf.mxu0
  %v5535 = vadd.f32 %v5293, %v5534
  %5536 = vmatprep.mubr.f32.mxu0 0.0
  %5537 = vmatmul.mubr.f32.gmra.mxu0 %v5431
  %v5538 = vpop.f32.mrf.mxu0
  %v5539 = vadd.f32 %v5297, %v5538
  %v5540 = vpop.f32.mrf.mxu0
  %v5541 = vadd.f32 %v5299, %v5540
  %5542 = vmatprep.mubr.f32.mxu0 0.0
  %5543 = vmatmul.mubr.f32.gmra.mxu0 %v5434
  %v5544 = vpop.f32.mrf.mxu0
  %v5545 = vadd.f32 %v5303, %v5544
  %v5546 = vpop.f32.mrf.mxu0
  %v5547 = vadd.f32 %v5305, %v5546
  %5548 = vdwg.mxu0
  %5549 = vmatprep.subr.mxu0 0.0
  %5550 = vmatpush1.msra.mxu0 0.0
  %5551 = vmatprep.subr.mxu0 0.0
  %5552 = vmatpush1.msra.mxu0 0.0
  %5553 = vmatprep.subr.mxu0 0.0
  %5554 = vmatpush1.msra.mxu0 0.0
  %5555 = vmatprep.subr.mxu0 0.0
  %5556 = vmatpush1.msra.mxu0 0.0
  %5557 = vmatprep.subr.mxu0 0.0
  %5558 = vmatpush1.msra.mxu0 0.0
  %5559 = vmatprep.subr.mxu0 0.0
  %5560 = vmatpush1.msra.mxu0 0.0
  %5561 = vmatprep.subr.mxu0 0.0
  %5562 = vmatpush1.msra.mxu0 0.0
  %5563 = vmatprep.subr.mxu0 0.0
  %5564 = vmatpush1.msra.mxu0 0.0
  %5565 = vmatprep.subr.mxu0 0.0
  %5566 = vmatpush1.msra.mxu0 %v5079
  %5567 = vmatprep.subr.mxu0 0.0
  %5568 = vmatpush1.msra.mxu0 %v5076
  %5569 = vmatprep.subr.mxu0 0.0
  %5570 = vmatpush1.msra.mxu0 %v5073
  %5571 = vmatprep.subr.mxu0 0.0
  %5572 = vmatpush1.msra.mxu0 %v5070
  %5573 = vmatprep.subr.mxu0 0.0
  %5574 = vmatpush1.msra.mxu0 %v5067
  %5575 = vmatprep.subr.mxu0 0.0
  %5576 = vmatpush1.msra.mxu0 %v5064
  %5577 = vmatprep.subr.mxu0 0.0
  %5578 = vmatpush1.msra.mxu0 %v5061
  %5579 = vmatprep.subr.mxu0 0.0
  %5580 = vmatpush1.msra.mxu0 %v5058
  %5581 = vmatprep.subr.mxu0 0.0
  %5582 = vmatpush2.msra.mxu0 0.0
  %5583 = vmatprep.subr.mxu0 0.0
  %5584 = vmatpush2.msra.mxu0 0.0
  %5585 = vmatprep.subr.mxu0 0.0
  %5586 = vmatpush2.msra.mxu0 0.0
  %5587 = vmatprep.subr.mxu0 0.0
  %5588 = vmatpush2.msra.mxu0 0.0
  %5589 = vmatprep.subr.mxu0 0.0
  %5590 = vmatpush2.msra.mxu0 0.0
  %5591 = vmatprep.subr.mxu0 0.0
  %5592 = vmatpush2.msra.mxu0 0.0
  %5593 = vmatprep.subr.mxu0 0.0
  %5594 = vmatpush2.msra.mxu0 0.0
  %5595 = vmatprep.subr.mxu0 0.0
  %5596 = vmatpush2.msra.mxu0 0.0
  %5597 = vmatprep.subr.mxu0 0.0
  %5598 = vmatpush2.msra.mxu0 0.0
  %5599 = vmatprep.subr.mxu0 0.0
  %5600 = vmatpush2.msra.mxu0 0.0
  %5601 = vmatprep.subr.mxu0 0.0
  %5602 = vmatpush2.msra.mxu0 0.0
  %5603 = vmatprep.subr.mxu0 0.0
  %5604 = vmatpush2.msra.mxu0 0.0
  %5605 = vmatprep.subr.mxu0 0.0
  %5606 = vmatpush2.msra.mxu0 0.0
  %5607 = vmatprep.subr.mxu0 0.0
  %5608 = vmatpush2.msra.mxu0 0.0
  %5609 = vmatprep.subr.mxu0 0.0
  %5610 = vmatpush2.msra.mxu0 0.0
  %5611 = vmatprep.subr.mxu0 0.0
  %5612 = vmatpush2.msra.mxu0 0.0
  %5613 = vmatprep.mubr.f32.mxu0 0.0
  %5614 = vmatmul.mubr.f32.gmra.mxu0 %v5413
  %v5615 = vpop.f32.mrf.mxu0
  %v5616 = vadd.f32 %v5374, %v5615
  %v5617 = vpop.f32.mrf.mxu0
  %5618 = vmatprep.mubr.f32.mxu0 0.0
  %5619 = vmatmul.mubr.f32.gmra.mxu0 %v5416
  %v5620 = vpop.f32.mrf.mxu0
  %v5621 = vadd.f32 %v5379, %v5620
  %v5622 = vpop.f32.mrf.mxu0
  %5623 = vmatprep.mubr.f32.mxu0 0.0
  %5624 = vmatmul.mubr.f32.gmra.mxu0 %v5419
  %v5625 = vpop.f32.mrf.mxu0
  %v5626 = vadd.f32 %v5384, %v5625
  %v5627 = vpop.f32.mrf.mxu0
  %5628 = vmatprep.mubr.f32.mxu0 0.0
  %5629 = vmatmul.mubr.f32.gmra.mxu0 %v5422
  %v5630 = vpop.f32.mrf.mxu0
  %v5631 = vadd.f32 %v5389, %v5630
  %v5632 = vpop.f32.mrf.mxu0
  %5633 = vmatprep.mubr.f32.mxu0 0.0
  %5634 = vmatmul.mubr.f32.gmra.mxu0 %v5425
  %v5635 = vpop.f32.mrf.mxu0
  %v5636 = vadd.f32 %v5394, %v5635
  %v5637 = vpop.f32.mrf.mxu0
  %5638 = vmatprep.mubr.f32.mxu0 0.0
  %5639 = vmatmul.mubr.f32.gmra.mxu0 %v5428
  %v5640 = vpop.f32.mrf.mxu0
  %v5641 = vadd.f32 %v5399, %v5640
  %v5642 = vpop.f32.mrf.mxu0
  %5643 = vmatprep.mubr.f32.mxu0 0.0
  %5644 = vmatmul.mubr.f32.gmra.mxu0 %v5431
  %v5645 = vpop.f32.mrf.mxu0
  %v5646 = vadd.f32 %v5404, %v5645
  %v5647 = vpop.f32.mrf.mxu0
  %5648 = vmatprep.mubr.f32.mxu0 0.0
  %5649 = vmatmul.mubr.f32.gmra.mxu0 %v5434
  %v5650 = vpop.f32.mrf.mxu0
  %v5651 = vadd.f32 %v5409, %v5650
  %v5652 = vpop.f32.mrf.mxu0
  %5653 = vdwg.mxu0
  %s5654 = scalar_lea.vmem %s3, 128
  %v5655 = vld [vmem:[%s5654] sm:$0xff]
  %v5656 = vld [vmem:[%s5654 + $0x8] sm:$0xff]
  %v5657 = vld [vmem:[%s5654 + $0x10] sm:$0xff]
  %v5658 = vld [vmem:[%s5654 + $0x18] sm:$0xff]
  %v5659 = vld [vmem:[%s5654 + $0x20] sm:$0xff]
  %v5660 = vld [vmem:[%s5654 + $0x28] sm:$0xff]
  %v5661 = vld [vmem:[%s5654 + $0x30] sm:$0xff]
  %v5662 = vld [vmem:[%s5654 + $0x38] sm:$0xff]
  %5663 = vrot.lane.b32.xlu0 %v5056, 126
  %v5664 = vpop.permute.xlu0 %5663
  %5665 = vrot.lane.b32.xlu0 %v5059, 126
  %v5666 = vpop.permute.xlu0 %5665
  %5667 = vrot.lane.b32.xlu0 %v5062, 126
  %v5668 = vpop.permute.xlu0 %5667
  %5669 = vrot.lane.b32.xlu0 %v5065, 126
  %v5670 = vpop.permute.xlu0 %5669
  %5671 = vrot.lane.b32.xlu0 %v5068, 126
  %v5672 = vpop.permute.xlu0 %5671
  %5673 = vrot.lane.b32.xlu0 %v5071, 126
  %v5674 = vpop.permute.xlu0 %5673
  %5675 = vrot.lane.b32.xlu0 %v5074, 126
  %v5676 = vpop.permute.xlu0 %5675
  %5677 = vrot.lane.b32.xlu0 %v5077, 126
  %v5678 = vpop.permute.xlu0 %5677
  %5679 = vrot.lane.b32.xlu0 %v5057, 126
  %v5680 = vpop.permute.xlu0 %5679
  %5681 = vrot.lane.b32.xlu0 %v5060, 126
  %v5682 = vpop.permute.xlu0 %5681
  %5683 = vrot.lane.b32.xlu0 %v5063, 126
  %v5684 = vpop.permute.xlu0 %5683
  %5685 = vrot.lane.b32.xlu0 %v5066, 126
  %v5686 = vpop.permute.xlu0 %5685
  %5687 = vrot.lane.b32.xlu0 %v5069, 126
  %v5688 = vpop.permute.xlu0 %5687
  %5689 = vrot.lane.b32.xlu0 %v5072, 126
  %v5690 = vpop.permute.xlu0 %5689
  %5691 = vrot.lane.b32.xlu0 %v5075, 126
  %v5692 = vpop.permute.xlu0 %5691
  %5693 = vrot.lane.b32.xlu0 %v5078, 126
  %v5694 = vpop.permute.xlu0 %5693
  %5695 = vrot.lane.b32.xlu0 %v5058, 126
  %v5696 = vpop.permute.xlu0 %5695
  %5697 = vrot.lane.b32.xlu0 %v5061, 126
  %v5698 = vpop.permute.xlu0 %5697
  %5699 = vrot.lane.b32.xlu0 %v5064, 126
  %v5700 = vpop.permute.xlu0 %5699
  %5701 = vrot.lane.b32.xlu0 %v5067, 126
  %v5702 = vpop.permute.xlu0 %5701
  %5703 = vrot.lane.b32.xlu0 %v5070, 126
  %v5704 = vpop.permute.xlu0 %5703
  %5705 = vrot.lane.b32.xlu0 %v5073, 126
  %v5706 = vpop.permute.xlu0 %5705
  %5707 = vrot.lane.b32.xlu0 %v5076, 126
  %v5708 = vpop.permute.xlu0 %5707
  %5709 = vrot.lane.b32.xlu0 %v5079, 126
  %v5710 = vpop.permute.xlu0 %5709
  %v5711 = vsel %vm589, %v5680, %v5696
  %v5712 = vsel %vm589, %v5682, %v5698
  %v5713 = vsel %vm589, %v5684, %v5700
  %v5714 = vsel %vm589, %v5686, %v5702
  %v5715 = vsel %vm589, %v5688, %v5704
  %v5716 = vsel %vm589, %v5690, %v5706
  %v5717 = vsel %vm589, %v5692, %v5708
  %v5718 = vsel %vm589, %v5694, %v5710
  %v5719 = vsel %vm589, %v5664, %v5680
  %v5720 = vsel %vm589, %v5666, %v5682
  %v5721 = vsel %vm589, %v5668, %v5684
  %v5722 = vsel %vm589, %v5670, %v5686
  %v5723 = vsel %vm589, %v5672, %v5688
  %v5724 = vsel %vm589, %v5674, %v5690
  %v5725 = vsel %vm589, %v5676, %v5692
  %v5726 = vsel %vm589, %v5678, %v5694
  %v5727 = vsel %vm589, %v5696, %v5664
  %v5728 = vsel %vm589, %v5698, %v5666
  %v5729 = vsel %vm589, %v5700, %v5668
  %v5730 = vsel %vm589, %v5702, %v5670
  %v5731 = vsel %vm589, %v5704, %v5672
  %v5732 = vsel %vm589, %v5706, %v5674
  %v5733 = vsel %vm589, %v5708, %v5676
  %v5734 = vsel %vm589, %v5710, %v5678
  %v5736 = vsel %vm5169, %v5655, 0
  %v5739 = vsel %vm5169, %v5656, 0
  %v5742 = vsel %vm5169, %v5657, 0
  %v5745 = vsel %vm5169, %v5658, 0
  %v5748 = vsel %vm5169, %v5659, 0
  %v5751 = vsel %vm5169, %v5660, 0
  %v5754 = vsel %vm5169, %v5661, 0
  %v5757 = vsel %vm5169, %v5662, 0
  %5759 = vmatprep.subr.mxu0 0.0
  %5760 = vmatpush1.msra.mxu0 0.0
  %5761 = vmatprep.subr.mxu0 0.0
  %5762 = vmatpush1.msra.mxu0 0.0
  %5763 = vmatprep.subr.mxu0 0.0
  %5764 = vmatpush1.msra.mxu0 0.0
  %5765 = vmatprep.subr.mxu0 0.0
  %5766 = vmatpush1.msra.mxu0 0.0
  %5767 = vmatprep.subr.mxu0 0.0
  %5768 = vmatpush1.msra.mxu0 0.0
  %5769 = vmatprep.subr.mxu0 0.0
  %5770 = vmatpush1.msra.mxu0 0.0
  %5771 = vmatprep.subr.mxu0 0.0
  %5772 = vmatpush1.msra.mxu0 0.0
  %5773 = vmatprep.subr.mxu0 0.0
  %5774 = vmatpush1.msra.mxu0 0.0
  %5775 = vmatprep.subr.mxu0 %v5718
  %5776 = vmatpush1.msra.mxu0 %v5726
  %5777 = vmatprep.subr.mxu0 %v5717
  %5778 = vmatpush1.msra.mxu0 %v5725
  %5779 = vmatprep.subr.mxu0 %v5716
  %5780 = vmatpush1.msra.mxu0 %v5724
  %5781 = vmatprep.subr.mxu0 %v5715
  %5782 = vmatpush1.msra.mxu0 %v5723
  %5783 = vmatprep.subr.mxu0 %v5714
  %5784 = vmatpush1.msra.mxu0 %v5722
  %5785 = vmatprep.subr.mxu0 %v5713
  %5786 = vmatpush1.msra.mxu0 %v5721
  %5787 = vmatprep.subr.mxu0 %v5712
  %5788 = vmatpush1.msra.mxu0 %v5720
  %5789 = vmatprep.subr.mxu0 %v5711
  %5790 = vmatpush1.msra.mxu0 %v5719
  %5791 = vmatprep.subr.mxu0 0.0
  %5792 = vmatpush2.msra.mxu0 0.0
  %5793 = vmatprep.subr.mxu0 0.0
  %5794 = vmatpush2.msra.mxu0 0.0
  %5795 = vmatprep.subr.mxu0 0.0
  %5796 = vmatpush2.msra.mxu0 0.0
  %5797 = vmatprep.subr.mxu0 0.0
  %5798 = vmatpush2.msra.mxu0 0.0
  %5799 = vmatprep.subr.mxu0 0.0
  %5800 = vmatpush2.msra.mxu0 0.0
  %5801 = vmatprep.subr.mxu0 0.0
  %5802 = vmatpush2.msra.mxu0 0.0
  %5803 = vmatprep.subr.mxu0 0.0
  %5804 = vmatpush2.msra.mxu0 0.0
  %5805 = vmatprep.subr.mxu0 0.0
  %5806 = vmatpush2.msra.mxu0 0.0
  %5807 = vmatprep.subr.mxu0 0.0
  %5808 = vmatpush2.msra.mxu0 0.0
  %5809 = vmatprep.subr.mxu0 0.0
  %5810 = vmatpush2.msra.mxu0 0.0
  %5811 = vmatprep.subr.mxu0 0.0
  %5812 = vmatpush2.msra.mxu0 0.0
  %5813 = vmatprep.subr.mxu0 0.0
  %5814 = vmatpush2.msra.mxu0 0.0
  %5815 = vmatprep.subr.mxu0 0.0
  %5816 = vmatpush2.msra.mxu0 0.0
  %5817 = vmatprep.subr.mxu0 0.0
  %5818 = vmatpush2.msra.mxu0 0.0
  %5819 = vmatprep.subr.mxu0 0.0
  %5820 = vmatpush2.msra.mxu0 0.0
  %5821 = vmatprep.subr.mxu0 0.0
  %5822 = vmatpush2.msra.mxu0 0.0
  %5823 = vmatprep.mubr.f32.mxu0 0.0
  %5824 = vmatmul.mubr.f32.gmra.mxu0 %v5736
  %v5825 = vpop.f32.mrf.mxu0
  %v5826 = vadd.f32 0.0, %v5825
  %v5827 = vpop.f32.mrf.mxu0
  %v5828 = vadd.f32 0.0, %v5827
  %5829 = vmatprep.mubr.f32.mxu0 0.0
  %5830 = vmatmul.mubr.f32.gmra.mxu0 %v5739
  %v5831 = vpop.f32.mrf.mxu0
  %v5832 = vadd.f32 0.0, %v5831
  %v5833 = vpop.f32.mrf.mxu0
  %v5834 = vadd.f32 0.0, %v5833
  %5835 = vmatprep.mubr.f32.mxu0 0.0
  %5836 = vmatmul.mubr.f32.gmra.mxu0 %v5742
  %v5837 = vpop.f32.mrf.mxu0
  %v5838 = vadd.f32 0.0, %v5837
  %v5839 = vpop.f32.mrf.mxu0
  %v5840 = vadd.f32 0.0, %v5839
  %5841 = vmatprep.mubr.f32.mxu0 0.0
  %5842 = vmatmul.mubr.f32.gmra.mxu0 %v5745
  %v5843 = vpop.f32.mrf.mxu0
  %v5844 = vadd.f32 0.0, %v5843
  %v5845 = vpop.f32.mrf.mxu0
  %v5846 = vadd.f32 0.0, %v5845
  %5847 = vmatprep.mubr.f32.mxu0 0.0
  %5848 = vmatmul.mubr.f32.gmra.mxu0 %v5748
  %v5849 = vpop.f32.mrf.mxu0
  %v5850 = vadd.f32 0.0, %v5849
  %v5851 = vpop.f32.mrf.mxu0
  %v5852 = vadd.f32 0.0, %v5851
  %5853 = vmatprep.mubr.f32.mxu0 0.0
  %5854 = vmatmul.mubr.f32.gmra.mxu0 %v5751
  %v5855 = vpop.f32.mrf.mxu0
  %v5856 = vadd.f32 0.0, %v5855
  %v5857 = vpop.f32.mrf.mxu0
  %v5858 = vadd.f32 0.0, %v5857
  %5859 = vmatprep.mubr.f32.mxu0 0.0
  %5860 = vmatmul.mubr.f32.gmra.mxu0 %v5754
  %v5861 = vpop.f32.mrf.mxu0
  %v5862 = vadd.f32 0.0, %v5861
  %v5863 = vpop.f32.mrf.mxu0
  %v5864 = vadd.f32 0.0, %v5863
  %5865 = vmatprep.mubr.f32.mxu0 0.0
  %5866 = vmatmul.mubr.f32.gmra.mxu0 %v5757
  %v5867 = vpop.f32.mrf.mxu0
  %v5868 = vadd.f32 0.0, %v5867
  %v5869 = vpop.f32.mrf.mxu0
  %v5870 = vadd.f32 0.0, %v5869
  %5871 = vdwg.mxu0
  %5872 = vmatprep.subr.mxu0 0.0
  %5873 = vmatpush1.msra.mxu0 0.0
  %5874 = vmatprep.subr.mxu0 0.0
  %5875 = vmatpush1.msra.mxu0 0.0
  %5876 = vmatprep.subr.mxu0 0.0
  %5877 = vmatpush1.msra.mxu0 0.0
  %5878 = vmatprep.subr.mxu0 0.0
  %5879 = vmatpush1.msra.mxu0 0.0
  %5880 = vmatprep.subr.mxu0 0.0
  %5881 = vmatpush1.msra.mxu0 0.0
  %5882 = vmatprep.subr.mxu0 0.0
  %5883 = vmatpush1.msra.mxu0 0.0
  %5884 = vmatprep.subr.mxu0 0.0
  %5885 = vmatpush1.msra.mxu0 0.0
  %5886 = vmatprep.subr.mxu0 0.0
  %5887 = vmatpush1.msra.mxu0 0.0
  %5888 = vmatprep.subr.mxu0 0.0
  %5889 = vmatpush1.msra.mxu0 %v5734
  %5890 = vmatprep.subr.mxu0 0.0
  %5891 = vmatpush1.msra.mxu0 %v5733
  %5892 = vmatprep.subr.mxu0 0.0
  %5893 = vmatpush1.msra.mxu0 %v5732
  %5894 = vmatprep.subr.mxu0 0.0
  %5895 = vmatpush1.msra.mxu0 %v5731
  %5896 = vmatprep.subr.mxu0 0.0
  %5897 = vmatpush1.msra.mxu0 %v5730
  %5898 = vmatprep.subr.mxu0 0.0
  %5899 = vmatpush1.msra.mxu0 %v5729
  %5900 = vmatprep.subr.mxu0 0.0
  %5901 = vmatpush1.msra.mxu0 %v5728
  %5902 = vmatprep.subr.mxu0 0.0
  %5903 = vmatpush1.msra.mxu0 %v5727
  %5904 = vmatprep.subr.mxu0 0.0
  %5905 = vmatpush2.msra.mxu0 0.0
  %5906 = vmatprep.subr.mxu0 0.0
  %5907 = vmatpush2.msra.mxu0 0.0
  %5908 = vmatprep.subr.mxu0 0.0
  %5909 = vmatpush2.msra.mxu0 0.0
  %5910 = vmatprep.subr.mxu0 0.0
  %5911 = vmatpush2.msra.mxu0 0.0
  %5912 = vmatprep.subr.mxu0 0.0
  %5913 = vmatpush2.msra.mxu0 0.0
  %5914 = vmatprep.subr.mxu0 0.0
  %5915 = vmatpush2.msra.mxu0 0.0
  %5916 = vmatprep.subr.mxu0 0.0
  %5917 = vmatpush2.msra.mxu0 0.0
  %5918 = vmatprep.subr.mxu0 0.0
  %5919 = vmatpush2.msra.mxu0 0.0
  %5920 = vmatprep.subr.mxu0 0.0
  %5921 = vmatpush2.msra.mxu0 0.0
  %5922 = vmatprep.subr.mxu0 0.0
  %5923 = vmatpush2.msra.mxu0 0.0
  %5924 = vmatprep.subr.mxu0 0.0
  %5925 = vmatpush2.msra.mxu0 0.0
  %5926 = vmatprep.subr.mxu0 0.0
  %5927 = vmatpush2.msra.mxu0 0.0
  %5928 = vmatprep.subr.mxu0 0.0
  %5929 = vmatpush2.msra.mxu0 0.0
  %5930 = vmatprep.subr.mxu0 0.0
  %5931 = vmatpush2.msra.mxu0 0.0
  %5932 = vmatprep.subr.mxu0 0.0
  %5933 = vmatpush2.msra.mxu0 0.0
  %5934 = vmatprep.subr.mxu0 0.0
  %5935 = vmatpush2.msra.mxu0 0.0
  %5936 = vmatprep.mubr.f32.mxu0 0.0
  %5937 = vmatmul.mubr.f32.gmra.mxu0 %v5736
  %v5938 = vpop.f32.mrf.mxu0
  %v5939 = vadd.f32 0.0, %v5938
  %v5940 = vpop.f32.mrf.mxu0
  %5941 = vmatprep.mubr.f32.mxu0 0.0
  %5942 = vmatmul.mubr.f32.gmra.mxu0 %v5739
  %v5943 = vpop.f32.mrf.mxu0
  %v5944 = vadd.f32 0.0, %v5943
  %v5945 = vpop.f32.mrf.mxu0
  %5946 = vmatprep.mubr.f32.mxu0 0.0
  %5947 = vmatmul.mubr.f32.gmra.mxu0 %v5742
  %v5948 = vpop.f32.mrf.mxu0
  %v5949 = vadd.f32 0.0, %v5948
  %v5950 = vpop.f32.mrf.mxu0
  %5951 = vmatprep.mubr.f32.mxu0 0.0
  %5952 = vmatmul.mubr.f32.gmra.mxu0 %v5745
  %v5953 = vpop.f32.mrf.mxu0
  %v5954 = vadd.f32 0.0, %v5953
  %v5955 = vpop.f32.mrf.mxu0
  %5956 = vmatprep.mubr.f32.mxu0 0.0
  %5957 = vmatmul.mubr.f32.gmra.mxu0 %v5748
  %v5958 = vpop.f32.mrf.mxu0
  %v5959 = vadd.f32 0.0, %v5958
  %v5960 = vpop.f32.mrf.mxu0
  %5961 = vmatprep.mubr.f32.mxu0 0.0
  %5962 = vmatmul.mubr.f32.gmra.mxu0 %v5751
  %v5963 = vpop.f32.mrf.mxu0
  %v5964 = vadd.f32 0.0, %v5963
  %v5965 = vpop.f32.mrf.mxu0
  %5966 = vmatprep.mubr.f32.mxu0 0.0
  %5967 = vmatmul.mubr.f32.gmra.mxu0 %v5754
  %v5968 = vpop.f32.mrf.mxu0
  %v5969 = vadd.f32 0.0, %v5968
  %v5970 = vpop.f32.mrf.mxu0
  %5971 = vmatprep.mubr.f32.mxu0 0.0
  %5972 = vmatmul.mubr.f32.gmra.mxu0 %v5757
  %v5973 = vpop.f32.mrf.mxu0
  %v5974 = vadd.f32 0.0, %v5973
  %v5975 = vpop.f32.mrf.mxu0
  %5976 = vdwg.mxu0
  %v5977 = vadd.f32 %v5503, %v5826
  %v5978 = vadd.f32 %v5505, %v5828
  %v5979 = vadd.f32 %v5616, %v5939
  %v5980 = vadd.f32 %v5509, %v5832
  %v5981 = vadd.f32 %v5511, %v5834
  %v5982 = vadd.f32 %v5621, %v5944
  %v5983 = vadd.f32 %v5515, %v5838
  %v5984 = vadd.f32 %v5517, %v5840
  %v5985 = vadd.f32 %v5626, %v5949
  %v5986 = vadd.f32 %v5521, %v5844
  %v5987 = vadd.f32 %v5523, %v5846
  %v5988 = vadd.f32 %v5631, %v5954
  %v5989 = vadd.f32 %v5527, %v5850
  %v5990 = vadd.f32 %v5529, %v5852
  %v5991 = vadd.f32 %v5636, %v5959
  %v5992 = vadd.f32 %v5533, %v5856
  %v5993 = vadd.f32 %v5535, %v5858
  %v5994 = vadd.f32 %v5641, %v5964
  %v5995 = vadd.f32 %v5539, %v5862
  %v5996 = vadd.f32 %v5541, %v5864
  %v5997 = vadd.f32 %v5646, %v5969
  %v5998 = vadd.f32 %v5545, %v5868
  %v5999 = vadd.f32 %v5547, %v5870
  %v6000 = vadd.f32 %v5651, %v5974
  %s6001 = scalar_lea.vmem %s3, 192
  %v6002 = vld [vmem:[%s6001] sm:$0xff]
  %v6003 = vld [vmem:[%s6001 + $0x8] sm:$0xff]
  %v6004 = vld [vmem:[%s6001 + $0x10] sm:$0xff]
  %v6005 = vld [vmem:[%s6001 + $0x18] sm:$0xff]
  %v6006 = vld [vmem:[%s6001 + $0x20] sm:$0xff]
  %v6007 = vld [vmem:[%s6001 + $0x28] sm:$0xff]
  %v6008 = vld [vmem:[%s6001 + $0x30] sm:$0xff]
  %v6009 = vld [vmem:[%s6001 + $0x38] sm:$0xff]
  %6010 = vrot.lane.b32.xlu0 %v5056, 125
  %v6011 = vpop.permute.xlu0 %6010
  %6012 = vrot.lane.b32.xlu0 %v5059, 125
  %v6013 = vpop.permute.xlu0 %6012
  %6014 = vrot.lane.b32.xlu0 %v5062, 125
  %v6015 = vpop.permute.xlu0 %6014
  %6016 = vrot.lane.b32.xlu0 %v5065, 125
  %v6017 = vpop.permute.xlu0 %6016
  %6018 = vrot.lane.b32.xlu0 %v5068, 125
  %v6019 = vpop.permute.xlu0 %6018
  %6020 = vrot.lane.b32.xlu0 %v5071, 125
  %v6021 = vpop.permute.xlu0 %6020
  %6022 = vrot.lane.b32.xlu0 %v5074, 125
  %v6023 = vpop.permute.xlu0 %6022
  %6024 = vrot.lane.b32.xlu0 %v5077, 125
  %v6025 = vpop.permute.xlu0 %6024
  %6026 = vrot.lane.b32.xlu0 %v5057, 125
  %v6027 = vpop.permute.xlu0 %6026
  %6028 = vrot.lane.b32.xlu0 %v5060, 125
  %v6029 = vpop.permute.xlu0 %6028
  %6030 = vrot.lane.b32.xlu0 %v5063, 125
  %v6031 = vpop.permute.xlu0 %6030
  %6032 = vrot.lane.b32.xlu0 %v5066, 125
  %v6033 = vpop.permute.xlu0 %6032
  %6034 = vrot.lane.b32.xlu0 %v5069, 125
  %v6035 = vpop.permute.xlu0 %6034
  %6036 = vrot.lane.b32.xlu0 %v5072, 125
  %v6037 = vpop.permute.xlu0 %6036
  %6038 = vrot.lane.b32.xlu0 %v5075, 125
  %v6039 = vpop.permute.xlu0 %6038
  %6040 = vrot.lane.b32.xlu0 %v5078, 125
  %v6041 = vpop.permute.xlu0 %6040
  %6042 = vrot.lane.b32.xlu0 %v5058, 125
  %v6043 = vpop.permute.xlu0 %6042
  %6044 = vrot.lane.b32.xlu0 %v5061, 125
  %v6045 = vpop.permute.xlu0 %6044
  %6046 = vrot.lane.b32.xlu0 %v5064, 125
  %v6047 = vpop.permute.xlu0 %6046
  %6048 = vrot.lane.b32.xlu0 %v5067, 125
  %v6049 = vpop.permute.xlu0 %6048
  %6050 = vrot.lane.b32.xlu0 %v5070, 125
  %v6051 = vpop.permute.xlu0 %6050
  %6052 = vrot.lane.b32.xlu0 %v5073, 125
  %v6053 = vpop.permute.xlu0 %6052
  %6054 = vrot.lane.b32.xlu0 %v5076, 125
  %v6055 = vpop.permute.xlu0 %6054
  %6056 = vrot.lane.b32.xlu0 %v5079, 125
  %v6057 = vpop.permute.xlu0 %6056
  %v6058 = vsel %vm883, %v6027, %v6043
  %v6059 = vsel %vm883, %v6029, %v6045
  %v6060 = vsel %vm883, %v6031, %v6047
  %v6061 = vsel %vm883, %v6033, %v6049
  %v6062 = vsel %vm883, %v6035, %v6051
  %v6063 = vsel %vm883, %v6037, %v6053
  %v6064 = vsel %vm883, %v6039, %v6055
  %v6065 = vsel %vm883, %v6041, %v6057
  %v6066 = vsel %vm883, %v6011, %v6027
  %v6067 = vsel %vm883, %v6013, %v6029
  %v6068 = vsel %vm883, %v6015, %v6031
  %v6069 = vsel %vm883, %v6017, %v6033
  %v6070 = vsel %vm883, %v6019, %v6035
  %v6071 = vsel %vm883, %v6021, %v6037
  %v6072 = vsel %vm883, %v6023, %v6039
  %v6073 = vsel %vm883, %v6025, %v6041
  %v6074 = vsel %vm883, %v6043, %v6011
  %v6075 = vsel %vm883, %v6045, %v6013
  %v6076 = vsel %vm883, %v6047, %v6015
  %v6077 = vsel %vm883, %v6049, %v6017
  %v6078 = vsel %vm883, %v6051, %v6019
  %v6079 = vsel %vm883, %v6053, %v6021
  %v6080 = vsel %vm883, %v6055, %v6023
  %v6081 = vsel %vm883, %v6057, %v6025
  %v6083 = vsel %vm5169, %v6002, 0
  %v6086 = vsel %vm5169, %v6003, 0
  %v6089 = vsel %vm5169, %v6004, 0
  %v6092 = vsel %vm5169, %v6005, 0
  %v6095 = vsel %vm5169, %v6006, 0
  %v6098 = vsel %vm5169, %v6007, 0
  %v6101 = vsel %vm5169, %v6008, 0
  %v6104 = vsel %vm5169, %v6009, 0
  %6106 = vmatprep.subr.mxu0 0.0
  %6107 = vmatpush1.msra.mxu0 0.0
  %6108 = vmatprep.subr.mxu0 0.0
  %6109 = vmatpush1.msra.mxu0 0.0
  %6110 = vmatprep.subr.mxu0 0.0
  %6111 = vmatpush1.msra.mxu0 0.0
  %6112 = vmatprep.subr.mxu0 0.0
  %6113 = vmatpush1.msra.mxu0 0.0
  %6114 = vmatprep.subr.mxu0 0.0
  %6115 = vmatpush1.msra.mxu0 0.0
  %6116 = vmatprep.subr.mxu0 0.0
  %6117 = vmatpush1.msra.mxu0 0.0
  %6118 = vmatprep.subr.mxu0 0.0
  %6119 = vmatpush1.msra.mxu0 0.0
  %6120 = vmatprep.subr.mxu0 0.0
  %6121 = vmatpush1.msra.mxu0 0.0
  %6122 = vmatprep.subr.mxu0 %v6065
  %6123 = vmatpush1.msra.mxu0 %v6073
  %6124 = vmatprep.subr.mxu0 %v6064
  %6125 = vmatpush1.msra.mxu0 %v6072
  %6126 = vmatprep.subr.mxu0 %v6063
  %6127 = vmatpush1.msra.mxu0 %v6071
  %6128 = vmatprep.subr.mxu0 %v6062
  %6129 = vmatpush1.msra.mxu0 %v6070
  %6130 = vmatprep.subr.mxu0 %v6061
  %6131 = vmatpush1.msra.mxu0 %v6069
  %6132 = vmatprep.subr.mxu0 %v6060
  %6133 = vmatpush1.msra.mxu0 %v6068
  %6134 = vmatprep.subr.mxu0 %v6059
  %6135 = vmatpush1.msra.mxu0 %v6067
  %6136 = vmatprep.subr.mxu0 %v6058
  %6137 = vmatpush1.msra.mxu0 %v6066
  %6138 = vmatprep.subr.mxu0 0.0
  %6139 = vmatpush2.msra.mxu0 0.0
  %6140 = vmatprep.subr.mxu0 0.0
  %6141 = vmatpush2.msra.mxu0 0.0
  %6142 = vmatprep.subr.mxu0 0.0
  %6143 = vmatpush2.msra.mxu0 0.0
  %6144 = vmatprep.subr.mxu0 0.0
  %6145 = vmatpush2.msra.mxu0 0.0
  %6146 = vmatprep.subr.mxu0 0.0
  %6147 = vmatpush2.msra.mxu0 0.0
  %6148 = vmatprep.subr.mxu0 0.0
  %6149 = vmatpush2.msra.mxu0 0.0
  %6150 = vmatprep.subr.mxu0 0.0
  %6151 = vmatpush2.msra.mxu0 0.0
  %6152 = vmatprep.subr.mxu0 0.0
  %6153 = vmatpush2.msra.mxu0 0.0
  %6154 = vmatprep.subr.mxu0 0.0
  %6155 = vmatpush2.msra.mxu0 0.0
  %6156 = vmatprep.subr.mxu0 0.0
  %6157 = vmatpush2.msra.mxu0 0.0
  %6158 = vmatprep.subr.mxu0 0.0
  %6159 = vmatpush2.msra.mxu0 0.0
  %6160 = vmatprep.subr.mxu0 0.0
  %6161 = vmatpush2.msra.mxu0 0.0
  %6162 = vmatprep.subr.mxu0 0.0
  %6163 = vmatpush2.msra.mxu0 0.0
  %6164 = vmatprep.subr.mxu0 0.0
  %6165 = vmatpush2.msra.mxu0 0.0
  %6166 = vmatprep.subr.mxu0 0.0
  %6167 = vmatpush2.msra.mxu0 0.0
  %6168 = vmatprep.subr.mxu0 0.0
  %6169 = vmatpush2.msra.mxu0 0.0
  %6170 = vmatprep.mubr.f32.mxu0 0.0
  %6171 = vmatmul.mubr.f32.gmra.mxu0 %v6083
  %v6172 = vpop.f32.mrf.mxu0
  %v6173 = vadd.f32 0.0, %v6172
  %v6174 = vpop.f32.mrf.mxu0
  %v6175 = vadd.f32 0.0, %v6174
  %6176 = vmatprep.mubr.f32.mxu0 0.0
  %6177 = vmatmul.mubr.f32.gmra.mxu0 %v6086
  %v6178 = vpop.f32.mrf.mxu0
  %v6179 = vadd.f32 0.0, %v6178
  %v6180 = vpop.f32.mrf.mxu0
  %v6181 = vadd.f32 0.0, %v6180
  %6182 = vmatprep.mubr.f32.mxu0 0.0
  %6183 = vmatmul.mubr.f32.gmra.mxu0 %v6089
  %v6184 = vpop.f32.mrf.mxu0
  %v6185 = vadd.f32 0.0, %v6184
  %v6186 = vpop.f32.mrf.mxu0
  %v6187 = vadd.f32 0.0, %v6186
  %6188 = vmatprep.mubr.f32.mxu0 0.0
  %6189 = vmatmul.mubr.f32.gmra.mxu0 %v6092
  %v6190 = vpop.f32.mrf.mxu0
  %v6191 = vadd.f32 0.0, %v6190
  %v6192 = vpop.f32.mrf.mxu0
  %v6193 = vadd.f32 0.0, %v6192
  %6194 = vmatprep.mubr.f32.mxu0 0.0
  %6195 = vmatmul.mubr.f32.gmra.mxu0 %v6095
  %v6196 = vpop.f32.mrf.mxu0
  %v6197 = vadd.f32 0.0, %v6196
  %v6198 = vpop.f32.mrf.mxu0
  %v6199 = vadd.f32 0.0, %v6198
  %6200 = vmatprep.mubr.f32.mxu0 0.0
  %6201 = vmatmul.mubr.f32.gmra.mxu0 %v6098
  %v6202 = vpop.f32.mrf.mxu0
  %v6203 = vadd.f32 0.0, %v6202
  %v6204 = vpop.f32.mrf.mxu0
  %v6205 = vadd.f32 0.0, %v6204
  %6206 = vmatprep.mubr.f32.mxu0 0.0
  %6207 = vmatmul.mubr.f32.gmra.mxu0 %v6101
  %v6208 = vpop.f32.mrf.mxu0
  %v6209 = vadd.f32 0.0, %v6208
  %v6210 = vpop.f32.mrf.mxu0
  %v6211 = vadd.f32 0.0, %v6210
  %6212 = vmatprep.mubr.f32.mxu0 0.0
  %6213 = vmatmul.mubr.f32.gmra.mxu0 %v6104
  %v6214 = vpop.f32.mrf.mxu0
  %v6215 = vadd.f32 0.0, %v6214
  %v6216 = vpop.f32.mrf.mxu0
  %v6217 = vadd.f32 0.0, %v6216
  %6218 = vdwg.mxu0
  %6219 = vmatprep.subr.mxu0 0.0
  %6220 = vmatpush1.msra.mxu0 0.0
  %6221 = vmatprep.subr.mxu0 0.0
  %6222 = vmatpush1.msra.mxu0 0.0
  %6223 = vmatprep.subr.mxu0 0.0
  %6224 = vmatpush1.msra.mxu0 0.0
  %6225 = vmatprep.subr.mxu0 0.0
  %6226 = vmatpush1.msra.mxu0 0.0
  %6227 = vmatprep.subr.mxu0 0.0
  %6228 = vmatpush1.msra.mxu0 0.0
  %6229 = vmatprep.subr.mxu0 0.0
  %6230 = vmatpush1.msra.mxu0 0.0
  %6231 = vmatprep.subr.mxu0 0.0
  %6232 = vmatpush1.msra.mxu0 0.0
  %6233 = vmatprep.subr.mxu0 0.0
  %6234 = vmatpush1.msra.mxu0 0.0
  %6235 = vmatprep.subr.mxu0 0.0
  %6236 = vmatpush1.msra.mxu0 %v6081
  %6237 = vmatprep.subr.mxu0 0.0
  %6238 = vmatpush1.msra.mxu0 %v6080
  %6239 = vmatprep.subr.mxu0 0.0
  %6240 = vmatpush1.msra.mxu0 %v6079
  %6241 = vmatprep.subr.mxu0 0.0
  %6242 = vmatpush1.msra.mxu0 %v6078
  %6243 = vmatprep.subr.mxu0 0.0
  %6244 = vmatpush1.msra.mxu0 %v6077
  %6245 = vmatprep.subr.mxu0 0.0
  %6246 = vmatpush1.msra.mxu0 %v6076
  %6247 = vmatprep.subr.mxu0 0.0
  %6248 = vmatpush1.msra.mxu0 %v6075
  %6249 = vmatprep.subr.mxu0 0.0
  %6250 = vmatpush1.msra.mxu0 %v6074
  %6251 = vmatprep.subr.mxu0 0.0
  %6252 = vmatpush2.msra.mxu0 0.0
  %6253 = vmatprep.subr.mxu0 0.0
  %6254 = vmatpush2.msra.mxu0 0.0
  %6255 = vmatprep.subr.mxu0 0.0
  %6256 = vmatpush2.msra.mxu0 0.0
  %6257 = vmatprep.subr.mxu0 0.0
  %6258 = vmatpush2.msra.mxu0 0.0
  %6259 = vmatprep.subr.mxu0 0.0
  %6260 = vmatpush2.msra.mxu0 0.0
  %6261 = vmatprep.subr.mxu0 0.0
  %6262 = vmatpush2.msra.mxu0 0.0
  %6263 = vmatprep.subr.mxu0 0.0
  %6264 = vmatpush2.msra.mxu0 0.0
  %6265 = vmatprep.subr.mxu0 0.0
  %6266 = vmatpush2.msra.mxu0 0.0
  %6267 = vmatprep.subr.mxu0 0.0
  %6268 = vmatpush2.msra.mxu0 0.0
  %6269 = vmatprep.subr.mxu0 0.0
  %6270 = vmatpush2.msra.mxu0 0.0
  %6271 = vmatprep.subr.mxu0 0.0
  %6272 = vmatpush2.msra.mxu0 0.0
  %6273 = vmatprep.subr.mxu0 0.0
  %6274 = vmatpush2.msra.mxu0 0.0
  %6275 = vmatprep.subr.mxu0 0.0
  %6276 = vmatpush2.msra.mxu0 0.0
  %6277 = vmatprep.subr.mxu0 0.0
  %6278 = vmatpush2.msra.mxu0 0.0
  %6279 = vmatprep.subr.mxu0 0.0
  %6280 = vmatpush2.msra.mxu0 0.0
  %6281 = vmatprep.subr.mxu0 0.0
  %6282 = vmatpush2.msra.mxu0 0.0
  %6283 = vmatprep.mubr.f32.mxu0 0.0
  %6284 = vmatmul.mubr.f32.gmra.mxu0 %v6083
  %v6285 = vpop.f32.mrf.mxu0
  %v6286 = vadd.f32 0.0, %v6285
  %v6287 = vpop.f32.mrf.mxu0
  %6288 = vmatprep.mubr.f32.mxu0 0.0
  %6289 = vmatmul.mubr.f32.gmra.mxu0 %v6086
  %v6290 = vpop.f32.mrf.mxu0
  %v6291 = vadd.f32 0.0, %v6290
  %v6292 = vpop.f32.mrf.mxu0
  %6293 = vmatprep.mubr.f32.mxu0 0.0
  %6294 = vmatmul.mubr.f32.gmra.mxu0 %v6089
  %v6295 = vpop.f32.mrf.mxu0
  %v6296 = vadd.f32 0.0, %v6295
  %v6297 = vpop.f32.mrf.mxu0
  %6298 = vmatprep.mubr.f32.mxu0 0.0
  %6299 = vmatmul.mubr.f32.gmra.mxu0 %v6092
  %v6300 = vpop.f32.mrf.mxu0
  %v6301 = vadd.f32 0.0, %v6300
  %v6302 = vpop.f32.mrf.mxu0
  %6303 = vmatprep.mubr.f32.mxu0 0.0
  %6304 = vmatmul.mubr.f32.gmra.mxu0 %v6095
  %v6305 = vpop.f32.mrf.mxu0
  %v6306 = vadd.f32 0.0, %v6305
  %v6307 = vpop.f32.mrf.mxu0
  %6308 = vmatprep.mubr.f32.mxu0 0.0
  %6309 = vmatmul.mubr.f32.gmra.mxu0 %v6098
  %v6310 = vpop.f32.mrf.mxu0
  %v6311 = vadd.f32 0.0, %v6310
  %v6312 = vpop.f32.mrf.mxu0
  %6313 = vmatprep.mubr.f32.mxu0 0.0
  %6314 = vmatmul.mubr.f32.gmra.mxu0 %v6101
  %v6315 = vpop.f32.mrf.mxu0
  %v6316 = vadd.f32 0.0, %v6315
  %v6317 = vpop.f32.mrf.mxu0
  %6318 = vmatprep.mubr.f32.mxu0 0.0
  %6319 = vmatmul.mubr.f32.gmra.mxu0 %v6104
  %v6320 = vpop.f32.mrf.mxu0
  %v6321 = vadd.f32 0.0, %v6320
  %v6322 = vpop.f32.mrf.mxu0
  %6323 = vdwg.mxu0
  %v6324 = vadd.f32 %v5977, %v6173
  %v6325 = vadd.f32 %v5978, %v6175
  %v6326 = vadd.f32 %v5979, %v6286
  %v6327 = vadd.f32 %v5980, %v6179
  %v6328 = vadd.f32 %v5981, %v6181
  %v6329 = vadd.f32 %v5982, %v6291
  %v6330 = vadd.f32 %v5983, %v6185
  %v6331 = vadd.f32 %v5984, %v6187
  %v6332 = vadd.f32 %v5985, %v6296
  %v6333 = vadd.f32 %v5986, %v6191
  %v6334 = vadd.f32 %v5987, %v6193
  %v6335 = vadd.f32 %v5988, %v6301
  %v6336 = vadd.f32 %v5989, %v6197
  %v6337 = vadd.f32 %v5990, %v6199
  %v6338 = vadd.f32 %v5991, %v6306
  %v6339 = vadd.f32 %v5992, %v6203
  %v6340 = vadd.f32 %v5993, %v6205
  %v6341 = vadd.f32 %v5994, %v6311
  %v6342 = vadd.f32 %v5995, %v6209
  %v6343 = vadd.f32 %v5996, %v6211
  %v6344 = vadd.f32 %v5997, %v6316
  %v6345 = vadd.f32 %v5998, %v6215
  %v6346 = vadd.f32 %v5999, %v6217
  %v6347 = vadd.f32 %v6000, %v6321
  %s6348 = scalar_lea.vmem %s3, 256
  %v6349 = vld [vmem:[%s6348] sm:$0xff]
  %v6350 = vld [vmem:[%s6348 + $0x8] sm:$0xff]
  %v6351 = vld [vmem:[%s6348 + $0x10] sm:$0xff]
  %v6352 = vld [vmem:[%s6348 + $0x18] sm:$0xff]
  %v6353 = vld [vmem:[%s6348 + $0x20] sm:$0xff]
  %v6354 = vld [vmem:[%s6348 + $0x28] sm:$0xff]
  %v6355 = vld [vmem:[%s6348 + $0x30] sm:$0xff]
  %v6356 = vld [vmem:[%s6348 + $0x38] sm:$0xff]
  %6357 = vrot.lane.b32.xlu0 %v5056, 124
  %v6358 = vpop.permute.xlu0 %6357
  %6359 = vrot.lane.b32.xlu0 %v5059, 124
  %v6360 = vpop.permute.xlu0 %6359
  %6361 = vrot.lane.b32.xlu0 %v5062, 124
  %v6362 = vpop.permute.xlu0 %6361
  %6363 = vrot.lane.b32.xlu0 %v5065, 124
  %v6364 = vpop.permute.xlu0 %6363
  %6365 = vrot.lane.b32.xlu0 %v5068, 124
  %v6366 = vpop.permute.xlu0 %6365
  %6367 = vrot.lane.b32.xlu0 %v5071, 124
  %v6368 = vpop.permute.xlu0 %6367
  %6369 = vrot.lane.b32.xlu0 %v5074, 124
  %v6370 = vpop.permute.xlu0 %6369
  %6371 = vrot.lane.b32.xlu0 %v5077, 124
  %v6372 = vpop.permute.xlu0 %6371
  %6373 = vrot.lane.b32.xlu0 %v5057, 124
  %v6374 = vpop.permute.xlu0 %6373
  %6375 = vrot.lane.b32.xlu0 %v5060, 124
  %v6376 = vpop.permute.xlu0 %6375
  %6377 = vrot.lane.b32.xlu0 %v5063, 124
  %v6378 = vpop.permute.xlu0 %6377
  %6379 = vrot.lane.b32.xlu0 %v5066, 124
  %v6380 = vpop.permute.xlu0 %6379
  %6381 = vrot.lane.b32.xlu0 %v5069, 124
  %v6382 = vpop.permute.xlu0 %6381
  %6383 = vrot.lane.b32.xlu0 %v5072, 124
  %v6384 = vpop.permute.xlu0 %6383
  %6385 = vrot.lane.b32.xlu0 %v5075, 124
  %v6386 = vpop.permute.xlu0 %6385
  %6387 = vrot.lane.b32.xlu0 %v5078, 124
  %v6388 = vpop.permute.xlu0 %6387
  %6389 = vrot.lane.b32.xlu0 %v5058, 124
  %v6390 = vpop.permute.xlu0 %6389
  %6391 = vrot.lane.b32.xlu0 %v5061, 124
  %v6392 = vpop.permute.xlu0 %6391
  %6393 = vrot.lane.b32.xlu0 %v5064, 124
  %v6394 = vpop.permute.xlu0 %6393
  %6395 = vrot.lane.b32.xlu0 %v5067, 124
  %v6396 = vpop.permute.xlu0 %6395
  %6397 = vrot.lane.b32.xlu0 %v5070, 124
  %v6398 = vpop.permute.xlu0 %6397
  %6399 = vrot.lane.b32.xlu0 %v5073, 124
  %v6400 = vpop.permute.xlu0 %6399
  %6401 = vrot.lane.b32.xlu0 %v5076, 124
  %v6402 = vpop.permute.xlu0 %6401
  %6403 = vrot.lane.b32.xlu0 %v5079, 124
  %v6404 = vpop.permute.xlu0 %6403
  %v6405 = vsel %vm1177, %v6374, %v6390
  %v6406 = vsel %vm1177, %v6376, %v6392
  %v6407 = vsel %vm1177, %v6378, %v6394
  %v6408 = vsel %vm1177, %v6380, %v6396
  %v6409 = vsel %vm1177, %v6382, %v6398
  %v6410 = vsel %vm1177, %v6384, %v6400
  %v6411 = vsel %vm1177, %v6386, %v6402
  %v6412 = vsel %vm1177, %v6388, %v6404
  %v6413 = vsel %vm1177, %v6358, %v6374
  %v6414 = vsel %vm1177, %v6360, %v6376
  %v6415 = vsel %vm1177, %v6362, %v6378
  %v6416 = vsel %vm1177, %v6364, %v6380
  %v6417 = vsel %vm1177, %v6366, %v6382
  %v6418 = vsel %vm1177, %v6368, %v6384
  %v6419 = vsel %vm1177, %v6370, %v6386
  %v6420 = vsel %vm1177, %v6372, %v6388
  %v6421 = vsel %vm1177, %v6390, %v6358
  %v6422 = vsel %vm1177, %v6392, %v6360
  %v6423 = vsel %vm1177, %v6394, %v6362
  %v6424 = vsel %vm1177, %v6396, %v6364
  %v6425 = vsel %vm1177, %v6398, %v6366
  %v6426 = vsel %vm1177, %v6400, %v6368
  %v6427 = vsel %vm1177, %v6402, %v6370
  %v6428 = vsel %vm1177, %v6404, %v6372
  %v6430 = vsel %vm5169, %v6349, 0
  %v6433 = vsel %vm5169, %v6350, 0
  %v6436 = vsel %vm5169, %v6351, 0
  %v6439 = vsel %vm5169, %v6352, 0
  %v6442 = vsel %vm5169, %v6353, 0
  %v6445 = vsel %vm5169, %v6354, 0
  %v6448 = vsel %vm5169, %v6355, 0
  %v6451 = vsel %vm5169, %v6356, 0
  %6453 = vmatprep.subr.mxu0 0.0
  %6454 = vmatpush1.msra.mxu0 0.0
  %6455 = vmatprep.subr.mxu0 0.0
  %6456 = vmatpush1.msra.mxu0 0.0
  %6457 = vmatprep.subr.mxu0 0.0
  %6458 = vmatpush1.msra.mxu0 0.0
  %6459 = vmatprep.subr.mxu0 0.0
  %6460 = vmatpush1.msra.mxu0 0.0
  %6461 = vmatprep.subr.mxu0 0.0
  %6462 = vmatpush1.msra.mxu0 0.0
  %6463 = vmatprep.subr.mxu0 0.0
  %6464 = vmatpush1.msra.mxu0 0.0
  %6465 = vmatprep.subr.mxu0 0.0
  %6466 = vmatpush1.msra.mxu0 0.0
  %6467 = vmatprep.subr.mxu0 0.0
  %6468 = vmatpush1.msra.mxu0 0.0
  %6469 = vmatprep.subr.mxu0 %v6412
  %6470 = vmatpush1.msra.mxu0 %v6420
  %6471 = vmatprep.subr.mxu0 %v6411
  %6472 = vmatpush1.msra.mxu0 %v6419
  %6473 = vmatprep.subr.mxu0 %v6410
  %6474 = vmatpush1.msra.mxu0 %v6418
  %6475 = vmatprep.subr.mxu0 %v6409
  %6476 = vmatpush1.msra.mxu0 %v6417
  %6477 = vmatprep.subr.mxu0 %v6408
  %6478 = vmatpush1.msra.mxu0 %v6416
  %6479 = vmatprep.subr.mxu0 %v6407
  %6480 = vmatpush1.msra.mxu0 %v6415
  %6481 = vmatprep.subr.mxu0 %v6406
  %6482 = vmatpush1.msra.mxu0 %v6414
  %6483 = vmatprep.subr.mxu0 %v6405
  %6484 = vmatpush1.msra.mxu0 %v6413
  %6485 = vmatprep.subr.mxu0 0.0
  %6486 = vmatpush2.msra.mxu0 0.0
  %6487 = vmatprep.subr.mxu0 0.0
  %6488 = vmatpush2.msra.mxu0 0.0
  %6489 = vmatprep.subr.mxu0 0.0
  %6490 = vmatpush2.msra.mxu0 0.0
  %6491 = vmatprep.subr.mxu0 0.0
  %6492 = vmatpush2.msra.mxu0 0.0
  %6493 = vmatprep.subr.mxu0 0.0
  %6494 = vmatpush2.msra.mxu0 0.0
  %6495 = vmatprep.subr.mxu0 0.0
  %6496 = vmatpush2.msra.mxu0 0.0
  %6497 = vmatprep.subr.mxu0 0.0
  %6498 = vmatpush2.msra.mxu0 0.0
  %6499 = vmatprep.subr.mxu0 0.0
  %6500 = vmatpush2.msra.mxu0 0.0
  %6501 = vmatprep.subr.mxu0 0.0
  %6502 = vmatpush2.msra.mxu0 0.0
  %6503 = vmatprep.subr.mxu0 0.0
  %6504 = vmatpush2.msra.mxu0 0.0
  %6505 = vmatprep.subr.mxu0 0.0
  %6506 = vmatpush2.msra.mxu0 0.0
  %6507 = vmatprep.subr.mxu0 0.0
  %6508 = vmatpush2.msra.mxu0 0.0
  %6509 = vmatprep.subr.mxu0 0.0
  %6510 = vmatpush2.msra.mxu0 0.0
  %6511 = vmatprep.subr.mxu0 0.0
  %6512 = vmatpush2.msra.mxu0 0.0
  %6513 = vmatprep.subr.mxu0 0.0
  %6514 = vmatpush2.msra.mxu0 0.0
  %6515 = vmatprep.subr.mxu0 0.0
  %6516 = vmatpush2.msra.mxu0 0.0
  %6517 = vmatprep.mubr.f32.mxu0 0.0
  %6518 = vmatmul.mubr.f32.gmra.mxu0 %v6430
  %v6519 = vpop.f32.mrf.mxu0
  %v6520 = vadd.f32 0.0, %v6519
  %v6521 = vpop.f32.mrf.mxu0
  %v6522 = vadd.f32 0.0, %v6521
  %6523 = vmatprep.mubr.f32.mxu0 0.0
  %6524 = vmatmul.mubr.f32.gmra.mxu0 %v6433
  %v6525 = vpop.f32.mrf.mxu0
  %v6526 = vadd.f32 0.0, %v6525
  %v6527 = vpop.f32.mrf.mxu0
  %v6528 = vadd.f32 0.0, %v6527
  %6529 = vmatprep.mubr.f32.mxu0 0.0
  %6530 = vmatmul.mubr.f32.gmra.mxu0 %v6436
  %v6531 = vpop.f32.mrf.mxu0
  %v6532 = vadd.f32 0.0, %v6531
  %v6533 = vpop.f32.mrf.mxu0
  %v6534 = vadd.f32 0.0, %v6533
  %6535 = vmatprep.mubr.f32.mxu0 0.0
  %6536 = vmatmul.mubr.f32.gmra.mxu0 %v6439
  %v6537 = vpop.f32.mrf.mxu0
  %v6538 = vadd.f32 0.0, %v6537
  %v6539 = vpop.f32.mrf.mxu0
  %v6540 = vadd.f32 0.0, %v6539
  %6541 = vmatprep.mubr.f32.mxu0 0.0
  %6542 = vmatmul.mubr.f32.gmra.mxu0 %v6442
  %v6543 = vpop.f32.mrf.mxu0
  %v6544 = vadd.f32 0.0, %v6543
  %v6545 = vpop.f32.mrf.mxu0
  %v6546 = vadd.f32 0.0, %v6545
  %6547 = vmatprep.mubr.f32.mxu0 0.0
  %6548 = vmatmul.mubr.f32.gmra.mxu0 %v6445
  %v6549 = vpop.f32.mrf.mxu0
  %v6550 = vadd.f32 0.0, %v6549
  %v6551 = vpop.f32.mrf.mxu0
  %v6552 = vadd.f32 0.0, %v6551
  %6553 = vmatprep.mubr.f32.mxu0 0.0
  %6554 = vmatmul.mubr.f32.gmra.mxu0 %v6448
  %v6555 = vpop.f32.mrf.mxu0
  %v6556 = vadd.f32 0.0, %v6555
  %v6557 = vpop.f32.mrf.mxu0
  %v6558 = vadd.f32 0.0, %v6557
  %6559 = vmatprep.mubr.f32.mxu0 0.0
  %6560 = vmatmul.mubr.f32.gmra.mxu0 %v6451
  %v6561 = vpop.f32.mrf.mxu0
  %v6562 = vadd.f32 0.0, %v6561
  %v6563 = vpop.f32.mrf.mxu0
  %v6564 = vadd.f32 0.0, %v6563
  %6565 = vdwg.mxu0
  %6566 = vmatprep.subr.mxu0 0.0
  %6567 = vmatpush1.msra.mxu0 0.0
  %6568 = vmatprep.subr.mxu0 0.0
  %6569 = vmatpush1.msra.mxu0 0.0
  %6570 = vmatprep.subr.mxu0 0.0
  %6571 = vmatpush1.msra.mxu0 0.0
  %6572 = vmatprep.subr.mxu0 0.0
  %6573 = vmatpush1.msra.mxu0 0.0
  %6574 = vmatprep.subr.mxu0 0.0
  %6575 = vmatpush1.msra.mxu0 0.0
  %6576 = vmatprep.subr.mxu0 0.0
  %6577 = vmatpush1.msra.mxu0 0.0
  %6578 = vmatprep.subr.mxu0 0.0
  %6579 = vmatpush1.msra.mxu0 0.0
  %6580 = vmatprep.subr.mxu0 0.0
  %6581 = vmatpush1.msra.mxu0 0.0
  %6582 = vmatprep.subr.mxu0 0.0
  %6583 = vmatpush1.msra.mxu0 %v6428
  %6584 = vmatprep.subr.mxu0 0.0
  %6585 = vmatpush1.msra.mxu0 %v6427
  %6586 = vmatprep.subr.mxu0 0.0
  %6587 = vmatpush1.msra.mxu0 %v6426
  %6588 = vmatprep.subr.mxu0 0.0
  %6589 = vmatpush1.msra.mxu0 %v6425
  %6590 = vmatprep.subr.mxu0 0.0
  %6591 = vmatpush1.msra.mxu0 %v6424
  %6592 = vmatprep.subr.mxu0 0.0
  %6593 = vmatpush1.msra.mxu0 %v6423
  %6594 = vmatprep.subr.mxu0 0.0
  %6595 = vmatpush1.msra.mxu0 %v6422
  %6596 = vmatprep.subr.mxu0 0.0
  %6597 = vmatpush1.msra.mxu0 %v6421
  %6598 = vmatprep.subr.mxu0 0.0
  %6599 = vmatpush2.msra.mxu0 0.0
  %6600 = vmatprep.subr.mxu0 0.0
  %6601 = vmatpush2.msra.mxu0 0.0
  %6602 = vmatprep.subr.mxu0 0.0
  %6603 = vmatpush2.msra.mxu0 0.0
  %6604 = vmatprep.subr.mxu0 0.0
  %6605 = vmatpush2.msra.mxu0 0.0
  %6606 = vmatprep.subr.mxu0 0.0
  %6607 = vmatpush2.msra.mxu0 0.0
  %6608 = vmatprep.subr.mxu0 0.0
  %6609 = vmatpush2.msra.mxu0 0.0
  %6610 = vmatprep.subr.mxu0 0.0
  %6611 = vmatpush2.msra.mxu0 0.0
  %6612 = vmatprep.subr.mxu0 0.0
  %6613 = vmatpush2.msra.mxu0 0.0
  %6614 = vmatprep.subr.mxu0 0.0
  %6615 = vmatpush2.msra.mxu0 0.0
  %6616 = vmatprep.subr.mxu0 0.0
  %6617 = vmatpush2.msra.mxu0 0.0
  %6618 = vmatprep.subr.mxu0 0.0
  %6619 = vmatpush2.msra.mxu0 0.0
  %6620 = vmatprep.subr.mxu0 0.0
  %6621 = vmatpush2.msra.mxu0 0.0
  %6622 = vmatprep.subr.mxu0 0.0
  %6623 = vmatpush2.msra.mxu0 0.0
  %6624 = vmatprep.subr.mxu0 0.0
  %6625 = vmatpush2.msra.mxu0 0.0
  %6626 = vmatprep.subr.mxu0 0.0
  %6627 = vmatpush2.msra.mxu0 0.0
  %6628 = vmatprep.subr.mxu0 0.0
  %6629 = vmatpush2.msra.mxu0 0.0
  %6630 = vmatprep.mubr.f32.mxu0 0.0
  %6631 = vmatmul.mubr.f32.gmra.mxu0 %v6430
  %v6632 = vpop.f32.mrf.mxu0
  %v6633 = vadd.f32 0.0, %v6632
  %v6634 = vpop.f32.mrf.mxu0
  %6635 = vmatprep.mubr.f32.mxu0 0.0
  %6636 = vmatmul.mubr.f32.gmra.mxu0 %v6433
  %v6637 = vpop.f32.mrf.mxu0
  %v6638 = vadd.f32 0.0, %v6637
  %v6639 = vpop.f32.mrf.mxu0
  %6640 = vmatprep.mubr.f32.mxu0 0.0
  %6641 = vmatmul.mubr.f32.gmra.mxu0 %v6436
  %v6642 = vpop.f32.mrf.mxu0
  %v6643 = vadd.f32 0.0, %v6642
  %v6644 = vpop.f32.mrf.mxu0
  %6645 = vmatprep.mubr.f32.mxu0 0.0
  %6646 = vmatmul.mubr.f32.gmra.mxu0 %v6439
  %v6647 = vpop.f32.mrf.mxu0
  %v6648 = vadd.f32 0.0, %v6647
  %v6649 = vpop.f32.mrf.mxu0
  %6650 = vmatprep.mubr.f32.mxu0 0.0
  %6651 = vmatmul.mubr.f32.gmra.mxu0 %v6442
  %v6652 = vpop.f32.mrf.mxu0
  %v6653 = vadd.f32 0.0, %v6652
  %v6654 = vpop.f32.mrf.mxu0
  %6655 = vmatprep.mubr.f32.mxu0 0.0
  %6656 = vmatmul.mubr.f32.gmra.mxu0 %v6445
  %v6657 = vpop.f32.mrf.mxu0
  %v6658 = vadd.f32 0.0, %v6657
  %v6659 = vpop.f32.mrf.mxu0
  %6660 = vmatprep.mubr.f32.mxu0 0.0
  %6661 = vmatmul.mubr.f32.gmra.mxu0 %v6448
  %v6662 = vpop.f32.mrf.mxu0
  %v6663 = vadd.f32 0.0, %v6662
  %v6664 = vpop.f32.mrf.mxu0
  %6665 = vmatprep.mubr.f32.mxu0 0.0
  %6666 = vmatmul.mubr.f32.gmra.mxu0 %v6451
  %v6667 = vpop.f32.mrf.mxu0
  %v6668 = vadd.f32 0.0, %v6667
  %v6669 = vpop.f32.mrf.mxu0
  %6670 = vdwg.mxu0
  %v6671 = vadd.f32 %v6324, %v6520
  %v6672 = vadd.f32 %v6325, %v6522
  %v6673 = vadd.f32 %v6326, %v6633
  %v6674 = vadd.f32 %v6327, %v6526
  %v6675 = vadd.f32 %v6328, %v6528
  %v6676 = vadd.f32 %v6329, %v6638
  %v6677 = vadd.f32 %v6330, %v6532
  %v6678 = vadd.f32 %v6331, %v6534
  %v6679 = vadd.f32 %v6332, %v6643
  %v6680 = vadd.f32 %v6333, %v6538
  %v6681 = vadd.f32 %v6334, %v6540
  %v6682 = vadd.f32 %v6335, %v6648
  %v6683 = vadd.f32 %v6336, %v6544
  %v6684 = vadd.f32 %v6337, %v6546
  %v6685 = vadd.f32 %v6338, %v6653
  %v6686 = vadd.f32 %v6339, %v6550
  %v6687 = vadd.f32 %v6340, %v6552
  %v6688 = vadd.f32 %v6341, %v6658
  %v6689 = vadd.f32 %v6342, %v6556
  %v6690 = vadd.f32 %v6343, %v6558
  %v6691 = vadd.f32 %v6344, %v6663
  %v6692 = vadd.f32 %v6345, %v6562
  %v6693 = vadd.f32 %v6346, %v6564
  %v6694 = vadd.f32 %v6347, %v6668
  %v6695 = vld [vmem:[%s4] sm:$0xff]
  %v6696 = vld [vmem:[%s4 + $0x8] sm:$0xff]
  %v6697 = vld [vmem:[%s4 + $0x10] sm:$0xff]
  %v6698 = vld [vmem:[%s4 + $0x18] sm:$0xff]
  %v6699 = vld [vmem:[%s4 + $0x20] sm:$0xff]
  %v6700 = vld [vmem:[%s4 + $0x28] sm:$0xff]
  %v6701 = vld [vmem:[%s4 + $0x30] sm:$0xff]
  %v6702 = vld [vmem:[%s4 + $0x38] sm:$0xff]
  %6704 = vset.pattern.permute.xlu0 0
  %6705 = vperm.xlu0 %6704, %v6695
  %v6706 = vpop.permute.xlu0 %6705
  %6709 = vset.pattern.permute.xlu0 0
  %6710 = vperm.xlu0 %6709, %v6696
  %v6711 = vpop.permute.xlu0 %6710
  %6714 = vset.pattern.permute.xlu0 0
  %6715 = vperm.xlu0 %6714, %v6697
  %v6716 = vpop.permute.xlu0 %6715
  %6719 = vset.pattern.permute.xlu0 0
  %6720 = vperm.xlu0 %6719, %v6698
  %v6721 = vpop.permute.xlu0 %6720
  %6724 = vset.pattern.permute.xlu0 0
  %6725 = vperm.xlu0 %6724, %v6699
  %v6726 = vpop.permute.xlu0 %6725
  %6729 = vset.pattern.permute.xlu0 0
  %6730 = vperm.xlu0 %6729, %v6700
  %v6731 = vpop.permute.xlu0 %6730
  %6734 = vset.pattern.permute.xlu0 0
  %6735 = vperm.xlu0 %6734, %v6701
  %v6736 = vpop.permute.xlu0 %6735
  %6739 = vset.pattern.permute.xlu0 0
  %6740 = vperm.xlu0 %6739, %v6702
  %v6741 = vpop.permute.xlu0 %6740
  %v6743 = vadd.f32 %v6671, %v6706
  %v6744 = vadd.f32 %v6672, %v6706
  %v6745 = vadd.f32 %v6673, %v6706
  %v6746 = vadd.f32 %v6674, %v6711
  %v6747 = vadd.f32 %v6675, %v6711
  %v6748 = vadd.f32 %v6676, %v6711
  %v6749 = vadd.f32 %v6677, %v6716
  %v6750 = vadd.f32 %v6678, %v6716
  %v6751 = vadd.f32 %v6679, %v6716
  %v6752 = vadd.f32 %v6680, %v6721
  %v6753 = vadd.f32 %v6681, %v6721
  %v6754 = vadd.f32 %v6682, %v6721
  %v6755 = vadd.f32 %v6683, %v6726
  %v6756 = vadd.f32 %v6684, %v6726
  %v6757 = vadd.f32 %v6685, %v6726
  %v6758 = vadd.f32 %v6686, %v6731
  %v6759 = vadd.f32 %v6687, %v6731
  %v6760 = vadd.f32 %v6688, %v6731
  %v6761 = vadd.f32 %v6689, %v6736
  %v6762 = vadd.f32 %v6690, %v6736
  %v6763 = vadd.f32 %v6691, %v6736
  %v6764 = vadd.f32 %v6692, %v6741
  %v6765 = vadd.f32 %v6693, %v6741
  %v6766 = vadd.f32 %v6694, %v6741
  %v6767 = vmax.f32 %v6743, 0.0
  %v6768 = vmax.f32 %v6744, 0.0
  %v6769 = vmax.f32 %v6745, 0.0
  %v6770 = vmax.f32 %v6746, 0.0
  %v6771 = vmax.f32 %v6747, 0.0
  %v6772 = vmax.f32 %v6748, 0.0
  %v6773 = vmax.f32 %v6749, 0.0
  %v6774 = vmax.f32 %v6750, 0.0
  %v6775 = vmax.f32 %v6751, 0.0
  %v6776 = vmax.f32 %v6752, 0.0
  %v6777 = vmax.f32 %v6753, 0.0
  %v6778 = vmax.f32 %v6754, 0.0
  %v6779 = vmax.f32 %v6755, 0.0
  %v6780 = vmax.f32 %v6756, 0.0
  %v6781 = vmax.f32 %v6757, 0.0
  %v6782 = vmax.f32 %v6758, 0.0
  %v6783 = vmax.f32 %v6759, 0.0
  %v6784 = vmax.f32 %v6760, 0.0
  %v6785 = vmax.f32 %v6761, 0.0
  %v6786 = vmax.f32 %v6762, 0.0
  %v6787 = vmax.f32 %v6763, 0.0
  %v6788 = vmax.f32 %v6764, 0.0
  %v6789 = vmax.f32 %v6765, 0.0
  %v6790 = vmax.f32 %v6766, 0.0
  %v6791 = vld [vmem:[%s5] sm:$0xff]
  %v6792 = vld [vmem:[%s5 + $0x8] sm:$0xff]
  %v6793 = vld [vmem:[%s5 + $0x10] sm:$0xff]
  %v6794 = vld [vmem:[%s5 + $0x18] sm:$0xff]
  %v6795 = vld [vmem:[%s5 + $0x20] sm:$0xff]
  %v6796 = vld [vmem:[%s5 + $0x28] sm:$0xff]
  %v6797 = vld [vmem:[%s5 + $0x30] sm:$0xff]
  %v6798 = vld [vmem:[%s5 + $0x38] sm:$0xff]
  %v6799 = vld [vmem:[%s5 + $0x40] sm:$0xff]
  %v6800 = vld [vmem:[%s5 + $0x48] sm:$0xff]
  %v6801 = vld [vmem:[%s5 + $0x50] sm:$0xff]
  %v6802 = vld [vmem:[%s5 + $0x58] sm:$0xff]
  %v6803 = vld [vmem:[%s5 + $0x60] sm:$0xff]
  %v6804 = vld [vmem:[%s5 + $0x68] sm:$0xff]
  %v6805 = vld [vmem:[%s5 + $0x70] sm:$0xff]
  %v6806 = vld [vmem:[%s5 + $0x78] sm:$0xff]
  %v6807 = vld [vmem:[%s5 + $0x80] sm:$0xff]
  %v6808 = vld [vmem:[%s5 + $0x88] sm:$0xff]
  %v6809 = vld [vmem:[%s5 + $0x90] sm:$0xff]
  %v6810 = vld [vmem:[%s5 + $0x98] sm:$0xff]
  %v6811 = vld [vmem:[%s5 + $0xa0] sm:$0xff]
  %v6812 = vld [vmem:[%s5 + $0xa8] sm:$0xff]
  %v6813 = vld [vmem:[%s5 + $0xb0] sm:$0xff]
  %v6814 = vld [vmem:[%s5 + $0xb8] sm:$0xff]
  %v6815 = vld [vmem:[%s5 + $0xc0] sm:$0xff]
  %v6816 = vld [vmem:[%s5 + $0xc8] sm:$0xff]
  %v6817 = vld [vmem:[%s5 + $0xd0] sm:$0xff]
  %v6818 = vld [vmem:[%s5 + $0xd8] sm:$0xff]
  %v6819 = vld [vmem:[%s5 + $0xe0] sm:$0xff]
  %v6820 = vld [vmem:[%s5 + $0xe8] sm:$0xff]
  %v6821 = vld [vmem:[%s5 + $0xf0] sm:$0xff]
  %v6822 = vld [vmem:[%s5 + $0xf8] sm:$0xff]
  %v6823 = vld [vmem:[%s5 + $0x100] sm:$0xff]
  %v6824 = vld [vmem:[%s5 + $0x108] sm:$0xff]
  %v6825 = vld [vmem:[%s5 + $0x110] sm:$0xff]
  %v6826 = vld [vmem:[%s5 + $0x118] sm:$0xff]
  %v6827 = vld [vmem:[%s5 + $0x120] sm:$0xff]
  %v6828 = vld [vmem:[%s5 + $0x128] sm:$0xff]
  %v6829 = vld [vmem:[%s5 + $0x130] sm:$0xff]
  %v6830 = vld [vmem:[%s5 + $0x138] sm:$0xff]
  %v6831 = vld [vmem:[%s5 + $0x140] sm:$0xff]
  %v6832 = vld [vmem:[%s5 + $0x148] sm:$0xff]
  %v6833 = vld [vmem:[%s5 + $0x150] sm:$0xff]
  %v6834 = vld [vmem:[%s5 + $0x158] sm:$0xff]
  %v6835 = vld [vmem:[%s5 + $0x160] sm:$0xff]
  %v6836 = vld [vmem:[%s5 + $0x168] sm:$0xff]
  %v6837 = vld [vmem:[%s5 + $0x170] sm:$0xff]
  %v6838 = vld [vmem:[%s5 + $0x178] sm:$0xff]
  %6839 = vmatprep.subr.mxu0 0.0
  %6840 = vmatpush1.msra.mxu0 %v6806
  %6841 = vmatprep.subr.mxu0 0.0
  %6842 = vmatpush1.msra.mxu0 %v6805
  %6843 = vmatprep.subr.mxu0 0.0
  %6844 = vmatpush1.msra.mxu0 %v6804
  %6845 = vmatprep.subr.mxu0 0.0
  %6846 = vmatpush1.msra.mxu0 %v6803
  %6847 = vmatprep.subr.mxu0 0.0
  %6848 = vmatpush1.msra.mxu0 %v6802
  %6849 = vmatprep.subr.mxu0 0.0
  %6850 = vmatpush1.msra.mxu0 %v6801
  %6851 = vmatprep.subr.mxu0 0.0
  %6852 = vmatpush1.msra.mxu0 %v6800
  %6853 = vmatprep.subr.mxu0 0.0
  %6854 = vmatpush1.msra.mxu0 %v6799
  %6855 = vmatprep.subr.mxu0 0.0
  %6856 = vmatpush1.msra.mxu0 %v6798
  %6857 = vmatprep.subr.mxu0 0.0
  %6858 = vmatpush1.msra.mxu0 %v6797
  %6859 = vmatprep.subr.mxu0 0.0
  %6860 = vmatpush1.msra.mxu0 %v6796
  %6861 = vmatprep.subr.mxu0 0.0
  %6862 = vmatpush1.msra.mxu0 %v6795
  %6863 = vmatprep.subr.mxu0 0.0
  %6864 = vmatpush1.msra.mxu0 %v6794
  %6865 = vmatprep.subr.mxu0 0.0
  %6866 = vmatpush1.msra.mxu0 %v6793
  %6867 = vmatprep.subr.mxu0 0.0
  %6868 = vmatpush1.msra.mxu0 %v6792
  %6869 = vmatprep.subr.mxu0 0.0
  %6870 = vmatpush1.msra.mxu0 %v6791
  %6871 = vmatprep.subr.mxu0 0.0
  %6872 = vmatpush2.msra.mxu0 %v6822
  %6873 = vmatprep.subr.mxu0 0.0
  %6874 = vmatpush2.msra.mxu0 %v6821
  %6875 = vmatprep.subr.mxu0 0.0
  %6876 = vmatpush2.msra.mxu0 %v6820
  %6877 = vmatprep.subr.mxu0 0.0
  %6878 = vmatpush2.msra.mxu0 %v6819
  %6879 = vmatprep.subr.mxu0 0.0
  %6880 = vmatpush2.msra.mxu0 %v6818
  %6881 = vmatprep.subr.mxu0 0.0
  %6882 = vmatpush2.msra.mxu0 %v6817
  %6883 = vmatprep.subr.mxu0 0.0
  %6884 = vmatpush2.msra.mxu0 %v6816
  %6885 = vmatprep.subr.mxu0 0.0
  %6886 = vmatpush2.msra.mxu0 %v6815
  %6887 = vmatprep.subr.mxu0 0.0
  %6888 = vmatpush2.msra.mxu0 %v6814
  %6889 = vmatprep.subr.mxu0 0.0
  %6890 = vmatpush2.msra.mxu0 %v6813
  %6891 = vmatprep.subr.mxu0 0.0
  %6892 = vmatpush2.msra.mxu0 %v6812
  %6893 = vmatprep.subr.mxu0 0.0
  %6894 = vmatpush2.msra.mxu0 %v6811
  %6895 = vmatprep.subr.mxu0 0.0
  %6896 = vmatpush2.msra.mxu0 %v6810
  %6897 = vmatprep.subr.mxu0 0.0
  %6898 = vmatpush2.msra.mxu0 %v6809
  %6899 = vmatprep.subr.mxu0 0.0
  %6900 = vmatpush2.msra.mxu0 %v6808
  %6901 = vmatprep.subr.mxu0 0.0
  %6902 = vmatpush2.msra.mxu0 %v6807
  %6903 = vmatprep.mubr.f32.mxu0 %v6768
  %6904 = vmatmul.mubr.f32.gmra.mxu0 %v6767
  %v6905 = vpop.f32.mrf.mxu0
  %v6906 = vadd.f32 0.0, %v6905
  %v6907 = vpop.f32.mrf.mxu0
  %6908 = vmatprep.mubr.f32.mxu0 %v6771
  %6909 = vmatmul.mubr.f32.gmra.mxu0 %v6770
  %v6910 = vpop.f32.mrf.mxu0
  %v6911 = vadd.f32 0.0, %v6910
  %v6912 = vpop.f32.mrf.mxu0
  %6913 = vmatprep.mubr.f32.mxu0 %v6774
  %6914 = vmatmul.mubr.f32.gmra.mxu0 %v6773
  %v6915 = vpop.f32.mrf.mxu0
  %v6916 = vadd.f32 0.0, %v6915
  %v6917 = vpop.f32.mrf.mxu0
  %6918 = vmatprep.mubr.f32.mxu0 %v6777
  %6919 = vmatmul.mubr.f32.gmra.mxu0 %v6776
  %v6920 = vpop.f32.mrf.mxu0
  %v6921 = vadd.f32 0.0, %v6920
  %v6922 = vpop.f32.mrf.mxu0
  %6923 = vmatprep.mubr.f32.mxu0 %v6780
  %6924 = vmatmul.mubr.f32.gmra.mxu0 %v6779
  %v6925 = vpop.f32.mrf.mxu0
  %v6926 = vadd.f32 0.0, %v6925
  %v6927 = vpop.f32.mrf.mxu0
  %6928 = vmatprep.mubr.f32.mxu0 %v6783
  %6929 = vmatmul.mubr.f32.gmra.mxu0 %v6782
  %v6930 = vpop.f32.mrf.mxu0
  %v6931 = vadd.f32 0.0, %v6930
  %v6932 = vpop.f32.mrf.mxu0
  %6933 = vmatprep.mubr.f32.mxu0 %v6786
  %6934 = vmatmul.mubr.f32.gmra.mxu0 %v6785
  %v6935 = vpop.f32.mrf.mxu0
  %v6936 = vadd.f32 0.0, %v6935
  %v6937 = vpop.f32.mrf.mxu0
  %6938 = vmatprep.mubr.f32.mxu0 %v6789
  %6939 = vmatmul.mubr.f32.gmra.mxu0 %v6788
  %v6940 = vpop.f32.mrf.mxu0
  %v6941 = vadd.f32 0.0, %v6940
  %v6942 = vpop.f32.mrf.mxu0
  %6943 = vdwg.mxu0
  %6944 = vmatprep.subr.mxu0 0.0
  %6945 = vmatpush1.msra.mxu0 %v6838
  %6946 = vmatprep.subr.mxu0 0.0
  %6947 = vmatpush1.msra.mxu0 %v6837
  %6948 = vmatprep.subr.mxu0 0.0
  %6949 = vmatpush1.msra.mxu0 %v6836
  %6950 = vmatprep.subr.mxu0 0.0
  %6951 = vmatpush1.msra.mxu0 %v6835
  %6952 = vmatprep.subr.mxu0 0.0
  %6953 = vmatpush1.msra.mxu0 %v6834
  %6954 = vmatprep.subr.mxu0 0.0
  %6955 = vmatpush1.msra.mxu0 %v6833
  %6956 = vmatprep.subr.mxu0 0.0
  %6957 = vmatpush1.msra.mxu0 %v6832
  %6958 = vmatprep.subr.mxu0 0.0
  %6959 = vmatpush1.msra.mxu0 %v6831
  %6960 = vmatprep.subr.mxu0 0.0
  %6961 = vmatpush1.msra.mxu0 %v6830
  %6962 = vmatprep.subr.mxu0 0.0
  %6963 = vmatpush1.msra.mxu0 %v6829
  %6964 = vmatprep.subr.mxu0 0.0
  %6965 = vmatpush1.msra.mxu0 %v6828
  %6966 = vmatprep.subr.mxu0 0.0
  %6967 = vmatpush1.msra.mxu0 %v6827
  %6968 = vmatprep.subr.mxu0 0.0
  %6969 = vmatpush1.msra.mxu0 %v6826
  %6970 = vmatprep.subr.mxu0 0.0
  %6971 = vmatpush1.msra.mxu0 %v6825
  %6972 = vmatprep.subr.mxu0 0.0
  %6973 = vmatpush1.msra.mxu0 %v6824
  %6974 = vmatprep.subr.mxu0 0.0
  %6975 = vmatpush1.msra.mxu0 %v6823
  %6976 = vmatprep.subr.mxu0 0.0
  %6977 = vmatpush2.msra.mxu0 0.0
  %6978 = vmatprep.subr.mxu0 0.0
  %6979 = vmatpush2.msra.mxu0 0.0
  %6980 = vmatprep.subr.mxu0 0.0
  %6981 = vmatpush2.msra.mxu0 0.0
  %6982 = vmatprep.subr.mxu0 0.0
  %6983 = vmatpush2.msra.mxu0 0.0
  %6984 = vmatprep.subr.mxu0 0.0
  %6985 = vmatpush2.msra.mxu0 0.0
  %6986 = vmatprep.subr.mxu0 0.0
  %6987 = vmatpush2.msra.mxu0 0.0
  %6988 = vmatprep.subr.mxu0 0.0
  %6989 = vmatpush2.msra.mxu0 0.0
  %6990 = vmatprep.subr.mxu0 0.0
  %6991 = vmatpush2.msra.mxu0 0.0
  %6992 = vmatprep.subr.mxu0 0.0
  %6993 = vmatpush2.msra.mxu0 0.0
  %6994 = vmatprep.subr.mxu0 0.0
  %6995 = vmatpush2.msra.mxu0 0.0
  %6996 = vmatprep.subr.mxu0 0.0
  %6997 = vmatpush2.msra.mxu0 0.0
  %6998 = vmatprep.subr.mxu0 0.0
  %6999 = vmatpush2.msra.mxu0 0.0
  %7000 = vmatprep.subr.mxu0 0.0
  %7001 = vmatpush2.msra.mxu0 0.0
  %7002 = vmatprep.subr.mxu0 0.0
  %7003 = vmatpush2.msra.mxu0 0.0
  %7004 = vmatprep.subr.mxu0 0.0
  %7005 = vmatpush2.msra.mxu0 0.0
  %7006 = vmatprep.subr.mxu0 0.0
  %7007 = vmatpush2.msra.mxu0 0.0
  %7008 = vmatprep.mubr.f32.mxu0 0.0
  %7009 = vmatmul.mubr.f32.gmra.mxu0 %v6769
  %v7010 = vpop.f32.mrf.mxu0
  %v7011 = vadd.f32 %v6906, %v7010
  %v7012 = vpop.f32.mrf.mxu0
  %7013 = vmatprep.mubr.f32.mxu0 0.0
  %7014 = vmatmul.mubr.f32.gmra.mxu0 %v6772
  %v7015 = vpop.f32.mrf.mxu0
  %v7016 = vadd.f32 %v6911, %v7015
  %v7017 = vpop.f32.mrf.mxu0
  %7018 = vmatprep.mubr.f32.mxu0 0.0
  %7019 = vmatmul.mubr.f32.gmra.mxu0 %v6775
  %v7020 = vpop.f32.mrf.mxu0
  %v7021 = vadd.f32 %v6916, %v7020
  %v7022 = vpop.f32.mrf.mxu0
  %7023 = vmatprep.mubr.f32.mxu0 0.0
  %7024 = vmatmul.mubr.f32.gmra.mxu0 %v6778
  %v7025 = vpop.f32.mrf.mxu0
  %v7026 = vadd.f32 %v6921, %v7025
  %v7027 = vpop.f32.mrf.mxu0
  %7028 = vmatprep.mubr.f32.mxu0 0.0
  %7029 = vmatmul.mubr.f32.gmra.mxu0 %v6781
  %v7030 = vpop.f32.mrf.mxu0
  %v7031 = vadd.f32 %v6926, %v7030
  %v7032 = vpop.f32.mrf.mxu0
  %7033 = vmatprep.mubr.f32.mxu0 0.0
  %7034 = vmatmul.mubr.f32.gmra.mxu0 %v6784
  %v7035 = vpop.f32.mrf.mxu0
  %v7036 = vadd.f32 %v6931, %v7035
  %v7037 = vpop.f32.mrf.mxu0
  %7038 = vmatprep.mubr.f32.mxu0 0.0
  %7039 = vmatmul.mubr.f32.gmra.mxu0 %v6787
  %v7040 = vpop.f32.mrf.mxu0
  %v7041 = vadd.f32 %v6936, %v7040
  %v7042 = vpop.f32.mrf.mxu0
  %7043 = vmatprep.mubr.f32.mxu0 0.0
  %7044 = vmatmul.mubr.f32.gmra.mxu0 %v6790
  %v7045 = vpop.f32.mrf.mxu0
  %v7046 = vadd.f32 %v6941, %v7045
  %v7047 = vpop.f32.mrf.mxu0
  %7048 = vdwg.mxu0
  %vm7049 = vcmask 64512
  %7050 = vst.msk [vmem:[%s6] sm:$0xff] %vm7049, %v7011
  %7051 = vst.msk [vmem:[%s6 + $0x8] sm:$0xff] %vm7049, %v7016
  %7052 = vst.msk [vmem:[%s6 + $0x10] sm:$0xff] %vm7049, %v7021
  %7053 = vst.msk [vmem:[%s6 + $0x18] sm:$0xff] %vm7049, %v7026
  %7054 = vst.msk [vmem:[%s6 + $0x20] sm:$0xff] %vm7049, %v7031
  %7055 = vst.msk [vmem:[%s6 + $0x28] sm:$0xff] %vm7049, %v7036
  %7056 = vst.msk [vmem:[%s6 + $0x30] sm:$0xff] %vm7049, %v7041
  %7057 = vst.msk [vmem:[%s6 + $0x38] sm:$0xff] %vm7049, %v7046
  // Predicated region
  $region26: #{audio_backbone_forward.1} parent=0 // pred_check
    _
  $region27: #{audio_backbone_forward.1} parent=0 // pred_check_branch
    %7059 = sbr.rel (0) target = $region29
  $region28: #{audio_backbone_forward.1} parent=0 // pred_region
    _
  $region29: #{audio_backbone_forward.1} parent=0 // pred_fallthru
    _
  // Predicated region
  $region30: #{audio_backbone_forward.1} parent=0 // pred_check
    _
  $region31: #{audio_backbone_forward.1} parent=0 // pred_check_branch
    %7061 = sbr.rel (0) target = $region33
  $region32: #{audio_backbone_forward.1} parent=0 // pred_region
    _
  $region33: #{audio_backbone_forward.1} parent=0 // pred_fallthru
    _

</llo_original>
